<compile_context>
chip_gen: v5e
topology: v5e:2x2
jax: 0.10.0
libtpu: 0.0.40
codegen_flags: <defaults>
</compile_context>

<pallas_src>
import functools

import jax
import jax.numpy as jnp
from jax import lax
from jax.experimental import pallas as pl
from jax.experimental.pallas import tpu as pltpu


# ----------------------------------------------------------------------------
# Fused bidirectional LSTM layer kernel (single pallas_call per layer)
# ----------------------------------------------------------------------------
def _bilstm_kernel(x_ref, m_ref, wih_ref, b_ref, whhf_ref, whhb_ref, o_ref, gx_ref,
                   *, emit_sequence):
    """x_ref: [T, B, D] time-major input, m_ref: [T, B, 1] {0,1} mask,
    wih_ref: [D, 8H] (fwd 4H || bwd 4H, gate order i,f,g,o), b_ref: [1, 8H],
    whhf/whhb: [H, 4H].  Output: [T, B, 2H] if emit_sequence else [B, 2H]."""
    T, B, D = x_ref.shape
    H = whhf_ref.shape[0]
    G = 4 * H

    # ---- hoisted input projection: one big MXU matmul for both directions ----
    x2d = x_ref[...].reshape(T * B, D)
    gx_ref[...] = (jnp.dot(x2d, wih_ref[...], preferred_element_type=jnp.float32)
                   + b_ref[...]).reshape(T, B, 2 * G)

    def cell(g, h_prev, c_prev, m):
        i = jax.nn.sigmoid(g[:, 0 * H:1 * H])
        f = jax.nn.sigmoid(g[:, 1 * H:2 * H])
        gg = jnp.tanh(g[:, 2 * H:3 * H])
        o = jax.nn.sigmoid(g[:, 3 * H:4 * H])
        c_new = f * c_prev + i * gg
        h_new = o * jnp.tanh(c_new)
        # packed-sequence semantics: padded steps keep state and emit zeros
        c = m * c_new + (1.0 - m) * c_prev
        h = m * h_new + (1.0 - m) * h_prev
        return h, c, m * h_new

    def step(t, carry):
        h_f, c_f, h_b, c_b = carry
        rt = T - 1 - t                              # backward direction time index
        m_t = m_ref[t]                              # [B, 1]
        m_r = m_ref[rt]
        g_f = gx_ref[t, :, :G] + jnp.dot(h_f, whhf_ref[...],
                                         preferred_element_type=jnp.float32)
        g_b = gx_ref[rt, :, G:] + jnp.dot(h_b, whhb_ref[...],
                                          preferred_element_type=jnp.float32)
        h_f, c_f, y_f = cell(g_f, h_f, c_f, m_t)
        h_b, c_b, y_b = cell(g_b, h_b, c_b, m_r)
        if emit_sequence:
            o_ref[t, :, :H] = y_f
            o_ref[rt, :, H:] = y_b
        return h_f, c_f, h_b, c_b

    z = jnp.zeros((B, H), jnp.float32)
    h_f, _, h_b, _ = lax.fori_loop(0, T, step, (z, z, z, z), unroll=True)

    if not emit_sequence:
        # final hidden states only: fwd at last valid step (masked carry), bwd at t=0
        o_ref[...] = jnp.concatenate([h_f, h_b], axis=-1)


def bilstm(x_tbd, mask_tb1, w_ih, b, whh_f, whh_b, *, emit_sequence):
    T, Bt, D = x_tbd.shape
    H = whh_f.shape[0]
    if emit_sequence:
        out_shape = (T, Bt, 2 * H)
        out_spec = pl.BlockSpec(out_shape, lambda i: (0, 0, 0))
    else:
        out_shape = (Bt, 2 * H)
        out_spec = pl.BlockSpec(out_shape, lambda i: (0, 0))
    kernel = functools.partial(_bilstm_kernel, emit_sequence=emit_sequence)
    return pl.pallas_call(
        kernel,
        out_shape=jax.ShapeDtypeStruct(out_shape, jnp.float32),
        grid_spec=pltpu.PrefetchScalarGridSpec(
            num_scalar_prefetch=0,
            grid=(1,),
            in_specs=[
                pl.BlockSpec((T, Bt, D), lambda i: (0, 0, 0)),
                pl.BlockSpec((T, Bt, 1), lambda i: (0, 0, 0)),
                pl.BlockSpec((D, 8 * H), lambda i: (0, 0)),
                pl.BlockSpec((1, 8 * H), lambda i: (0, 0)),
                pl.BlockSpec((H, 4 * H), lambda i: (0, 0)),
                pl.BlockSpec((H, 4 * H), lambda i: (0, 0)),
            ],
            out_specs=out_spec,
            scratch_shapes=[pltpu.VMEM((T, Bt, 8 * H), jnp.float32)],
        ),
        compiler_params=pltpu.CompilerParams(dimension_semantics=("arbitrary",)),
    )(x_tbd, mask_tb1, w_ih, b, whh_f, whh_b)


# ----------------------------------------------------------------------------
# MLP tagger kernel (lane-dense padded output)
# ----------------------------------------------------------------------------
def _mlp_kernel(x_ref, w_ref, b_ref, o_ref):
    y = jnp.dot(x_ref[...], w_ref[...], preferred_element_type=jnp.float32) + b_ref[...]
    o_ref[...] = jnp.where(y > 0, y, 0.1 * y)            # LeakyReLU(negative_slope=0.1)


def mlp_tag(x2d, w, b):
    M, D = x2d.shape
    n = w.shape[1]
    n_pad = ((n + 127) // 128) * 128                     # lane-dense output stores
    w_p = jnp.pad(w, ((0, 0), (0, n_pad - n)))
    b_p = jnp.pad(b, ((0, 0), (0, n_pad - n)))
    out = pl.pallas_call(
        _mlp_kernel,
        out_shape=jax.ShapeDtypeStruct((M, n_pad), jnp.float32),
        grid_spec=pltpu.PrefetchScalarGridSpec(
            num_scalar_prefetch=0,
            grid=(1,),
            in_specs=[
                pl.BlockSpec((M, D), lambda i: (0, 0)),
                pl.BlockSpec((D, n_pad), lambda i: (0, 0)),
                pl.BlockSpec((1, n_pad), lambda i: (0, 0)),
            ],
            out_specs=pl.BlockSpec((M, n_pad), lambda i: (0, 0)),
        ),
    )(x2d, w_p, b_p)
    return out[:, :n]


# ----------------------------------------------------------------------------
# Tagger forward (glue in plain JAX, hot path in Pallas)
# ----------------------------------------------------------------------------
def tagger_forward(packed, words, chars, pad_index=0):
    B, S = words.shape
    Lc = chars.shape[2]

    # ----- tiny integer transposes only; activations stay time-major ------------
    words_t = words.T                                                   # [S, B]
    wmask_f = (words_t != pad_index)[:, :, None].astype(jnp.float32)    # [S, B, 1]

    # NOTE: the reference computes ext_words but embeds `words` directly; we follow it.
    embed_t = packed["word_embed"][words_t]                             # [S, B, E]

    # ----- CHAR_LSTM over every word slot (dense, masked); final states only ----
    N = S * B
    Np = ((N + 7) // 8) * 8
    chars_ln = chars.transpose(1, 0, 2).reshape(N, Lc)                  # rows = (s, b)
    if Np != N:
        chars_ln = jnp.pad(chars_ln, ((0, Np - N), (0, 0)))
    chars_ln = chars_ln.T                                               # [Lc, Np] time-major
    char_emb = packed["char_embed"][chars_ln]                           # [Lc, Np, Dc]
    # TODO(synk): char pad index hardcoded to 0 (word pad_index is parameterized).
    cmask = (chars_ln != 0)[:, :, None].astype(jnp.float32)             # [Lc, Np, 1]
    char_h = bilstm(char_emb, cmask, packed["cw_ih"], packed["cb"],
                    packed["cw_f_hh"], packed["cw_b_hh"],
                    emit_sequence=False)                                # [Np, 2Hc]
    char_h = char_h[:N].reshape(S, B, -1)                               # [S, B, 2Hc]

    # embed_dropout / lstm_dropout / mlp dropout: identity in eval mode
    x_t = jnp.concatenate([embed_t, char_h], axis=-1)                   # [S, B, D0]

    # ----- pad batch to a full sublane group (8) for VPU / MXU occupancy ---------
    Bp = max(8, ((B + 7) // 8) * 8)
    if Bp != B:
        x_t = jnp.pad(x_t, ((0, 0), (0, Bp - B), (0, 0)))
        wmask_f = jnp.pad(wmask_f, ((0, 0), (0, Bp - B), (0, 0)))

    # ----- stacked BiLSTM, packed-sequence semantics via masking -----------------
    for lp in packed["lstm_layers"]:
        x_t = bilstm(x_t, wmask_f, lp["w_ih"], lp["b"], lp["wf_hh"], lp["wb_hh"],
                     emit_sequence=True)                                # [S, Bp, 2H]

    # ----- tagger MLP -------------------------------------------------------------
    s = mlp_tag(x_t.reshape(S * Bp, x_t.shape[-1]), packed["mlp_w"], packed["mlp_b"])
    s = s.reshape(S, Bp, -1)[:, :B]                                     # [S, B, n_tags]
    return s.transpose(1, 0, 2)                                         # [B, S, n_tags]


# ----------------------------------------------------------------------------
# Deterministic synthetic parameters (PyTorch-shaped) + packing for the kernels
# ----------------------------------------------------------------------------
def init_params(key, cfg):
    def nrm(k, shape, scale=0.1):
        return scale * jax.random.normal(k, shape, dtype=jnp.float32)

    keys = jax.random.split(key, 32)
    Hc = cfg["n_char_out"] // 2
    H = cfg["n_lstm_hidden"]
    p = {
        "word_embed": nrm(keys[0], (cfg["n_words"], cfg["n_embed"])),
        "char_embed": nrm(keys[1], (cfg["n_chars"], cfg["n_char_embed"])),
        "cw_f_ih": nrm(keys[2], (cfg["n_char_embed"], 4 * Hc)),
        "cw_f_hh": nrm(keys[3], (Hc, 4 * Hc)),
        "cb_f":    nrm(keys[4], (1, 4 * Hc)),
        "cw_b_ih": nrm(keys[5], (cfg["n_char_embed"], 4 * Hc)),
        "cw_b_hh": nrm(keys[6], (Hc, 4 * Hc)),
        "cb_b":    nrm(keys[7], (1, 4 * Hc)),
        "mlp_w":   nrm(keys[8], (2 * H, cfg["n_tags"])),
        "mlp_b":   nrm(keys[9], (1, cfg["n_tags"])),
    }
    layers = []
    d_in = cfg["n_embed"] + cfg["n_char_out"]
    k = 10
    for _ in range(cfg["n_lstm_layers"]):
        layers.append({
            "wf_ih": nrm(keys[k + 0], (d_in, 4 * H)),
            "wf_hh": nrm(keys[k + 1], (H, 4 * H)),
            "bf":    nrm(keys[k + 2], (1, 4 * H)),
            "wb_ih": nrm(keys[k + 3], (d_in, 4 * H)),
            "wb_hh": nrm(keys[k + 4], (H, 4 * H)),
            "bb":    nrm(keys[k + 5], (1, 4 * H)),
        })
        k += 6
        d_in = 2 * H
    p["lstm_layers"] = layers
    return p


def pack_params(p):
    """Pack per-direction input weights as [D, 8H] = [fwd 4H || bwd 4H]."""
    def comb(a, b_):
        return jnp.concatenate([a, b_], axis=1)

    return {
        "word_embed": p["word_embed"],
        "char_embed": p["char_embed"],
        "cw_ih": comb(p["cw_f_ih"], p["cw_b_ih"]),
        "cb":    comb(p["cb_f"], p["cb_b"]),
        "cw_f_hh": p["cw_f_hh"],
        "cw_b_hh": p["cw_b_hh"],
        "mlp_w": p["mlp_w"],
        "mlp_b": p["mlp_b"],
        "lstm_layers": [
            {"w_ih": comb(l["wf_ih"], l["wb_ih"]),
             "b":    comb(l["bf"], l["bb"]),
             "wf_hh": l["wf_hh"],
             "wb_hh": l["wb_hh"]}
            for l in p["lstm_layers"]
        ],
    }


if __name__ == "__main__":
    cfg = dict(n_words=50, n_embed=32, n_chars=20, n_char_embed=16, n_char_out=16,
               n_lstm_hidden=32, n_lstm_layers=2, n_tags=8, pad_index=0, unk_index=1)

    key = jax.random.PRNGKey(0)
    pkey, wkey, ckey = jax.random.split(key, 3)
    params = init_params(pkey, cfg)
    packed = pack_params(params)

    B, S, Lc = 2, 8, 4
    lens = jnp.array([8, 5], dtype=jnp.int32)                 # max(lens) == S, as in batching
    words = jax.random.randint(wkey, (B, S), 2, cfg["n_words"], dtype=jnp.int32)
    pos = jnp.arange(S)[None, :]
    words = jnp.where(pos < lens[:, None], words, cfg["pad_index"])

    chars = jax.random.randint(ckey, (B, S, Lc), 1, cfg["n_chars"], dtype=jnp.int32)
    char_lens = jnp.where(words > 0, 1 + (words % Lc), 0)      # 1..Lc chars per valid word
    cpos = jnp.arange(Lc)[None, None, :]
    chars = jnp.where(cpos < char_lens[:, :, None], chars, 0)  # char pad index 0

    fwd = jax.jit(tagger_forward, static_argnames=("pad_index",))
    s_tag = fwd(packed, words, chars, pad_index=cfg["pad_index"])
    s_tag = jax.block_until_ready(s_tag)

    assert s_tag.shape == (B, S, cfg["n_tags"])
    assert bool(jnp.all(jnp.isfinite(s_tag)))
    print("KERNEL_OK")
</pallas_src>

<mosaic_0001>
module attributes {stable_mosaic.version = 11 : i64} {
  func.func @_bilstm_kernel(%arg0: i32, %arg1: memref<4x16x16xf32, #tpu.memory_space<vmem>>, %arg2: memref<4x16x1xf32, #tpu.memory_space<vmem>>, %arg3: memref<16x64xf32, #tpu.memory_space<vmem>>, %arg4: memref<1x64xf32, #tpu.memory_space<vmem>>, %arg5: memref<8x32xf32, #tpu.memory_space<vmem>>, %arg6: memref<8x32xf32, #tpu.memory_space<vmem>>, %arg7: memref<16x16xf32, #tpu.memory_space<vmem>>, %arg8: memref<4x16x64xf32, #tpu.memory_space<vmem>>) attributes {dimension_semantics = [#tpu.dimension_semantics<arbitrary>], iteration_bounds = array<i64: 1>, scalar_prefetch = 0 : i64, scratch_operands = 1 : i64, tpu.core_type = #tpu.core_type<tc>, window_params = [{pipeline_mode = #tpu.pipeline_mode<synchronous>, transform_indices = @transform_0, window_bounds = array<i64: 4, 16, 16>}, {pipeline_mode = #tpu.pipeline_mode<synchronous>, transform_indices = @transform_1, window_bounds = array<i64: 4, 16, 1>}, {pipeline_mode = #tpu.pipeline_mode<synchronous>, transform_indices = @transform_2, window_bounds = array<i64: 16, 64>}, {pipeline_mode = #tpu.pipeline_mode<synchronous>, transform_indices = @transform_3, window_bounds = array<i64: 1, 64>}, {pipeline_mode = #tpu.pipeline_mode<synchronous>, transform_indices = @transform_4, window_bounds = array<i64: 8, 32>}, {pipeline_mode = #tpu.pipeline_mode<synchronous>, transform_indices = @transform_5, window_bounds = array<i64: 8, 32>}, {pipeline_mode = #tpu.pipeline_mode<synchronous>, transform_indices = @transform_6, window_bounds = array<i64: 16, 16>}]} {
    %c0 = arith.constant 0 : index
    %c0_0 = arith.constant 0 : index
    %c0_1 = arith.constant 0 : index
    %0 = vector.load %arg1[%c0, %c0_0, %c0_1] : memref<4x16x16xf32, #tpu.memory_space<vmem>>, vector<4x16x16xf32>
    %1 = vector.shape_cast %0 : vector<4x16x16xf32> to vector<64x16xf32>
    %c0_2 = arith.constant 0 : index
    %c0_3 = arith.constant 0 : index
    %2 = vector.load %arg3[%c0_2, %c0_3] : memref<16x64xf32, #tpu.memory_space<vmem>>, vector<16x64xf32>
    %cst = arith.constant dense<0.000000e+00> : vector<64x64xf32>
    %3 = tpu.matmul %1, %2, %cst {dimension_numbers = #tpu.dot_dimension_numbers<[1], [0], [0], [1], [0, 0, 1, 1], [], []>} : vector<64x16xf32>, vector<16x64xf32>, vector<64x64xf32> -> vector<64x64xf32>
    %c0_4 = arith.constant 0 : index
    %c0_5 = arith.constant 0 : index
    %4 = vector.load %arg4[%c0_4, %c0_5] : memref<1x64xf32, #tpu.memory_space<vmem>>, vector<1x64xf32>
    %5 = vector.broadcast %4 : vector<1x64xf32> to vector<64x64xf32>
    %6 = arith.addf %3, %5 : vector<64x64xf32>
    %7 = vector.shape_cast %6 : vector<64x64xf32> to vector<4x16x64xf32>
    %c0_6 = arith.constant 0 : index
    %c0_7 = arith.constant 0 : index
    %c0_8 = arith.constant 0 : index
    %8 = vector.load %arg8[%c0_6, %c0_7, %c0_8] : memref<4x16x64xf32, #tpu.memory_space<vmem>>, vector<4x16x64xf32>
    tpu.vector_store %arg8[%c0_6, %c0_7, %c0_8], %7 {strides = array<i32>} : memref<4x16x64xf32, #tpu.memory_space<vmem>>, vector<4x16x64xf32>,
    %cst_9 = arith.constant 0.000000e+00 : f32
    %9 = vector.broadcast %cst_9 : f32 to vector<16x8xf32>
    %c0_i32 = arith.constant 0 : i32
    %c3_i32 = arith.constant 3 : i32
    %10 = arith.subi %c3_i32, %c0_i32 : i32
    %11 = arith.index_cast %c0_i32 : i32 to index
    %c0_10 = arith.constant 0 : index
    %c0_11 = arith.constant 0 : index
    %12 = vector.load %arg2[%11, %c0_10, %c0_11] : memref<4x16x1xf32, #tpu.memory_space<vmem>>, vector<1x16x1xf32>
    %13 = vector.shape_cast %12 : vector<1x16x1xf32> to vector<16x1xf32>
    %14 = arith.index_cast %10 : i32 to index
    %c0_12 = arith.constant 0 : index
    %c0_13 = arith.constant 0 : index
    %15 = vector.load %arg2[%14, %c0_12, %c0_13] : memref<4x16x1xf32, #tpu.memory_space<vmem>>, vector<1x16x1xf32>
    %16 = vector.shape_cast %15 : vector<1x16x1xf32> to vector<16x1xf32>
    %17 = arith.index_cast %c0_i32 : i32 to index
    %c0_14 = arith.constant 0 : index
    %c0_15 = arith.constant 0 : index
    %18 = vector.load %arg8[%17, %c0_14, %c0_15] : memref<4x16x64xf32, #tpu.memory_space<vmem>>, vector<1x16x32xf32>
    %19 = vector.shape_cast %18 : vector<1x16x32xf32> to vector<16x32xf32>
    %c0_16 = arith.constant 0 : index
    %c0_17 = arith.constant 0 : index
    %20 = vector.load %arg5[%c0_16, %c0_17] : memref<8x32xf32, #tpu.memory_space<vmem>>, vector<8x32xf32>
    %cst_18 = arith.constant dense<0.000000e+00> : vector<16x32xf32>
    %21 = tpu.matmul %9, %20, %cst_18 {dimension_numbers = #tpu.dot_dimension_numbers<[1], [0], [0], [1], [0, 0, 1, 1], [], []>} : vector<16x8xf32>, vector<8x32xf32>, vector<16x32xf32> -> vector<16x32xf32>
    %22 = arith.addf %19, %21 : vector<16x32xf32>
    %23 = arith.index_cast %10 : i32 to index
    %c0_19 = arith.constant 0 : index
    %c32 = arith.constant 32 : index
    %24 = vector.load %arg8[%23, %c0_19, %c32] : memref<4x16x64xf32, #tpu.memory_space<vmem>>, vector<1x16x32xf32>
    %25 = vector.shape_cast %24 : vector<1x16x32xf32> to vector<16x32xf32>
    %c0_20 = arith.constant 0 : index
    %c0_21 = arith.constant 0 : index
    %26 = vector.load %arg6[%c0_20, %c0_21] : memref<8x32xf32, #tpu.memory_space<vmem>>, vector<8x32xf32>
    %cst_22 = arith.constant dense<0.000000e+00> : vector<16x32xf32>
    %27 = tpu.matmul %9, %26, %cst_22 {dimension_numbers = #tpu.dot_dimension_numbers<[1], [0], [0], [1], [0, 0, 1, 1], [], []>} : vector<16x8xf32>, vector<8x32xf32>, vector<16x32xf32> -> vector<16x32xf32>
    %28 = arith.addf %25, %27 : vector<16x32xf32>
    %29 = vector.extract_strided_slice %22 {offsets = [0, 0], sizes = [16, 8], strides = [1, 1]} : vector<16x32xf32> to vector<16x8xf32>
    %30 = arith.negf %29 : vector<16x8xf32>
    %31 = math.exp %30 : vector<16x8xf32>
    %cst_23 = arith.constant 1.000000e+00 : f32
    %32 = vector.broadcast %cst_23 : f32 to vector<16x8xf32>
    %33 = arith.addf %32, %31 : vector<16x8xf32>
    %34 = arith.divf %32, %33 : vector<16x8xf32>
    %35 = vector.extract_strided_slice %22 {offsets = [0, 8], sizes = [16, 8], strides = [1, 1]} : vector<16x32xf32> to vector<16x8xf32>
    %36 = arith.negf %35 : vector<16x8xf32>
    %37 = math.exp %36 : vector<16x8xf32>
    %cst_24 = arith.constant 1.000000e+00 : f32
    %38 = vector.broadcast %cst_24 : f32 to vector<16x8xf32>
    %39 = arith.addf %38, %37 : vector<16x8xf32>
    %40 = arith.divf %38, %39 : vector<16x8xf32>
    %41 = vector.extract_strided_slice %22 {offsets = [0, 16], sizes = [16, 8], strides = [1, 1]} : vector<16x32xf32> to vector<16x8xf32>
    %42 = math.tanh %41 : vector<16x8xf32>
    %43 = vector.extract_strided_slice %22 {offsets = [0, 24], sizes = [16, 8], strides = [1, 1]} : vector<16x32xf32> to vector<16x8xf32>
    %44 = arith.negf %43 : vector<16x8xf32>
    %45 = math.exp %44 : vector<16x8xf32>
    %cst_25 = arith.constant 1.000000e+00 : f32
    %46 = vector.broadcast %cst_25 : f32 to vector<16x8xf32>
    %47 = arith.addf %46, %45 : vector<16x8xf32>
    %48 = arith.divf %46, %47 : vector<16x8xf32>
    %49 = arith.mulf %40, %9 : vector<16x8xf32>
    %50 = arith.mulf %34, %42 : vector<16x8xf32>
    %51 = arith.addf %49, %50 : vector<16x8xf32>
    %52 = math.tanh %51 : vector<16x8xf32>
    %53 = arith.mulf %48, %52 : vector<16x8xf32>
    %54 = vector.broadcast %13 : vector<16x1xf32> to vector<16x8xf32>
    %55 = arith.mulf %54, %51 : vector<16x8xf32>
    %cst_26 = arith.constant 1.000000e+00 : f32
    %56 = vector.broadcast %cst_26 : f32 to vector<16x1xf32>
    %57 = arith.subf %56, %13 : vector<16x1xf32>
    %58 = vector.broadcast %57 : vector<16x1xf32> to vector<16x8xf32>
    %59 = arith.mulf %58, %9 : vector<16x8xf32>
    %60 = arith.addf %55, %59 : vector<16x8xf32>
    %61 = vector.broadcast %13 : vector<16x1xf32> to vector<16x8xf32>
    %62 = arith.mulf %61, %53 : vector<16x8xf32>
    %cst_27 = arith.constant 1.000000e+00 : f32
    %63 = vector.broadcast %cst_27 : f32 to vector<16x1xf32>
    %64 = arith.subf %63, %13 : vector<16x1xf32>
    %65 = vector.broadcast %64 : vector<16x1xf32> to vector<16x8xf32>
    %66 = arith.mulf %65, %9 : vector<16x8xf32>
    %67 = arith.addf %62, %66 : vector<16x8xf32>
    %68 = vector.extract_strided_slice %28 {offsets = [0, 0], sizes = [16, 8], strides = [1, 1]} : vector<16x32xf32> to vector<16x8xf32>
    %69 = arith.negf %68 : vector<16x8xf32>
    %70 = math.exp %69 : vector<16x8xf32>
    %cst_28 = arith.constant 1.000000e+00 : f32
    %71 = vector.broadcast %cst_28 : f32 to vector<16x8xf32>
    %72 = arith.addf %71, %70 : vector<16x8xf32>
    %73 = arith.divf %71, %72 : vector<16x8xf32>
    %74 = vector.extract_strided_slice %28 {offsets = [0, 8], sizes = [16, 8], strides = [1, 1]} : vector<16x32xf32> to vector<16x8xf32>
    %75 = arith.negf %74 : vector<16x8xf32>
    %76 = math.exp %75 : vector<16x8xf32>
    %cst_29 = arith.constant 1.000000e+00 : f32
    %77 = vector.broadcast %cst_29 : f32 to vector<16x8xf32>
    %78 = arith.addf %77, %76 : vector<16x8xf32>
    %79 = arith.divf %77, %78 : vector<16x8xf32>
    %80 = vector.extract_strided_slice %28 {offsets = [0, 16], sizes = [16, 8], strides = [1, 1]} : vector<16x32xf32> to vector<16x8xf32>
    %81 = math.tanh %80 : vector<16x8xf32>
    %82 = vector.extract_strided_slice %28 {offsets = [0, 24], sizes = [16, 8], strides = [1, 1]} : vector<16x32xf32> to vector<16x8xf32>
    %83 = arith.negf %82 : vector<16x8xf32>
    %84 = math.exp %83 : vector<16x8xf32>
    %cst_30 = arith.constant 1.000000e+00 : f32
    %85 = vector.broadcast %cst_30 : f32 to vector<16x8xf32>
    %86 = arith.addf %85, %84 : vector<16x8xf32>
    %87 = arith.divf %85, %86 : vector<16x8xf32>
    %88 = arith.mulf %79, %9 : vector<16x8xf32>
    %89 = arith.mulf %73, %81 : vector<16x8xf32>
    %90 = arith.addf %88, %89 : vector<16x8xf32>
    %91 = math.tanh %90 : vector<16x8xf32>
    %92 = arith.mulf %87, %91 : vector<16x8xf32>
    %93 = vector.broadcast %16 : vector<16x1xf32> to vector<16x8xf32>
    %94 = arith.mulf %93, %90 : vector<16x8xf32>
    %cst_31 = arith.constant 1.000000e+00 : f32
    %95 = vector.broadcast %cst_31 : f32 to vector<16x1xf32>
    %96 = arith.subf %95, %16 : vector<16x1xf32>
    %97 = vector.broadcast %96 : vector<16x1xf32> to vector<16x8xf32>
    %98 = arith.mulf %97, %9 : vector<16x8xf32>
    %99 = arith.addf %94, %98 : vector<16x8xf32>
    %100 = vector.broadcast %16 : vector<16x1xf32> to vector<16x8xf32>
    %101 = arith.mulf %100, %92 : vector<16x8xf32>
    %cst_32 = arith.constant 1.000000e+00 : f32
    %102 = vector.broadcast %cst_32 : f32 to vector<16x1xf32>
    %103 = arith.subf %102, %16 : vector<16x1xf32>
    %104 = vector.broadcast %103 : vector<16x1xf32> to vector<16x8xf32>
    %105 = arith.mulf %104, %9 : vector<16x8xf32>
    %106 = arith.addf %101, %105 : vector<16x8xf32>
    %c1_i32 = arith.constant 1 : i32
    %c3_i32_33 = arith.constant 3 : i32
    %107 = arith.subi %c3_i32_33, %c1_i32 : i32
    %108 = arith.index_cast %c1_i32 : i32 to index
    %c0_34 = arith.constant 0 : index
    %c0_35 = arith.constant 0 : index
    %109 = vector.load %arg2[%108, %c0_34, %c0_35] : memref<4x16x1xf32, #tpu.memory_space<vmem>>, vector<1x16x1xf32>
    %110 = vector.shape_cast %109 : vector<1x16x1xf32> to vector<16x1xf32>
    %111 = arith.index_cast %107 : i32 to index
    %c0_36 = arith.constant 0 : index
    %c0_37 = arith.constant 0 : index
    %112 = vector.load %arg2[%111, %c0_36, %c0_37] : memref<4x16x1xf32, #tpu.memory_space<vmem>>, vector<1x16x1xf32>
    %113 = vector.shape_cast %112 : vector<1x16x1xf32> to vector<16x1xf32>
    %114 = arith.index_cast %c1_i32 : i32 to index
    %c0_38 = arith.constant 0 : index
    %c0_39 = arith.constant 0 : index
    %115 = vector.load %arg8[%114, %c0_38, %c0_39] : memref<4x16x64xf32, #tpu.memory_space<vmem>>, vector<1x16x32xf32>
    %116 = vector.shape_cast %115 : vector<1x16x32xf32> to vector<16x32xf32>
    %c0_40 = arith.constant 0 : index
    %c0_41 = arith.constant 0 : index
    %117 = vector.load %arg5[%c0_40, %c0_41] : memref<8x32xf32, #tpu.memory_space<vmem>>, vector<8x32xf32>
    %cst_42 = arith.constant dense<0.000000e+00> : vector<16x32xf32>
    %118 = tpu.matmul %67, %117, %cst_42 {dimension_numbers = #tpu.dot_dimension_numbers<[1], [0], [0], [1], [0, 0, 1, 1], [], []>} : vector<16x8xf32>, vector<8x32xf32>, vector<16x32xf32> -> vector<16x32xf32>
    %119 = arith.addf %116, %118 : vector<16x32xf32>
    %120 = arith.index_cast %107 : i32 to index
    %c0_43 = arith.constant 0 : index
    %c32_44 = arith.constant 32 : index
    %121 = vector.load %arg8[%120, %c0_43, %c32_44] : memref<4x16x64xf32, #tpu.memory_space<vmem>>, vector<1x16x32xf32>
    %122 = vector.shape_cast %121 : vector<1x16x32xf32> to vector<16x32xf32>
    %c0_45 = arith.constant 0 : index
    %c0_46 = arith.constant 0 : index
    %123 = vector.load %arg6[%c0_45, %c0_46] : memref<8x32xf32, #tpu.memory_space<vmem>>, vector<8x32xf32>
    %cst_47 = arith.constant dense<0.000000e+00> : vector<16x32xf32>
    %124 = tpu.matmul %106, %123, %cst_47 {dimension_numbers = #tpu.dot_dimension_numbers<[1], [0], [0], [1], [0, 0, 1, 1], [], []>} : vector<16x8xf32>, vector<8x32xf32>, vector<16x32xf32> -> vector<16x32xf32>
    %125 = arith.addf %122, %124 : vector<16x32xf32>
    %126 = vector.extract_strided_slice %119 {offsets = [0, 0], sizes = [16, 8], strides = [1, 1]} : vector<16x32xf32> to vector<16x8xf32>
    %127 = arith.negf %126 : vector<16x8xf32>
    %128 = math.exp %127 : vector<16x8xf32>
    %cst_48 = arith.constant 1.000000e+00 : f32
    %129 = vector.broadcast %cst_48 : f32 to vector<16x8xf32>
    %130 = arith.addf %129, %128 : vector<16x8xf32>
    %131 = arith.divf %129, %130 : vector<16x8xf32>
    %132 = vector.extract_strided_slice %119 {offsets = [0, 8], sizes = [16, 8], strides = [1, 1]} : vector<16x32xf32> to vector<16x8xf32>
    %133 = arith.negf %132 : vector<16x8xf32>
    %134 = math.exp %133 : vector<16x8xf32>
    %cst_49 = arith.constant 1.000000e+00 : f32
    %135 = vector.broadcast %cst_49 : f32 to vector<16x8xf32>
    %136 = arith.addf %135, %134 : vector<16x8xf32>
    %137 = arith.divf %135, %136 : vector<16x8xf32>
    %138 = vector.extract_strided_slice %119 {offsets = [0, 16], sizes = [16, 8], strides = [1, 1]} : vector<16x32xf32> to vector<16x8xf32>
    %139 = math.tanh %138 : vector<16x8xf32>
    %140 = vector.extract_strided_slice %119 {offsets = [0, 24], sizes = [16, 8], strides = [1, 1]} : vector<16x32xf32> to vector<16x8xf32>
    %141 = arith.negf %140 : vector<16x8xf32>
    %142 = math.exp %141 : vector<16x8xf32>
    %cst_50 = arith.constant 1.000000e+00 : f32
    %143 = vector.broadcast %cst_50 : f32 to vector<16x8xf32>
    %144 = arith.addf %143, %142 : vector<16x8xf32>
    %145 = arith.divf %143, %144 : vector<16x8xf32>
    %146 = arith.mulf %137, %60 : vector<16x8xf32>
    %147 = arith.mulf %131, %139 : vector<16x8xf32>
    %148 = arith.addf %146, %147 : vector<16x8xf32>
    %149 = math.tanh %148 : vector<16x8xf32>
    %150 = arith.mulf %145, %149 : vector<16x8xf32>
    %151 = vector.broadcast %110 : vector<16x1xf32> to vector<16x8xf32>
    %152 = arith.mulf %151, %148 : vector<16x8xf32>
    %cst_51 = arith.constant 1.000000e+00 : f32
    %153 = vector.broadcast %cst_51 : f32 to vector<16x1xf32>
    %154 = arith.subf %153, %110 : vector<16x1xf32>
    %155 = vector.broadcast %154 : vector<16x1xf32> to vector<16x8xf32>
    %156 = arith.mulf %155, %60 : vector<16x8xf32>
    %157 = arith.addf %152, %156 : vector<16x8xf32>
    %158 = vector.broadcast %110 : vector<16x1xf32> to vector<16x8xf32>
    %159 = arith.mulf %158, %150 : vector<16x8xf32>
    %cst_52 = arith.constant 1.000000e+00 : f32
    %160 = vector.broadcast %cst_52 : f32 to vector<16x1xf32>
    %161 = arith.subf %160, %110 : vector<16x1xf32>
    %162 = vector.broadcast %161 : vector<16x1xf32> to vector<16x8xf32>
    %163 = arith.mulf %162, %67 : vector<16x8xf32>
    %164 = arith.addf %159, %163 : vector<16x8xf32>
    %165 = vector.extract_strided_slice %125 {offsets = [0, 0], sizes = [16, 8], strides = [1, 1]} : vector<16x32xf32> to vector<16x8xf32>
    %166 = arith.negf %165 : vector<16x8xf32>
    %167 = math.exp %166 : vector<16x8xf32>
    %cst_53 = arith.constant 1.000000e+00 : f32
    %168 = vector.broadcast %cst_53 : f32 to vector<16x8xf32>
    %169 = arith.addf %168, %167 : vector<16x8xf32>
    %170 = arith.divf %168, %169 : vector<16x8xf32>
    %171 = vector.extract_strided_slice %125 {offsets = [0, 8], sizes = [16, 8], strides = [1, 1]} : vector<16x32xf32> to vector<16x8xf32>
    %172 = arith.negf %171 : vector<16x8xf32>
    %173 = math.exp %172 : vector<16x8xf32>
    %cst_54 = arith.constant 1.000000e+00 : f32
    %174 = vector.broadcast %cst_54 : f32 to vector<16x8xf32>
    %175 = arith.addf %174, %173 : vector<16x8xf32>
    %176 = arith.divf %174, %175 : vector<16x8xf32>
    %177 = vector.extract_strided_slice %125 {offsets = [0, 16], sizes = [16, 8], strides = [1, 1]} : vector<16x32xf32> to vector<16x8xf32>
    %178 = math.tanh %177 : vector<16x8xf32>
    %179 = vector.extract_strided_slice %125 {offsets = [0, 24], sizes = [16, 8], strides = [1, 1]} : vector<16x32xf32> to vector<16x8xf32>
    %180 = arith.negf %179 : vector<16x8xf32>
    %181 = math.exp %180 : vector<16x8xf32>
    %cst_55 = arith.constant 1.000000e+00 : f32
    %182 = vector.broadcast %cst_55 : f32 to vector<16x8xf32>
    %183 = arith.addf %182, %181 : vector<16x8xf32>
    %184 = arith.divf %182, %183 : vector<16x8xf32>
    %185 = arith.mulf %176, %99 : vector<16x8xf32>
    %186 = arith.mulf %170, %178 : vector<16x8xf32>
    %187 = arith.addf %185, %186 : vector<16x8xf32>
    %188 = math.tanh %187 : vector<16x8xf32>
    %189 = arith.mulf %184, %188 : vector<16x8xf32>
    %190 = vector.broadcast %113 : vector<16x1xf32> to vector<16x8xf32>
    %191 = arith.mulf %190, %187 : vector<16x8xf32>
    %cst_56 = arith.constant 1.000000e+00 : f32
    %192 = vector.broadcast %cst_56 : f32 to vector<16x1xf32>
    %193 = arith.subf %192, %113 : vector<16x1xf32>
    %194 = vector.broadcast %193 : vector<16x1xf32> to vector<16x8xf32>
    %195 = arith.mulf %194, %99 : vector<16x8xf32>
    %196 = arith.addf %191, %195 : vector<16x8xf32>
    %197 = vector.broadcast %113 : vector<16x1xf32> to vector<16x8xf32>
    %198 = arith.mulf %197, %189 : vector<16x8xf32>
    %cst_57 = arith.constant 1.000000e+00 : f32
    %199 = vector.broadcast %cst_57 : f32 to vector<16x1xf32>
    %200 = arith.subf %199, %113 : vector<16x1xf32>
    %201 = vector.broadcast %200 : vector<16x1xf32> to vector<16x8xf32>
    %202 = arith.mulf %201, %106 : vector<16x8xf32>
    %203 = arith.addf %198, %202 : vector<16x8xf32>
    %c2_i32 = arith.constant 2 : i32
    %c3_i32_58 = arith.constant 3 : i32
    %204 = arith.subi %c3_i32_58, %c2_i32 : i32
    %205 = arith.index_cast %c2_i32 : i32 to index
    %c0_59 = arith.constant 0 : index
    %c0_60 = arith.constant 0 : index
    %206 = vector.load %arg2[%205, %c0_59, %c0_60] : memref<4x16x1xf32, #tpu.memory_space<vmem>>, vector<1x16x1xf32>
    %207 = vector.shape_cast %206 : vector<1x16x1xf32> to vector<16x1xf32>
    %208 = arith.index_cast %204 : i32 to index
    %c0_61 = arith.constant 0 : index
    %c0_62 = arith.constant 0 : index
    %209 = vector.load %arg2[%208, %c0_61, %c0_62] : memref<4x16x1xf32, #tpu.memory_space<vmem>>, vector<1x16x1xf32>
    %210 = vector.shape_cast %209 : vector<1x16x1xf32> to vector<16x1xf32>
    %211 = arith.index_cast %c2_i32 : i32 to index
    %c0_63 = arith.constant 0 : index
    %c0_64 = arith.constant 0 : index
    %212 = vector.load %arg8[%211, %c0_63, %c0_64] : memref<4x16x64xf32, #tpu.memory_space<vmem>>, vector<1x16x32xf32>
    %213 = vector.shape_cast %212 : vector<1x16x32xf32> to vector<16x32xf32>
    %c0_65 = arith.constant 0 : index
    %c0_66 = arith.constant 0 : index
    %214 = vector.load %arg5[%c0_65, %c0_66] : memref<8x32xf32, #tpu.memory_space<vmem>>, vector<8x32xf32>
    %cst_67 = arith.constant dense<0.000000e+00> : vector<16x32xf32>
    %215 = tpu.matmul %164, %214, %cst_67 {dimension_numbers = #tpu.dot_dimension_numbers<[1], [0], [0], [1], [0, 0, 1, 1], [], []>} : vector<16x8xf32>, vector<8x32xf32>, vector<16x32xf32> -> vector<16x32xf32>
    %216 = arith.addf %213, %215 : vector<16x32xf32>
    %217 = arith.index_cast %204 : i32 to index
    %c0_68 = arith.constant 0 : index
    %c32_69 = arith.constant 32 : index
    %218 = vector.load %arg8[%217, %c0_68, %c32_69] : memref<4x16x64xf32, #tpu.memory_space<vmem>>, vector<1x16x32xf32>
    %219 = vector.shape_cast %218 : vector<1x16x32xf32> to vector<16x32xf32>
    %c0_70 = arith.constant 0 : index
    %c0_71 = arith.constant 0 : index
    %220 = vector.load %arg6[%c0_70, %c0_71] : memref<8x32xf32, #tpu.memory_space<vmem>>, vector<8x32xf32>
    %cst_72 = arith.constant dense<0.000000e+00> : vector<16x32xf32>
    %221 = tpu.matmul %203, %220, %cst_72 {dimension_numbers = #tpu.dot_dimension_numbers<[1], [0], [0], [1], [0, 0, 1, 1], [], []>} : vector<16x8xf32>, vector<8x32xf32>, vector<16x32xf32> -> vector<16x32xf32>
    %222 = arith.addf %219, %221 : vector<16x32xf32>
    %223 = vector.extract_strided_slice %216 {offsets = [0, 0], sizes = [16, 8], strides = [1, 1]} : vector<16x32xf32> to vector<16x8xf32>
    %224 = arith.negf %223 : vector<16x8xf32>
    %225 = math.exp %224 : vector<16x8xf32>
    %cst_73 = arith.constant 1.000000e+00 : f32
    %226 = vector.broadcast %cst_73 : f32 to vector<16x8xf32>
    %227 = arith.addf %226, %225 : vector<16x8xf32>
    %228 = arith.divf %226, %227 : vector<16x8xf32>
    %229 = vector.extract_strided_slice %216 {offsets = [0, 8], sizes = [16, 8], strides = [1, 1]} : vector<16x32xf32> to vector<16x8xf32>
    %230 = arith.negf %229 : vector<16x8xf32>
    %231 = math.exp %230 : vector<16x8xf32>
    %cst_74 = arith.constant 1.000000e+00 : f32
    %232 = vector.broadcast %cst_74 : f32 to vector<16x8xf32>
    %233 = arith.addf %232, %231 : vector<16x8xf32>
    %234 = arith.divf %232, %233 : vector<16x8xf32>
    %235 = vector.extract_strided_slice %216 {offsets = [0, 16], sizes = [16, 8], strides = [1, 1]} : vector<16x32xf32> to vector<16x8xf32>
    %236 = math.tanh %235 : vector<16x8xf32>
    %237 = vector.extract_strided_slice %216 {offsets = [0, 24], sizes = [16, 8], strides = [1, 1]} : vector<16x32xf32> to vector<16x8xf32>
    %238 = arith.negf %237 : vector<16x8xf32>
    %239 = math.exp %238 : vector<16x8xf32>
    %cst_75 = arith.constant 1.000000e+00 : f32
    %240 = vector.broadcast %cst_75 : f32 to vector<16x8xf32>
    %241 = arith.addf %240, %239 : vector<16x8xf32>
    %242 = arith.divf %240, %241 : vector<16x8xf32>
    %243 = arith.mulf %234, %157 : vector<16x8xf32>
    %244 = arith.mulf %228, %236 : vector<16x8xf32>
    %245 = arith.addf %243, %244 : vector<16x8xf32>
    %246 = math.tanh %245 : vector<16x8xf32>
    %247 = arith.mulf %242, %246 : vector<16x8xf32>
    %248 = vector.broadcast %207 : vector<16x1xf32> to vector<16x8xf32>
    %249 = arith.mulf %248, %245 : vector<16x8xf32>
    %cst_76 = arith.constant 1.000000e+00 : f32
    %250 = vector.broadcast %cst_76 : f32 to vector<16x1xf32>
    %251 = arith.subf %250, %207 : vector<16x1xf32>
    %252 = vector.broadcast %251 : vector<16x1xf32> to vector<16x8xf32>
    %253 = arith.mulf %252, %157 : vector<16x8xf32>
    %254 = arith.addf %249, %253 : vector<16x8xf32>
    %255 = vector.broadcast %207 : vector<16x1xf32> to vector<16x8xf32>
    %256 = arith.mulf %255, %247 : vector<16x8xf32>
    %cst_77 = arith.constant 1.000000e+00 : f32
    %257 = vector.broadcast %cst_77 : f32 to vector<16x1xf32>
    %258 = arith.subf %257, %207 : vector<16x1xf32>
    %259 = vector.broadcast %258 : vector<16x1xf32> to vector<16x8xf32>
    %260 = arith.mulf %259, %164 : vector<16x8xf32>
    %261 = arith.addf %256, %260 : vector<16x8xf32>
    %262 = vector.extract_strided_slice %222 {offsets = [0, 0], sizes = [16, 8], strides = [1, 1]} : vector<16x32xf32> to vector<16x8xf32>
    %263 = arith.negf %262 : vector<16x8xf32>
    %264 = math.exp %263 : vector<16x8xf32>
    %cst_78 = arith.constant 1.000000e+00 : f32
    %265 = vector.broadcast %cst_78 : f32 to vector<16x8xf32>
    %266 = arith.addf %265, %264 : vector<16x8xf32>
    %267 = arith.divf %265, %266 : vector<16x8xf32>
    %268 = vector.extract_strided_slice %222 {offsets = [0, 8], sizes = [16, 8], strides = [1, 1]} : vector<16x32xf32> to vector<16x8xf32>
    %269 = arith.negf %268 : vector<16x8xf32>
    %270 = math.exp %269 : vector<16x8xf32>
    %cst_79 = arith.constant 1.000000e+00 : f32
    %271 = vector.broadcast %cst_79 : f32 to vector<16x8xf32>
    %272 = arith.addf %271, %270 : vector<16x8xf32>
    %273 = arith.divf %271, %272 : vector<16x8xf32>
    %274 = vector.extract_strided_slice %222 {offsets = [0, 16], sizes = [16, 8], strides = [1, 1]} : vector<16x32xf32> to vector<16x8xf32>
    %275 = math.tanh %274 : vector<16x8xf32>
    %276 = vector.extract_strided_slice %222 {offsets = [0, 24], sizes = [16, 8], strides = [1, 1]} : vector<16x32xf32> to vector<16x8xf32>
    %277 = arith.negf %276 : vector<16x8xf32>
    %278 = math.exp %277 : vector<16x8xf32>
    %cst_80 = arith.constant 1.000000e+00 : f32
    %279 = vector.broadcast %cst_80 : f32 to vector<16x8xf32>
    %280 = arith.addf %279, %278 : vector<16x8xf32>
    %281 = arith.divf %279, %280 : vector<16x8xf32>
    %282 = arith.mulf %273, %196 : vector<16x8xf32>
    %283 = arith.mulf %267, %275 : vector<16x8xf32>
    %284 = arith.addf %282, %283 : vector<16x8xf32>
    %285 = math.tanh %284 : vector<16x8xf32>
    %286 = arith.mulf %281, %285 : vector<16x8xf32>
    %287 = vector.broadcast %210 : vector<16x1xf32> to vector<16x8xf32>
    %288 = arith.mulf %287, %284 : vector<16x8xf32>
    %cst_81 = arith.constant 1.000000e+00 : f32
    %289 = vector.broadcast %cst_81 : f32 to vector<16x1xf32>
    %290 = arith.subf %289, %210 : vector<16x1xf32>
    %291 = vector.broadcast %290 : vector<16x1xf32> to vector<16x8xf32>
    %292 = arith.mulf %291, %196 : vector<16x8xf32>
    %293 = arith.addf %288, %292 : vector<16x8xf32>
    %294 = vector.broadcast %210 : vector<16x1xf32> to vector<16x8xf32>
    %295 = arith.mulf %294, %286 : vector<16x8xf32>
    %cst_82 = arith.constant 1.000000e+00 : f32
    %296 = vector.broadcast %cst_82 : f32 to vector<16x1xf32>
    %297 = arith.subf %296, %210 : vector<16x1xf32>
    %298 = vector.broadcast %297 : vector<16x1xf32> to vector<16x8xf32>
    %299 = arith.mulf %298, %203 : vector<16x8xf32>
    %300 = arith.addf %295, %299 : vector<16x8xf32>
    %c3_i32_83 = arith.constant 3 : i32
    %c3_i32_84 = arith.constant 3 : i32
    %301 = arith.subi %c3_i32_84, %c3_i32_83 : i32
    %302 = arith.index_cast %c3_i32_83 : i32 to index
    %c0_85 = arith.constant 0 : index
    %c0_86 = arith.constant 0 : index
    %303 = vector.load %arg2[%302, %c0_85, %c0_86] : memref<4x16x1xf32, #tpu.memory_space<vmem>>, vector<1x16x1xf32>
    %304 = vector.shape_cast %303 : vector<1x16x1xf32> to vector<16x1xf32>
    %305 = arith.index_cast %301 : i32 to index
    %c0_87 = arith.constant 0 : index
    %c0_88 = arith.constant 0 : index
    %306 = vector.load %arg2[%305, %c0_87, %c0_88] : memref<4x16x1xf32, #tpu.memory_space<vmem>>, vector<1x16x1xf32>
    %307 = vector.shape_cast %306 : vector<1x16x1xf32> to vector<16x1xf32>
    %308 = arith.index_cast %c3_i32_83 : i32 to index
    %c0_89 = arith.constant 0 : index
    %c0_90 = arith.constant 0 : index
    %309 = vector.load %arg8[%308, %c0_89, %c0_90] : memref<4x16x64xf32, #tpu.memory_space<vmem>>, vector<1x16x32xf32>
    %310 = vector.shape_cast %309 : vector<1x16x32xf32> to vector<16x32xf32>
    %c0_91 = arith.constant 0 : index
    %c0_92 = arith.constant 0 : index
    %311 = vector.load %arg5[%c0_91, %c0_92] : memref<8x32xf32, #tpu.memory_space<vmem>>, vector<8x32xf32>
    %cst_93 = arith.constant dense<0.000000e+00> : vector<16x32xf32>
    %312 = tpu.matmul %261, %311, %cst_93 {dimension_numbers = #tpu.dot_dimension_numbers<[1], [0], [0], [1], [0, 0, 1, 1], [], []>} : vector<16x8xf32>, vector<8x32xf32>, vector<16x32xf32> -> vector<16x32xf32>
    %313 = arith.addf %310, %312 : vector<16x32xf32>
    %314 = arith.index_cast %301 : i32 to index
    %c0_94 = arith.constant 0 : index
    %c32_95 = arith.constant 32 : index
    %315 = vector.load %arg8[%314, %c0_94, %c32_95] : memref<4x16x64xf32, #tpu.memory_space<vmem>>, vector<1x16x32xf32>
    %316 = vector.shape_cast %315 : vector<1x16x32xf32> to vector<16x32xf32>
    %c0_96 = arith.constant 0 : index
    %c0_97 = arith.constant 0 : index
    %317 = vector.load %arg6[%c0_96, %c0_97] : memref<8x32xf32, #tpu.memory_space<vmem>>, vector<8x32xf32>
    %cst_98 = arith.constant dense<0.000000e+00> : vector<16x32xf32>
    %318 = tpu.matmul %300, %317, %cst_98 {dimension_numbers = #tpu.dot_dimension_numbers<[1], [0], [0], [1], [0, 0, 1, 1], [], []>} : vector<16x8xf32>, vector<8x32xf32>, vector<16x32xf32> -> vector<16x32xf32>
    %319 = arith.addf %316, %318 : vector<16x32xf32>
    %320 = vector.extract_strided_slice %313 {offsets = [0, 0], sizes = [16, 8], strides = [1, 1]} : vector<16x32xf32> to vector<16x8xf32>
    %321 = arith.negf %320 : vector<16x8xf32>
    %322 = math.exp %321 : vector<16x8xf32>
    %cst_99 = arith.constant 1.000000e+00 : f32
    %323 = vector.broadcast %cst_99 : f32 to vector<16x8xf32>
    %324 = arith.addf %323, %322 : vector<16x8xf32>
    %325 = arith.divf %323, %324 : vector<16x8xf32>
    %326 = vector.extract_strided_slice %313 {offsets = [0, 8], sizes = [16, 8], strides = [1, 1]} : vector<16x32xf32> to vector<16x8xf32>
    %327 = arith.negf %326 : vector<16x8xf32>
    %328 = math.exp %327 : vector<16x8xf32>
    %cst_100 = arith.constant 1.000000e+00 : f32
    %329 = vector.broadcast %cst_100 : f32 to vector<16x8xf32>
    %330 = arith.addf %329, %328 : vector<16x8xf32>
    %331 = arith.divf %329, %330 : vector<16x8xf32>
    %332 = vector.extract_strided_slice %313 {offsets = [0, 16], sizes = [16, 8], strides = [1, 1]} : vector<16x32xf32> to vector<16x8xf32>
    %333 = math.tanh %332 : vector<16x8xf32>
    %334 = vector.extract_strided_slice %313 {offsets = [0, 24], sizes = [16, 8], strides = [1, 1]} : vector<16x32xf32> to vector<16x8xf32>
    %335 = arith.negf %334 : vector<16x8xf32>
    %336 = math.exp %335 : vector<16x8xf32>
    %cst_101 = arith.constant 1.000000e+00 : f32
    %337 = vector.broadcast %cst_101 : f32 to vector<16x8xf32>
    %338 = arith.addf %337, %336 : vector<16x8xf32>
    %339 = arith.divf %337, %338 : vector<16x8xf32>
    %340 = arith.mulf %331, %254 : vector<16x8xf32>
    %341 = arith.mulf %325, %333 : vector<16x8xf32>
    %342 = arith.addf %340, %341 : vector<16x8xf32>
    %343 = math.tanh %342 : vector<16x8xf32>
    %344 = arith.mulf %339, %343 : vector<16x8xf32>
    %345 = vector.broadcast %304 : vector<16x1xf32> to vector<16x8xf32>
    %346 = arith.mulf %345, %342 : vector<16x8xf32>
    %cst_102 = arith.constant 1.000000e+00 : f32
    %347 = vector.broadcast %cst_102 : f32 to vector<16x1xf32>
    %348 = arith.subf %347, %304 : vector<16x1xf32>
    %349 = vector.broadcast %348 : vector<16x1xf32> to vector<16x8xf32>
    %350 = arith.mulf %349, %254 : vector<16x8xf32>
    %351 = arith.addf %346, %350 : vector<16x8xf32>
    %352 = vector.broadcast %304 : vector<16x1xf32> to vector<16x8xf32>
    %353 = arith.mulf %352, %344 : vector<16x8xf32>
    %cst_103 = arith.constant 1.000000e+00 : f32
    %354 = vector.broadcast %cst_103 : f32 to vector<16x1xf32>
    %355 = arith.subf %354, %304 : vector<16x1xf32>
    %356 = vector.broadcast %355 : vector<16x1xf32> to vector<16x8xf32>
    %357 = arith.mulf %356, %261 : vector<16x8xf32>
    %358 = arith.addf %353, %357 : vector<16x8xf32>
    %359 = vector.extract_strided_slice %319 {offsets = [0, 0], sizes = [16, 8], strides = [1, 1]} : vector<16x32xf32> to vector<16x8xf32>
    %360 = arith.negf %359 : vector<16x8xf32>
    %361 = math.exp %360 : vector<16x8xf32>
    %cst_104 = arith.constant 1.000000e+00 : f32
    %362 = vector.broadcast %cst_104 : f32 to vector<16x8xf32>
    %363 = arith.addf %362, %361 : vector<16x8xf32>
    %364 = arith.divf %362, %363 : vector<16x8xf32>
    %365 = vector.extract_strided_slice %319 {offsets = [0, 8], sizes = [16, 8], strides = [1, 1]} : vector<16x32xf32> to vector<16x8xf32>
    %366 = arith.negf %365 : vector<16x8xf32>
    %367 = math.exp %366 : vector<16x8xf32>
    %cst_105 = arith.constant 1.000000e+00 : f32
    %368 = vector.broadcast %cst_105 : f32 to vector<16x8xf32>
    %369 = arith.addf %368, %367 : vector<16x8xf32>
    %370 = arith.divf %368, %369 : vector<16x8xf32>
    %371 = vector.extract_strided_slice %319 {offsets = [0, 16], sizes = [16, 8], strides = [1, 1]} : vector<16x32xf32> to vector<16x8xf32>
    %372 = math.tanh %371 : vector<16x8xf32>
    %373 = vector.extract_strided_slice %319 {offsets = [0, 24], sizes = [16, 8], strides = [1, 1]} : vector<16x32xf32> to vector<16x8xf32>
    %374 = arith.negf %373 : vector<16x8xf32>
    %375 = math.exp %374 : vector<16x8xf32>
    %cst_106 = arith.constant 1.000000e+00 : f32
    %376 = vector.broadcast %cst_106 : f32 to vector<16x8xf32>
    %377 = arith.addf %376, %375 : vector<16x8xf32>
    %378 = arith.divf %376, %377 : vector<16x8xf32>
    %379 = arith.mulf %370, %293 : vector<16x8xf32>
    %380 = arith.mulf %364, %372 : vector<16x8xf32>
    %381 = arith.addf %379, %380 : vector<16x8xf32>
    %382 = math.tanh %381 : vector<16x8xf32>
    %383 = arith.mulf %378, %382 : vector<16x8xf32>
    %384 = vector.broadcast %307 : vector<16x1xf32> to vector<16x8xf32>
    %385 = arith.mulf %384, %381 : vector<16x8xf32>
    %cst_107 = arith.constant 1.000000e+00 : f32
    %386 = vector.broadcast %cst_107 : f32 to vector<16x1xf32>
    %387 = arith.subf %386, %307 : vector<16x1xf32>
    %388 = vector.broadcast %387 : vector<16x1xf32> to vector<16x8xf32>
    %389 = arith.mulf %388, %293 : vector<16x8xf32>
    %390 = arith.addf %385, %389 : vector<16x8xf32>
    %391 = vector.broadcast %307 : vector<16x1xf32> to vector<16x8xf32>
    %392 = arith.mulf %391, %383 : vector<16x8xf32>
    %cst_108 = arith.constant 1.000000e+00 : f32
    %393 = vector.broadcast %cst_108 : f32 to vector<16x1xf32>
    %394 = arith.subf %393, %307 : vector<16x1xf32>
    %395 = vector.broadcast %394 : vector<16x1xf32> to vector<16x8xf32>
    %396 = arith.mulf %395, %300 : vector<16x8xf32>
    %397 = arith.addf %392, %396 : vector<16x8xf32>
    %c4_i32 = arith.constant 4 : i32
    %398 = tpu.concatenate %358, %397 in 1 : vector<16x8xf32>, vector<16x8xf32> -> vector<16x16xf32>
    %c0_109 = arith.constant 0 : index
    %c0_110 = arith.constant 0 : index
    %399 = vector.load %arg7[%c0_109, %c0_110] : memref<16x16xf32, #tpu.memory_space<vmem>>, vector<16x16xf32>
    tpu.vector_store %arg7[%c0_109, %c0_110], %398 {strides = array<i32>} : memref<16x16xf32, #tpu.memory_space<vmem>>, vector<16x16xf32>,
    return
  }
  func.func @transform_0(%arg0: i32) -> (i32, i32, i32) {
    %c0_i32 = arith.constant 0 : i32
    %c0_i32_0 = arith.constant 0 : i32
    %c0_i32_1 = arith.constant 0 : i32
    %c0_i32_2 = arith.constant 0 : i32
    return %c0_i32, %c0_i32_0, %c0_i32_1 : i32, i32, i32
  }
  func.func @transform_1(%arg0: i32) -> (i32, i32, i32) {
    %c0_i32 = arith.constant 0 : i32
    %c0_i32_0 = arith.constant 0 : i32
    %c0_i32_1 = arith.constant 0 : i32
    %c0_i32_2 = arith.constant 0 : i32
    return %c0_i32, %c0_i32_0, %c0_i32_1 : i32, i32, i32
  }
  func.func @transform_2(%arg0: i32) -> (i32, i32) {
    %c0_i32 = arith.constant 0 : i32
    %c0_i32_0 = arith.constant 0 : i32
    %c0_i32_1 = arith.constant 0 : i32
    return %c0_i32, %c0_i32_0 : i32, i32
  }
  func.func @transform_3(%arg0: i32) -> (i32, i32) {
    %c0_i32 = arith.constant 0 : i32
    %c0_i32_0 = arith.constant 0 : i32
    %c0_i32_1 = arith.constant 0 : i32
    return %c0_i32, %c0_i32_0 : i32, i32
  }
  func.func @transform_4(%arg0: i32) -> (i32, i32) {
    %c0_i32 = arith.constant 0 : i32
    %c0_i32_0 = arith.constant 0 : i32
    %c0_i32_1 = arith.constant 0 : i32
    return %c0_i32, %c0_i32_0 : i32, i32
  }
  func.func @transform_5(%arg0: i32) -> (i32, i32) {
    %c0_i32 = arith.constant 0 : i32
    %c0_i32_0 = arith.constant 0 : i32
    %c0_i32_1 = arith.constant 0 : i32
    return %c0_i32, %c0_i32_0 : i32, i32
  }
  func.func @transform_6(%arg0: i32) -> (i32, i32) {
    %c0_i32 = arith.constant 0 : i32
    %c0_i32_0 = arith.constant 0 : i32
    %c0_i32_1 = arith.constant 0 : i32
    return %c0_i32, %c0_i32_0 : i32, i32
  }
}

module attributes {stable_mosaic.version = 11 : i64} {
  func.func @_bilstm_kernel(%arg0: i32, %arg1: memref<8x8x48xf32, #tpu.memory_space<vmem>>, %arg2: memref<8x8x1xf32, #tpu.memory_space<vmem>>, %arg3: memref<48x256xf32, #tpu.memory_space<vmem>>, %arg4: memref<1x256xf32, #tpu.memory_space<vmem>>, %arg5: memref<32x128xf32, #tpu.memory_space<vmem>>, %arg6: memref<32x128xf32, #tpu.memory_space<vmem>>, %arg7: memref<8x8x64xf32, #tpu.memory_space<vmem>>, %arg8: memref<8x8x256xf32, #tpu.memory_space<vmem>>) attributes {dimension_semantics = [#tpu.dimension_semantics<arbitrary>], iteration_bounds = array<i64: 1>, scalar_prefetch = 0 : i64, scratch_operands = 1 : i64, tpu.core_type = #tpu.core_type<tc>, window_params = [{pipeline_mode = #tpu.pipeline_mode<synchronous>, transform_indices = @transform_0, window_bounds = array<i64: 8, 8, 48>}, {pipeline_mode = #tpu.pipeline_mode<synchronous>, transform_indices = @transform_1, window_bounds = array<i64: 8, 8, 1>}, {pipeline_mode = #tpu.pipeline_mode<synchronous>, transform_indices = @transform_2, window_bounds = array<i64: 48, 256>}, {pipeline_mode = #tpu.pipeline_mode<synchronous>, transform_indices = @transform_3, window_bounds = array<i64: 1, 256>}, {pipeline_mode = #tpu.pipeline_mode<synchronous>, transform_indices = @transform_4, window_bounds = array<i64: 32, 128>}, {pipeline_mode = #tpu.pipeline_mode<synchronous>, transform_indices = @transform_5, window_bounds = array<i64: 32, 128>}, {pipeline_mode = #tpu.pipeline_mode<synchronous>, transform_indices = @transform_6, window_bounds = array<i64: 8, 8, 64>}]} {
    %c0 = arith.constant 0 : index
    %c0_0 = arith.constant 0 : index
    %c0_1 = arith.constant 0 : index
    %0 = vector.load %arg1[%c0, %c0_0, %c0_1] : memref<8x8x48xf32, #tpu.memory_space<vmem>>, vector<8x8x48xf32>
    %1 = vector.shape_cast %0 : vector<8x8x48xf32> to vector<64x48xf32>
    %c0_2 = arith.constant 0 : index
    %c0_3 = arith.constant 0 : index
    %2 = vector.load %arg3[%c0_2, %c0_3] : memref<48x256xf32, #tpu.memory_space<vmem>>, vector<48x256xf32>
    %cst = arith.constant dense<0.000000e+00> : vector<64x256xf32>
    %3 = tpu.matmul %1, %2, %cst {dimension_numbers = #tpu.dot_dimension_numbers<[1], [0], [0], [1], [0, 0, 1, 1], [], []>} : vector<64x48xf32>, vector<48x256xf32>, vector<64x256xf32> -> vector<64x256xf32>
    %c0_4 = arith.constant 0 : index
    %c0_5 = arith.constant 0 : index
    %4 = vector.load %arg4[%c0_4, %c0_5] : memref<1x256xf32, #tpu.memory_space<vmem>>, vector<1x256xf32>
    %5 = vector.broadcast %4 : vector<1x256xf32> to vector<64x256xf32>
    %6 = arith.addf %3, %5 : vector<64x256xf32>
    %7 = vector.shape_cast %6 : vector<64x256xf32> to vector<8x8x256xf32>
    %c0_6 = arith.constant 0 : index
    %c0_7 = arith.constant 0 : index
    %c0_8 = arith.constant 0 : index
    %8 = vector.load %arg8[%c0_6, %c0_7, %c0_8] : memref<8x8x256xf32, #tpu.memory_space<vmem>>, vector<8x8x256xf32>
    tpu.vector_store %arg8[%c0_6, %c0_7, %c0_8], %7 {strides = array<i32>} : memref<8x8x256xf32, #tpu.memory_space<vmem>>, vector<8x8x256xf32>,
    %cst_9 = arith.constant 0.000000e+00 : f32
    %9 = vector.broadcast %cst_9 : f32 to vector<8x32xf32>
    %c0_i32 = arith.constant 0 : i32
    %c7_i32 = arith.constant 7 : i32
    %10 = arith.subi %c7_i32, %c0_i32 : i32
    %11 = arith.index_cast %c0_i32 : i32 to index
    %c0_10 = arith.constant 0 : index
    %c0_11 = arith.constant 0 : index
    %12 = vector.load %arg2[%11, %c0_10, %c0_11] : memref<8x8x1xf32, #tpu.memory_space<vmem>>, vector<1x8x1xf32>
    %13 = vector.shape_cast %12 : vector<1x8x1xf32> to vector<8x1xf32>
    %14 = arith.index_cast %10 : i32 to index
    %c0_12 = arith.constant 0 : index
    %c0_13 = arith.constant 0 : index
    %15 = vector.load %arg2[%14, %c0_12, %c0_13] : memref<8x8x1xf32, #tpu.memory_space<vmem>>, vector<1x8x1xf32>
    %16 = vector.shape_cast %15 : vector<1x8x1xf32> to vector<8x1xf32>
    %17 = arith.index_cast %c0_i32 : i32 to index
    %c0_14 = arith.constant 0 : index
    %c0_15 = arith.constant 0 : index
    %18 = vector.load %arg8[%17, %c0_14, %c0_15] : memref<8x8x256xf32, #tpu.memory_space<vmem>>, vector<1x8x128xf32>
    %19 = vector.shape_cast %18 : vector<1x8x128xf32> to vector<8x128xf32>
    %c0_16 = arith.constant 0 : index
    %c0_17 = arith.constant 0 : index
    %20 = vector.load %arg5[%c0_16, %c0_17] : memref<32x128xf32, #tpu.memory_space<vmem>>, vector<32x128xf32>
    %cst_18 = arith.constant dense<0.000000e+00> : vector<8x128xf32>
    %21 = tpu.matmul %9, %20, %cst_18 {dimension_numbers = #tpu.dot_dimension_numbers<[1], [0], [0], [1], [0, 0, 1, 1], [], []>} : vector<8x32xf32>, vector<32x128xf32>, vector<8x128xf32> -> vector<8x128xf32>
    %22 = arith.addf %19, %21 : vector<8x128xf32>
    %23 = arith.index_cast %10 : i32 to index
    %c0_19 = arith.constant 0 : index
    %c128 = arith.constant 128 : index
    %24 = vector.load %arg8[%23, %c0_19, %c128] : memref<8x8x256xf32, #tpu.memory_space<vmem>>, vector<1x8x128xf32>
    %25 = vector.shape_cast %24 : vector<1x8x128xf32> to vector<8x128xf32>
    %c0_20 = arith.constant 0 : index
    %c0_21 = arith.constant 0 : index
    %26 = vector.load %arg6[%c0_20, %c0_21] : memref<32x128xf32, #tpu.memory_space<vmem>>, vector<32x128xf32>
    %cst_22 = arith.constant dense<0.000000e+00> : vector<8x128xf32>
    %27 = tpu.matmul %9, %26, %cst_22 {dimension_numbers = #tpu.dot_dimension_numbers<[1], [0], [0], [1], [0, 0, 1, 1], [], []>} : vector<8x32xf32>, vector<32x128xf32>, vector<8x128xf32> -> vector<8x128xf32>
    %28 = arith.addf %25, %27 : vector<8x128xf32>
    %29 = vector.extract_strided_slice %22 {offsets = [0, 0], sizes = [8, 32], strides = [1, 1]} : vector<8x128xf32> to vector<8x32xf32>
    %30 = arith.negf %29 : vector<8x32xf32>
    %31 = math.exp %30 : vector<8x32xf32>
    %cst_23 = arith.constant 1.000000e+00 : f32
    %32 = vector.broadcast %cst_23 : f32 to vector<8x32xf32>
    %33 = arith.addf %32, %31 : vector<8x32xf32>
    %34 = arith.divf %32, %33 : vector<8x32xf32>
    %35 = vector.extract_strided_slice %22 {offsets = [0, 32], sizes = [8, 32], strides = [1, 1]} : vector<8x128xf32> to vector<8x32xf32>
    %36 = arith.negf %35 : vector<8x32xf32>
    %37 = math.exp %36 : vector<8x32xf32>
    %cst_24 = arith.constant 1.000000e+00 : f32
    %38 = vector.broadcast %cst_24 : f32 to vector<8x32xf32>
    %39 = arith.addf %38, %37 : vector<8x32xf32>
    %40 = arith.divf %38, %39 : vector<8x32xf32>
    %41 = vector.extract_strided_slice %22 {offsets = [0, 64], sizes = [8, 32], strides = [1, 1]} : vector<8x128xf32> to vector<8x32xf32>
    %42 = math.tanh %41 : vector<8x32xf32>
    %43 = vector.extract_strided_slice %22 {offsets = [0, 96], sizes = [8, 32], strides = [1, 1]} : vector<8x128xf32> to vector<8x32xf32>
    %44 = arith.negf %43 : vector<8x32xf32>
    %45 = math.exp %44 : vector<8x32xf32>
    %cst_25 = arith.constant 1.000000e+00 : f32
    %46 = vector.broadcast %cst_25 : f32 to vector<8x32xf32>
    %47 = arith.addf %46, %45 : vector<8x32xf32>
    %48 = arith.divf %46, %47 : vector<8x32xf32>
    %49 = arith.mulf %40, %9 : vector<8x32xf32>
    %50 = arith.mulf %34, %42 : vector<8x32xf32>
    %51 = arith.addf %49, %50 : vector<8x32xf32>
    %52 = math.tanh %51 : vector<8x32xf32>
    %53 = arith.mulf %48, %52 : vector<8x32xf32>
    %54 = vector.broadcast %13 : vector<8x1xf32> to vector<8x32xf32>
    %55 = arith.mulf %54, %51 : vector<8x32xf32>
    %cst_26 = arith.constant 1.000000e+00 : f32
    %56 = vector.broadcast %cst_26 : f32 to vector<8x1xf32>
    %57 = arith.subf %56, %13 : vector<8x1xf32>
    %58 = vector.broadcast %57 : vector<8x1xf32> to vector<8x32xf32>
    %59 = arith.mulf %58, %9 : vector<8x32xf32>
    %60 = arith.addf %55, %59 : vector<8x32xf32>
    %61 = vector.broadcast %13 : vector<8x1xf32> to vector<8x32xf32>
    %62 = arith.mulf %61, %53 : vector<8x32xf32>
    %cst_27 = arith.constant 1.000000e+00 : f32
    %63 = vector.broadcast %cst_27 : f32 to vector<8x1xf32>
    %64 = arith.subf %63, %13 : vector<8x1xf32>
    %65 = vector.broadcast %64 : vector<8x1xf32> to vector<8x32xf32>
    %66 = arith.mulf %65, %9 : vector<8x32xf32>
    %67 = arith.addf %62, %66 : vector<8x32xf32>
    %68 = vector.broadcast %13 : vector<8x1xf32> to vector<8x32xf32>
    %69 = arith.mulf %68, %53 : vector<8x32xf32>
    %70 = vector.extract_strided_slice %28 {offsets = [0, 0], sizes = [8, 32], strides = [1, 1]} : vector<8x128xf32> to vector<8x32xf32>
    %71 = arith.negf %70 : vector<8x32xf32>
    %72 = math.exp %71 : vector<8x32xf32>
    %cst_28 = arith.constant 1.000000e+00 : f32
    %73 = vector.broadcast %cst_28 : f32 to vector<8x32xf32>
    %74 = arith.addf %73, %72 : vector<8x32xf32>
    %75 = arith.divf %73, %74 : vector<8x32xf32>
    %76 = vector.extract_strided_slice %28 {offsets = [0, 32], sizes = [8, 32], strides = [1, 1]} : vector<8x128xf32> to vector<8x32xf32>
    %77 = arith.negf %76 : vector<8x32xf32>
    %78 = math.exp %77 : vector<8x32xf32>
    %cst_29 = arith.constant 1.000000e+00 : f32
    %79 = vector.broadcast %cst_29 : f32 to vector<8x32xf32>
    %80 = arith.addf %79, %78 : vector<8x32xf32>
    %81 = arith.divf %79, %80 : vector<8x32xf32>
    %82 = vector.extract_strided_slice %28 {offsets = [0, 64], sizes = [8, 32], strides = [1, 1]} : vector<8x128xf32> to vector<8x32xf32>
    %83 = math.tanh %82 : vector<8x32xf32>
    %84 = vector.extract_strided_slice %28 {offsets = [0, 96], sizes = [8, 32], strides = [1, 1]} : vector<8x128xf32> to vector<8x32xf32>
    %85 = arith.negf %84 : vector<8x32xf32>
    %86 = math.exp %85 : vector<8x32xf32>
    %cst_30 = arith.constant 1.000000e+00 : f32
    %87 = vector.broadcast %cst_30 : f32 to vector<8x32xf32>
    %88 = arith.addf %87, %86 : vector<8x32xf32>
    %89 = arith.divf %87, %88 : vector<8x32xf32>
    %90 = arith.mulf %81, %9 : vector<8x32xf32>
    %91 = arith.mulf %75, %83 : vector<8x32xf32>
    %92 = arith.addf %90, %91 : vector<8x32xf32>
    %93 = math.tanh %92 : vector<8x32xf32>
    %94 = arith.mulf %89, %93 : vector<8x32xf32>
    %95 = vector.broadcast %16 : vector<8x1xf32> to vector<8x32xf32>
    %96 = arith.mulf %95, %92 : vector<8x32xf32>
    %cst_31 = arith.constant 1.000000e+00 : f32
    %97 = vector.broadcast %cst_31 : f32 to vector<8x1xf32>
    %98 = arith.subf %97, %16 : vector<8x1xf32>
    %99 = vector.broadcast %98 : vector<8x1xf32> to vector<8x32xf32>
    %100 = arith.mulf %99, %9 : vector<8x32xf32>
    %101 = arith.addf %96, %100 : vector<8x32xf32>
    %102 = vector.broadcast %16 : vector<8x1xf32> to vector<8x32xf32>
    %103 = arith.mulf %102, %94 : vector<8x32xf32>
    %cst_32 = arith.constant 1.000000e+00 : f32
    %104 = vector.broadcast %cst_32 : f32 to vector<8x1xf32>
    %105 = arith.subf %104, %16 : vector<8x1xf32>
    %106 = vector.broadcast %105 : vector<8x1xf32> to vector<8x32xf32>
    %107 = arith.mulf %106, %9 : vector<8x32xf32>
    %108 = arith.addf %103, %107 : vector<8x32xf32>
    %109 = vector.broadcast %16 : vector<8x1xf32> to vector<8x32xf32>
    %110 = arith.mulf %109, %94 : vector<8x32xf32>
    %111 = arith.index_cast %c0_i32 : i32 to index
    %c0_33 = arith.constant 0 : index
    %c0_34 = arith.constant 0 : index
    %112 = vector.load %arg7[%111, %c0_33, %c0_34] : memref<8x8x64xf32, #tpu.memory_space<vmem>>, vector<1x8x32xf32>
    %113 = vector.shape_cast %112 : vector<1x8x32xf32> to vector<8x32xf32>
    %114 = vector.shape_cast %69 : vector<8x32xf32> to vector<1x8x32xf32>
    tpu.vector_store %arg7[%111, %c0_33, %c0_34], %114 {strides = array<i32>} : memref<8x8x64xf32, #tpu.memory_space<vmem>>, vector<1x8x32xf32>,
    %115 = arith.index_cast %10 : i32 to index
    %c0_35 = arith.constant 0 : index
    %c32 = arith.constant 32 : index
    %116 = vector.load %arg7[%115, %c0_35, %c32] : memref<8x8x64xf32, #tpu.memory_space<vmem>>, vector<1x8x32xf32>
    %117 = vector.shape_cast %116 : vector<1x8x32xf32> to vector<8x32xf32>
    %118 = vector.shape_cast %110 : vector<8x32xf32> to vector<1x8x32xf32>
    tpu.vector_store %arg7[%115, %c0_35, %c32], %118 {strides = array<i32>} : memref<8x8x64xf32, #tpu.memory_space<vmem>>, vector<1x8x32xf32>,
    %c1_i32 = arith.constant 1 : i32
    %c7_i32_36 = arith.constant 7 : i32
    %119 = arith.subi %c7_i32_36, %c1_i32 : i32
    %120 = arith.index_cast %c1_i32 : i32 to index
    %c0_37 = arith.constant 0 : index
    %c0_38 = arith.constant 0 : index
    %121 = vector.load %arg2[%120, %c0_37, %c0_38] : memref<8x8x1xf32, #tpu.memory_space<vmem>>, vector<1x8x1xf32>
    %122 = vector.shape_cast %121 : vector<1x8x1xf32> to vector<8x1xf32>
    %123 = arith.index_cast %119 : i32 to index
    %c0_39 = arith.constant 0 : index
    %c0_40 = arith.constant 0 : index
    %124 = vector.load %arg2[%123, %c0_39, %c0_40] : memref<8x8x1xf32, #tpu.memory_space<vmem>>, vector<1x8x1xf32>
    %125 = vector.shape_cast %124 : vector<1x8x1xf32> to vector<8x1xf32>
    %126 = arith.index_cast %c1_i32 : i32 to index
    %c0_41 = arith.constant 0 : index
    %c0_42 = arith.constant 0 : index
    %127 = vector.load %arg8[%126, %c0_41, %c0_42] : memref<8x8x256xf32, #tpu.memory_space<vmem>>, vector<1x8x128xf32>
    %128 = vector.shape_cast %127 : vector<1x8x128xf32> to vector<8x128xf32>
    %c0_43 = arith.constant 0 : index
    %c0_44 = arith.constant 0 : index
    %129 = vector.load %arg5[%c0_43, %c0_44] : memref<32x128xf32, #tpu.memory_space<vmem>>, vector<32x128xf32>
    %cst_45 = arith.constant dense<0.000000e+00> : vector<8x128xf32>
    %130 = tpu.matmul %67, %129, %cst_45 {dimension_numbers = #tpu.dot_dimension_numbers<[1], [0], [0], [1], [0, 0, 1, 1], [], []>} : vector<8x32xf32>, vector<32x128xf32>, vector<8x128xf32> -> vector<8x128xf32>
    %131 = arith.addf %128, %130 : vector<8x128xf32>
    %132 = arith.index_cast %119 : i32 to index
    %c0_46 = arith.constant 0 : index
    %c128_47 = arith.constant 128 : index
    %133 = vector.load %arg8[%132, %c0_46, %c128_47] : memref<8x8x256xf32, #tpu.memory_space<vmem>>, vector<1x8x128xf32>
    %134 = vector.shape_cast %133 : vector<1x8x128xf32> to vector<8x128xf32>
    %c0_48 = arith.constant 0 : index
    %c0_49 = arith.constant 0 : index
    %135 = vector.load %arg6[%c0_48, %c0_49] : memref<32x128xf32, #tpu.memory_space<vmem>>, vector<32x128xf32>
    %cst_50 = arith.constant dense<0.000000e+00> : vector<8x128xf32>
    %136 = tpu.matmul %108, %135, %cst_50 {dimension_numbers = #tpu.dot_dimension_numbers<[1], [0], [0], [1], [0, 0, 1, 1], [], []>} : vector<8x32xf32>, vector<32x128xf32>, vector<8x128xf32> -> vector<8x128xf32>
    %137 = arith.addf %134, %136 : vector<8x128xf32>
    %138 = vector.extract_strided_slice %131 {offsets = [0, 0], sizes = [8, 32], strides = [1, 1]} : vector<8x128xf32> to vector<8x32xf32>
    %139 = arith.negf %138 : vector<8x32xf32>
    %140 = math.exp %139 : vector<8x32xf32>
    %cst_51 = arith.constant 1.000000e+00 : f32
    %141 = vector.broadcast %cst_51 : f32 to vector<8x32xf32>
    %142 = arith.addf %141, %140 : vector<8x32xf32>
    %143 = arith.divf %141, %142 : vector<8x32xf32>
    %144 = vector.extract_strided_slice %131 {offsets = [0, 32], sizes = [8, 32], strides = [1, 1]} : vector<8x128xf32> to vector<8x32xf32>
    %145 = arith.negf %144 : vector<8x32xf32>
    %146 = math.exp %145 : vector<8x32xf32>
    %cst_52 = arith.constant 1.000000e+00 : f32
    %147 = vector.broadcast %cst_52 : f32 to vector<8x32xf32>
    %148 = arith.addf %147, %146 : vector<8x32xf32>
    %149 = arith.divf %147, %148 : vector<8x32xf32>
    %150 = vector.extract_strided_slice %131 {offsets = [0, 64], sizes = [8, 32], strides = [1, 1]} : vector<8x128xf32> to vector<8x32xf32>
    %151 = math.tanh %150 : vector<8x32xf32>
    %152 = vector.extract_strided_slice %131 {offsets = [0, 96], sizes = [8, 32], strides = [1, 1]} : vector<8x128xf32> to vector<8x32xf32>
    %153 = arith.negf %152 : vector<8x32xf32>
    %154 = math.exp %153 : vector<8x32xf32>
    %cst_53 = arith.constant 1.000000e+00 : f32
    %155 = vector.broadcast %cst_53 : f32 to vector<8x32xf32>
    %156 = arith.addf %155, %154 : vector<8x32xf32>
    %157 = arith.divf %155, %156 : vector<8x32xf32>
    %158 = arith.mulf %149, %60 : vector<8x32xf32>
    %159 = arith.mulf %143, %151 : vector<8x32xf32>
    %160 = arith.addf %158, %159 : vector<8x32xf32>
    %161 = math.tanh %160 : vector<8x32xf32>
    %162 = arith.mulf %157, %161 : vector<8x32xf32>
    %163 = vector.broadcast %122 : vector<8x1xf32> to vector<8x32xf32>
    %164 = arith.mulf %163, %160 : vector<8x32xf32>
    %cst_54 = arith.constant 1.000000e+00 : f32
    %165 = vector.broadcast %cst_54 : f32 to vector<8x1xf32>
    %166 = arith.subf %165, %122 : vector<8x1xf32>
    %167 = vector.broadcast %166 : vector<8x1xf32> to vector<8x32xf32>
    %168 = arith.mulf %167, %60 : vector<8x32xf32>
    %169 = arith.addf %164, %168 : vector<8x32xf32>
    %170 = vector.broadcast %122 : vector<8x1xf32> to vector<8x32xf32>
    %171 = arith.mulf %170, %162 : vector<8x32xf32>
    %cst_55 = arith.constant 1.000000e+00 : f32
    %172 = vector.broadcast %cst_55 : f32 to vector<8x1xf32>
    %173 = arith.subf %172, %122 : vector<8x1xf32>
    %174 = vector.broadcast %173 : vector<8x1xf32> to vector<8x32xf32>
    %175 = arith.mulf %174, %67 : vector<8x32xf32>
    %176 = arith.addf %171, %175 : vector<8x32xf32>
    %177 = vector.broadcast %122 : vector<8x1xf32> to vector<8x32xf32>
    %178 = arith.mulf %177, %162 : vector<8x32xf32>
    %179 = vector.extract_strided_slice %137 {offsets = [0, 0], sizes = [8, 32], strides = [1, 1]} : vector<8x128xf32> to vector<8x32xf32>
    %180 = arith.negf %179 : vector<8x32xf32>
    %181 = math.exp %180 : vector<8x32xf32>
    %cst_56 = arith.constant 1.000000e+00 : f32
    %182 = vector.broadcast %cst_56 : f32 to vector<8x32xf32>
    %183 = arith.addf %182, %181 : vector<8x32xf32>
    %184 = arith.divf %182, %183 : vector<8x32xf32>
    %185 = vector.extract_strided_slice %137 {offsets = [0, 32], sizes = [8, 32], strides = [1, 1]} : vector<8x128xf32> to vector<8x32xf32>
    %186 = arith.negf %185 : vector<8x32xf32>
    %187 = math.exp %186 : vector<8x32xf32>
    %cst_57 = arith.constant 1.000000e+00 : f32
    %188 = vector.broadcast %cst_57 : f32 to vector<8x32xf32>
    %189 = arith.addf %188, %187 : vector<8x32xf32>
    %190 = arith.divf %188, %189 : vector<8x32xf32>
    %191 = vector.extract_strided_slice %137 {offsets = [0, 64], sizes = [8, 32], strides = [1, 1]} : vector<8x128xf32> to vector<8x32xf32>
    %192 = math.tanh %191 : vector<8x32xf32>
    %193 = vector.extract_strided_slice %137 {offsets = [0, 96], sizes = [8, 32], strides = [1, 1]} : vector<8x128xf32> to vector<8x32xf32>
    %194 = arith.negf %193 : vector<8x32xf32>
    %195 = math.exp %194 : vector<8x32xf32>
    %cst_58 = arith.constant 1.000000e+00 : f32
    %196 = vector.broadcast %cst_58 : f32 to vector<8x32xf32>
    %197 = arith.addf %196, %195 : vector<8x32xf32>
    %198 = arith.divf %196, %197 : vector<8x32xf32>
    %199 = arith.mulf %190, %101 : vector<8x32xf32>
    %200 = arith.mulf %184, %192 : vector<8x32xf32>
    %201 = arith.addf %199, %200 : vector<8x32xf32>
    %202 = math.tanh %201 : vector<8x32xf32>
    %203 = arith.mulf %198, %202 : vector<8x32xf32>
    %204 = vector.broadcast %125 : vector<8x1xf32> to vector<8x32xf32>
    %205 = arith.mulf %204, %201 : vector<8x32xf32>
    %cst_59 = arith.constant 1.000000e+00 : f32
    %206 = vector.broadcast %cst_59 : f32 to vector<8x1xf32>
    %207 = arith.subf %206, %125 : vector<8x1xf32>
    %208 = vector.broadcast %207 : vector<8x1xf32> to vector<8x32xf32>
    %209 = arith.mulf %208, %101 : vector<8x32xf32>
    %210 = arith.addf %205, %209 : vector<8x32xf32>
    %211 = vector.broadcast %125 : vector<8x1xf32> to vector<8x32xf32>
    %212 = arith.mulf %211, %203 : vector<8x32xf32>
    %cst_60 = arith.constant 1.000000e+00 : f32
    %213 = vector.broadcast %cst_60 : f32 to vector<8x1xf32>
    %214 = arith.subf %213, %125 : vector<8x1xf32>
    %215 = vector.broadcast %214 : vector<8x1xf32> to vector<8x32xf32>
    %216 = arith.mulf %215, %108 : vector<8x32xf32>
    %217 = arith.addf %212, %216 : vector<8x32xf32>
    %218 = vector.broadcast %125 : vector<8x1xf32> to vector<8x32xf32>
    %219 = arith.mulf %218, %203 : vector<8x32xf32>
    %220 = arith.index_cast %c1_i32 : i32 to index
    %c0_61 = arith.constant 0 : index
    %c0_62 = arith.constant 0 : index
    %221 = vector.load %arg7[%220, %c0_61, %c0_62] : memref<8x8x64xf32, #tpu.memory_space<vmem>>, vector<1x8x32xf32>
    %222 = vector.shape_cast %221 : vector<1x8x32xf32> to vector<8x32xf32>
    %223 = vector.shape_cast %178 : vector<8x32xf32> to vector<1x8x32xf32>
    tpu.vector_store %arg7[%220, %c0_61, %c0_62], %223 {strides = array<i32>} : memref<8x8x64xf32, #tpu.memory_space<vmem>>, vector<1x8x32xf32>,
    %224 = arith.index_cast %119 : i32 to index
    %c0_63 = arith.constant 0 : index
    %c32_64 = arith.constant 32 : index
    %225 = vector.load %arg7[%224, %c0_63, %c32_64] : memref<8x8x64xf32, #tpu.memory_space<vmem>>, vector<1x8x32xf32>
    %226 = vector.shape_cast %225 : vector<1x8x32xf32> to vector<8x32xf32>
    %227 = vector.shape_cast %219 : vector<8x32xf32> to vector<1x8x32xf32>
    tpu.vector_store %arg7[%224, %c0_63, %c32_64], %227 {strides = array<i32>} : memref<8x8x64xf32, #tpu.memory_space<vmem>>, vector<1x8x32xf32>,
    %c2_i32 = arith.constant 2 : i32
    %c7_i32_65 = arith.constant 7 : i32
    %228 = arith.subi %c7_i32_65, %c2_i32 : i32
    %229 = arith.index_cast %c2_i32 : i32 to index
    %c0_66 = arith.constant 0 : index
    %c0_67 = arith.constant 0 : index
    %230 = vector.load %arg2[%229, %c0_66, %c0_67] : memref<8x8x1xf32, #tpu.memory_space<vmem>>, vector<1x8x1xf32>
    %231 = vector.shape_cast %230 : vector<1x8x1xf32> to vector<8x1xf32>
    %232 = arith.index_cast %228 : i32 to index
    %c0_68 = arith.constant 0 : index
    %c0_69 = arith.constant 0 : index
    %233 = vector.load %arg2[%232, %c0_68, %c0_69] : memref<8x8x1xf32, #tpu.memory_space<vmem>>, vector<1x8x1xf32>
    %234 = vector.shape_cast %233 : vector<1x8x1xf32> to vector<8x1xf32>
    %235 = arith.index_cast %c2_i32 : i32 to index
    %c0_70 = arith.constant 0 : index
    %c0_71 = arith.constant 0 : index
    %236 = vector.load %arg8[%235, %c0_70, %c0_71] : memref<8x8x256xf32, #tpu.memory_space<vmem>>, vector<1x8x128xf32>
    %237 = vector.shape_cast %236 : vector<1x8x128xf32> to vector<8x128xf32>
    %c0_72 = arith.constant 0 : index
    %c0_73 = arith.constant 0 : index
    %238 = vector.load %arg5[%c0_72, %c0_73] : memref<32x128xf32, #tpu.memory_space<vmem>>, vector<32x128xf32>
    %cst_74 = arith.constant dense<0.000000e+00> : vector<8x128xf32>
    %239 = tpu.matmul %176, %238, %cst_74 {dimension_numbers = #tpu.dot_dimension_numbers<[1], [0], [0], [1], [0, 0, 1, 1], [], []>} : vector<8x32xf32>, vector<32x128xf32>, vector<8x128xf32> -> vector<8x128xf32>
    %240 = arith.addf %237, %239 : vector<8x128xf32>
    %241 = arith.index_cast %228 : i32 to index
    %c0_75 = arith.constant 0 : index
    %c128_76 = arith.constant 128 : index
    %242 = vector.load %arg8[%241, %c0_75, %c128_76] : memref<8x8x256xf32, #tpu.memory_space<vmem>>, vector<1x8x128xf32>
    %243 = vector.shape_cast %242 : vector<1x8x128xf32> to vector<8x128xf32>
    %c0_77 = arith.constant 0 : index
    %c0_78 = arith.constant 0 : index
    %244 = vector.load %arg6[%c0_77, %c0_78] : memref<32x128xf32, #tpu.memory_space<vmem>>, vector<32x128xf32>
    %cst_79 = arith.constant dense<0.000000e+00> : vector<8x128xf32>
    %245 = tpu.matmul %217, %244, %cst_79 {dimension_numbers = #tpu.dot_dimension_numbers<[1], [0], [0], [1], [0, 0, 1, 1], [], []>} : vector<8x32xf32>, vector<32x128xf32>, vector<8x128xf32> -> vector<8x128xf32>
    %246 = arith.addf %243, %245 : vector<8x128xf32>
    %247 = vector.extract_strided_slice %240 {offsets = [0, 0], sizes = [8, 32], strides = [1, 1]} : vector<8x128xf32> to vector<8x32xf32>
    %248 = arith.negf %247 : vector<8x32xf32>
    %249 = math.exp %248 : vector<8x32xf32>
    %cst_80 = arith.constant 1.000000e+00 : f32
    %250 = vector.broadcast %cst_80 : f32 to vector<8x32xf32>
    %251 = arith.addf %250, %249 : vector<8x32xf32>
    %252 = arith.divf %250, %251 : vector<8x32xf32>
    %253 = vector.extract_strided_slice %240 {offsets = [0, 32], sizes = [8, 32], strides = [1, 1]} : vector<8x128xf32> to vector<8x32xf32>
    %254 = arith.negf %253 : vector<8x32xf32>
    %255 = math.exp %254 : vector<8x32xf32>
    %cst_81 = arith.constant 1.000000e+00 : f32
    %256 = vector.broadcast %cst_81 : f32 to vector<8x32xf32>
    %257 = arith.addf %256, %255 : vector<8x32xf32>
    %258 = arith.divf %256, %257 : vector<8x32xf32>
    %259 = vector.extract_strided_slice %240 {offsets = [0, 64], sizes = [8, 32], strides = [1, 1]} : vector<8x128xf32> to vector<8x32xf32>
    %260 = math.tanh %259 : vector<8x32xf32>
    %261 = vector.extract_strided_slice %240 {offsets = [0, 96], sizes = [8, 32], strides = [1, 1]} : vector<8x128xf32> to vector<8x32xf32>
    %262 = arith.negf %261 : vector<8x32xf32>
    %263 = math.exp %262 : vector<8x32xf32>
    %cst_82 = arith.constant 1.000000e+00 : f32
    %264 = vector.broadcast %cst_82 : f32 to vector<8x32xf32>
    %265 = arith.addf %264, %263 : vector<8x32xf32>
    %266 = arith.divf %264, %265 : vector<8x32xf32>
    %267 = arith.mulf %258, %169 : vector<8x32xf32>
    %268 = arith.mulf %252, %260 : vector<8x32xf32>
    %269 = arith.addf %267, %268 : vector<8x32xf32>
    %270 = math.tanh %269 : vector<8x32xf32>
    %271 = arith.mulf %266, %270 : vector<8x32xf32>
    %272 = vector.broadcast %231 : vector<8x1xf32> to vector<8x32xf32>
    %273 = arith.mulf %272, %269 : vector<8x32xf32>
    %cst_83 = arith.constant 1.000000e+00 : f32
    %274 = vector.broadcast %cst_83 : f32 to vector<8x1xf32>
    %275 = arith.subf %274, %231 : vector<8x1xf32>
    %276 = vector.broadcast %275 : vector<8x1xf32> to vector<8x32xf32>
    %277 = arith.mulf %276, %169 : vector<8x32xf32>
    %278 = arith.addf %273, %277 : vector<8x32xf32>
    %279 = vector.broadcast %231 : vector<8x1xf32> to vector<8x32xf32>
    %280 = arith.mulf %279, %271 : vector<8x32xf32>
    %cst_84 = arith.constant 1.000000e+00 : f32
    %281 = vector.broadcast %cst_84 : f32 to vector<8x1xf32>
    %282 = arith.subf %281, %231 : vector<8x1xf32>
    %283 = vector.broadcast %282 : vector<8x1xf32> to vector<8x32xf32>
    %284 = arith.mulf %283, %176 : vector<8x32xf32>
    %285 = arith.addf %280, %284 : vector<8x32xf32>
    %286 = vector.broadcast %231 : vector<8x1xf32> to vector<8x32xf32>
    %287 = arith.mulf %286, %271 : vector<8x32xf32>
    %288 = vector.extract_strided_slice %246 {offsets = [0, 0], sizes = [8, 32], strides = [1, 1]} : vector<8x128xf32> to vector<8x32xf32>
    %289 = arith.negf %288 : vector<8x32xf32>
    %290 = math.exp %289 : vector<8x32xf32>
    %cst_85 = arith.constant 1.000000e+00 : f32
    %291 = vector.broadcast %cst_85 : f32 to vector<8x32xf32>
    %292 = arith.addf %291, %290 : vector<8x32xf32>
    %293 = arith.divf %291, %292 : vector<8x32xf32>
    %294 = vector.extract_strided_slice %246 {offsets = [0, 32], sizes = [8, 32], strides = [1, 1]} : vector<8x128xf32> to vector<8x32xf32>
    %295 = arith.negf %294 : vector<8x32xf32>
    %296 = math.exp %295 : vector<8x32xf32>
    %cst_86 = arith.constant 1.000000e+00 : f32
    %297 = vector.broadcast %cst_86 : f32 to vector<8x32xf32>
    %298 = arith.addf %297, %296 : vector<8x32xf32>
    %299 = arith.divf %297, %298 : vector<8x32xf32>
    %300 = vector.extract_strided_slice %246 {offsets = [0, 64], sizes = [8, 32], strides = [1, 1]} : vector<8x128xf32> to vector<8x32xf32>
    %301 = math.tanh %300 : vector<8x32xf32>
    %302 = vector.extract_strided_slice %246 {offsets = [0, 96], sizes = [8, 32], strides = [1, 1]} : vector<8x128xf32> to vector<8x32xf32>
    %303 = arith.negf %302 : vector<8x32xf32>
    %304 = math.exp %303 : vector<8x32xf32>
    %cst_87 = arith.constant 1.000000e+00 : f32
    %305 = vector.broadcast %cst_87 : f32 to vector<8x32xf32>
    %306 = arith.addf %305, %304 : vector<8x32xf32>
    %307 = arith.divf %305, %306 : vector<8x32xf32>
    %308 = arith.mulf %299, %210 : vector<8x32xf32>
    %309 = arith.mulf %293, %301 : vector<8x32xf32>
    %310 = arith.addf %308, %309 : vector<8x32xf32>
    %311 = math.tanh %310 : vector<8x32xf32>
    %312 = arith.mulf %307, %311 : vector<8x32xf32>
    %313 = vector.broadcast %234 : vector<8x1xf32> to vector<8x32xf32>
    %314 = arith.mulf %313, %310 : vector<8x32xf32>
    %cst_88 = arith.constant 1.000000e+00 : f32
    %315 = vector.broadcast %cst_88 : f32 to vector<8x1xf32>
    %316 = arith.subf %315, %234 : vector<8x1xf32>
    %317 = vector.broadcast %316 : vector<8x1xf32> to vector<8x32xf32>
    %318 = arith.mulf %317, %210 : vector<8x32xf32>
    %319 = arith.addf %314, %318 : vector<8x32xf32>
    %320 = vector.broadcast %234 : vector<8x1xf32> to vector<8x32xf32>
    %321 = arith.mulf %320, %312 : vector<8x32xf32>
    %cst_89 = arith.constant 1.000000e+00 : f32
    %322 = vector.broadcast %cst_89 : f32 to vector<8x1xf32>
    %323 = arith.subf %322, %234 : vector<8x1xf32>
    %324 = vector.broadcast %323 : vector<8x1xf32> to vector<8x32xf32>
    %325 = arith.mulf %324, %217 : vector<8x32xf32>
    %326 = arith.addf %321, %325 : vector<8x32xf32>
    %327 = vector.broadcast %234 : vector<8x1xf32> to vector<8x32xf32>
    %328 = arith.mulf %327, %312 : vector<8x32xf32>
    %329 = arith.index_cast %c2_i32 : i32 to index
    %c0_90 = arith.constant 0 : index
    %c0_91 = arith.constant 0 : index
    %330 = vector.load %arg7[%329, %c0_90, %c0_91] : memref<8x8x64xf32, #tpu.memory_space<vmem>>, vector<1x8x32xf32>
    %331 = vector.shape_cast %330 : vector<1x8x32xf32> to vector<8x32xf32>
    %332 = vector.shape_cast %287 : vector<8x32xf32> to vector<1x8x32xf32>
    tpu.vector_store %arg7[%329, %c0_90, %c0_91], %332 {strides = array<i32>} : memref<8x8x64xf32, #tpu.memory_space<vmem>>, vector<1x8x32xf32>,
    %333 = arith.index_cast %228 : i32 to index
    %c0_92 = arith.constant 0 : index
    %c32_93 = arith.constant 32 : index
    %334 = vector.load %arg7[%333, %c0_92, %c32_93] : memref<8x8x64xf32, #tpu.memory_space<vmem>>, vector<1x8x32xf32>
    %335 = vector.shape_cast %334 : vector<1x8x32xf32> to vector<8x32xf32>
    %336 = vector.shape_cast %328 : vector<8x32xf32> to vector<1x8x32xf32>
    tpu.vector_store %arg7[%333, %c0_92, %c32_93], %336 {strides = array<i32>} : memref<8x8x64xf32, #tpu.memory_space<vmem>>, vector<1x8x32xf32>,
    %c3_i32 = arith.constant 3 : i32
    %c7_i32_94 = arith.constant 7 : i32
    %337 = arith.subi %c7_i32_94, %c3_i32 : i32
    %338 = arith.index_cast %c3_i32 : i32 to index
    %c0_95 = arith.constant 0 : index
    %c0_96 = arith.constant 0 : index
    %339 = vector.load %arg2[%338, %c0_95, %c0_96] : memref<8x8x1xf32, #tpu.memory_space<vmem>>, vector<1x8x1xf32>
    %340 = vector.shape_cast %339 : vector<1x8x1xf32> to vector<8x1xf32>
    %341 = arith.index_cast %337 : i32 to index
    %c0_97 = arith.constant 0 : index
    %c0_98 = arith.constant 0 : index
    %342 = vector.load %arg2[%341, %c0_97, %c0_98] : memref<8x8x1xf32, #tpu.memory_space<vmem>>, vector<1x8x1xf32>
    %343 = vector.shape_cast %342 : vector<1x8x1xf32> to vector<8x1xf32>
    %344 = arith.index_cast %c3_i32 : i32 to index
    %c0_99 = arith.constant 0 : index
    %c0_100 = arith.constant 0 : index
    %345 = vector.load %arg8[%344, %c0_99, %c0_100] : memref<8x8x256xf32, #tpu.memory_space<vmem>>, vector<1x8x128xf32>
    %346 = vector.shape_cast %345 : vector<1x8x128xf32> to vector<8x128xf32>
    %c0_101 = arith.constant 0 : index
    %c0_102 = arith.constant 0 : index
    %347 = vector.load %arg5[%c0_101, %c0_102] : memref<32x128xf32, #tpu.memory_space<vmem>>, vector<32x128xf32>
    %cst_103 = arith.constant dense<0.000000e+00> : vector<8x128xf32>
    %348 = tpu.matmul %285, %347, %cst_103 {dimension_numbers = #tpu.dot_dimension_numbers<[1], [0], [0], [1], [0, 0, 1, 1], [], []>} : vector<8x32xf32>, vector<32x128xf32>, vector<8x128xf32> -> vector<8x128xf32>
    %349 = arith.addf %346, %348 : vector<8x128xf32>
    %350 = arith.index_cast %337 : i32 to index
    %c0_104 = arith.constant 0 : index
    %c128_105 = arith.constant 128 : index
    %351 = vector.load %arg8[%350, %c0_104, %c128_105] : memref<8x8x256xf32, #tpu.memory_space<vmem>>, vector<1x8x128xf32>
    %352 = vector.shape_cast %351 : vector<1x8x128xf32> to vector<8x128xf32>
    %c0_106 = arith.constant 0 : index
    %c0_107 = arith.constant 0 : index
    %353 = vector.load %arg6[%c0_106, %c0_107] : memref<32x128xf32, #tpu.memory_space<vmem>>, vector<32x128xf32>
    %cst_108 = arith.constant dense<0.000000e+00> : vector<8x128xf32>
    %354 = tpu.matmul %326, %353, %cst_108 {dimension_numbers = #tpu.dot_dimension_numbers<[1], [0], [0], [1], [0, 0, 1, 1], [], []>} : vector<8x32xf32>, vector<32x128xf32>, vector<8x128xf32> -> vector<8x128xf32>
    %355 = arith.addf %352, %354 : vector<8x128xf32>
    %356 = vector.extract_strided_slice %349 {offsets = [0, 0], sizes = [8, 32], strides = [1, 1]} : vector<8x128xf32> to vector<8x32xf32>
    %357 = arith.negf %356 : vector<8x32xf32>
    %358 = math.exp %357 : vector<8x32xf32>
    %cst_109 = arith.constant 1.000000e+00 : f32
    %359 = vector.broadcast %cst_109 : f32 to vector<8x32xf32>
    %360 = arith.addf %359, %358 : vector<8x32xf32>
    %361 = arith.divf %359, %360 : vector<8x32xf32>
    %362 = vector.extract_strided_slice %349 {offsets = [0, 32], sizes = [8, 32], strides = [1, 1]} : vector<8x128xf32> to vector<8x32xf32>
    %363 = arith.negf %362 : vector<8x32xf32>
    %364 = math.exp %363 : vector<8x32xf32>
    %cst_110 = arith.constant 1.000000e+00 : f32
    %365 = vector.broadcast %cst_110 : f32 to vector<8x32xf32>
    %366 = arith.addf %365, %364 : vector<8x32xf32>
    %367 = arith.divf %365, %366 : vector<8x32xf32>
    %368 = vector.extract_strided_slice %349 {offsets = [0, 64], sizes = [8, 32], strides = [1, 1]} : vector<8x128xf32> to vector<8x32xf32>
    %369 = math.tanh %368 : vector<8x32xf32>
    %370 = vector.extract_strided_slice %349 {offsets = [0, 96], sizes = [8, 32], strides = [1, 1]} : vector<8x128xf32> to vector<8x32xf32>
    %371 = arith.negf %370 : vector<8x32xf32>
    %372 = math.exp %371 : vector<8x32xf32>
    %cst_111 = arith.constant 1.000000e+00 : f32
    %373 = vector.broadcast %cst_111 : f32 to vector<8x32xf32>
    %374 = arith.addf %373, %372 : vector<8x32xf32>
    %375 = arith.divf %373, %374 : vector<8x32xf32>
    %376 = arith.mulf %367, %278 : vector<8x32xf32>
    %377 = arith.mulf %361, %369 : vector<8x32xf32>
    %378 = arith.addf %376, %377 : vector<8x32xf32>
    %379 = math.tanh %378 : vector<8x32xf32>
    %380 = arith.mulf %375, %379 : vector<8x32xf32>
    %381 = vector.broadcast %340 : vector<8x1xf32> to vector<8x32xf32>
    %382 = arith.mulf %381, %378 : vector<8x32xf32>
    %cst_112 = arith.constant 1.000000e+00 : f32
    %383 = vector.broadcast %cst_112 : f32 to vector<8x1xf32>
    %384 = arith.subf %383, %340 : vector<8x1xf32>
    %385 = vector.broadcast %384 : vector<8x1xf32> to vector<8x32xf32>
    %386 = arith.mulf %385, %278 : vector<8x32xf32>
    %387 = arith.addf %382, %386 : vector<8x32xf32>
    %388 = vector.broadcast %340 : vector<8x1xf32> to vector<8x32xf32>
    %389 = arith.mulf %388, %380 : vector<8x32xf32>
    %cst_113 = arith.constant 1.000000e+00 : f32
    %390 = vector.broadcast %cst_113 : f32 to vector<8x1xf32>
    %391 = arith.subf %390, %340 : vector<8x1xf32>
    %392 = vector.broadcast %391 : vector<8x1xf32> to vector<8x32xf32>
    %393 = arith.mulf %392, %285 : vector<8x32xf32>
    %394 = arith.addf %389, %393 : vector<8x32xf32>
    %395 = vector.broadcast %340 : vector<8x1xf32> to vector<8x32xf32>
    %396 = arith.mulf %395, %380 : vector<8x32xf32>
    %397 = vector.extract_strided_slice %355 {offsets = [0, 0], sizes = [8, 32], strides = [1, 1]} : vector<8x128xf32> to vector<8x32xf32>
    %398 = arith.negf %397 : vector<8x32xf32>
    %399 = math.exp %398 : vector<8x32xf32>
    %cst_114 = arith.constant 1.000000e+00 : f32
    %400 = vector.broadcast %cst_114 : f32 to vector<8x32xf32>
    %401 = arith.addf %400, %399 : vector<8x32xf32>
    %402 = arith.divf %400, %401 : vector<8x32xf32>
    %403 = vector.extract_strided_slice %355 {offsets = [0, 32], sizes = [8, 32], strides = [1, 1]} : vector<8x128xf32> to vector<8x32xf32>
    %404 = arith.negf %403 : vector<8x32xf32>
    %405 = math.exp %404 : vector<8x32xf32>
    %cst_115 = arith.constant 1.000000e+00 : f32
    %406 = vector.broadcast %cst_115 : f32 to vector<8x32xf32>
    %407 = arith.addf %406, %405 : vector<8x32xf32>
    %408 = arith.divf %406, %407 : vector<8x32xf32>
    %409 = vector.extract_strided_slice %355 {offsets = [0, 64], sizes = [8, 32], strides = [1, 1]} : vector<8x128xf32> to vector<8x32xf32>
    %410 = math.tanh %409 : vector<8x32xf32>
    %411 = vector.extract_strided_slice %355 {offsets = [0, 96], sizes = [8, 32], strides = [1, 1]} : vector<8x128xf32> to vector<8x32xf32>
    %412 = arith.negf %411 : vector<8x32xf32>
    %413 = math.exp %412 : vector<8x32xf32>
    %cst_116 = arith.constant 1.000000e+00 : f32
    %414 = vector.broadcast %cst_116 : f32 to vector<8x32xf32>
    %415 = arith.addf %414, %413 : vector<8x32xf32>
    %416 = arith.divf %414, %415 : vector<8x32xf32>
    %417 = arith.mulf %408, %319 : vector<8x32xf32>
    %418 = arith.mulf %402, %410 : vector<8x32xf32>
    %419 = arith.addf %417, %418 : vector<8x32xf32>
    %420 = math.tanh %419 : vector<8x32xf32>
    %421 = arith.mulf %416, %420 : vector<8x32xf32>
    %422 = vector.broadcast %343 : vector<8x1xf32> to vector<8x32xf32>
    %423 = arith.mulf %422, %419 : vector<8x32xf32>
    %cst_117 = arith.constant 1.000000e+00 : f32
    %424 = vector.broadcast %cst_117 : f32 to vector<8x1xf32>
    %425 = arith.subf %424, %343 : vector<8x1xf32>
    %426 = vector.broadcast %425 : vector<8x1xf32> to vector<8x32xf32>
    %427 = arith.mulf %426, %319 : vector<8x32xf32>
    %428 = arith.addf %423, %427 : vector<8x32xf32>
    %429 = vector.broadcast %343 : vector<8x1xf32> to vector<8x32xf32>
    %430 = arith.mulf %429, %421 : vector<8x32xf32>
    %cst_118 = arith.constant 1.000000e+00 : f32
    %431 = vector.broadcast %cst_118 : f32 to vector<8x1xf32>
    %432 = arith.subf %431, %343 : vector<8x1xf32>
    %433 = vector.broadcast %432 : vector<8x1xf32> to vector<8x32xf32>
    %434 = arith.mulf %433, %326 : vector<8x32xf32>
    %435 = arith.addf %430, %434 : vector<8x32xf32>
    %436 = vector.broadcast %343 : vector<8x1xf32> to vector<8x32xf32>
    %437 = arith.mulf %436, %421 : vector<8x32xf32>
    %438 = arith.index_cast %c3_i32 : i32 to index
    %c0_119 = arith.constant 0 : index
    %c0_120 = arith.constant 0 : index
    %439 = vector.load %arg7[%438, %c0_119, %c0_120] : memref<8x8x64xf32, #tpu.memory_space<vmem>>, vector<1x8x32xf32>
    %440 = vector.shape_cast %439 : vector<1x8x32xf32> to vector<8x32xf32>
    %441 = vector.shape_cast %396 : vector<8x32xf32> to vector<1x8x32xf32>
    tpu.vector_store %arg7[%438, %c0_119, %c0_120], %441 {strides = array<i32>} : memref<8x8x64xf32, #tpu.memory_space<vmem>>, vector<1x8x32xf32>,
    %442 = arith.index_cast %337 : i32 to index
    %c0_121 = arith.constant 0 : index
    %c32_122 = arith.constant 32 : index
    %443 = vector.load %arg7[%442, %c0_121, %c32_122] : memref<8x8x64xf32, #tpu.memory_space<vmem>>, vector<1x8x32xf32>
    %444 = vector.shape_cast %443 : vector<1x8x32xf32> to vector<8x32xf32>
    %445 = vector.shape_cast %437 : vector<8x32xf32> to vector<1x8x32xf32>
    tpu.vector_store %arg7[%442, %c0_121, %c32_122], %445 {strides = array<i32>} : memref<8x8x64xf32, #tpu.memory_space<vmem>>, vector<1x8x32xf32>,
    %c4_i32 = arith.constant 4 : i32
    %c7_i32_123 = arith.constant 7 : i32
    %446 = arith.subi %c7_i32_123, %c4_i32 : i32
    %447 = arith.index_cast %c4_i32 : i32 to index
    %c0_124 = arith.constant 0 : index
    %c0_125 = arith.constant 0 : index
    %448 = vector.load %arg2[%447, %c0_124, %c0_125] : memref<8x8x1xf32, #tpu.memory_space<vmem>>, vector<1x8x1xf32>
    %449 = vector.shape_cast %448 : vector<1x8x1xf32> to vector<8x1xf32>
    %450 = arith.index_cast %446 : i32 to index
    %c0_126 = arith.constant 0 : index
    %c0_127 = arith.constant 0 : index
    %451 = vector.load %arg2[%450, %c0_126, %c0_127] : memref<8x8x1xf32, #tpu.memory_space<vmem>>, vector<1x8x1xf32>
    %452 = vector.shape_cast %451 : vector<1x8x1xf32> to vector<8x1xf32>
    %453 = arith.index_cast %c4_i32 : i32 to index
    %c0_128 = arith.constant 0 : index
    %c0_129 = arith.constant 0 : index
    %454 = vector.load %arg8[%453, %c0_128, %c0_129] : memref<8x8x256xf32, #tpu.memory_space<vmem>>, vector<1x8x128xf32>
    %455 = vector.shape_cast %454 : vector<1x8x128xf32> to vector<8x128xf32>
    %c0_130 = arith.constant 0 : index
    %c0_131 = arith.constant 0 : index
    %456 = vector.load %arg5[%c0_130, %c0_131] : memref<32x128xf32, #tpu.memory_space<vmem>>, vector<32x128xf32>
    %cst_132 = arith.constant dense<0.000000e+00> : vector<8x128xf32>
    %457 = tpu.matmul %394, %456, %cst_132 {dimension_numbers = #tpu.dot_dimension_numbers<[1], [0], [0], [1], [0, 0, 1, 1], [], []>} : vector<8x32xf32>, vector<32x128xf32>, vector<8x128xf32> -> vector<8x128xf32>
    %458 = arith.addf %455, %457 : vector<8x128xf32>
    %459 = arith.index_cast %446 : i32 to index
    %c0_133 = arith.constant 0 : index
    %c128_134 = arith.constant 128 : index
    %460 = vector.load %arg8[%459, %c0_133, %c128_134] : memref<8x8x256xf32, #tpu.memory_space<vmem>>, vector<1x8x128xf32>
    %461 = vector.shape_cast %460 : vector<1x8x128xf32> to vector<8x128xf32>
    %c0_135 = arith.constant 0 : index
    %c0_136 = arith.constant 0 : index
    %462 = vector.load %arg6[%c0_135, %c0_136] : memref<32x128xf32, #tpu.memory_space<vmem>>, vector<32x128xf32>
    %cst_137 = arith.constant dense<0.000000e+00> : vector<8x128xf32>
    %463 = tpu.matmul %435, %462, %cst_137 {dimension_numbers = #tpu.dot_dimension_numbers<[1], [0], [0], [1], [0, 0, 1, 1], [], []>} : vector<8x32xf32>, vector<32x128xf32>, vector<8x128xf32> -> vector<8x128xf32>
    %464 = arith.addf %461, %463 : vector<8x128xf32>
    %465 = vector.extract_strided_slice %458 {offsets = [0, 0], sizes = [8, 32], strides = [1, 1]} : vector<8x128xf32> to vector<8x32xf32>
    %466 = arith.negf %465 : vector<8x32xf32>
    %467 = math.exp %466 : vector<8x32xf32>
    %cst_138 = arith.constant 1.000000e+00 : f32
    %468 = vector.broadcast %cst_138 : f32 to vector<8x32xf32>
    %469 = arith.addf %468, %467 : vector<8x32xf32>
    %470 = arith.divf %468, %469 : vector<8x32xf32>
    %471 = vector.extract_strided_slice %458 {offsets = [0, 32], sizes = [8, 32], strides = [1, 1]} : vector<8x128xf32> to vector<8x32xf32>
    %472 = arith.negf %471 : vector<8x32xf32>
    %473 = math.exp %472 : vector<8x32xf32>
    %cst_139 = arith.constant 1.000000e+00 : f32
    %474 = vector.broadcast %cst_139 : f32 to vector<8x32xf32>
    %475 = arith.addf %474, %473 : vector<8x32xf32>
    %476 = arith.divf %474, %475 : vector<8x32xf32>
    %477 = vector.extract_strided_slice %458 {offsets = [0, 64], sizes = [8, 32], strides = [1, 1]} : vector<8x128xf32> to vector<8x32xf32>
    %478 = math.tanh %477 : vector<8x32xf32>
    %479 = vector.extract_strided_slice %458 {offsets = [0, 96], sizes = [8, 32], strides = [1, 1]} : vector<8x128xf32> to vector<8x32xf32>
    %480 = arith.negf %479 : vector<8x32xf32>
    %481 = math.exp %480 : vector<8x32xf32>
    %cst_140 = arith.constant 1.000000e+00 : f32
    %482 = vector.broadcast %cst_140 : f32 to vector<8x32xf32>
    %483 = arith.addf %482, %481 : vector<8x32xf32>
    %484 = arith.divf %482, %483 : vector<8x32xf32>
    %485 = arith.mulf %476, %387 : vector<8x32xf32>
    %486 = arith.mulf %470, %478 : vector<8x32xf32>
    %487 = arith.addf %485, %486 : vector<8x32xf32>
    %488 = math.tanh %487 : vector<8x32xf32>
    %489 = arith.mulf %484, %488 : vector<8x32xf32>
    %490 = vector.broadcast %449 : vector<8x1xf32> to vector<8x32xf32>
    %491 = arith.mulf %490, %487 : vector<8x32xf32>
    %cst_141 = arith.constant 1.000000e+00 : f32
    %492 = vector.broadcast %cst_141 : f32 to vector<8x1xf32>
    %493 = arith.subf %492, %449 : vector<8x1xf32>
    %494 = vector.broadcast %493 : vector<8x1xf32> to vector<8x32xf32>
    %495 = arith.mulf %494, %387 : vector<8x32xf32>
    %496 = arith.addf %491, %495 : vector<8x32xf32>
    %497 = vector.broadcast %449 : vector<8x1xf32> to vector<8x32xf32>
    %498 = arith.mulf %497, %489 : vector<8x32xf32>
    %cst_142 = arith.constant 1.000000e+00 : f32
    %499 = vector.broadcast %cst_142 : f32 to vector<8x1xf32>
    %500 = arith.subf %499, %449 : vector<8x1xf32>
    %501 = vector.broadcast %500 : vector<8x1xf32> to vector<8x32xf32>
    %502 = arith.mulf %501, %394 : vector<8x32xf32>
    %503 = arith.addf %498, %502 : vector<8x32xf32>
    %504 = vector.broadcast %449 : vector<8x1xf32> to vector<8x32xf32>
    %505 = arith.mulf %504, %489 : vector<8x32xf32>
    %506 = vector.extract_strided_slice %464 {offsets = [0, 0], sizes = [8, 32], strides = [1, 1]} : vector<8x128xf32> to vector<8x32xf32>
    %507 = arith.negf %506 : vector<8x32xf32>
    %508 = math.exp %507 : vector<8x32xf32>
    %cst_143 = arith.constant 1.000000e+00 : f32
    %509 = vector.broadcast %cst_143 : f32 to vector<8x32xf32>
    %510 = arith.addf %509, %508 : vector<8x32xf32>
    %511 = arith.divf %509, %510 : vector<8x32xf32>
    %512 = vector.extract_strided_slice %464 {offsets = [0, 32], sizes = [8, 32], strides = [1, 1]} : vector<8x128xf32> to vector<8x32xf32>
    %513 = arith.negf %512 : vector<8x32xf32>
    %514 = math.exp %513 : vector<8x32xf32>
    %cst_144 = arith.constant 1.000000e+00 : f32
    %515 = vector.broadcast %cst_144 : f32 to vector<8x32xf32>
    %516 = arith.addf %515, %514 : vector<8x32xf32>
    %517 = arith.divf %515, %516 : vector<8x32xf32>
    %518 = vector.extract_strided_slice %464 {offsets = [0, 64], sizes = [8, 32], strides = [1, 1]} : vector<8x128xf32> to vector<8x32xf32>
    %519 = math.tanh %518 : vector<8x32xf32>
    %520 = vector.extract_strided_slice %464 {offsets = [0, 96], sizes = [8, 32], strides = [1, 1]} : vector<8x128xf32> to vector<8x32xf32>
    %521 = arith.negf %520 : vector<8x32xf32>
    %522 = math.exp %521 : vector<8x32xf32>
    %cst_145 = arith.constant 1.000000e+00 : f32
    %523 = vector.broadcast %cst_145 : f32 to vector<8x32xf32>
    %524 = arith.addf %523, %522 : vector<8x32xf32>
    %525 = arith.divf %523, %524 : vector<8x32xf32>
    %526 = arith.mulf %517, %428 : vector<8x32xf32>
    %527 = arith.mulf %511, %519 : vector<8x32xf32>
    %528 = arith.addf %526, %527 : vector<8x32xf32>
    %529 = math.tanh %528 : vector<8x32xf32>
    %530 = arith.mulf %525, %529 : vector<8x32xf32>
    %531 = vector.broadcast %452 : vector<8x1xf32> to vector<8x32xf32>
    %532 = arith.mulf %531, %528 : vector<8x32xf32>
    %cst_146 = arith.constant 1.000000e+00 : f32
    %533 = vector.broadcast %cst_146 : f32 to vector<8x1xf32>
    %534 = arith.subf %533, %452 : vector<8x1xf32>
    %535 = vector.broadcast %534 : vector<8x1xf32> to vector<8x32xf32>
    %536 = arith.mulf %535, %428 : vector<8x32xf32>
    %537 = arith.addf %532, %536 : vector<8x32xf32>
    %538 = vector.broadcast %452 : vector<8x1xf32> to vector<8x32xf32>
    %539 = arith.mulf %538, %530 : vector<8x32xf32>
    %cst_147 = arith.constant 1.000000e+00 : f32
    %540 = vector.broadcast %cst_147 : f32 to vector<8x1xf32>
    %541 = arith.subf %540, %452 : vector<8x1xf32>
    %542 = vector.broadcast %541 : vector<8x1xf32> to vector<8x32xf32>
    %543 = arith.mulf %542, %435 : vector<8x32xf32>
    %544 = arith.addf %539, %543 : vector<8x32xf32>
    %545 = vector.broadcast %452 : vector<8x1xf32> to vector<8x32xf32>
    %546 = arith.mulf %545, %530 : vector<8x32xf32>
    %547 = arith.index_cast %c4_i32 : i32 to index
    %c0_148 = arith.constant 0 : index
    %c0_149 = arith.constant 0 : index
    %548 = vector.load %arg7[%547, %c0_148, %c0_149] : memref<8x8x64xf32, #tpu.memory_space<vmem>>, vector<1x8x32xf32>
    %549 = vector.shape_cast %548 : vector<1x8x32xf32> to vector<8x32xf32>
    %550 = vector.shape_cast %505 : vector<8x32xf32> to vector<1x8x32xf32>
    tpu.vector_store %arg7[%547, %c0_148, %c0_149], %550 {strides = array<i32>} : memref<8x8x64xf32, #tpu.memory_space<vmem>>, vector<1x8x32xf32>,
    %551 = arith.index_cast %446 : i32 to index
    %c0_150 = arith.constant 0 : index
    %c32_151 = arith.constant 32 : index
    %552 = vector.load %arg7[%551, %c0_150, %c32_151] : memref<8x8x64xf32, #tpu.memory_space<vmem>>, vector<1x8x32xf32>
    %553 = vector.shape_cast %552 : vector<1x8x32xf32> to vector<8x32xf32>
    %554 = vector.shape_cast %546 : vector<8x32xf32> to vector<1x8x32xf32>
    tpu.vector_store %arg7[%551, %c0_150, %c32_151], %554 {strides = array<i32>} : memref<8x8x64xf32, #tpu.memory_space<vmem>>, vector<1x8x32xf32>,
    %c5_i32 = arith.constant 5 : i32
    %c7_i32_152 = arith.constant 7 : i32
    %555 = arith.subi %c7_i32_152, %c5_i32 : i32
    %556 = arith.index_cast %c5_i32 : i32 to index
    %c0_153 = arith.constant 0 : index
    %c0_154 = arith.constant 0 : index
    %557 = vector.load %arg2[%556, %c0_153, %c0_154] : memref<8x8x1xf32, #tpu.memory_space<vmem>>, vector<1x8x1xf32>
    %558 = vector.shape_cast %557 : vector<1x8x1xf32> to vector<8x1xf32>
    %559 = arith.index_cast %555 : i32 to index
    %c0_155 = arith.constant 0 : index
    %c0_156 = arith.constant 0 : index
    %560 = vector.load %arg2[%559, %c0_155, %c0_156] : memref<8x8x1xf32, #tpu.memory_space<vmem>>, vector<1x8x1xf32>
    %561 = vector.shape_cast %560 : vector<1x8x1xf32> to vector<8x1xf32>
    %562 = arith.index_cast %c5_i32 : i32 to index
    %c0_157 = arith.constant 0 : index
    %c0_158 = arith.constant 0 : index
    %563 = vector.load %arg8[%562, %c0_157, %c0_158] : memref<8x8x256xf32, #tpu.memory_space<vmem>>, vector<1x8x128xf32>
    %564 = vector.shape_cast %563 : vector<1x8x128xf32> to vector<8x128xf32>
    %c0_159 = arith.constant 0 : index
    %c0_160 = arith.constant 0 : index
    %565 = vector.load %arg5[%c0_159, %c0_160] : memref<32x128xf32, #tpu.memory_space<vmem>>, vector<32x128xf32>
    %cst_161 = arith.constant dense<0.000000e+00> : vector<8x128xf32>
    %566 = tpu.matmul %503, %565, %cst_161 {dimension_numbers = #tpu.dot_dimension_numbers<[1], [0], [0], [1], [0, 0, 1, 1], [], []>} : vector<8x32xf32>, vector<32x128xf32>, vector<8x128xf32> -> vector<8x128xf32>
    %567 = arith.addf %564, %566 : vector<8x128xf32>
    %568 = arith.index_cast %555 : i32 to index
    %c0_162 = arith.constant 0 : index
    %c128_163 = arith.constant 128 : index
    %569 = vector.load %arg8[%568, %c0_162, %c128_163] : memref<8x8x256xf32, #tpu.memory_space<vmem>>, vector<1x8x128xf32>
    %570 = vector.shape_cast %569 : vector<1x8x128xf32> to vector<8x128xf32>
    %c0_164 = arith.constant 0 : index
    %c0_165 = arith.constant 0 : index
    %571 = vector.load %arg6[%c0_164, %c0_165] : memref<32x128xf32, #tpu.memory_space<vmem>>, vector<32x128xf32>
    %cst_166 = arith.constant dense<0.000000e+00> : vector<8x128xf32>
    %572 = tpu.matmul %544, %571, %cst_166 {dimension_numbers = #tpu.dot_dimension_numbers<[1], [0], [0], [1], [0, 0, 1, 1], [], []>} : vector<8x32xf32>, vector<32x128xf32>, vector<8x128xf32> -> vector<8x128xf32>
    %573 = arith.addf %570, %572 : vector<8x128xf32>
    %574 = vector.extract_strided_slice %567 {offsets = [0, 0], sizes = [8, 32], strides = [1, 1]} : vector<8x128xf32> to vector<8x32xf32>
    %575 = arith.negf %574 : vector<8x32xf32>
    %576 = math.exp %575 : vector<8x32xf32>
    %cst_167 = arith.constant 1.000000e+00 : f32
    %577 = vector.broadcast %cst_167 : f32 to vector<8x32xf32>
    %578 = arith.addf %577, %576 : vector<8x32xf32>
    %579 = arith.divf %577, %578 : vector<8x32xf32>
    %580 = vector.extract_strided_slice %567 {offsets = [0, 32], sizes = [8, 32], strides = [1, 1]} : vector<8x128xf32> to vector<8x32xf32>
    %581 = arith.negf %580 : vector<8x32xf32>
    %582 = math.exp %581 : vector<8x32xf32>
    %cst_168 = arith.constant 1.000000e+00 : f32
    %583 = vector.broadcast %cst_168 : f32 to vector<8x32xf32>
    %584 = arith.addf %583, %582 : vector<8x32xf32>
    %585 = arith.divf %583, %584 : vector<8x32xf32>
    %586 = vector.extract_strided_slice %567 {offsets = [0, 64], sizes = [8, 32], strides = [1, 1]} : vector<8x128xf32> to vector<8x32xf32>
    %587 = math.tanh %586 : vector<8x32xf32>
    %588 = vector.extract_strided_slice %567 {offsets = [0, 96], sizes = [8, 32], strides = [1, 1]} : vector<8x128xf32> to vector<8x32xf32>
    %589 = arith.negf %588 : vector<8x32xf32>
    %590 = math.exp %589 : vector<8x32xf32>
    %cst_169 = arith.constant 1.000000e+00 : f32
    %591 = vector.broadcast %cst_169 : f32 to vector<8x32xf32>
    %592 = arith.addf %591, %590 : vector<8x32xf32>
    %593 = arith.divf %591, %592 : vector<8x32xf32>
    %594 = arith.mulf %585, %496 : vector<8x32xf32>
    %595 = arith.mulf %579, %587 : vector<8x32xf32>
    %596 = arith.addf %594, %595 : vector<8x32xf32>
    %597 = math.tanh %596 : vector<8x32xf32>
    %598 = arith.mulf %593, %597 : vector<8x32xf32>
    %599 = vector.broadcast %558 : vector<8x1xf32> to vector<8x32xf32>
    %600 = arith.mulf %599, %596 : vector<8x32xf32>
    %cst_170 = arith.constant 1.000000e+00 : f32
    %601 = vector.broadcast %cst_170 : f32 to vector<8x1xf32>
    %602 = arith.subf %601, %558 : vector<8x1xf32>
    %603 = vector.broadcast %602 : vector<8x1xf32> to vector<8x32xf32>
    %604 = arith.mulf %603, %496 : vector<8x32xf32>
    %605 = arith.addf %600, %604 : vector<8x32xf32>
    %606 = vector.broadcast %558 : vector<8x1xf32> to vector<8x32xf32>
    %607 = arith.mulf %606, %598 : vector<8x32xf32>
    %cst_171 = arith.constant 1.000000e+00 : f32
    %608 = vector.broadcast %cst_171 : f32 to vector<8x1xf32>
    %609 = arith.subf %608, %558 : vector<8x1xf32>
    %610 = vector.broadcast %609 : vector<8x1xf32> to vector<8x32xf32>
    %611 = arith.mulf %610, %503 : vector<8x32xf32>
    %612 = arith.addf %607, %611 : vector<8x32xf32>
    %613 = vector.broadcast %558 : vector<8x1xf32> to vector<8x32xf32>
    %614 = arith.mulf %613, %598 : vector<8x32xf32>
    %615 = vector.extract_strided_slice %573 {offsets = [0, 0], sizes = [8, 32], strides = [1, 1]} : vector<8x128xf32> to vector<8x32xf32>
    %616 = arith.negf %615 : vector<8x32xf32>
    %617 = math.exp %616 : vector<8x32xf32>
    %cst_172 = arith.constant 1.000000e+00 : f32
    %618 = vector.broadcast %cst_172 : f32 to vector<8x32xf32>
    %619 = arith.addf %618, %617 : vector<8x32xf32>
    %620 = arith.divf %618, %619 : vector<8x32xf32>
    %621 = vector.extract_strided_slice %573 {offsets = [0, 32], sizes = [8, 32], strides = [1, 1]} : vector<8x128xf32> to vector<8x32xf32>
    %622 = arith.negf %621 : vector<8x32xf32>
    %623 = math.exp %622 : vector<8x32xf32>
    %cst_173 = arith.constant 1.000000e+00 : f32
    %624 = vector.broadcast %cst_173 : f32 to vector<8x32xf32>
    %625 = arith.addf %624, %623 : vector<8x32xf32>
    %626 = arith.divf %624, %625 : vector<8x32xf32>
    %627 = vector.extract_strided_slice %573 {offsets = [0, 64], sizes = [8, 32], strides = [1, 1]} : vector<8x128xf32> to vector<8x32xf32>
    %628 = math.tanh %627 : vector<8x32xf32>
    %629 = vector.extract_strided_slice %573 {offsets = [0, 96], sizes = [8, 32], strides = [1, 1]} : vector<8x128xf32> to vector<8x32xf32>
    %630 = arith.negf %629 : vector<8x32xf32>
    %631 = math.exp %630 : vector<8x32xf32>
    %cst_174 = arith.constant 1.000000e+00 : f32
    %632 = vector.broadcast %cst_174 : f32 to vector<8x32xf32>
    %633 = arith.addf %632, %631 : vector<8x32xf32>
    %634 = arith.divf %632, %633 : vector<8x32xf32>
    %635 = arith.mulf %626, %537 : vector<8x32xf32>
    %636 = arith.mulf %620, %628 : vector<8x32xf32>
    %637 = arith.addf %635, %636 : vector<8x32xf32>
    %638 = math.tanh %637 : vector<8x32xf32>
    %639 = arith.mulf %634, %638 : vector<8x32xf32>
    %640 = vector.broadcast %561 : vector<8x1xf32> to vector<8x32xf32>
    %641 = arith.mulf %640, %637 : vector<8x32xf32>
    %cst_175 = arith.constant 1.000000e+00 : f32
    %642 = vector.broadcast %cst_175 : f32 to vector<8x1xf32>
    %643 = arith.subf %642, %561 : vector<8x1xf32>
    %644 = vector.broadcast %643 : vector<8x1xf32> to vector<8x32xf32>
    %645 = arith.mulf %644, %537 : vector<8x32xf32>
    %646 = arith.addf %641, %645 : vector<8x32xf32>
    %647 = vector.broadcast %561 : vector<8x1xf32> to vector<8x32xf32>
    %648 = arith.mulf %647, %639 : vector<8x32xf32>
    %cst_176 = arith.constant 1.000000e+00 : f32
    %649 = vector.broadcast %cst_176 : f32 to vector<8x1xf32>
    %650 = arith.subf %649, %561 : vector<8x1xf32>
    %651 = vector.broadcast %650 : vector<8x1xf32> to vector<8x32xf32>
    %652 = arith.mulf %651, %544 : vector<8x32xf32>
    %653 = arith.addf %648, %652 : vector<8x32xf32>
    %654 = vector.broadcast %561 : vector<8x1xf32> to vector<8x32xf32>
    %655 = arith.mulf %654, %639 : vector<8x32xf32>
    %656 = arith.index_cast %c5_i32 : i32 to index
    %c0_177 = arith.constant 0 : index
    %c0_178 = arith.constant 0 : index
    %657 = vector.load %arg7[%656, %c0_177, %c0_178] : memref<8x8x64xf32, #tpu.memory_space<vmem>>, vector<1x8x32xf32>
    %658 = vector.shape_cast %657 : vector<1x8x32xf32> to vector<8x32xf32>
    %659 = vector.shape_cast %614 : vector<8x32xf32> to vector<1x8x32xf32>
    tpu.vector_store %arg7[%656, %c0_177, %c0_178], %659 {strides = array<i32>} : memref<8x8x64xf32, #tpu.memory_space<vmem>>, vector<1x8x32xf32>,
    %660 = arith.index_cast %555 : i32 to index
    %c0_179 = arith.constant 0 : index
    %c32_180 = arith.constant 32 : index
    %661 = vector.load %arg7[%660, %c0_179, %c32_180] : memref<8x8x64xf32, #tpu.memory_space<vmem>>, vector<1x8x32xf32>
    %662 = vector.shape_cast %661 : vector<1x8x32xf32> to vector<8x32xf32>
    %663 = vector.shape_cast %655 : vector<8x32xf32> to vector<1x8x32xf32>
    tpu.vector_store %arg7[%660, %c0_179, %c32_180], %663 {strides = array<i32>} : memref<8x8x64xf32, #tpu.memory_space<vmem>>, vector<1x8x32xf32>,
    %c6_i32 = arith.constant 6 : i32
    %c7_i32_181 = arith.constant 7 : i32
    %664 = arith.subi %c7_i32_181, %c6_i32 : i32
    %665 = arith.index_cast %c6_i32 : i32 to index
    %c0_182 = arith.constant 0 : index
    %c0_183 = arith.constant 0 : index
    %666 = vector.load %arg2[%665, %c0_182, %c0_183] : memref<8x8x1xf32, #tpu.memory_space<vmem>>, vector<1x8x1xf32>
    %667 = vector.shape_cast %666 : vector<1x8x1xf32> to vector<8x1xf32>
    %668 = arith.index_cast %664 : i32 to index
    %c0_184 = arith.constant 0 : index
    %c0_185 = arith.constant 0 : index
    %669 = vector.load %arg2[%668, %c0_184, %c0_185] : memref<8x8x1xf32, #tpu.memory_space<vmem>>, vector<1x8x1xf32>
    %670 = vector.shape_cast %669 : vector<1x8x1xf32> to vector<8x1xf32>
    %671 = arith.index_cast %c6_i32 : i32 to index
    %c0_186 = arith.constant 0 : index
    %c0_187 = arith.constant 0 : index
    %672 = vector.load %arg8[%671, %c0_186, %c0_187] : memref<8x8x256xf32, #tpu.memory_space<vmem>>, vector<1x8x128xf32>
    %673 = vector.shape_cast %672 : vector<1x8x128xf32> to vector<8x128xf32>
    %c0_188 = arith.constant 0 : index
    %c0_189 = arith.constant 0 : index
    %674 = vector.load %arg5[%c0_188, %c0_189] : memref<32x128xf32, #tpu.memory_space<vmem>>, vector<32x128xf32>
    %cst_190 = arith.constant dense<0.000000e+00> : vector<8x128xf32>
    %675 = tpu.matmul %612, %674, %cst_190 {dimension_numbers = #tpu.dot_dimension_numbers<[1], [0], [0], [1], [0, 0, 1, 1], [], []>} : vector<8x32xf32>, vector<32x128xf32>, vector<8x128xf32> -> vector<8x128xf32>
    %676 = arith.addf %673, %675 : vector<8x128xf32>
    %677 = arith.index_cast %664 : i32 to index
    %c0_191 = arith.constant 0 : index
    %c128_192 = arith.constant 128 : index
    %678 = vector.load %arg8[%677, %c0_191, %c128_192] : memref<8x8x256xf32, #tpu.memory_space<vmem>>, vector<1x8x128xf32>
    %679 = vector.shape_cast %678 : vector<1x8x128xf32> to vector<8x128xf32>
    %c0_193 = arith.constant 0 : index
    %c0_194 = arith.constant 0 : index
    %680 = vector.load %arg6[%c0_193, %c0_194] : memref<32x128xf32, #tpu.memory_space<vmem>>, vector<32x128xf32>
    %cst_195 = arith.constant dense<0.000000e+00> : vector<8x128xf32>
    %681 = tpu.matmul %653, %680, %cst_195 {dimension_numbers = #tpu.dot_dimension_numbers<[1], [0], [0], [1], [0, 0, 1, 1], [], []>} : vector<8x32xf32>, vector<32x128xf32>, vector<8x128xf32> -> vector<8x128xf32>
    %682 = arith.addf %679, %681 : vector<8x128xf32>
    %683 = vector.extract_strided_slice %676 {offsets = [0, 0], sizes = [8, 32], strides = [1, 1]} : vector<8x128xf32> to vector<8x32xf32>
    %684 = arith.negf %683 : vector<8x32xf32>
    %685 = math.exp %684 : vector<8x32xf32>
    %cst_196 = arith.constant 1.000000e+00 : f32
    %686 = vector.broadcast %cst_196 : f32 to vector<8x32xf32>
    %687 = arith.addf %686, %685 : vector<8x32xf32>
    %688 = arith.divf %686, %687 : vector<8x32xf32>
    %689 = vector.extract_strided_slice %676 {offsets = [0, 32], sizes = [8, 32], strides = [1, 1]} : vector<8x128xf32> to vector<8x32xf32>
    %690 = arith.negf %689 : vector<8x32xf32>
    %691 = math.exp %690 : vector<8x32xf32>
    %cst_197 = arith.constant 1.000000e+00 : f32
    %692 = vector.broadcast %cst_197 : f32 to vector<8x32xf32>
    %693 = arith.addf %692, %691 : vector<8x32xf32>
    %694 = arith.divf %692, %693 : vector<8x32xf32>
    %695 = vector.extract_strided_slice %676 {offsets = [0, 64], sizes = [8, 32], strides = [1, 1]} : vector<8x128xf32> to vector<8x32xf32>
    %696 = math.tanh %695 : vector<8x32xf32>
    %697 = vector.extract_strided_slice %676 {offsets = [0, 96], sizes = [8, 32], strides = [1, 1]} : vector<8x128xf32> to vector<8x32xf32>
    %698 = arith.negf %697 : vector<8x32xf32>
    %699 = math.exp %698 : vector<8x32xf32>
    %cst_198 = arith.constant 1.000000e+00 : f32
    %700 = vector.broadcast %cst_198 : f32 to vector<8x32xf32>
    %701 = arith.addf %700, %699 : vector<8x32xf32>
    %702 = arith.divf %700, %701 : vector<8x32xf32>
    %703 = arith.mulf %694, %605 : vector<8x32xf32>
    %704 = arith.mulf %688, %696 : vector<8x32xf32>
    %705 = arith.addf %703, %704 : vector<8x32xf32>
    %706 = math.tanh %705 : vector<8x32xf32>
    %707 = arith.mulf %702, %706 : vector<8x32xf32>
    %708 = vector.broadcast %667 : vector<8x1xf32> to vector<8x32xf32>
    %709 = arith.mulf %708, %705 : vector<8x32xf32>
    %cst_199 = arith.constant 1.000000e+00 : f32
    %710 = vector.broadcast %cst_199 : f32 to vector<8x1xf32>
    %711 = arith.subf %710, %667 : vector<8x1xf32>
    %712 = vector.broadcast %711 : vector<8x1xf32> to vector<8x32xf32>
    %713 = arith.mulf %712, %605 : vector<8x32xf32>
    %714 = arith.addf %709, %713 : vector<8x32xf32>
    %715 = vector.broadcast %667 : vector<8x1xf32> to vector<8x32xf32>
    %716 = arith.mulf %715, %707 : vector<8x32xf32>
    %cst_200 = arith.constant 1.000000e+00 : f32
    %717 = vector.broadcast %cst_200 : f32 to vector<8x1xf32>
    %718 = arith.subf %717, %667 : vector<8x1xf32>
    %719 = vector.broadcast %718 : vector<8x1xf32> to vector<8x32xf32>
    %720 = arith.mulf %719, %612 : vector<8x32xf32>
    %721 = arith.addf %716, %720 : vector<8x32xf32>
    %722 = vector.broadcast %667 : vector<8x1xf32> to vector<8x32xf32>
    %723 = arith.mulf %722, %707 : vector<8x32xf32>
    %724 = vector.extract_strided_slice %682 {offsets = [0, 0], sizes = [8, 32], strides = [1, 1]} : vector<8x128xf32> to vector<8x32xf32>
    %725 = arith.negf %724 : vector<8x32xf32>
    %726 = math.exp %725 : vector<8x32xf32>
    %cst_201 = arith.constant 1.000000e+00 : f32
    %727 = vector.broadcast %cst_201 : f32 to vector<8x32xf32>
    %728 = arith.addf %727, %726 : vector<8x32xf32>
    %729 = arith.divf %727, %728 : vector<8x32xf32>
    %730 = vector.extract_strided_slice %682 {offsets = [0, 32], sizes = [8, 32], strides = [1, 1]} : vector<8x128xf32> to vector<8x32xf32>
    %731 = arith.negf %730 : vector<8x32xf32>
    %732 = math.exp %731 : vector<8x32xf32>
    %cst_202 = arith.constant 1.000000e+00 : f32
    %733 = vector.broadcast %cst_202 : f32 to vector<8x32xf32>
    %734 = arith.addf %733, %732 : vector<8x32xf32>
    %735 = arith.divf %733, %734 : vector<8x32xf32>
    %736 = vector.extract_strided_slice %682 {offsets = [0, 64], sizes = [8, 32], strides = [1, 1]} : vector<8x128xf32> to vector<8x32xf32>
    %737 = math.tanh %736 : vector<8x32xf32>
    %738 = vector.extract_strided_slice %682 {offsets = [0, 96], sizes = [8, 32], strides = [1, 1]} : vector<8x128xf32> to vector<8x32xf32>
    %739 = arith.negf %738 : vector<8x32xf32>
    %740 = math.exp %739 : vector<8x32xf32>
    %cst_203 = arith.constant 1.000000e+00 : f32
    %741 = vector.broadcast %cst_203 : f32 to vector<8x32xf32>
    %742 = arith.addf %741, %740 : vector<8x32xf32>
    %743 = arith.divf %741, %742 : vector<8x32xf32>
    %744 = arith.mulf %735, %646 : vector<8x32xf32>
    %745 = arith.mulf %729, %737 : vector<8x32xf32>
    %746 = arith.addf %744, %745 : vector<8x32xf32>
    %747 = math.tanh %746 : vector<8x32xf32>
    %748 = arith.mulf %743, %747 : vector<8x32xf32>
    %749 = vector.broadcast %670 : vector<8x1xf32> to vector<8x32xf32>
    %750 = arith.mulf %749, %746 : vector<8x32xf32>
    %cst_204 = arith.constant 1.000000e+00 : f32
    %751 = vector.broadcast %cst_204 : f32 to vector<8x1xf32>
    %752 = arith.subf %751, %670 : vector<8x1xf32>
    %753 = vector.broadcast %752 : vector<8x1xf32> to vector<8x32xf32>
    %754 = arith.mulf %753, %646 : vector<8x32xf32>
    %755 = arith.addf %750, %754 : vector<8x32xf32>
    %756 = vector.broadcast %670 : vector<8x1xf32> to vector<8x32xf32>
    %757 = arith.mulf %756, %748 : vector<8x32xf32>
    %cst_205 = arith.constant 1.000000e+00 : f32
    %758 = vector.broadcast %cst_205 : f32 to vector<8x1xf32>
    %759 = arith.subf %758, %670 : vector<8x1xf32>
    %760 = vector.broadcast %759 : vector<8x1xf32> to vector<8x32xf32>
    %761 = arith.mulf %760, %653 : vector<8x32xf32>
    %762 = arith.addf %757, %761 : vector<8x32xf32>
    %763 = vector.broadcast %670 : vector<8x1xf32> to vector<8x32xf32>
    %764 = arith.mulf %763, %748 : vector<8x32xf32>
    %765 = arith.index_cast %c6_i32 : i32 to index
    %c0_206 = arith.constant 0 : index
    %c0_207 = arith.constant 0 : index
    %766 = vector.load %arg7[%765, %c0_206, %c0_207] : memref<8x8x64xf32, #tpu.memory_space<vmem>>, vector<1x8x32xf32>
    %767 = vector.shape_cast %766 : vector<1x8x32xf32> to vector<8x32xf32>
    %768 = vector.shape_cast %723 : vector<8x32xf32> to vector<1x8x32xf32>
    tpu.vector_store %arg7[%765, %c0_206, %c0_207], %768 {strides = array<i32>} : memref<8x8x64xf32, #tpu.memory_space<vmem>>, vector<1x8x32xf32>,
    %769 = arith.index_cast %664 : i32 to index
    %c0_208 = arith.constant 0 : index
    %c32_209 = arith.constant 32 : index
    %770 = vector.load %arg7[%769, %c0_208, %c32_209] : memref<8x8x64xf32, #tpu.memory_space<vmem>>, vector<1x8x32xf32>
    %771 = vector.shape_cast %770 : vector<1x8x32xf32> to vector<8x32xf32>
    %772 = vector.shape_cast %764 : vector<8x32xf32> to vector<1x8x32xf32>
    tpu.vector_store %arg7[%769, %c0_208, %c32_209], %772 {strides = array<i32>} : memref<8x8x64xf32, #tpu.memory_space<vmem>>, vector<1x8x32xf32>,
    %c7_i32_210 = arith.constant 7 : i32
    %c7_i32_211 = arith.constant 7 : i32
    %773 = arith.subi %c7_i32_211, %c7_i32_210 : i32
    %774 = arith.index_cast %c7_i32_210 : i32 to index
    %c0_212 = arith.constant 0 : index
    %c0_213 = arith.constant 0 : index
    %775 = vector.load %arg2[%774, %c0_212, %c0_213] : memref<8x8x1xf32, #tpu.memory_space<vmem>>, vector<1x8x1xf32>
    %776 = vector.shape_cast %775 : vector<1x8x1xf32> to vector<8x1xf32>
    %777 = arith.index_cast %773 : i32 to index
    %c0_214 = arith.constant 0 : index
    %c0_215 = arith.constant 0 : index
    %778 = vector.load %arg2[%777, %c0_214, %c0_215] : memref<8x8x1xf32, #tpu.memory_space<vmem>>, vector<1x8x1xf32>
    %779 = vector.shape_cast %778 : vector<1x8x1xf32> to vector<8x1xf32>
    %780 = arith.index_cast %c7_i32_210 : i32 to index
    %c0_216 = arith.constant 0 : index
    %c0_217 = arith.constant 0 : index
    %781 = vector.load %arg8[%780, %c0_216, %c0_217] : memref<8x8x256xf32, #tpu.memory_space<vmem>>, vector<1x8x128xf32>
    %782 = vector.shape_cast %781 : vector<1x8x128xf32> to vector<8x128xf32>
    %c0_218 = arith.constant 0 : index
    %c0_219 = arith.constant 0 : index
    %783 = vector.load %arg5[%c0_218, %c0_219] : memref<32x128xf32, #tpu.memory_space<vmem>>, vector<32x128xf32>
    %cst_220 = arith.constant dense<0.000000e+00> : vector<8x128xf32>
    %784 = tpu.matmul %721, %783, %cst_220 {dimension_numbers = #tpu.dot_dimension_numbers<[1], [0], [0], [1], [0, 0, 1, 1], [], []>} : vector<8x32xf32>, vector<32x128xf32>, vector<8x128xf32> -> vector<8x128xf32>
    %785 = arith.addf %782, %784 : vector<8x128xf32>
    %786 = arith.index_cast %773 : i32 to index
    %c0_221 = arith.constant 0 : index
    %c128_222 = arith.constant 128 : index
    %787 = vector.load %arg8[%786, %c0_221, %c128_222] : memref<8x8x256xf32, #tpu.memory_space<vmem>>, vector<1x8x128xf32>
    %788 = vector.shape_cast %787 : vector<1x8x128xf32> to vector<8x128xf32>
    %c0_223 = arith.constant 0 : index
    %c0_224 = arith.constant 0 : index
    %789 = vector.load %arg6[%c0_223, %c0_224] : memref<32x128xf32, #tpu.memory_space<vmem>>, vector<32x128xf32>
    %cst_225 = arith.constant dense<0.000000e+00> : vector<8x128xf32>
    %790 = tpu.matmul %762, %789, %cst_225 {dimension_numbers = #tpu.dot_dimension_numbers<[1], [0], [0], [1], [0, 0, 1, 1], [], []>} : vector<8x32xf32>, vector<32x128xf32>, vector<8x128xf32> -> vector<8x128xf32>
    %791 = arith.addf %788, %790 : vector<8x128xf32>
    %792 = vector.extract_strided_slice %785 {offsets = [0, 0], sizes = [8, 32], strides = [1, 1]} : vector<8x128xf32> to vector<8x32xf32>
    %793 = arith.negf %792 : vector<8x32xf32>
    %794 = math.exp %793 : vector<8x32xf32>
    %cst_226 = arith.constant 1.000000e+00 : f32
    %795 = vector.broadcast %cst_226 : f32 to vector<8x32xf32>
    %796 = arith.addf %795, %794 : vector<8x32xf32>
    %797 = arith.divf %795, %796 : vector<8x32xf32>
    %798 = vector.extract_strided_slice %785 {offsets = [0, 32], sizes = [8, 32], strides = [1, 1]} : vector<8x128xf32> to vector<8x32xf32>
    %799 = arith.negf %798 : vector<8x32xf32>
    %800 = math.exp %799 : vector<8x32xf32>
    %cst_227 = arith.constant 1.000000e+00 : f32
    %801 = vector.broadcast %cst_227 : f32 to vector<8x32xf32>
    %802 = arith.addf %801, %800 : vector<8x32xf32>
    %803 = arith.divf %801, %802 : vector<8x32xf32>
    %804 = vector.extract_strided_slice %785 {offsets = [0, 64], sizes = [8, 32], strides = [1, 1]} : vector<8x128xf32> to vector<8x32xf32>
    %805 = math.tanh %804 : vector<8x32xf32>
    %806 = vector.extract_strided_slice %785 {offsets = [0, 96], sizes = [8, 32], strides = [1, 1]} : vector<8x128xf32> to vector<8x32xf32>
    %807 = arith.negf %806 : vector<8x32xf32>
    %808 = math.exp %807 : vector<8x32xf32>
    %cst_228 = arith.constant 1.000000e+00 : f32
    %809 = vector.broadcast %cst_228 : f32 to vector<8x32xf32>
    %810 = arith.addf %809, %808 : vector<8x32xf32>
    %811 = arith.divf %809, %810 : vector<8x32xf32>
    %812 = arith.mulf %803, %714 : vector<8x32xf32>
    %813 = arith.mulf %797, %805 : vector<8x32xf32>
    %814 = arith.addf %812, %813 : vector<8x32xf32>
    %815 = math.tanh %814 : vector<8x32xf32>
    %816 = arith.mulf %811, %815 : vector<8x32xf32>
    %817 = vector.broadcast %776 : vector<8x1xf32> to vector<8x32xf32>
    %818 = arith.mulf %817, %814 : vector<8x32xf32>
    %cst_229 = arith.constant 1.000000e+00 : f32
    %819 = vector.broadcast %cst_229 : f32 to vector<8x1xf32>
    %820 = arith.subf %819, %776 : vector<8x1xf32>
    %821 = vector.broadcast %820 : vector<8x1xf32> to vector<8x32xf32>
    %822 = arith.mulf %821, %714 : vector<8x32xf32>
    %823 = arith.addf %818, %822 : vector<8x32xf32>
    %824 = vector.broadcast %776 : vector<8x1xf32> to vector<8x32xf32>
    %825 = arith.mulf %824, %816 : vector<8x32xf32>
    %cst_230 = arith.constant 1.000000e+00 : f32
    %826 = vector.broadcast %cst_230 : f32 to vector<8x1xf32>
    %827 = arith.subf %826, %776 : vector<8x1xf32>
    %828 = vector.broadcast %827 : vector<8x1xf32> to vector<8x32xf32>
    %829 = arith.mulf %828, %721 : vector<8x32xf32>
    %830 = arith.addf %825, %829 : vector<8x32xf32>
    %831 = vector.broadcast %776 : vector<8x1xf32> to vector<8x32xf32>
    %832 = arith.mulf %831, %816 : vector<8x32xf32>
    %833 = vector.extract_strided_slice %791 {offsets = [0, 0], sizes = [8, 32], strides = [1, 1]} : vector<8x128xf32> to vector<8x32xf32>
    %834 = arith.negf %833 : vector<8x32xf32>
    %835 = math.exp %834 : vector<8x32xf32>
    %cst_231 = arith.constant 1.000000e+00 : f32
    %836 = vector.broadcast %cst_231 : f32 to vector<8x32xf32>
    %837 = arith.addf %836, %835 : vector<8x32xf32>
    %838 = arith.divf %836, %837 : vector<8x32xf32>
    %839 = vector.extract_strided_slice %791 {offsets = [0, 32], sizes = [8, 32], strides = [1, 1]} : vector<8x128xf32> to vector<8x32xf32>
    %840 = arith.negf %839 : vector<8x32xf32>
    %841 = math.exp %840 : vector<8x32xf32>
    %cst_232 = arith.constant 1.000000e+00 : f32
    %842 = vector.broadcast %cst_232 : f32 to vector<8x32xf32>
    %843 = arith.addf %842, %841 : vector<8x32xf32>
    %844 = arith.divf %842, %843 : vector<8x32xf32>
    %845 = vector.extract_strided_slice %791 {offsets = [0, 64], sizes = [8, 32], strides = [1, 1]} : vector<8x128xf32> to vector<8x32xf32>
    %846 = math.tanh %845 : vector<8x32xf32>
    %847 = vector.extract_strided_slice %791 {offsets = [0, 96], sizes = [8, 32], strides = [1, 1]} : vector<8x128xf32> to vector<8x32xf32>
    %848 = arith.negf %847 : vector<8x32xf32>
    %849 = math.exp %848 : vector<8x32xf32>
    %cst_233 = arith.constant 1.000000e+00 : f32
    %850 = vector.broadcast %cst_233 : f32 to vector<8x32xf32>
    %851 = arith.addf %850, %849 : vector<8x32xf32>
    %852 = arith.divf %850, %851 : vector<8x32xf32>
    %853 = arith.mulf %844, %755 : vector<8x32xf32>
    %854 = arith.mulf %838, %846 : vector<8x32xf32>
    %855 = arith.addf %853, %854 : vector<8x32xf32>
    %856 = math.tanh %855 : vector<8x32xf32>
    %857 = arith.mulf %852, %856 : vector<8x32xf32>
    %858 = vector.broadcast %779 : vector<8x1xf32> to vector<8x32xf32>
    %859 = arith.mulf %858, %855 : vector<8x32xf32>
    %cst_234 = arith.constant 1.000000e+00 : f32
    %860 = vector.broadcast %cst_234 : f32 to vector<8x1xf32>
    %861 = arith.subf %860, %779 : vector<8x1xf32>
    %862 = vector.broadcast %861 : vector<8x1xf32> to vector<8x32xf32>
    %863 = arith.mulf %862, %755 : vector<8x32xf32>
    %864 = arith.addf %859, %863 : vector<8x32xf32>
    %865 = vector.broadcast %779 : vector<8x1xf32> to vector<8x32xf32>
    %866 = arith.mulf %865, %857 : vector<8x32xf32>
    %cst_235 = arith.constant 1.000000e+00 : f32
    %867 = vector.broadcast %cst_235 : f32 to vector<8x1xf32>
    %868 = arith.subf %867, %779 : vector<8x1xf32>
    %869 = vector.broadcast %868 : vector<8x1xf32> to vector<8x32xf32>
    %870 = arith.mulf %869, %762 : vector<8x32xf32>
    %871 = arith.addf %866, %870 : vector<8x32xf32>
    %872 = vector.broadcast %779 : vector<8x1xf32> to vector<8x32xf32>
    %873 = arith.mulf %872, %857 : vector<8x32xf32>
    %874 = arith.index_cast %c7_i32_210 : i32 to index
    %c0_236 = arith.constant 0 : index
    %c0_237 = arith.constant 0 : index
    %875 = vector.load %arg7[%874, %c0_236, %c0_237] : memref<8x8x64xf32, #tpu.memory_space<vmem>>, vector<1x8x32xf32>
    %876 = vector.shape_cast %875 : vector<1x8x32xf32> to vector<8x32xf32>
    %877 = vector.shape_cast %832 : vector<8x32xf32> to vector<1x8x32xf32>
    tpu.vector_store %arg7[%874, %c0_236, %c0_237], %877 {strides = array<i32>} : memref<8x8x64xf32, #tpu.memory_space<vmem>>, vector<1x8x32xf32>,
    %878 = arith.index_cast %773 : i32 to index
    %c0_238 = arith.constant 0 : index
    %c32_239 = arith.constant 32 : index
    %879 = vector.load %arg7[%878, %c0_238, %c32_239] : memref<8x8x64xf32, #tpu.memory_space<vmem>>, vector<1x8x32xf32>
    %880 = vector.shape_cast %879 : vector<1x8x32xf32> to vector<8x32xf32>
    %881 = vector.shape_cast %873 : vector<8x32xf32> to vector<1x8x32xf32>
    tpu.vector_store %arg7[%878, %c0_238, %c32_239], %881 {strides = array<i32>} : memref<8x8x64xf32, #tpu.memory_space<vmem>>, vector<1x8x32xf32>,
    %c8_i32 = arith.constant 8 : i32
    return
  }
  func.func @transform_0(%arg0: i32) -> (i32, i32, i32) {
    %c0_i32 = arith.constant 0 : i32
    %c0_i32_0 = arith.constant 0 : i32
    %c0_i32_1 = arith.constant 0 : i32
    %c0_i32_2 = arith.constant 0 : i32
    return %c0_i32, %c0_i32_0, %c0_i32_1 : i32, i32, i32
  }
  func.func @transform_1(%arg0: i32) -> (i32, i32, i32) {
    %c0_i32 = arith.constant 0 : i32
    %c0_i32_0 = arith.constant 0 : i32
    %c0_i32_1 = arith.constant 0 : i32
    %c0_i32_2 = arith.constant 0 : i32
    return %c0_i32, %c0_i32_0, %c0_i32_1 : i32, i32, i32
  }
  func.func @transform_2(%arg0: i32) -> (i32, i32) {
    %c0_i32 = arith.constant 0 : i32
    %c0_i32_0 = arith.constant 0 : i32
    %c0_i32_1 = arith.constant 0 : i32
    return %c0_i32, %c0_i32_0 : i32, i32
  }
  func.func @transform_3(%arg0: i32) -> (i32, i32) {
    %c0_i32 = arith.constant 0 : i32
    %c0_i32_0 = arith.constant 0 : i32
    %c0_i32_1 = arith.constant 0 : i32
    return %c0_i32, %c0_i32_0 : i32, i32
  }
  func.func @transform_4(%arg0: i32) -> (i32, i32) {
    %c0_i32 = arith.constant 0 : i32
    %c0_i32_0 = arith.constant 0 : i32
    %c0_i32_1 = arith.constant 0 : i32
    return %c0_i32, %c0_i32_0 : i32, i32
  }
  func.func @transform_5(%arg0: i32) -> (i32, i32) {
    %c0_i32 = arith.constant 0 : i32
    %c0_i32_0 = arith.constant 0 : i32
    %c0_i32_1 = arith.constant 0 : i32
    return %c0_i32, %c0_i32_0 : i32, i32
  }
  func.func @transform_6(%arg0: i32) -> (i32, i32, i32) {
    %c0_i32 = arith.constant 0 : i32
    %c0_i32_0 = arith.constant 0 : i32
    %c0_i32_1 = arith.constant 0 : i32
    %c0_i32_2 = arith.constant 0 : i32
    return %c0_i32, %c0_i32_0, %c0_i32_1 : i32, i32, i32
  }
}

module attributes {stable_mosaic.version = 11 : i64} {
  func.func @_bilstm_kernel(%arg0: i32, %arg1: memref<8x8x64xf32, #tpu.memory_space<vmem>>, %arg2: memref<8x8x1xf32, #tpu.memory_space<vmem>>, %arg3: memref<64x256xf32, #tpu.memory_space<vmem>>, %arg4: memref<1x256xf32, #tpu.memory_space<vmem>>, %arg5: memref<32x128xf32, #tpu.memory_space<vmem>>, %arg6: memref<32x128xf32, #tpu.memory_space<vmem>>, %arg7: memref<8x8x64xf32, #tpu.memory_space<vmem>>, %arg8: memref<8x8x256xf32, #tpu.memory_space<vmem>>) attributes {dimension_semantics = [#tpu.dimension_semantics<arbitrary>], iteration_bounds = array<i64: 1>, scalar_prefetch = 0 : i64, scratch_operands = 1 : i64, tpu.core_type = #tpu.core_type<tc>, window_params = [{pipeline_mode = #tpu.pipeline_mode<synchronous>, transform_indices = @transform_0, window_bounds = array<i64: 8, 8, 64>}, {pipeline_mode = #tpu.pipeline_mode<synchronous>, transform_indices = @transform_1, window_bounds = array<i64: 8, 8, 1>}, {pipeline_mode = #tpu.pipeline_mode<synchronous>, transform_indices = @transform_2, window_bounds = array<i64: 64, 256>}, {pipeline_mode = #tpu.pipeline_mode<synchronous>, transform_indices = @transform_3, window_bounds = array<i64: 1, 256>}, {pipeline_mode = #tpu.pipeline_mode<synchronous>, transform_indices = @transform_4, window_bounds = array<i64: 32, 128>}, {pipeline_mode = #tpu.pipeline_mode<synchronous>, transform_indices = @transform_5, window_bounds = array<i64: 32, 128>}, {pipeline_mode = #tpu.pipeline_mode<synchronous>, transform_indices = @transform_6, window_bounds = array<i64: 8, 8, 64>}]} {
    %c0 = arith.constant 0 : index
    %c0_0 = arith.constant 0 : index
    %c0_1 = arith.constant 0 : index
    %0 = vector.load %arg1[%c0, %c0_0, %c0_1] : memref<8x8x64xf32, #tpu.memory_space<vmem>>, vector<8x8x64xf32>
    %1 = vector.shape_cast %0 : vector<8x8x64xf32> to vector<64x64xf32>
    %c0_2 = arith.constant 0 : index
    %c0_3 = arith.constant 0 : index
    %2 = vector.load %arg3[%c0_2, %c0_3] : memref<64x256xf32, #tpu.memory_space<vmem>>, vector<64x256xf32>
    %cst = arith.constant dense<0.000000e+00> : vector<64x256xf32>
    %3 = tpu.matmul %1, %2, %cst {dimension_numbers = #tpu.dot_dimension_numbers<[1], [0], [0], [1], [0, 0, 1, 1], [], []>} : vector<64x64xf32>, vector<64x256xf32>, vector<64x256xf32> -> vector<64x256xf32>
    %c0_4 = arith.constant 0 : index
    %c0_5 = arith.constant 0 : index
    %4 = vector.load %arg4[%c0_4, %c0_5] : memref<1x256xf32, #tpu.memory_space<vmem>>, vector<1x256xf32>
    %5 = vector.broadcast %4 : vector<1x256xf32> to vector<64x256xf32>
    %6 = arith.addf %3, %5 : vector<64x256xf32>
    %7 = vector.shape_cast %6 : vector<64x256xf32> to vector<8x8x256xf32>
    %c0_6 = arith.constant 0 : index
    %c0_7 = arith.constant 0 : index
    %c0_8 = arith.constant 0 : index
    %8 = vector.load %arg8[%c0_6, %c0_7, %c0_8] : memref<8x8x256xf32, #tpu.memory_space<vmem>>, vector<8x8x256xf32>
    tpu.vector_store %arg8[%c0_6, %c0_7, %c0_8], %7 {strides = array<i32>} : memref<8x8x256xf32, #tpu.memory_space<vmem>>, vector<8x8x256xf32>,
    %cst_9 = arith.constant 0.000000e+00 : f32
    %9 = vector.broadcast %cst_9 : f32 to vector<8x32xf32>
    %c0_i32 = arith.constant 0 : i32
    %c7_i32 = arith.constant 7 : i32
    %10 = arith.subi %c7_i32, %c0_i32 : i32
    %11 = arith.index_cast %c0_i32 : i32 to index
    %c0_10 = arith.constant 0 : index
    %c0_11 = arith.constant 0 : index
    %12 = vector.load %arg2[%11, %c0_10, %c0_11] : memref<8x8x1xf32, #tpu.memory_space<vmem>>, vector<1x8x1xf32>
    %13 = vector.shape_cast %12 : vector<1x8x1xf32> to vector<8x1xf32>
    %14 = arith.index_cast %10 : i32 to index
    %c0_12 = arith.constant 0 : index
    %c0_13 = arith.constant 0 : index
    %15 = vector.load %arg2[%14, %c0_12, %c0_13] : memref<8x8x1xf32, #tpu.memory_space<vmem>>, vector<1x8x1xf32>
    %16 = vector.shape_cast %15 : vector<1x8x1xf32> to vector<8x1xf32>
    %17 = arith.index_cast %c0_i32 : i32 to index
    %c0_14 = arith.constant 0 : index
    %c0_15 = arith.constant 0 : index
    %18 = vector.load %arg8[%17, %c0_14, %c0_15] : memref<8x8x256xf32, #tpu.memory_space<vmem>>, vector<1x8x128xf32>
    %19 = vector.shape_cast %18 : vector<1x8x128xf32> to vector<8x128xf32>
    %c0_16 = arith.constant 0 : index
    %c0_17 = arith.constant 0 : index
    %20 = vector.load %arg5[%c0_16, %c0_17] : memref<32x128xf32, #tpu.memory_space<vmem>>, vector<32x128xf32>
    %cst_18 = arith.constant dense<0.000000e+00> : vector<8x128xf32>
    %21 = tpu.matmul %9, %20, %cst_18 {dimension_numbers = #tpu.dot_dimension_numbers<[1], [0], [0], [1], [0, 0, 1, 1], [], []>} : vector<8x32xf32>, vector<32x128xf32>, vector<8x128xf32> -> vector<8x128xf32>
    %22 = arith.addf %19, %21 : vector<8x128xf32>
    %23 = arith.index_cast %10 : i32 to index
    %c0_19 = arith.constant 0 : index
    %c128 = arith.constant 128 : index
    %24 = vector.load %arg8[%23, %c0_19, %c128] : memref<8x8x256xf32, #tpu.memory_space<vmem>>, vector<1x8x128xf32>
    %25 = vector.shape_cast %24 : vector<1x8x128xf32> to vector<8x128xf32>
    %c0_20 = arith.constant 0 : index
    %c0_21 = arith.constant 0 : index
    %26 = vector.load %arg6[%c0_20, %c0_21] : memref<32x128xf32, #tpu.memory_space<vmem>>, vector<32x128xf32>
    %cst_22 = arith.constant dense<0.000000e+00> : vector<8x128xf32>
    %27 = tpu.matmul %9, %26, %cst_22 {dimension_numbers = #tpu.dot_dimension_numbers<[1], [0], [0], [1], [0, 0, 1, 1], [], []>} : vector<8x32xf32>, vector<32x128xf32>, vector<8x128xf32> -> vector<8x128xf32>
    %28 = arith.addf %25, %27 : vector<8x128xf32>
    %29 = vector.extract_strided_slice %22 {offsets = [0, 0], sizes = [8, 32], strides = [1, 1]} : vector<8x128xf32> to vector<8x32xf32>
    %30 = arith.negf %29 : vector<8x32xf32>
    %31 = math.exp %30 : vector<8x32xf32>
    %cst_23 = arith.constant 1.000000e+00 : f32
    %32 = vector.broadcast %cst_23 : f32 to vector<8x32xf32>
    %33 = arith.addf %32, %31 : vector<8x32xf32>
    %34 = arith.divf %32, %33 : vector<8x32xf32>
    %35 = vector.extract_strided_slice %22 {offsets = [0, 32], sizes = [8, 32], strides = [1, 1]} : vector<8x128xf32> to vector<8x32xf32>
    %36 = arith.negf %35 : vector<8x32xf32>
    %37 = math.exp %36 : vector<8x32xf32>
    %cst_24 = arith.constant 1.000000e+00 : f32
    %38 = vector.broadcast %cst_24 : f32 to vector<8x32xf32>
    %39 = arith.addf %38, %37 : vector<8x32xf32>
    %40 = arith.divf %38, %39 : vector<8x32xf32>
    %41 = vector.extract_strided_slice %22 {offsets = [0, 64], sizes = [8, 32], strides = [1, 1]} : vector<8x128xf32> to vector<8x32xf32>
    %42 = math.tanh %41 : vector<8x32xf32>
    %43 = vector.extract_strided_slice %22 {offsets = [0, 96], sizes = [8, 32], strides = [1, 1]} : vector<8x128xf32> to vector<8x32xf32>
    %44 = arith.negf %43 : vector<8x32xf32>
    %45 = math.exp %44 : vector<8x32xf32>
    %cst_25 = arith.constant 1.000000e+00 : f32
    %46 = vector.broadcast %cst_25 : f32 to vector<8x32xf32>
    %47 = arith.addf %46, %45 : vector<8x32xf32>
    %48 = arith.divf %46, %47 : vector<8x32xf32>
    %49 = arith.mulf %40, %9 : vector<8x32xf32>
    %50 = arith.mulf %34, %42 : vector<8x32xf32>
    %51 = arith.addf %49, %50 : vector<8x32xf32>
    %52 = math.tanh %51 : vector<8x32xf32>
    %53 = arith.mulf %48, %52 : vector<8x32xf32>
    %54 = vector.broadcast %13 : vector<8x1xf32> to vector<8x32xf32>
    %55 = arith.mulf %54, %51 : vector<8x32xf32>
    %cst_26 = arith.constant 1.000000e+00 : f32
    %56 = vector.broadcast %cst_26 : f32 to vector<8x1xf32>
    %57 = arith.subf %56, %13 : vector<8x1xf32>
    %58 = vector.broadcast %57 : vector<8x1xf32> to vector<8x32xf32>
    %59 = arith.mulf %58, %9 : vector<8x32xf32>
    %60 = arith.addf %55, %59 : vector<8x32xf32>
    %61 = vector.broadcast %13 : vector<8x1xf32> to vector<8x32xf32>
    %62 = arith.mulf %61, %53 : vector<8x32xf32>
    %cst_27 = arith.constant 1.000000e+00 : f32
    %63 = vector.broadcast %cst_27 : f32 to vector<8x1xf32>
    %64 = arith.subf %63, %13 : vector<8x1xf32>
    %65 = vector.broadcast %64 : vector<8x1xf32> to vector<8x32xf32>
    %66 = arith.mulf %65, %9 : vector<8x32xf32>
    %67 = arith.addf %62, %66 : vector<8x32xf32>
    %68 = vector.broadcast %13 : vector<8x1xf32> to vector<8x32xf32>
    %69 = arith.mulf %68, %53 : vector<8x32xf32>
    %70 = vector.extract_strided_slice %28 {offsets = [0, 0], sizes = [8, 32], strides = [1, 1]} : vector<8x128xf32> to vector<8x32xf32>
    %71 = arith.negf %70 : vector<8x32xf32>
    %72 = math.exp %71 : vector<8x32xf32>
    %cst_28 = arith.constant 1.000000e+00 : f32
    %73 = vector.broadcast %cst_28 : f32 to vector<8x32xf32>
    %74 = arith.addf %73, %72 : vector<8x32xf32>
    %75 = arith.divf %73, %74 : vector<8x32xf32>
    %76 = vector.extract_strided_slice %28 {offsets = [0, 32], sizes = [8, 32], strides = [1, 1]} : vector<8x128xf32> to vector<8x32xf32>
    %77 = arith.negf %76 : vector<8x32xf32>
    %78 = math.exp %77 : vector<8x32xf32>
    %cst_29 = arith.constant 1.000000e+00 : f32
    %79 = vector.broadcast %cst_29 : f32 to vector<8x32xf32>
    %80 = arith.addf %79, %78 : vector<8x32xf32>
    %81 = arith.divf %79, %80 : vector<8x32xf32>
    %82 = vector.extract_strided_slice %28 {offsets = [0, 64], sizes = [8, 32], strides = [1, 1]} : vector<8x128xf32> to vector<8x32xf32>
    %83 = math.tanh %82 : vector<8x32xf32>
    %84 = vector.extract_strided_slice %28 {offsets = [0, 96], sizes = [8, 32], strides = [1, 1]} : vector<8x128xf32> to vector<8x32xf32>
    %85 = arith.negf %84 : vector<8x32xf32>
    %86 = math.exp %85 : vector<8x32xf32>
    %cst_30 = arith.constant 1.000000e+00 : f32
    %87 = vector.broadcast %cst_30 : f32 to vector<8x32xf32>
    %88 = arith.addf %87, %86 : vector<8x32xf32>
    %89 = arith.divf %87, %88 : vector<8x32xf32>
    %90 = arith.mulf %81, %9 : vector<8x32xf32>
    %91 = arith.mulf %75, %83 : vector<8x32xf32>
    %92 = arith.addf %90, %91 : vector<8x32xf32>
    %93 = math.tanh %92 : vector<8x32xf32>
    %94 = arith.mulf %89, %93 : vector<8x32xf32>
    %95 = vector.broadcast %16 : vector<8x1xf32> to vector<8x32xf32>
    %96 = arith.mulf %95, %92 : vector<8x32xf32>
    %cst_31 = arith.constant 1.000000e+00 : f32
    %97 = vector.broadcast %cst_31 : f32 to vector<8x1xf32>
    %98 = arith.subf %97, %16 : vector<8x1xf32>
    %99 = vector.broadcast %98 : vector<8x1xf32> to vector<8x32xf32>
    %100 = arith.mulf %99, %9 : vector<8x32xf32>
    %101 = arith.addf %96, %100 : vector<8x32xf32>
    %102 = vector.broadcast %16 : vector<8x1xf32> to vector<8x32xf32>
    %103 = arith.mulf %102, %94 : vector<8x32xf32>
    %cst_32 = arith.constant 1.000000e+00 : f32
    %104 = vector.broadcast %cst_32 : f32 to vector<8x1xf32>
    %105 = arith.subf %104, %16 : vector<8x1xf32>
    %106 = vector.broadcast %105 : vector<8x1xf32> to vector<8x32xf32>
    %107 = arith.mulf %106, %9 : vector<8x32xf32>
    %108 = arith.addf %103, %107 : vector<8x32xf32>
    %109 = vector.broadcast %16 : vector<8x1xf32> to vector<8x32xf32>
    %110 = arith.mulf %109, %94 : vector<8x32xf32>
    %111 = arith.index_cast %c0_i32 : i32 to index
    %c0_33 = arith.constant 0 : index
    %c0_34 = arith.constant 0 : index
    %112 = vector.load %arg7[%111, %c0_33, %c0_34] : memref<8x8x64xf32, #tpu.memory_space<vmem>>, vector<1x8x32xf32>
    %113 = vector.shape_cast %112 : vector<1x8x32xf32> to vector<8x32xf32>
    %114 = vector.shape_cast %69 : vector<8x32xf32> to vector<1x8x32xf32>
    tpu.vector_store %arg7[%111, %c0_33, %c0_34], %114 {strides = array<i32>} : memref<8x8x64xf32, #tpu.memory_space<vmem>>, vector<1x8x32xf32>,
    %115 = arith.index_cast %10 : i32 to index
    %c0_35 = arith.constant 0 : index
    %c32 = arith.constant 32 : index
    %116 = vector.load %arg7[%115, %c0_35, %c32] : memref<8x8x64xf32, #tpu.memory_space<vmem>>, vector<1x8x32xf32>
    %117 = vector.shape_cast %116 : vector<1x8x32xf32> to vector<8x32xf32>
    %118 = vector.shape_cast %110 : vector<8x32xf32> to vector<1x8x32xf32>
    tpu.vector_store %arg7[%115, %c0_35, %c32], %118 {strides = array<i32>} : memref<8x8x64xf32, #tpu.memory_space<vmem>>, vector<1x8x32xf32>,
    %c1_i32 = arith.constant 1 : i32
    %c7_i32_36 = arith.constant 7 : i32
    %119 = arith.subi %c7_i32_36, %c1_i32 : i32
    %120 = arith.index_cast %c1_i32 : i32 to index
    %c0_37 = arith.constant 0 : index
    %c0_38 = arith.constant 0 : index
    %121 = vector.load %arg2[%120, %c0_37, %c0_38] : memref<8x8x1xf32, #tpu.memory_space<vmem>>, vector<1x8x1xf32>
    %122 = vector.shape_cast %121 : vector<1x8x1xf32> to vector<8x1xf32>
    %123 = arith.index_cast %119 : i32 to index
    %c0_39 = arith.constant 0 : index
    %c0_40 = arith.constant 0 : index
    %124 = vector.load %arg2[%123, %c0_39, %c0_40] : memref<8x8x1xf32, #tpu.memory_space<vmem>>, vector<1x8x1xf32>
    %125 = vector.shape_cast %124 : vector<1x8x1xf32> to vector<8x1xf32>
    %126 = arith.index_cast %c1_i32 : i32 to index
    %c0_41 = arith.constant 0 : index
    %c0_42 = arith.constant 0 : index
    %127 = vector.load %arg8[%126, %c0_41, %c0_42] : memref<8x8x256xf32, #tpu.memory_space<vmem>>, vector<1x8x128xf32>
    %128 = vector.shape_cast %127 : vector<1x8x128xf32> to vector<8x128xf32>
    %c0_43 = arith.constant 0 : index
    %c0_44 = arith.constant 0 : index
    %129 = vector.load %arg5[%c0_43, %c0_44] : memref<32x128xf32, #tpu.memory_space<vmem>>, vector<32x128xf32>
    %cst_45 = arith.constant dense<0.000000e+00> : vector<8x128xf32>
    %130 = tpu.matmul %67, %129, %cst_45 {dimension_numbers = #tpu.dot_dimension_numbers<[1], [0], [0], [1], [0, 0, 1, 1], [], []>} : vector<8x32xf32>, vector<32x128xf32>, vector<8x128xf32> -> vector<8x128xf32>
    %131 = arith.addf %128, %130 : vector<8x128xf32>
    %132 = arith.index_cast %119 : i32 to index
    %c0_46 = arith.constant 0 : index
    %c128_47 = arith.constant 128 : index
    %133 = vector.load %arg8[%132, %c0_46, %c128_47] : memref<8x8x256xf32, #tpu.memory_space<vmem>>, vector<1x8x128xf32>
    %134 = vector.shape_cast %133 : vector<1x8x128xf32> to vector<8x128xf32>
    %c0_48 = arith.constant 0 : index
    %c0_49 = arith.constant 0 : index
    %135 = vector.load %arg6[%c0_48, %c0_49] : memref<32x128xf32, #tpu.memory_space<vmem>>, vector<32x128xf32>
    %cst_50 = arith.constant dense<0.000000e+00> : vector<8x128xf32>
    %136 = tpu.matmul %108, %135, %cst_50 {dimension_numbers = #tpu.dot_dimension_numbers<[1], [0], [0], [1], [0, 0, 1, 1], [], []>} : vector<8x32xf32>, vector<32x128xf32>, vector<8x128xf32> -> vector<8x128xf32>
    %137 = arith.addf %134, %136 : vector<8x128xf32>
    %138 = vector.extract_strided_slice %131 {offsets = [0, 0], sizes = [8, 32], strides = [1, 1]} : vector<8x128xf32> to vector<8x32xf32>
    %139 = arith.negf %138 : vector<8x32xf32>
    %140 = math.exp %139 : vector<8x32xf32>
    %cst_51 = arith.constant 1.000000e+00 : f32
    %141 = vector.broadcast %cst_51 : f32 to vector<8x32xf32>
    %142 = arith.addf %141, %140 : vector<8x32xf32>
    %143 = arith.divf %141, %142 : vector<8x32xf32>
    %144 = vector.extract_strided_slice %131 {offsets = [0, 32], sizes = [8, 32], strides = [1, 1]} : vector<8x128xf32> to vector<8x32xf32>
    %145 = arith.negf %144 : vector<8x32xf32>
    %146 = math.exp %145 : vector<8x32xf32>
    %cst_52 = arith.constant 1.000000e+00 : f32
    %147 = vector.broadcast %cst_52 : f32 to vector<8x32xf32>
    %148 = arith.addf %147, %146 : vector<8x32xf32>
    %149 = arith.divf %147, %148 : vector<8x32xf32>
    %150 = vector.extract_strided_slice %131 {offsets = [0, 64], sizes = [8, 32], strides = [1, 1]} : vector<8x128xf32> to vector<8x32xf32>
    %151 = math.tanh %150 : vector<8x32xf32>
    %152 = vector.extract_strided_slice %131 {offsets = [0, 96], sizes = [8, 32], strides = [1, 1]} : vector<8x128xf32> to vector<8x32xf32>
    %153 = arith.negf %152 : vector<8x32xf32>
    %154 = math.exp %153 : vector<8x32xf32>
    %cst_53 = arith.constant 1.000000e+00 : f32
    %155 = vector.broadcast %cst_53 : f32 to vector<8x32xf32>
    %156 = arith.addf %155, %154 : vector<8x32xf32>
    %157 = arith.divf %155, %156 : vector<8x32xf32>
    %158 = arith.mulf %149, %60 : vector<8x32xf32>
    %159 = arith.mulf %143, %151 : vector<8x32xf32>
    %160 = arith.addf %158, %159 : vector<8x32xf32>
    %161 = math.tanh %160 : vector<8x32xf32>
    %162 = arith.mulf %157, %161 : vector<8x32xf32>
    %163 = vector.broadcast %122 : vector<8x1xf32> to vector<8x32xf32>
    %164 = arith.mulf %163, %160 : vector<8x32xf32>
    %cst_54 = arith.constant 1.000000e+00 : f32
    %165 = vector.broadcast %cst_54 : f32 to vector<8x1xf32>
    %166 = arith.subf %165, %122 : vector<8x1xf32>
    %167 = vector.broadcast %166 : vector<8x1xf32> to vector<8x32xf32>
    %168 = arith.mulf %167, %60 : vector<8x32xf32>
    %169 = arith.addf %164, %168 : vector<8x32xf32>
    %170 = vector.broadcast %122 : vector<8x1xf32> to vector<8x32xf32>
    %171 = arith.mulf %170, %162 : vector<8x32xf32>
    %cst_55 = arith.constant 1.000000e+00 : f32
    %172 = vector.broadcast %cst_55 : f32 to vector<8x1xf32>
    %173 = arith.subf %172, %122 : vector<8x1xf32>
    %174 = vector.broadcast %173 : vector<8x1xf32> to vector<8x32xf32>
    %175 = arith.mulf %174, %67 : vector<8x32xf32>
    %176 = arith.addf %171, %175 : vector<8x32xf32>
    %177 = vector.broadcast %122 : vector<8x1xf32> to vector<8x32xf32>
    %178 = arith.mulf %177, %162 : vector<8x32xf32>
    %179 = vector.extract_strided_slice %137 {offsets = [0, 0], sizes = [8, 32], strides = [1, 1]} : vector<8x128xf32> to vector<8x32xf32>
    %180 = arith.negf %179 : vector<8x32xf32>
    %181 = math.exp %180 : vector<8x32xf32>
    %cst_56 = arith.constant 1.000000e+00 : f32
    %182 = vector.broadcast %cst_56 : f32 to vector<8x32xf32>
    %183 = arith.addf %182, %181 : vector<8x32xf32>
    %184 = arith.divf %182, %183 : vector<8x32xf32>
    %185 = vector.extract_strided_slice %137 {offsets = [0, 32], sizes = [8, 32], strides = [1, 1]} : vector<8x128xf32> to vector<8x32xf32>
    %186 = arith.negf %185 : vector<8x32xf32>
    %187 = math.exp %186 : vector<8x32xf32>
    %cst_57 = arith.constant 1.000000e+00 : f32
    %188 = vector.broadcast %cst_57 : f32 to vector<8x32xf32>
    %189 = arith.addf %188, %187 : vector<8x32xf32>
    %190 = arith.divf %188, %189 : vector<8x32xf32>
    %191 = vector.extract_strided_slice %137 {offsets = [0, 64], sizes = [8, 32], strides = [1, 1]} : vector<8x128xf32> to vector<8x32xf32>
    %192 = math.tanh %191 : vector<8x32xf32>
    %193 = vector.extract_strided_slice %137 {offsets = [0, 96], sizes = [8, 32], strides = [1, 1]} : vector<8x128xf32> to vector<8x32xf32>
    %194 = arith.negf %193 : vector<8x32xf32>
    %195 = math.exp %194 : vector<8x32xf32>
    %cst_58 = arith.constant 1.000000e+00 : f32
    %196 = vector.broadcast %cst_58 : f32 to vector<8x32xf32>
    %197 = arith.addf %196, %195 : vector<8x32xf32>
    %198 = arith.divf %196, %197 : vector<8x32xf32>
    %199 = arith.mulf %190, %101 : vector<8x32xf32>
    %200 = arith.mulf %184, %192 : vector<8x32xf32>
    %201 = arith.addf %199, %200 : vector<8x32xf32>
    %202 = math.tanh %201 : vector<8x32xf32>
    %203 = arith.mulf %198, %202 : vector<8x32xf32>
    %204 = vector.broadcast %125 : vector<8x1xf32> to vector<8x32xf32>
    %205 = arith.mulf %204, %201 : vector<8x32xf32>
    %cst_59 = arith.constant 1.000000e+00 : f32
    %206 = vector.broadcast %cst_59 : f32 to vector<8x1xf32>
    %207 = arith.subf %206, %125 : vector<8x1xf32>
    %208 = vector.broadcast %207 : vector<8x1xf32> to vector<8x32xf32>
    %209 = arith.mulf %208, %101 : vector<8x32xf32>
    %210 = arith.addf %205, %209 : vector<8x32xf32>
    %211 = vector.broadcast %125 : vector<8x1xf32> to vector<8x32xf32>
    %212 = arith.mulf %211, %203 : vector<8x32xf32>
    %cst_60 = arith.constant 1.000000e+00 : f32
    %213 = vector.broadcast %cst_60 : f32 to vector<8x1xf32>
    %214 = arith.subf %213, %125 : vector<8x1xf32>
    %215 = vector.broadcast %214 : vector<8x1xf32> to vector<8x32xf32>
    %216 = arith.mulf %215, %108 : vector<8x32xf32>
    %217 = arith.addf %212, %216 : vector<8x32xf32>
    %218 = vector.broadcast %125 : vector<8x1xf32> to vector<8x32xf32>
    %219 = arith.mulf %218, %203 : vector<8x32xf32>
    %220 = arith.index_cast %c1_i32 : i32 to index
    %c0_61 = arith.constant 0 : index
    %c0_62 = arith.constant 0 : index
    %221 = vector.load %arg7[%220, %c0_61, %c0_62] : memref<8x8x64xf32, #tpu.memory_space<vmem>>, vector<1x8x32xf32>
    %222 = vector.shape_cast %221 : vector<1x8x32xf32> to vector<8x32xf32>
    %223 = vector.shape_cast %178 : vector<8x32xf32> to vector<1x8x32xf32>
    tpu.vector_store %arg7[%220, %c0_61, %c0_62], %223 {strides = array<i32>} : memref<8x8x64xf32, #tpu.memory_space<vmem>>, vector<1x8x32xf32>,
    %224 = arith.index_cast %119 : i32 to index
    %c0_63 = arith.constant 0 : index
    %c32_64 = arith.constant 32 : index
    %225 = vector.load %arg7[%224, %c0_63, %c32_64] : memref<8x8x64xf32, #tpu.memory_space<vmem>>, vector<1x8x32xf32>
    %226 = vector.shape_cast %225 : vector<1x8x32xf32> to vector<8x32xf32>
    %227 = vector.shape_cast %219 : vector<8x32xf32> to vector<1x8x32xf32>
    tpu.vector_store %arg7[%224, %c0_63, %c32_64], %227 {strides = array<i32>} : memref<8x8x64xf32, #tpu.memory_space<vmem>>, vector<1x8x32xf32>,
    %c2_i32 = arith.constant 2 : i32
    %c7_i32_65 = arith.constant 7 : i32
    %228 = arith.subi %c7_i32_65, %c2_i32 : i32
    %229 = arith.index_cast %c2_i32 : i32 to index
    %c0_66 = arith.constant 0 : index
    %c0_67 = arith.constant 0 : index
    %230 = vector.load %arg2[%229, %c0_66, %c0_67] : memref<8x8x1xf32, #tpu.memory_space<vmem>>, vector<1x8x1xf32>
    %231 = vector.shape_cast %230 : vector<1x8x1xf32> to vector<8x1xf32>
    %232 = arith.index_cast %228 : i32 to index
    %c0_68 = arith.constant 0 : index
    %c0_69 = arith.constant 0 : index
    %233 = vector.load %arg2[%232, %c0_68, %c0_69] : memref<8x8x1xf32, #tpu.memory_space<vmem>>, vector<1x8x1xf32>
    %234 = vector.shape_cast %233 : vector<1x8x1xf32> to vector<8x1xf32>
    %235 = arith.index_cast %c2_i32 : i32 to index
    %c0_70 = arith.constant 0 : index
    %c0_71 = arith.constant 0 : index
    %236 = vector.load %arg8[%235, %c0_70, %c0_71] : memref<8x8x256xf32, #tpu.memory_space<vmem>>, vector<1x8x128xf32>
    %237 = vector.shape_cast %236 : vector<1x8x128xf32> to vector<8x128xf32>
    %c0_72 = arith.constant 0 : index
    %c0_73 = arith.constant 0 : index
    %238 = vector.load %arg5[%c0_72, %c0_73] : memref<32x128xf32, #tpu.memory_space<vmem>>, vector<32x128xf32>
    %cst_74 = arith.constant dense<0.000000e+00> : vector<8x128xf32>
    %239 = tpu.matmul %176, %238, %cst_74 {dimension_numbers = #tpu.dot_dimension_numbers<[1], [0], [0], [1], [0, 0, 1, 1], [], []>} : vector<8x32xf32>, vector<32x128xf32>, vector<8x128xf32> -> vector<8x128xf32>
    %240 = arith.addf %237, %239 : vector<8x128xf32>
    %241 = arith.index_cast %228 : i32 to index
    %c0_75 = arith.constant 0 : index
    %c128_76 = arith.constant 128 : index
    %242 = vector.load %arg8[%241, %c0_75, %c128_76] : memref<8x8x256xf32, #tpu.memory_space<vmem>>, vector<1x8x128xf32>
    %243 = vector.shape_cast %242 : vector<1x8x128xf32> to vector<8x128xf32>
    %c0_77 = arith.constant 0 : index
    %c0_78 = arith.constant 0 : index
    %244 = vector.load %arg6[%c0_77, %c0_78] : memref<32x128xf32, #tpu.memory_space<vmem>>, vector<32x128xf32>
    %cst_79 = arith.constant dense<0.000000e+00> : vector<8x128xf32>
    %245 = tpu.matmul %217, %244, %cst_79 {dimension_numbers = #tpu.dot_dimension_numbers<[1], [0], [0], [1], [0, 0, 1, 1], [], []>} : vector<8x32xf32>, vector<32x128xf32>, vector<8x128xf32> -> vector<8x128xf32>
    %246 = arith.addf %243, %245 : vector<8x128xf32>
    %247 = vector.extract_strided_slice %240 {offsets = [0, 0], sizes = [8, 32], strides = [1, 1]} : vector<8x128xf32> to vector<8x32xf32>
    %248 = arith.negf %247 : vector<8x32xf32>
    %249 = math.exp %248 : vector<8x32xf32>
    %cst_80 = arith.constant 1.000000e+00 : f32
    %250 = vector.broadcast %cst_80 : f32 to vector<8x32xf32>
    %251 = arith.addf %250, %249 : vector<8x32xf32>
    %252 = arith.divf %250, %251 : vector<8x32xf32>
    %253 = vector.extract_strided_slice %240 {offsets = [0, 32], sizes = [8, 32], strides = [1, 1]} : vector<8x128xf32> to vector<8x32xf32>
    %254 = arith.negf %253 : vector<8x32xf32>
    %255 = math.exp %254 : vector<8x32xf32>
    %cst_81 = arith.constant 1.000000e+00 : f32
    %256 = vector.broadcast %cst_81 : f32 to vector<8x32xf32>
    %257 = arith.addf %256, %255 : vector<8x32xf32>
    %258 = arith.divf %256, %257 : vector<8x32xf32>
    %259 = vector.extract_strided_slice %240 {offsets = [0, 64], sizes = [8, 32], strides = [1, 1]} : vector<8x128xf32> to vector<8x32xf32>
    %260 = math.tanh %259 : vector<8x32xf32>
    %261 = vector.extract_strided_slice %240 {offsets = [0, 96], sizes = [8, 32], strides = [1, 1]} : vector<8x128xf32> to vector<8x32xf32>
    %262 = arith.negf %261 : vector<8x32xf32>
    %263 = math.exp %262 : vector<8x32xf32>
    %cst_82 = arith.constant 1.000000e+00 : f32
    %264 = vector.broadcast %cst_82 : f32 to vector<8x32xf32>
    %265 = arith.addf %264, %263 : vector<8x32xf32>
    %266 = arith.divf %264, %265 : vector<8x32xf32>
    %267 = arith.mulf %258, %169 : vector<8x32xf32>
    %268 = arith.mulf %252, %260 : vector<8x32xf32>
    %269 = arith.addf %267, %268 : vector<8x32xf32>
    %270 = math.tanh %269 : vector<8x32xf32>
    %271 = arith.mulf %266, %270 : vector<8x32xf32>
    %272 = vector.broadcast %231 : vector<8x1xf32> to vector<8x32xf32>
    %273 = arith.mulf %272, %269 : vector<8x32xf32>
    %cst_83 = arith.constant 1.000000e+00 : f32
    %274 = vector.broadcast %cst_83 : f32 to vector<8x1xf32>
    %275 = arith.subf %274, %231 : vector<8x1xf32>
    %276 = vector.broadcast %275 : vector<8x1xf32> to vector<8x32xf32>
    %277 = arith.mulf %276, %169 : vector<8x32xf32>
    %278 = arith.addf %273, %277 : vector<8x32xf32>
    %279 = vector.broadcast %231 : vector<8x1xf32> to vector<8x32xf32>
    %280 = arith.mulf %279, %271 : vector<8x32xf32>
    %cst_84 = arith.constant 1.000000e+00 : f32
    %281 = vector.broadcast %cst_84 : f32 to vector<8x1xf32>
    %282 = arith.subf %281, %231 : vector<8x1xf32>
    %283 = vector.broadcast %282 : vector<8x1xf32> to vector<8x32xf32>
    %284 = arith.mulf %283, %176 : vector<8x32xf32>
    %285 = arith.addf %280, %284 : vector<8x32xf32>
    %286 = vector.broadcast %231 : vector<8x1xf32> to vector<8x32xf32>
    %287 = arith.mulf %286, %271 : vector<8x32xf32>
    %288 = vector.extract_strided_slice %246 {offsets = [0, 0], sizes = [8, 32], strides = [1, 1]} : vector<8x128xf32> to vector<8x32xf32>
    %289 = arith.negf %288 : vector<8x32xf32>
    %290 = math.exp %289 : vector<8x32xf32>
    %cst_85 = arith.constant 1.000000e+00 : f32
    %291 = vector.broadcast %cst_85 : f32 to vector<8x32xf32>
    %292 = arith.addf %291, %290 : vector<8x32xf32>
    %293 = arith.divf %291, %292 : vector<8x32xf32>
    %294 = vector.extract_strided_slice %246 {offsets = [0, 32], sizes = [8, 32], strides = [1, 1]} : vector<8x128xf32> to vector<8x32xf32>
    %295 = arith.negf %294 : vector<8x32xf32>
    %296 = math.exp %295 : vector<8x32xf32>
    %cst_86 = arith.constant 1.000000e+00 : f32
    %297 = vector.broadcast %cst_86 : f32 to vector<8x32xf32>
    %298 = arith.addf %297, %296 : vector<8x32xf32>
    %299 = arith.divf %297, %298 : vector<8x32xf32>
    %300 = vector.extract_strided_slice %246 {offsets = [0, 64], sizes = [8, 32], strides = [1, 1]} : vector<8x128xf32> to vector<8x32xf32>
    %301 = math.tanh %300 : vector<8x32xf32>
    %302 = vector.extract_strided_slice %246 {offsets = [0, 96], sizes = [8, 32], strides = [1, 1]} : vector<8x128xf32> to vector<8x32xf32>
    %303 = arith.negf %302 : vector<8x32xf32>
    %304 = math.exp %303 : vector<8x32xf32>
    %cst_87 = arith.constant 1.000000e+00 : f32
    %305 = vector.broadcast %cst_87 : f32 to vector<8x32xf32>
    %306 = arith.addf %305, %304 : vector<8x32xf32>
    %307 = arith.divf %305, %306 : vector<8x32xf32>
    %308 = arith.mulf %299, %210 : vector<8x32xf32>
    %309 = arith.mulf %293, %301 : vector<8x32xf32>
    %310 = arith.addf %308, %309 : vector<8x32xf32>
    %311 = math.tanh %310 : vector<8x32xf32>
    %312 = arith.mulf %307, %311 : vector<8x32xf32>
    %313 = vector.broadcast %234 : vector<8x1xf32> to vector<8x32xf32>
    %314 = arith.mulf %313, %310 : vector<8x32xf32>
    %cst_88 = arith.constant 1.000000e+00 : f32
    %315 = vector.broadcast %cst_88 : f32 to vector<8x1xf32>
    %316 = arith.subf %315, %234 : vector<8x1xf32>
    %317 = vector.broadcast %316 : vector<8x1xf32> to vector<8x32xf32>
    %318 = arith.mulf %317, %210 : vector<8x32xf32>
    %319 = arith.addf %314, %318 : vector<8x32xf32>
    %320 = vector.broadcast %234 : vector<8x1xf32> to vector<8x32xf32>
    %321 = arith.mulf %320, %312 : vector<8x32xf32>
    %cst_89 = arith.constant 1.000000e+00 : f32
    %322 = vector.broadcast %cst_89 : f32 to vector<8x1xf32>
    %323 = arith.subf %322, %234 : vector<8x1xf32>
    %324 = vector.broadcast %323 : vector<8x1xf32> to vector<8x32xf32>
    %325 = arith.mulf %324, %217 : vector<8x32xf32>
    %326 = arith.addf %321, %325 : vector<8x32xf32>
    %327 = vector.broadcast %234 : vector<8x1xf32> to vector<8x32xf32>
    %328 = arith.mulf %327, %312 : vector<8x32xf32>
    %329 = arith.index_cast %c2_i32 : i32 to index
    %c0_90 = arith.constant 0 : index
    %c0_91 = arith.constant 0 : index
    %330 = vector.load %arg7[%329, %c0_90, %c0_91] : memref<8x8x64xf32, #tpu.memory_space<vmem>>, vector<1x8x32xf32>
    %331 = vector.shape_cast %330 : vector<1x8x32xf32> to vector<8x32xf32>
    %332 = vector.shape_cast %287 : vector<8x32xf32> to vector<1x8x32xf32>
    tpu.vector_store %arg7[%329, %c0_90, %c0_91], %332 {strides = array<i32>} : memref<8x8x64xf32, #tpu.memory_space<vmem>>, vector<1x8x32xf32>,
    %333 = arith.index_cast %228 : i32 to index
    %c0_92 = arith.constant 0 : index
    %c32_93 = arith.constant 32 : index
    %334 = vector.load %arg7[%333, %c0_92, %c32_93] : memref<8x8x64xf32, #tpu.memory_space<vmem>>, vector<1x8x32xf32>
    %335 = vector.shape_cast %334 : vector<1x8x32xf32> to vector<8x32xf32>
    %336 = vector.shape_cast %328 : vector<8x32xf32> to vector<1x8x32xf32>
    tpu.vector_store %arg7[%333, %c0_92, %c32_93], %336 {strides = array<i32>} : memref<8x8x64xf32, #tpu.memory_space<vmem>>, vector<1x8x32xf32>,
    %c3_i32 = arith.constant 3 : i32
    %c7_i32_94 = arith.constant 7 : i32
    %337 = arith.subi %c7_i32_94, %c3_i32 : i32
    %338 = arith.index_cast %c3_i32 : i32 to index
    %c0_95 = arith.constant 0 : index
    %c0_96 = arith.constant 0 : index
    %339 = vector.load %arg2[%338, %c0_95, %c0_96] : memref<8x8x1xf32, #tpu.memory_space<vmem>>, vector<1x8x1xf32>
    %340 = vector.shape_cast %339 : vector<1x8x1xf32> to vector<8x1xf32>
    %341 = arith.index_cast %337 : i32 to index
    %c0_97 = arith.constant 0 : index
    %c0_98 = arith.constant 0 : index
    %342 = vector.load %arg2[%341, %c0_97, %c0_98] : memref<8x8x1xf32, #tpu.memory_space<vmem>>, vector<1x8x1xf32>
    %343 = vector.shape_cast %342 : vector<1x8x1xf32> to vector<8x1xf32>
    %344 = arith.index_cast %c3_i32 : i32 to index
    %c0_99 = arith.constant 0 : index
    %c0_100 = arith.constant 0 : index
    %345 = vector.load %arg8[%344, %c0_99, %c0_100] : memref<8x8x256xf32, #tpu.memory_space<vmem>>, vector<1x8x128xf32>
    %346 = vector.shape_cast %345 : vector<1x8x128xf32> to vector<8x128xf32>
    %c0_101 = arith.constant 0 : index
    %c0_102 = arith.constant 0 : index
    %347 = vector.load %arg5[%c0_101, %c0_102] : memref<32x128xf32, #tpu.memory_space<vmem>>, vector<32x128xf32>
    %cst_103 = arith.constant dense<0.000000e+00> : vector<8x128xf32>
    %348 = tpu.matmul %285, %347, %cst_103 {dimension_numbers = #tpu.dot_dimension_numbers<[1], [0], [0], [1], [0, 0, 1, 1], [], []>} : vector<8x32xf32>, vector<32x128xf32>, vector<8x128xf32> -> vector<8x128xf32>
    %349 = arith.addf %346, %348 : vector<8x128xf32>
    %350 = arith.index_cast %337 : i32 to index
    %c0_104 = arith.constant 0 : index
    %c128_105 = arith.constant 128 : index
    %351 = vector.load %arg8[%350, %c0_104, %c128_105] : memref<8x8x256xf32, #tpu.memory_space<vmem>>, vector<1x8x128xf32>
    %352 = vector.shape_cast %351 : vector<1x8x128xf32> to vector<8x128xf32>
    %c0_106 = arith.constant 0 : index
    %c0_107 = arith.constant 0 : index
    %353 = vector.load %arg6[%c0_106, %c0_107] : memref<32x128xf32, #tpu.memory_space<vmem>>, vector<32x128xf32>
    %cst_108 = arith.constant dense<0.000000e+00> : vector<8x128xf32>
    %354 = tpu.matmul %326, %353, %cst_108 {dimension_numbers = #tpu.dot_dimension_numbers<[1], [0], [0], [1], [0, 0, 1, 1], [], []>} : vector<8x32xf32>, vector<32x128xf32>, vector<8x128xf32> -> vector<8x128xf32>
    %355 = arith.addf %352, %354 : vector<8x128xf32>
    %356 = vector.extract_strided_slice %349 {offsets = [0, 0], sizes = [8, 32], strides = [1, 1]} : vector<8x128xf32> to vector<8x32xf32>
    %357 = arith.negf %356 : vector<8x32xf32>
    %358 = math.exp %357 : vector<8x32xf32>
    %cst_109 = arith.constant 1.000000e+00 : f32
    %359 = vector.broadcast %cst_109 : f32 to vector<8x32xf32>
    %360 = arith.addf %359, %358 : vector<8x32xf32>
    %361 = arith.divf %359, %360 : vector<8x32xf32>
    %362 = vector.extract_strided_slice %349 {offsets = [0, 32], sizes = [8, 32], strides = [1, 1]} : vector<8x128xf32> to vector<8x32xf32>
    %363 = arith.negf %362 : vector<8x32xf32>
    %364 = math.exp %363 : vector<8x32xf32>
    %cst_110 = arith.constant 1.000000e+00 : f32
    %365 = vector.broadcast %cst_110 : f32 to vector<8x32xf32>
    %366 = arith.addf %365, %364 : vector<8x32xf32>
    %367 = arith.divf %365, %366 : vector<8x32xf32>
    %368 = vector.extract_strided_slice %349 {offsets = [0, 64], sizes = [8, 32], strides = [1, 1]} : vector<8x128xf32> to vector<8x32xf32>
    %369 = math.tanh %368 : vector<8x32xf32>
    %370 = vector.extract_strided_slice %349 {offsets = [0, 96], sizes = [8, 32], strides = [1, 1]} : vector<8x128xf32> to vector<8x32xf32>
    %371 = arith.negf %370 : vector<8x32xf32>
    %372 = math.exp %371 : vector<8x32xf32>
    %cst_111 = arith.constant 1.000000e+00 : f32
    %373 = vector.broadcast %cst_111 : f32 to vector<8x32xf32>
    %374 = arith.addf %373, %372 : vector<8x32xf32>
    %375 = arith.divf %373, %374 : vector<8x32xf32>
    %376 = arith.mulf %367, %278 : vector<8x32xf32>
    %377 = arith.mulf %361, %369 : vector<8x32xf32>
    %378 = arith.addf %376, %377 : vector<8x32xf32>
    %379 = math.tanh %378 : vector<8x32xf32>
    %380 = arith.mulf %375, %379 : vector<8x32xf32>
    %381 = vector.broadcast %340 : vector<8x1xf32> to vector<8x32xf32>
    %382 = arith.mulf %381, %378 : vector<8x32xf32>
    %cst_112 = arith.constant 1.000000e+00 : f32
    %383 = vector.broadcast %cst_112 : f32 to vector<8x1xf32>
    %384 = arith.subf %383, %340 : vector<8x1xf32>
    %385 = vector.broadcast %384 : vector<8x1xf32> to vector<8x32xf32>
    %386 = arith.mulf %385, %278 : vector<8x32xf32>
    %387 = arith.addf %382, %386 : vector<8x32xf32>
    %388 = vector.broadcast %340 : vector<8x1xf32> to vector<8x32xf32>
    %389 = arith.mulf %388, %380 : vector<8x32xf32>
    %cst_113 = arith.constant 1.000000e+00 : f32
    %390 = vector.broadcast %cst_113 : f32 to vector<8x1xf32>
    %391 = arith.subf %390, %340 : vector<8x1xf32>
    %392 = vector.broadcast %391 : vector<8x1xf32> to vector<8x32xf32>
    %393 = arith.mulf %392, %285 : vector<8x32xf32>
    %394 = arith.addf %389, %393 : vector<8x32xf32>
    %395 = vector.broadcast %340 : vector<8x1xf32> to vector<8x32xf32>
    %396 = arith.mulf %395, %380 : vector<8x32xf32>
    %397 = vector.extract_strided_slice %355 {offsets = [0, 0], sizes = [8, 32], strides = [1, 1]} : vector<8x128xf32> to vector<8x32xf32>
    %398 = arith.negf %397 : vector<8x32xf32>
    %399 = math.exp %398 : vector<8x32xf32>
    %cst_114 = arith.constant 1.000000e+00 : f32
    %400 = vector.broadcast %cst_114 : f32 to vector<8x32xf32>
    %401 = arith.addf %400, %399 : vector<8x32xf32>
    %402 = arith.divf %400, %401 : vector<8x32xf32>
    %403 = vector.extract_strided_slice %355 {offsets = [0, 32], sizes = [8, 32], strides = [1, 1]} : vector<8x128xf32> to vector<8x32xf32>
    %404 = arith.negf %403 : vector<8x32xf32>
    %405 = math.exp %404 : vector<8x32xf32>
    %cst_115 = arith.constant 1.000000e+00 : f32
    %406 = vector.broadcast %cst_115 : f32 to vector<8x32xf32>
    %407 = arith.addf %406, %405 : vector<8x32xf32>
    %408 = arith.divf %406, %407 : vector<8x32xf32>
    %409 = vector.extract_strided_slice %355 {offsets = [0, 64], sizes = [8, 32], strides = [1, 1]} : vector<8x128xf32> to vector<8x32xf32>
    %410 = math.tanh %409 : vector<8x32xf32>
    %411 = vector.extract_strided_slice %355 {offsets = [0, 96], sizes = [8, 32], strides = [1, 1]} : vector<8x128xf32> to vector<8x32xf32>
    %412 = arith.negf %411 : vector<8x32xf32>
    %413 = math.exp %412 : vector<8x32xf32>
    %cst_116 = arith.constant 1.000000e+00 : f32
    %414 = vector.broadcast %cst_116 : f32 to vector<8x32xf32>
    %415 = arith.addf %414, %413 : vector<8x32xf32>
    %416 = arith.divf %414, %415 : vector<8x32xf32>
    %417 = arith.mulf %408, %319 : vector<8x32xf32>
    %418 = arith.mulf %402, %410 : vector<8x32xf32>
    %419 = arith.addf %417, %418 : vector<8x32xf32>
    %420 = math.tanh %419 : vector<8x32xf32>
    %421 = arith.mulf %416, %420 : vector<8x32xf32>
    %422 = vector.broadcast %343 : vector<8x1xf32> to vector<8x32xf32>
    %423 = arith.mulf %422, %419 : vector<8x32xf32>
    %cst_117 = arith.constant 1.000000e+00 : f32
    %424 = vector.broadcast %cst_117 : f32 to vector<8x1xf32>
    %425 = arith.subf %424, %343 : vector<8x1xf32>
    %426 = vector.broadcast %425 : vector<8x1xf32> to vector<8x32xf32>
    %427 = arith.mulf %426, %319 : vector<8x32xf32>
    %428 = arith.addf %423, %427 : vector<8x32xf32>
    %429 = vector.broadcast %343 : vector<8x1xf32> to vector<8x32xf32>
    %430 = arith.mulf %429, %421 : vector<8x32xf32>
    %cst_118 = arith.constant 1.000000e+00 : f32
    %431 = vector.broadcast %cst_118 : f32 to vector<8x1xf32>
    %432 = arith.subf %431, %343 : vector<8x1xf32>
    %433 = vector.broadcast %432 : vector<8x1xf32> to vector<8x32xf32>
    %434 = arith.mulf %433, %326 : vector<8x32xf32>
    %435 = arith.addf %430, %434 : vector<8x32xf32>
    %436 = vector.broadcast %343 : vector<8x1xf32> to vector<8x32xf32>
    %437 = arith.mulf %436, %421 : vector<8x32xf32>
    %438 = arith.index_cast %c3_i32 : i32 to index
    %c0_119 = arith.constant 0 : index
    %c0_120 = arith.constant 0 : index
    %439 = vector.load %arg7[%438, %c0_119, %c0_120] : memref<8x8x64xf32, #tpu.memory_space<vmem>>, vector<1x8x32xf32>
    %440 = vector.shape_cast %439 : vector<1x8x32xf32> to vector<8x32xf32>
    %441 = vector.shape_cast %396 : vector<8x32xf32> to vector<1x8x32xf32>
    tpu.vector_store %arg7[%438, %c0_119, %c0_120], %441 {strides = array<i32>} : memref<8x8x64xf32, #tpu.memory_space<vmem>>, vector<1x8x32xf32>,
    %442 = arith.index_cast %337 : i32 to index
    %c0_121 = arith.constant 0 : index
    %c32_122 = arith.constant 32 : index
    %443 = vector.load %arg7[%442, %c0_121, %c32_122] : memref<8x8x64xf32, #tpu.memory_space<vmem>>, vector<1x8x32xf32>
    %444 = vector.shape_cast %443 : vector<1x8x32xf32> to vector<8x32xf32>
    %445 = vector.shape_cast %437 : vector<8x32xf32> to vector<1x8x32xf32>
    tpu.vector_store %arg7[%442, %c0_121, %c32_122], %445 {strides = array<i32>} : memref<8x8x64xf32, #tpu.memory_space<vmem>>, vector<1x8x32xf32>,
    %c4_i32 = arith.constant 4 : i32
    %c7_i32_123 = arith.constant 7 : i32
    %446 = arith.subi %c7_i32_123, %c4_i32 : i32
    %447 = arith.index_cast %c4_i32 : i32 to index
    %c0_124 = arith.constant 0 : index
    %c0_125 = arith.constant 0 : index
    %448 = vector.load %arg2[%447, %c0_124, %c0_125] : memref<8x8x1xf32, #tpu.memory_space<vmem>>, vector<1x8x1xf32>
    %449 = vector.shape_cast %448 : vector<1x8x1xf32> to vector<8x1xf32>
    %450 = arith.index_cast %446 : i32 to index
    %c0_126 = arith.constant 0 : index
    %c0_127 = arith.constant 0 : index
    %451 = vector.load %arg2[%450, %c0_126, %c0_127] : memref<8x8x1xf32, #tpu.memory_space<vmem>>, vector<1x8x1xf32>
    %452 = vector.shape_cast %451 : vector<1x8x1xf32> to vector<8x1xf32>
    %453 = arith.index_cast %c4_i32 : i32 to index
    %c0_128 = arith.constant 0 : index
    %c0_129 = arith.constant 0 : index
    %454 = vector.load %arg8[%453, %c0_128, %c0_129] : memref<8x8x256xf32, #tpu.memory_space<vmem>>, vector<1x8x128xf32>
    %455 = vector.shape_cast %454 : vector<1x8x128xf32> to vector<8x128xf32>
    %c0_130 = arith.constant 0 : index
    %c0_131 = arith.constant 0 : index
    %456 = vector.load %arg5[%c0_130, %c0_131] : memref<32x128xf32, #tpu.memory_space<vmem>>, vector<32x128xf32>
    %cst_132 = arith.constant dense<0.000000e+00> : vector<8x128xf32>
    %457 = tpu.matmul %394, %456, %cst_132 {dimension_numbers = #tpu.dot_dimension_numbers<[1], [0], [0], [1], [0, 0, 1, 1], [], []>} : vector<8x32xf32>, vector<32x128xf32>, vector<8x128xf32> -> vector<8x128xf32>
    %458 = arith.addf %455, %457 : vector<8x128xf32>
    %459 = arith.index_cast %446 : i32 to index
    %c0_133 = arith.constant 0 : index
    %c128_134 = arith.constant 128 : index
    %460 = vector.load %arg8[%459, %c0_133, %c128_134] : memref<8x8x256xf32, #tpu.memory_space<vmem>>, vector<1x8x128xf32>
    %461 = vector.shape_cast %460 : vector<1x8x128xf32> to vector<8x128xf32>
    %c0_135 = arith.constant 0 : index
    %c0_136 = arith.constant 0 : index
    %462 = vector.load %arg6[%c0_135, %c0_136] : memref<32x128xf32, #tpu.memory_space<vmem>>, vector<32x128xf32>
    %cst_137 = arith.constant dense<0.000000e+00> : vector<8x128xf32>
    %463 = tpu.matmul %435, %462, %cst_137 {dimension_numbers = #tpu.dot_dimension_numbers<[1], [0], [0], [1], [0, 0, 1, 1], [], []>} : vector<8x32xf32>, vector<32x128xf32>, vector<8x128xf32> -> vector<8x128xf32>
    %464 = arith.addf %461, %463 : vector<8x128xf32>
    %465 = vector.extract_strided_slice %458 {offsets = [0, 0], sizes = [8, 32], strides = [1, 1]} : vector<8x128xf32> to vector<8x32xf32>
    %466 = arith.negf %465 : vector<8x32xf32>
    %467 = math.exp %466 : vector<8x32xf32>
    %cst_138 = arith.constant 1.000000e+00 : f32
    %468 = vector.broadcast %cst_138 : f32 to vector<8x32xf32>
    %469 = arith.addf %468, %467 : vector<8x32xf32>
    %470 = arith.divf %468, %469 : vector<8x32xf32>
    %471 = vector.extract_strided_slice %458 {offsets = [0, 32], sizes = [8, 32], strides = [1, 1]} : vector<8x128xf32> to vector<8x32xf32>
    %472 = arith.negf %471 : vector<8x32xf32>
    %473 = math.exp %472 : vector<8x32xf32>
    %cst_139 = arith.constant 1.000000e+00 : f32
    %474 = vector.broadcast %cst_139 : f32 to vector<8x32xf32>
    %475 = arith.addf %474, %473 : vector<8x32xf32>
    %476 = arith.divf %474, %475 : vector<8x32xf32>
    %477 = vector.extract_strided_slice %458 {offsets = [0, 64], sizes = [8, 32], strides = [1, 1]} : vector<8x128xf32> to vector<8x32xf32>
    %478 = math.tanh %477 : vector<8x32xf32>
    %479 = vector.extract_strided_slice %458 {offsets = [0, 96], sizes = [8, 32], strides = [1, 1]} : vector<8x128xf32> to vector<8x32xf32>
    %480 = arith.negf %479 : vector<8x32xf32>
    %481 = math.exp %480 : vector<8x32xf32>
    %cst_140 = arith.constant 1.000000e+00 : f32
    %482 = vector.broadcast %cst_140 : f32 to vector<8x32xf32>
    %483 = arith.addf %482, %481 : vector<8x32xf32>
    %484 = arith.divf %482, %483 : vector<8x32xf32>
    %485 = arith.mulf %476, %387 : vector<8x32xf32>
    %486 = arith.mulf %470, %478 : vector<8x32xf32>
    %487 = arith.addf %485, %486 : vector<8x32xf32>
    %488 = math.tanh %487 : vector<8x32xf32>
    %489 = arith.mulf %484, %488 : vector<8x32xf32>
    %490 = vector.broadcast %449 : vector<8x1xf32> to vector<8x32xf32>
    %491 = arith.mulf %490, %487 : vector<8x32xf32>
    %cst_141 = arith.constant 1.000000e+00 : f32
    %492 = vector.broadcast %cst_141 : f32 to vector<8x1xf32>
    %493 = arith.subf %492, %449 : vector<8x1xf32>
    %494 = vector.broadcast %493 : vector<8x1xf32> to vector<8x32xf32>
    %495 = arith.mulf %494, %387 : vector<8x32xf32>
    %496 = arith.addf %491, %495 : vector<8x32xf32>
    %497 = vector.broadcast %449 : vector<8x1xf32> to vector<8x32xf32>
    %498 = arith.mulf %497, %489 : vector<8x32xf32>
    %cst_142 = arith.constant 1.000000e+00 : f32
    %499 = vector.broadcast %cst_142 : f32 to vector<8x1xf32>
    %500 = arith.subf %499, %449 : vector<8x1xf32>
    %501 = vector.broadcast %500 : vector<8x1xf32> to vector<8x32xf32>
    %502 = arith.mulf %501, %394 : vector<8x32xf32>
    %503 = arith.addf %498, %502 : vector<8x32xf32>
    %504 = vector.broadcast %449 : vector<8x1xf32> to vector<8x32xf32>
    %505 = arith.mulf %504, %489 : vector<8x32xf32>
    %506 = vector.extract_strided_slice %464 {offsets = [0, 0], sizes = [8, 32], strides = [1, 1]} : vector<8x128xf32> to vector<8x32xf32>
    %507 = arith.negf %506 : vector<8x32xf32>
    %508 = math.exp %507 : vector<8x32xf32>
    %cst_143 = arith.constant 1.000000e+00 : f32
    %509 = vector.broadcast %cst_143 : f32 to vector<8x32xf32>
    %510 = arith.addf %509, %508 : vector<8x32xf32>
    %511 = arith.divf %509, %510 : vector<8x32xf32>
    %512 = vector.extract_strided_slice %464 {offsets = [0, 32], sizes = [8, 32], strides = [1, 1]} : vector<8x128xf32> to vector<8x32xf32>
    %513 = arith.negf %512 : vector<8x32xf32>
    %514 = math.exp %513 : vector<8x32xf32>
    %cst_144 = arith.constant 1.000000e+00 : f32
    %515 = vector.broadcast %cst_144 : f32 to vector<8x32xf32>
    %516 = arith.addf %515, %514 : vector<8x32xf32>
    %517 = arith.divf %515, %516 : vector<8x32xf32>
    %518 = vector.extract_strided_slice %464 {offsets = [0, 64], sizes = [8, 32], strides = [1, 1]} : vector<8x128xf32> to vector<8x32xf32>
    %519 = math.tanh %518 : vector<8x32xf32>
    %520 = vector.extract_strided_slice %464 {offsets = [0, 96], sizes = [8, 32], strides = [1, 1]} : vector<8x128xf32> to vector<8x32xf32>
    %521 = arith.negf %520 : vector<8x32xf32>
    %522 = math.exp %521 : vector<8x32xf32>
    %cst_145 = arith.constant 1.000000e+00 : f32
    %523 = vector.broadcast %cst_145 : f32 to vector<8x32xf32>
    %524 = arith.addf %523, %522 : vector<8x32xf32>
    %525 = arith.divf %523, %524 : vector<8x32xf32>
    %526 = arith.mulf %517, %428 : vector<8x32xf32>
    %527 = arith.mulf %511, %519 : vector<8x32xf32>
    %528 = arith.addf %526, %527 : vector<8x32xf32>
    %529 = math.tanh %528 : vector<8x32xf32>
    %530 = arith.mulf %525, %529 : vector<8x32xf32>
    %531 = vector.broadcast %452 : vector<8x1xf32> to vector<8x32xf32>
    %532 = arith.mulf %531, %528 : vector<8x32xf32>
    %cst_146 = arith.constant 1.000000e+00 : f32
    %533 = vector.broadcast %cst_146 : f32 to vector<8x1xf32>
    %534 = arith.subf %533, %452 : vector<8x1xf32>
    %535 = vector.broadcast %534 : vector<8x1xf32> to vector<8x32xf32>
    %536 = arith.mulf %535, %428 : vector<8x32xf32>
    %537 = arith.addf %532, %536 : vector<8x32xf32>
    %538 = vector.broadcast %452 : vector<8x1xf32> to vector<8x32xf32>
    %539 = arith.mulf %538, %530 : vector<8x32xf32>
    %cst_147 = arith.constant 1.000000e+00 : f32
    %540 = vector.broadcast %cst_147 : f32 to vector<8x1xf32>
    %541 = arith.subf %540, %452 : vector<8x1xf32>
    %542 = vector.broadcast %541 : vector<8x1xf32> to vector<8x32xf32>
    %543 = arith.mulf %542, %435 : vector<8x32xf32>
    %544 = arith.addf %539, %543 : vector<8x32xf32>
    %545 = vector.broadcast %452 : vector<8x1xf32> to vector<8x32xf32>
    %546 = arith.mulf %545, %530 : vector<8x32xf32>
    %547 = arith.index_cast %c4_i32 : i32 to index
    %c0_148 = arith.constant 0 : index
    %c0_149 = arith.constant 0 : index
    %548 = vector.load %arg7[%547, %c0_148, %c0_149] : memref<8x8x64xf32, #tpu.memory_space<vmem>>, vector<1x8x32xf32>
    %549 = vector.shape_cast %548 : vector<1x8x32xf32> to vector<8x32xf32>
    %550 = vector.shape_cast %505 : vector<8x32xf32> to vector<1x8x32xf32>
    tpu.vector_store %arg7[%547, %c0_148, %c0_149], %550 {strides = array<i32>} : memref<8x8x64xf32, #tpu.memory_space<vmem>>, vector<1x8x32xf32>,
    %551 = arith.index_cast %446 : i32 to index
    %c0_150 = arith.constant 0 : index
    %c32_151 = arith.constant 32 : index
    %552 = vector.load %arg7[%551, %c0_150, %c32_151] : memref<8x8x64xf32, #tpu.memory_space<vmem>>, vector<1x8x32xf32>
    %553 = vector.shape_cast %552 : vector<1x8x32xf32> to vector<8x32xf32>
    %554 = vector.shape_cast %546 : vector<8x32xf32> to vector<1x8x32xf32>
    tpu.vector_store %arg7[%551, %c0_150, %c32_151], %554 {strides = array<i32>} : memref<8x8x64xf32, #tpu.memory_space<vmem>>, vector<1x8x32xf32>,
    %c5_i32 = arith.constant 5 : i32
    %c7_i32_152 = arith.constant 7 : i32
    %555 = arith.subi %c7_i32_152, %c5_i32 : i32
    %556 = arith.index_cast %c5_i32 : i32 to index
    %c0_153 = arith.constant 0 : index
    %c0_154 = arith.constant 0 : index
    %557 = vector.load %arg2[%556, %c0_153, %c0_154] : memref<8x8x1xf32, #tpu.memory_space<vmem>>, vector<1x8x1xf32>
    %558 = vector.shape_cast %557 : vector<1x8x1xf32> to vector<8x1xf32>
    %559 = arith.index_cast %555 : i32 to index
    %c0_155 = arith.constant 0 : index
    %c0_156 = arith.constant 0 : index
    %560 = vector.load %arg2[%559, %c0_155, %c0_156] : memref<8x8x1xf32, #tpu.memory_space<vmem>>, vector<1x8x1xf32>
    %561 = vector.shape_cast %560 : vector<1x8x1xf32> to vector<8x1xf32>
    %562 = arith.index_cast %c5_i32 : i32 to index
    %c0_157 = arith.constant 0 : index
    %c0_158 = arith.constant 0 : index
    %563 = vector.load %arg8[%562, %c0_157, %c0_158] : memref<8x8x256xf32, #tpu.memory_space<vmem>>, vector<1x8x128xf32>
    %564 = vector.shape_cast %563 : vector<1x8x128xf32> to vector<8x128xf32>
    %c0_159 = arith.constant 0 : index
    %c0_160 = arith.constant 0 : index
    %565 = vector.load %arg5[%c0_159, %c0_160] : memref<32x128xf32, #tpu.memory_space<vmem>>, vector<32x128xf32>
    %cst_161 = arith.constant dense<0.000000e+00> : vector<8x128xf32>
    %566 = tpu.matmul %503, %565, %cst_161 {dimension_numbers = #tpu.dot_dimension_numbers<[1], [0], [0], [1], [0, 0, 1, 1], [], []>} : vector<8x32xf32>, vector<32x128xf32>, vector<8x128xf32> -> vector<8x128xf32>
    %567 = arith.addf %564, %566 : vector<8x128xf32>
    %568 = arith.index_cast %555 : i32 to index
    %c0_162 = arith.constant 0 : index
    %c128_163 = arith.constant 128 : index
    %569 = vector.load %arg8[%568, %c0_162, %c128_163] : memref<8x8x256xf32, #tpu.memory_space<vmem>>, vector<1x8x128xf32>
    %570 = vector.shape_cast %569 : vector<1x8x128xf32> to vector<8x128xf32>
    %c0_164 = arith.constant 0 : index
    %c0_165 = arith.constant 0 : index
    %571 = vector.load %arg6[%c0_164, %c0_165] : memref<32x128xf32, #tpu.memory_space<vmem>>, vector<32x128xf32>
    %cst_166 = arith.constant dense<0.000000e+00> : vector<8x128xf32>
    %572 = tpu.matmul %544, %571, %cst_166 {dimension_numbers = #tpu.dot_dimension_numbers<[1], [0], [0], [1], [0, 0, 1, 1], [], []>} : vector<8x32xf32>, vector<32x128xf32>, vector<8x128xf32> -> vector<8x128xf32>
    %573 = arith.addf %570, %572 : vector<8x128xf32>
    %574 = vector.extract_strided_slice %567 {offsets = [0, 0], sizes = [8, 32], strides = [1, 1]} : vector<8x128xf32> to vector<8x32xf32>
    %575 = arith.negf %574 : vector<8x32xf32>
    %576 = math.exp %575 : vector<8x32xf32>
    %cst_167 = arith.constant 1.000000e+00 : f32
    %577 = vector.broadcast %cst_167 : f32 to vector<8x32xf32>
    %578 = arith.addf %577, %576 : vector<8x32xf32>
    %579 = arith.divf %577, %578 : vector<8x32xf32>
    %580 = vector.extract_strided_slice %567 {offsets = [0, 32], sizes = [8, 32], strides = [1, 1]} : vector<8x128xf32> to vector<8x32xf32>
    %581 = arith.negf %580 : vector<8x32xf32>
    %582 = math.exp %581 : vector<8x32xf32>
    %cst_168 = arith.constant 1.000000e+00 : f32
    %583 = vector.broadcast %cst_168 : f32 to vector<8x32xf32>
    %584 = arith.addf %583, %582 : vector<8x32xf32>
    %585 = arith.divf %583, %584 : vector<8x32xf32>
    %586 = vector.extract_strided_slice %567 {offsets = [0, 64], sizes = [8, 32], strides = [1, 1]} : vector<8x128xf32> to vector<8x32xf32>
    %587 = math.tanh %586 : vector<8x32xf32>
    %588 = vector.extract_strided_slice %567 {offsets = [0, 96], sizes = [8, 32], strides = [1, 1]} : vector<8x128xf32> to vector<8x32xf32>
    %589 = arith.negf %588 : vector<8x32xf32>
    %590 = math.exp %589 : vector<8x32xf32>
    %cst_169 = arith.constant 1.000000e+00 : f32
    %591 = vector.broadcast %cst_169 : f32 to vector<8x32xf32>
    %592 = arith.addf %591, %590 : vector<8x32xf32>
    %593 = arith.divf %591, %592 : vector<8x32xf32>
    %594 = arith.mulf %585, %496 : vector<8x32xf32>
    %595 = arith.mulf %579, %587 : vector<8x32xf32>
    %596 = arith.addf %594, %595 : vector<8x32xf32>
    %597 = math.tanh %596 : vector<8x32xf32>
    %598 = arith.mulf %593, %597 : vector<8x32xf32>
    %599 = vector.broadcast %558 : vector<8x1xf32> to vector<8x32xf32>
    %600 = arith.mulf %599, %596 : vector<8x32xf32>
    %cst_170 = arith.constant 1.000000e+00 : f32
    %601 = vector.broadcast %cst_170 : f32 to vector<8x1xf32>
    %602 = arith.subf %601, %558 : vector<8x1xf32>
    %603 = vector.broadcast %602 : vector<8x1xf32> to vector<8x32xf32>
    %604 = arith.mulf %603, %496 : vector<8x32xf32>
    %605 = arith.addf %600, %604 : vector<8x32xf32>
    %606 = vector.broadcast %558 : vector<8x1xf32> to vector<8x32xf32>
    %607 = arith.mulf %606, %598 : vector<8x32xf32>
    %cst_171 = arith.constant 1.000000e+00 : f32
    %608 = vector.broadcast %cst_171 : f32 to vector<8x1xf32>
    %609 = arith.subf %608, %558 : vector<8x1xf32>
    %610 = vector.broadcast %609 : vector<8x1xf32> to vector<8x32xf32>
    %611 = arith.mulf %610, %503 : vector<8x32xf32>
    %612 = arith.addf %607, %611 : vector<8x32xf32>
    %613 = vector.broadcast %558 : vector<8x1xf32> to vector<8x32xf32>
    %614 = arith.mulf %613, %598 : vector<8x32xf32>
    %615 = vector.extract_strided_slice %573 {offsets = [0, 0], sizes = [8, 32], strides = [1, 1]} : vector<8x128xf32> to vector<8x32xf32>
    %616 = arith.negf %615 : vector<8x32xf32>
    %617 = math.exp %616 : vector<8x32xf32>
    %cst_172 = arith.constant 1.000000e+00 : f32
    %618 = vector.broadcast %cst_172 : f32 to vector<8x32xf32>
    %619 = arith.addf %618, %617 : vector<8x32xf32>
    %620 = arith.divf %618, %619 : vector<8x32xf32>
    %621 = vector.extract_strided_slice %573 {offsets = [0, 32], sizes = [8, 32], strides = [1, 1]} : vector<8x128xf32> to vector<8x32xf32>
    %622 = arith.negf %621 : vector<8x32xf32>
    %623 = math.exp %622 : vector<8x32xf32>
    %cst_173 = arith.constant 1.000000e+00 : f32
    %624 = vector.broadcast %cst_173 : f32 to vector<8x32xf32>
    %625 = arith.addf %624, %623 : vector<8x32xf32>
    %626 = arith.divf %624, %625 : vector<8x32xf32>
    %627 = vector.extract_strided_slice %573 {offsets = [0, 64], sizes = [8, 32], strides = [1, 1]} : vector<8x128xf32> to vector<8x32xf32>
    %628 = math.tanh %627 : vector<8x32xf32>
    %629 = vector.extract_strided_slice %573 {offsets = [0, 96], sizes = [8, 32], strides = [1, 1]} : vector<8x128xf32> to vector<8x32xf32>
    %630 = arith.negf %629 : vector<8x32xf32>
    %631 = math.exp %630 : vector<8x32xf32>
    %cst_174 = arith.constant 1.000000e+00 : f32
    %632 = vector.broadcast %cst_174 : f32 to vector<8x32xf32>
    %633 = arith.addf %632, %631 : vector<8x32xf32>
    %634 = arith.divf %632, %633 : vector<8x32xf32>
    %635 = arith.mulf %626, %537 : vector<8x32xf32>
    %636 = arith.mulf %620, %628 : vector<8x32xf32>
    %637 = arith.addf %635, %636 : vector<8x32xf32>
    %638 = math.tanh %637 : vector<8x32xf32>
    %639 = arith.mulf %634, %638 : vector<8x32xf32>
    %640 = vector.broadcast %561 : vector<8x1xf32> to vector<8x32xf32>
    %641 = arith.mulf %640, %637 : vector<8x32xf32>
    %cst_175 = arith.constant 1.000000e+00 : f32
    %642 = vector.broadcast %cst_175 : f32 to vector<8x1xf32>
    %643 = arith.subf %642, %561 : vector<8x1xf32>
    %644 = vector.broadcast %643 : vector<8x1xf32> to vector<8x32xf32>
    %645 = arith.mulf %644, %537 : vector<8x32xf32>
    %646 = arith.addf %641, %645 : vector<8x32xf32>
    %647 = vector.broadcast %561 : vector<8x1xf32> to vector<8x32xf32>
    %648 = arith.mulf %647, %639 : vector<8x32xf32>
    %cst_176 = arith.constant 1.000000e+00 : f32
    %649 = vector.broadcast %cst_176 : f32 to vector<8x1xf32>
    %650 = arith.subf %649, %561 : vector<8x1xf32>
    %651 = vector.broadcast %650 : vector<8x1xf32> to vector<8x32xf32>
    %652 = arith.mulf %651, %544 : vector<8x32xf32>
    %653 = arith.addf %648, %652 : vector<8x32xf32>
    %654 = vector.broadcast %561 : vector<8x1xf32> to vector<8x32xf32>
    %655 = arith.mulf %654, %639 : vector<8x32xf32>
    %656 = arith.index_cast %c5_i32 : i32 to index
    %c0_177 = arith.constant 0 : index
    %c0_178 = arith.constant 0 : index
    %657 = vector.load %arg7[%656, %c0_177, %c0_178] : memref<8x8x64xf32, #tpu.memory_space<vmem>>, vector<1x8x32xf32>
    %658 = vector.shape_cast %657 : vector<1x8x32xf32> to vector<8x32xf32>
    %659 = vector.shape_cast %614 : vector<8x32xf32> to vector<1x8x32xf32>
    tpu.vector_store %arg7[%656, %c0_177, %c0_178], %659 {strides = array<i32>} : memref<8x8x64xf32, #tpu.memory_space<vmem>>, vector<1x8x32xf32>,
    %660 = arith.index_cast %555 : i32 to index
    %c0_179 = arith.constant 0 : index
    %c32_180 = arith.constant 32 : index
    %661 = vector.load %arg7[%660, %c0_179, %c32_180] : memref<8x8x64xf32, #tpu.memory_space<vmem>>, vector<1x8x32xf32>
    %662 = vector.shape_cast %661 : vector<1x8x32xf32> to vector<8x32xf32>
    %663 = vector.shape_cast %655 : vector<8x32xf32> to vector<1x8x32xf32>
    tpu.vector_store %arg7[%660, %c0_179, %c32_180], %663 {strides = array<i32>} : memref<8x8x64xf32, #tpu.memory_space<vmem>>, vector<1x8x32xf32>,
    %c6_i32 = arith.constant 6 : i32
    %c7_i32_181 = arith.constant 7 : i32
    %664 = arith.subi %c7_i32_181, %c6_i32 : i32
    %665 = arith.index_cast %c6_i32 : i32 to index
    %c0_182 = arith.constant 0 : index
    %c0_183 = arith.constant 0 : index
    %666 = vector.load %arg2[%665, %c0_182, %c0_183] : memref<8x8x1xf32, #tpu.memory_space<vmem>>, vector<1x8x1xf32>
    %667 = vector.shape_cast %666 : vector<1x8x1xf32> to vector<8x1xf32>
    %668 = arith.index_cast %664 : i32 to index
    %c0_184 = arith.constant 0 : index
    %c0_185 = arith.constant 0 : index
    %669 = vector.load %arg2[%668, %c0_184, %c0_185] : memref<8x8x1xf32, #tpu.memory_space<vmem>>, vector<1x8x1xf32>
    %670 = vector.shape_cast %669 : vector<1x8x1xf32> to vector<8x1xf32>
    %671 = arith.index_cast %c6_i32 : i32 to index
    %c0_186 = arith.constant 0 : index
    %c0_187 = arith.constant 0 : index
    %672 = vector.load %arg8[%671, %c0_186, %c0_187] : memref<8x8x256xf32, #tpu.memory_space<vmem>>, vector<1x8x128xf32>
    %673 = vector.shape_cast %672 : vector<1x8x128xf32> to vector<8x128xf32>
    %c0_188 = arith.constant 0 : index
    %c0_189 = arith.constant 0 : index
    %674 = vector.load %arg5[%c0_188, %c0_189] : memref<32x128xf32, #tpu.memory_space<vmem>>, vector<32x128xf32>
    %cst_190 = arith.constant dense<0.000000e+00> : vector<8x128xf32>
    %675 = tpu.matmul %612, %674, %cst_190 {dimension_numbers = #tpu.dot_dimension_numbers<[1], [0], [0], [1], [0, 0, 1, 1], [], []>} : vector<8x32xf32>, vector<32x128xf32>, vector<8x128xf32> -> vector<8x128xf32>
    %676 = arith.addf %673, %675 : vector<8x128xf32>
    %677 = arith.index_cast %664 : i32 to index
    %c0_191 = arith.constant 0 : index
    %c128_192 = arith.constant 128 : index
    %678 = vector.load %arg8[%677, %c0_191, %c128_192] : memref<8x8x256xf32, #tpu.memory_space<vmem>>, vector<1x8x128xf32>
    %679 = vector.shape_cast %678 : vector<1x8x128xf32> to vector<8x128xf32>
    %c0_193 = arith.constant 0 : index
    %c0_194 = arith.constant 0 : index
    %680 = vector.load %arg6[%c0_193, %c0_194] : memref<32x128xf32, #tpu.memory_space<vmem>>, vector<32x128xf32>
    %cst_195 = arith.constant dense<0.000000e+00> : vector<8x128xf32>
    %681 = tpu.matmul %653, %680, %cst_195 {dimension_numbers = #tpu.dot_dimension_numbers<[1], [0], [0], [1], [0, 0, 1, 1], [], []>} : vector<8x32xf32>, vector<32x128xf32>, vector<8x128xf32> -> vector<8x128xf32>
    %682 = arith.addf %679, %681 : vector<8x128xf32>
    %683 = vector.extract_strided_slice %676 {offsets = [0, 0], sizes = [8, 32], strides = [1, 1]} : vector<8x128xf32> to vector<8x32xf32>
    %684 = arith.negf %683 : vector<8x32xf32>
    %685 = math.exp %684 : vector<8x32xf32>
    %cst_196 = arith.constant 1.000000e+00 : f32
    %686 = vector.broadcast %cst_196 : f32 to vector<8x32xf32>
    %687 = arith.addf %686, %685 : vector<8x32xf32>
    %688 = arith.divf %686, %687 : vector<8x32xf32>
    %689 = vector.extract_strided_slice %676 {offsets = [0, 32], sizes = [8, 32], strides = [1, 1]} : vector<8x128xf32> to vector<8x32xf32>
    %690 = arith.negf %689 : vector<8x32xf32>
    %691 = math.exp %690 : vector<8x32xf32>
    %cst_197 = arith.constant 1.000000e+00 : f32
    %692 = vector.broadcast %cst_197 : f32 to vector<8x32xf32>
    %693 = arith.addf %692, %691 : vector<8x32xf32>
    %694 = arith.divf %692, %693 : vector<8x32xf32>
    %695 = vector.extract_strided_slice %676 {offsets = [0, 64], sizes = [8, 32], strides = [1, 1]} : vector<8x128xf32> to vector<8x32xf32>
    %696 = math.tanh %695 : vector<8x32xf32>
    %697 = vector.extract_strided_slice %676 {offsets = [0, 96], sizes = [8, 32], strides = [1, 1]} : vector<8x128xf32> to vector<8x32xf32>
    %698 = arith.negf %697 : vector<8x32xf32>
    %699 = math.exp %698 : vector<8x32xf32>
    %cst_198 = arith.constant 1.000000e+00 : f32
    %700 = vector.broadcast %cst_198 : f32 to vector<8x32xf32>
    %701 = arith.addf %700, %699 : vector<8x32xf32>
    %702 = arith.divf %700, %701 : vector<8x32xf32>
    %703 = arith.mulf %694, %605 : vector<8x32xf32>
    %704 = arith.mulf %688, %696 : vector<8x32xf32>
    %705 = arith.addf %703, %704 : vector<8x32xf32>
    %706 = math.tanh %705 : vector<8x32xf32>
    %707 = arith.mulf %702, %706 : vector<8x32xf32>
    %708 = vector.broadcast %667 : vector<8x1xf32> to vector<8x32xf32>
    %709 = arith.mulf %708, %705 : vector<8x32xf32>
    %cst_199 = arith.constant 1.000000e+00 : f32
    %710 = vector.broadcast %cst_199 : f32 to vector<8x1xf32>
    %711 = arith.subf %710, %667 : vector<8x1xf32>
    %712 = vector.broadcast %711 : vector<8x1xf32> to vector<8x32xf32>
    %713 = arith.mulf %712, %605 : vector<8x32xf32>
    %714 = arith.addf %709, %713 : vector<8x32xf32>
    %715 = vector.broadcast %667 : vector<8x1xf32> to vector<8x32xf32>
    %716 = arith.mulf %715, %707 : vector<8x32xf32>
    %cst_200 = arith.constant 1.000000e+00 : f32
    %717 = vector.broadcast %cst_200 : f32 to vector<8x1xf32>
    %718 = arith.subf %717, %667 : vector<8x1xf32>
    %719 = vector.broadcast %718 : vector<8x1xf32> to vector<8x32xf32>
    %720 = arith.mulf %719, %612 : vector<8x32xf32>
    %721 = arith.addf %716, %720 : vector<8x32xf32>
    %722 = vector.broadcast %667 : vector<8x1xf32> to vector<8x32xf32>
    %723 = arith.mulf %722, %707 : vector<8x32xf32>
    %724 = vector.extract_strided_slice %682 {offsets = [0, 0], sizes = [8, 32], strides = [1, 1]} : vector<8x128xf32> to vector<8x32xf32>
    %725 = arith.negf %724 : vector<8x32xf32>
    %726 = math.exp %725 : vector<8x32xf32>
    %cst_201 = arith.constant 1.000000e+00 : f32
    %727 = vector.broadcast %cst_201 : f32 to vector<8x32xf32>
    %728 = arith.addf %727, %726 : vector<8x32xf32>
    %729 = arith.divf %727, %728 : vector<8x32xf32>
    %730 = vector.extract_strided_slice %682 {offsets = [0, 32], sizes = [8, 32], strides = [1, 1]} : vector<8x128xf32> to vector<8x32xf32>
    %731 = arith.negf %730 : vector<8x32xf32>
    %732 = math.exp %731 : vector<8x32xf32>
    %cst_202 = arith.constant 1.000000e+00 : f32
    %733 = vector.broadcast %cst_202 : f32 to vector<8x32xf32>
    %734 = arith.addf %733, %732 : vector<8x32xf32>
    %735 = arith.divf %733, %734 : vector<8x32xf32>
    %736 = vector.extract_strided_slice %682 {offsets = [0, 64], sizes = [8, 32], strides = [1, 1]} : vector<8x128xf32> to vector<8x32xf32>
    %737 = math.tanh %736 : vector<8x32xf32>
    %738 = vector.extract_strided_slice %682 {offsets = [0, 96], sizes = [8, 32], strides = [1, 1]} : vector<8x128xf32> to vector<8x32xf32>
    %739 = arith.negf %738 : vector<8x32xf32>
    %740 = math.exp %739 : vector<8x32xf32>
    %cst_203 = arith.constant 1.000000e+00 : f32
    %741 = vector.broadcast %cst_203 : f32 to vector<8x32xf32>
    %742 = arith.addf %741, %740 : vector<8x32xf32>
    %743 = arith.divf %741, %742 : vector<8x32xf32>
    %744 = arith.mulf %735, %646 : vector<8x32xf32>
    %745 = arith.mulf %729, %737 : vector<8x32xf32>
    %746 = arith.addf %744, %745 : vector<8x32xf32>
    %747 = math.tanh %746 : vector<8x32xf32>
    %748 = arith.mulf %743, %747 : vector<8x32xf32>
    %749 = vector.broadcast %670 : vector<8x1xf32> to vector<8x32xf32>
    %750 = arith.mulf %749, %746 : vector<8x32xf32>
    %cst_204 = arith.constant 1.000000e+00 : f32
    %751 = vector.broadcast %cst_204 : f32 to vector<8x1xf32>
    %752 = arith.subf %751, %670 : vector<8x1xf32>
    %753 = vector.broadcast %752 : vector<8x1xf32> to vector<8x32xf32>
    %754 = arith.mulf %753, %646 : vector<8x32xf32>
    %755 = arith.addf %750, %754 : vector<8x32xf32>
    %756 = vector.broadcast %670 : vector<8x1xf32> to vector<8x32xf32>
    %757 = arith.mulf %756, %748 : vector<8x32xf32>
    %cst_205 = arith.constant 1.000000e+00 : f32
    %758 = vector.broadcast %cst_205 : f32 to vector<8x1xf32>
    %759 = arith.subf %758, %670 : vector<8x1xf32>
    %760 = vector.broadcast %759 : vector<8x1xf32> to vector<8x32xf32>
    %761 = arith.mulf %760, %653 : vector<8x32xf32>
    %762 = arith.addf %757, %761 : vector<8x32xf32>
    %763 = vector.broadcast %670 : vector<8x1xf32> to vector<8x32xf32>
    %764 = arith.mulf %763, %748 : vector<8x32xf32>
    %765 = arith.index_cast %c6_i32 : i32 to index
    %c0_206 = arith.constant 0 : index
    %c0_207 = arith.constant 0 : index
    %766 = vector.load %arg7[%765, %c0_206, %c0_207] : memref<8x8x64xf32, #tpu.memory_space<vmem>>, vector<1x8x32xf32>
    %767 = vector.shape_cast %766 : vector<1x8x32xf32> to vector<8x32xf32>
    %768 = vector.shape_cast %723 : vector<8x32xf32> to vector<1x8x32xf32>
    tpu.vector_store %arg7[%765, %c0_206, %c0_207], %768 {strides = array<i32>} : memref<8x8x64xf32, #tpu.memory_space<vmem>>, vector<1x8x32xf32>,
    %769 = arith.index_cast %664 : i32 to index
    %c0_208 = arith.constant 0 : index
    %c32_209 = arith.constant 32 : index
    %770 = vector.load %arg7[%769, %c0_208, %c32_209] : memref<8x8x64xf32, #tpu.memory_space<vmem>>, vector<1x8x32xf32>
    %771 = vector.shape_cast %770 : vector<1x8x32xf32> to vector<8x32xf32>
    %772 = vector.shape_cast %764 : vector<8x32xf32> to vector<1x8x32xf32>
    tpu.vector_store %arg7[%769, %c0_208, %c32_209], %772 {strides = array<i32>} : memref<8x8x64xf32, #tpu.memory_space<vmem>>, vector<1x8x32xf32>,
    %c7_i32_210 = arith.constant 7 : i32
    %c7_i32_211 = arith.constant 7 : i32
    %773 = arith.subi %c7_i32_211, %c7_i32_210 : i32
    %774 = arith.index_cast %c7_i32_210 : i32 to index
    %c0_212 = arith.constant 0 : index
    %c0_213 = arith.constant 0 : index
    %775 = vector.load %arg2[%774, %c0_212, %c0_213] : memref<8x8x1xf32, #tpu.memory_space<vmem>>, vector<1x8x1xf32>
    %776 = vector.shape_cast %775 : vector<1x8x1xf32> to vector<8x1xf32>
    %777 = arith.index_cast %773 : i32 to index
    %c0_214 = arith.constant 0 : index
    %c0_215 = arith.constant 0 : index
    %778 = vector.load %arg2[%777, %c0_214, %c0_215] : memref<8x8x1xf32, #tpu.memory_space<vmem>>, vector<1x8x1xf32>
    %779 = vector.shape_cast %778 : vector<1x8x1xf32> to vector<8x1xf32>
    %780 = arith.index_cast %c7_i32_210 : i32 to index
    %c0_216 = arith.constant 0 : index
    %c0_217 = arith.constant 0 : index
    %781 = vector.load %arg8[%780, %c0_216, %c0_217] : memref<8x8x256xf32, #tpu.memory_space<vmem>>, vector<1x8x128xf32>
    %782 = vector.shape_cast %781 : vector<1x8x128xf32> to vector<8x128xf32>
    %c0_218 = arith.constant 0 : index
    %c0_219 = arith.constant 0 : index
    %783 = vector.load %arg5[%c0_218, %c0_219] : memref<32x128xf32, #tpu.memory_space<vmem>>, vector<32x128xf32>
    %cst_220 = arith.constant dense<0.000000e+00> : vector<8x128xf32>
    %784 = tpu.matmul %721, %783, %cst_220 {dimension_numbers = #tpu.dot_dimension_numbers<[1], [0], [0], [1], [0, 0, 1, 1], [], []>} : vector<8x32xf32>, vector<32x128xf32>, vector<8x128xf32> -> vector<8x128xf32>
    %785 = arith.addf %782, %784 : vector<8x128xf32>
    %786 = arith.index_cast %773 : i32 to index
    %c0_221 = arith.constant 0 : index
    %c128_222 = arith.constant 128 : index
    %787 = vector.load %arg8[%786, %c0_221, %c128_222] : memref<8x8x256xf32, #tpu.memory_space<vmem>>, vector<1x8x128xf32>
    %788 = vector.shape_cast %787 : vector<1x8x128xf32> to vector<8x128xf32>
    %c0_223 = arith.constant 0 : index
    %c0_224 = arith.constant 0 : index
    %789 = vector.load %arg6[%c0_223, %c0_224] : memref<32x128xf32, #tpu.memory_space<vmem>>, vector<32x128xf32>
    %cst_225 = arith.constant dense<0.000000e+00> : vector<8x128xf32>
    %790 = tpu.matmul %762, %789, %cst_225 {dimension_numbers = #tpu.dot_dimension_numbers<[1], [0], [0], [1], [0, 0, 1, 1], [], []>} : vector<8x32xf32>, vector<32x128xf32>, vector<8x128xf32> -> vector<8x128xf32>
    %791 = arith.addf %788, %790 : vector<8x128xf32>
    %792 = vector.extract_strided_slice %785 {offsets = [0, 0], sizes = [8, 32], strides = [1, 1]} : vector<8x128xf32> to vector<8x32xf32>
    %793 = arith.negf %792 : vector<8x32xf32>
    %794 = math.exp %793 : vector<8x32xf32>
    %cst_226 = arith.constant 1.000000e+00 : f32
    %795 = vector.broadcast %cst_226 : f32 to vector<8x32xf32>
    %796 = arith.addf %795, %794 : vector<8x32xf32>
    %797 = arith.divf %795, %796 : vector<8x32xf32>
    %798 = vector.extract_strided_slice %785 {offsets = [0, 32], sizes = [8, 32], strides = [1, 1]} : vector<8x128xf32> to vector<8x32xf32>
    %799 = arith.negf %798 : vector<8x32xf32>
    %800 = math.exp %799 : vector<8x32xf32>
    %cst_227 = arith.constant 1.000000e+00 : f32
    %801 = vector.broadcast %cst_227 : f32 to vector<8x32xf32>
    %802 = arith.addf %801, %800 : vector<8x32xf32>
    %803 = arith.divf %801, %802 : vector<8x32xf32>
    %804 = vector.extract_strided_slice %785 {offsets = [0, 64], sizes = [8, 32], strides = [1, 1]} : vector<8x128xf32> to vector<8x32xf32>
    %805 = math.tanh %804 : vector<8x32xf32>
    %806 = vector.extract_strided_slice %785 {offsets = [0, 96], sizes = [8, 32], strides = [1, 1]} : vector<8x128xf32> to vector<8x32xf32>
    %807 = arith.negf %806 : vector<8x32xf32>
    %808 = math.exp %807 : vector<8x32xf32>
    %cst_228 = arith.constant 1.000000e+00 : f32
    %809 = vector.broadcast %cst_228 : f32 to vector<8x32xf32>
    %810 = arith.addf %809, %808 : vector<8x32xf32>
    %811 = arith.divf %809, %810 : vector<8x32xf32>
    %812 = arith.mulf %803, %714 : vector<8x32xf32>
    %813 = arith.mulf %797, %805 : vector<8x32xf32>
    %814 = arith.addf %812, %813 : vector<8x32xf32>
    %815 = math.tanh %814 : vector<8x32xf32>
    %816 = arith.mulf %811, %815 : vector<8x32xf32>
    %817 = vector.broadcast %776 : vector<8x1xf32> to vector<8x32xf32>
    %818 = arith.mulf %817, %814 : vector<8x32xf32>
    %cst_229 = arith.constant 1.000000e+00 : f32
    %819 = vector.broadcast %cst_229 : f32 to vector<8x1xf32>
    %820 = arith.subf %819, %776 : vector<8x1xf32>
    %821 = vector.broadcast %820 : vector<8x1xf32> to vector<8x32xf32>
    %822 = arith.mulf %821, %714 : vector<8x32xf32>
    %823 = arith.addf %818, %822 : vector<8x32xf32>
    %824 = vector.broadcast %776 : vector<8x1xf32> to vector<8x32xf32>
    %825 = arith.mulf %824, %816 : vector<8x32xf32>
    %cst_230 = arith.constant 1.000000e+00 : f32
    %826 = vector.broadcast %cst_230 : f32 to vector<8x1xf32>
    %827 = arith.subf %826, %776 : vector<8x1xf32>
    %828 = vector.broadcast %827 : vector<8x1xf32> to vector<8x32xf32>
    %829 = arith.mulf %828, %721 : vector<8x32xf32>
    %830 = arith.addf %825, %829 : vector<8x32xf32>
    %831 = vector.broadcast %776 : vector<8x1xf32> to vector<8x32xf32>
    %832 = arith.mulf %831, %816 : vector<8x32xf32>
    %833 = vector.extract_strided_slice %791 {offsets = [0, 0], sizes = [8, 32], strides = [1, 1]} : vector<8x128xf32> to vector<8x32xf32>
    %834 = arith.negf %833 : vector<8x32xf32>
    %835 = math.exp %834 : vector<8x32xf32>
    %cst_231 = arith.constant 1.000000e+00 : f32
    %836 = vector.broadcast %cst_231 : f32 to vector<8x32xf32>
    %837 = arith.addf %836, %835 : vector<8x32xf32>
    %838 = arith.divf %836, %837 : vector<8x32xf32>
    %839 = vector.extract_strided_slice %791 {offsets = [0, 32], sizes = [8, 32], strides = [1, 1]} : vector<8x128xf32> to vector<8x32xf32>
    %840 = arith.negf %839 : vector<8x32xf32>
    %841 = math.exp %840 : vector<8x32xf32>
    %cst_232 = arith.constant 1.000000e+00 : f32
    %842 = vector.broadcast %cst_232 : f32 to vector<8x32xf32>
    %843 = arith.addf %842, %841 : vector<8x32xf32>
    %844 = arith.divf %842, %843 : vector<8x32xf32>
    %845 = vector.extract_strided_slice %791 {offsets = [0, 64], sizes = [8, 32], strides = [1, 1]} : vector<8x128xf32> to vector<8x32xf32>
    %846 = math.tanh %845 : vector<8x32xf32>
    %847 = vector.extract_strided_slice %791 {offsets = [0, 96], sizes = [8, 32], strides = [1, 1]} : vector<8x128xf32> to vector<8x32xf32>
    %848 = arith.negf %847 : vector<8x32xf32>
    %849 = math.exp %848 : vector<8x32xf32>
    %cst_233 = arith.constant 1.000000e+00 : f32
    %850 = vector.broadcast %cst_233 : f32 to vector<8x32xf32>
    %851 = arith.addf %850, %849 : vector<8x32xf32>
    %852 = arith.divf %850, %851 : vector<8x32xf32>
    %853 = arith.mulf %844, %755 : vector<8x32xf32>
    %854 = arith.mulf %838, %846 : vector<8x32xf32>
    %855 = arith.addf %853, %854 : vector<8x32xf32>
    %856 = math.tanh %855 : vector<8x32xf32>
    %857 = arith.mulf %852, %856 : vector<8x32xf32>
    %858 = vector.broadcast %779 : vector<8x1xf32> to vector<8x32xf32>
    %859 = arith.mulf %858, %855 : vector<8x32xf32>
    %cst_234 = arith.constant 1.000000e+00 : f32
    %860 = vector.broadcast %cst_234 : f32 to vector<8x1xf32>
    %861 = arith.subf %860, %779 : vector<8x1xf32>
    %862 = vector.broadcast %861 : vector<8x1xf32> to vector<8x32xf32>
    %863 = arith.mulf %862, %755 : vector<8x32xf32>
    %864 = arith.addf %859, %863 : vector<8x32xf32>
    %865 = vector.broadcast %779 : vector<8x1xf32> to vector<8x32xf32>
    %866 = arith.mulf %865, %857 : vector<8x32xf32>
    %cst_235 = arith.constant 1.000000e+00 : f32
    %867 = vector.broadcast %cst_235 : f32 to vector<8x1xf32>
    %868 = arith.subf %867, %779 : vector<8x1xf32>
    %869 = vector.broadcast %868 : vector<8x1xf32> to vector<8x32xf32>
    %870 = arith.mulf %869, %762 : vector<8x32xf32>
    %871 = arith.addf %866, %870 : vector<8x32xf32>
    %872 = vector.broadcast %779 : vector<8x1xf32> to vector<8x32xf32>
    %873 = arith.mulf %872, %857 : vector<8x32xf32>
    %874 = arith.index_cast %c7_i32_210 : i32 to index
    %c0_236 = arith.constant 0 : index
    %c0_237 = arith.constant 0 : index
    %875 = vector.load %arg7[%874, %c0_236, %c0_237] : memref<8x8x64xf32, #tpu.memory_space<vmem>>, vector<1x8x32xf32>
    %876 = vector.shape_cast %875 : vector<1x8x32xf32> to vector<8x32xf32>
    %877 = vector.shape_cast %832 : vector<8x32xf32> to vector<1x8x32xf32>
    tpu.vector_store %arg7[%874, %c0_236, %c0_237], %877 {strides = array<i32>} : memref<8x8x64xf32, #tpu.memory_space<vmem>>, vector<1x8x32xf32>,
    %878 = arith.index_cast %773 : i32 to index
    %c0_238 = arith.constant 0 : index
    %c32_239 = arith.constant 32 : index
    %879 = vector.load %arg7[%878, %c0_238, %c32_239] : memref<8x8x64xf32, #tpu.memory_space<vmem>>, vector<1x8x32xf32>
    %880 = vector.shape_cast %879 : vector<1x8x32xf32> to vector<8x32xf32>
    %881 = vector.shape_cast %873 : vector<8x32xf32> to vector<1x8x32xf32>
    tpu.vector_store %arg7[%878, %c0_238, %c32_239], %881 {strides = array<i32>} : memref<8x8x64xf32, #tpu.memory_space<vmem>>, vector<1x8x32xf32>,
    %c8_i32 = arith.constant 8 : i32
    return
  }
  func.func @transform_0(%arg0: i32) -> (i32, i32, i32) {
    %c0_i32 = arith.constant 0 : i32
    %c0_i32_0 = arith.constant 0 : i32
    %c0_i32_1 = arith.constant 0 : i32
    %c0_i32_2 = arith.constant 0 : i32
    return %c0_i32, %c0_i32_0, %c0_i32_1 : i32, i32, i32
  }
  func.func @transform_1(%arg0: i32) -> (i32, i32, i32) {
    %c0_i32 = arith.constant 0 : i32
    %c0_i32_0 = arith.constant 0 : i32
    %c0_i32_1 = arith.constant 0 : i32
    %c0_i32_2 = arith.constant 0 : i32
    return %c0_i32, %c0_i32_0, %c0_i32_1 : i32, i32, i32
  }
  func.func @transform_2(%arg0: i32) -> (i32, i32) {
    %c0_i32 = arith.constant 0 : i32
    %c0_i32_0 = arith.constant 0 : i32
    %c0_i32_1 = arith.constant 0 : i32
    return %c0_i32, %c0_i32_0 : i32, i32
  }
  func.func @transform_3(%arg0: i32) -> (i32, i32) {
    %c0_i32 = arith.constant 0 : i32
    %c0_i32_0 = arith.constant 0 : i32
    %c0_i32_1 = arith.constant 0 : i32
    return %c0_i32, %c0_i32_0 : i32, i32
  }
  func.func @transform_4(%arg0: i32) -> (i32, i32) {
    %c0_i32 = arith.constant 0 : i32
    %c0_i32_0 = arith.constant 0 : i32
    %c0_i32_1 = arith.constant 0 : i32
    return %c0_i32, %c0_i32_0 : i32, i32
  }
  func.func @transform_5(%arg0: i32) -> (i32, i32) {
    %c0_i32 = arith.constant 0 : i32
    %c0_i32_0 = arith.constant 0 : i32
    %c0_i32_1 = arith.constant 0 : i32
    return %c0_i32, %c0_i32_0 : i32, i32
  }
  func.func @transform_6(%arg0: i32) -> (i32, i32, i32) {
    %c0_i32 = arith.constant 0 : i32
    %c0_i32_0 = arith.constant 0 : i32
    %c0_i32_1 = arith.constant 0 : i32
    %c0_i32_2 = arith.constant 0 : i32
    return %c0_i32, %c0_i32_0, %c0_i32_1 : i32, i32, i32
  }
}

module attributes {stable_mosaic.version = 11 : i64} {
  func.func @_mlp_kernel(%arg0: i32, %arg1: memref<64x64xf32, #tpu.memory_space<vmem>>, %arg2: memref<64x128xf32, #tpu.memory_space<vmem>>, %arg3: memref<1x128xf32, #tpu.memory_space<vmem>>, %arg4: memref<64x128xf32, #tpu.memory_space<vmem>>) attributes {dimension_semantics = [#tpu.dimension_semantics<arbitrary>], iteration_bounds = array<i64: 1>, scalar_prefetch = 0 : i64, scratch_operands = 0 : i64, tpu.core_type = #tpu.core_type<tc>, window_params = [{pipeline_mode = #tpu.pipeline_mode<synchronous>, transform_indices = @transform_0, window_bounds = array<i64: 64, 64>}, {pipeline_mode = #tpu.pipeline_mode<synchronous>, transform_indices = @transform_1, window_bounds = array<i64: 64, 128>}, {pipeline_mode = #tpu.pipeline_mode<synchronous>, transform_indices = @transform_2, window_bounds = array<i64: 1, 128>}, {pipeline_mode = #tpu.pipeline_mode<synchronous>, transform_indices = @transform_3, window_bounds = array<i64: 64, 128>}]} {
    %c0 = arith.constant 0 : index
    %c0_0 = arith.constant 0 : index
    %0 = vector.load %arg1[%c0, %c0_0] : memref<64x64xf32, #tpu.memory_space<vmem>>, vector<64x64xf32>
    %c0_1 = arith.constant 0 : index
    %c0_2 = arith.constant 0 : index
    %1 = vector.load %arg2[%c0_1, %c0_2] : memref<64x128xf32, #tpu.memory_space<vmem>>, vector<64x128xf32>
    %cst = arith.constant dense<0.000000e+00> : vector<64x128xf32>
    %2 = tpu.matmul %0, %1, %cst {dimension_numbers = #tpu.dot_dimension_numbers<[1], [0], [0], [1], [0, 0, 1, 1], [], []>} : vector<64x64xf32>, vector<64x128xf32>, vector<64x128xf32> -> vector<64x128xf32>
    %c0_3 = arith.constant 0 : index
    %c0_4 = arith.constant 0 : index
    %3 = vector.load %arg3[%c0_3, %c0_4] : memref<1x128xf32, #tpu.memory_space<vmem>>, vector<1x128xf32>
    %4 = vector.broadcast %3 : vector<1x128xf32> to vector<64x128xf32>
    %5 = arith.addf %2, %4 : vector<64x128xf32>
    %cst_5 = arith.constant 0.000000e+00 : f32
    %6 = vector.broadcast %cst_5 : f32 to vector<64x128xf32>
    %7 = arith.cmpf ogt, %5, %6 : vector<64x128xf32>
    %cst_6 = arith.constant 1.000000e-01 : f32
    %8 = vector.broadcast %cst_6 : f32 to vector<64x128xf32>
    %9 = arith.mulf %8, %5 : vector<64x128xf32>
    %10 = arith.select %7, %5, %9 : vector<64x128xi1>, vector<64x128xf32>
    %c0_7 = arith.constant 0 : index
    %c0_8 = arith.constant 0 : index
    %11 = vector.load %arg4[%c0_7, %c0_8] : memref<64x128xf32, #tpu.memory_space<vmem>>, vector<64x128xf32>
    tpu.vector_store %arg4[%c0_7, %c0_8], %10 {strides = array<i32>} : memref<64x128xf32, #tpu.memory_space<vmem>>, vector<64x128xf32>,
    return
  }
  func.func @transform_0(%arg0: i32) -> (i32, i32) {
    %c0_i32 = arith.constant 0 : i32
    %c0_i32_0 = arith.constant 0 : i32
    %c0_i32_1 = arith.constant 0 : i32
    return %c0_i32, %c0_i32_0 : i32, i32
  }
  func.func @transform_1(%arg0: i32) -> (i32, i32) {
    %c0_i32 = arith.constant 0 : i32
    %c0_i32_0 = arith.constant 0 : i32
    %c0_i32_1 = arith.constant 0 : i32
    return %c0_i32, %c0_i32_0 : i32, i32
  }
  func.func @transform_2(%arg0: i32) -> (i32, i32) {
    %c0_i32 = arith.constant 0 : i32
    %c0_i32_0 = arith.constant 0 : i32
    %c0_i32_1 = arith.constant 0 : i32
    return %c0_i32, %c0_i32_0 : i32, i32
  }
  func.func @transform_3(%arg0: i32) -> (i32, i32) {
    %c0_i32 = arith.constant 0 : i32
    %c0_i32_0 = arith.constant 0 : i32
    %c0_i32_1 = arith.constant 0 : i32
    return %c0_i32, %c0_i32_0 : i32, i32
  }
}

</mosaic_0001>

<llo_original>
// kernel: tagger_forward.7
$region0: #{tagger_forward.7}
  #allocation0 [shape = 'u32[]', space=smem, size = 0x4, offset = 0x4, fixed_abs, tag = 'smem constant byte address 0x4 - core index']
  #allocation1 [shape = 'u32[72,128]{1,0:T(1,128)}', space=vmem, size = 0x9000, scoped, tag = 'internal scratch']
  %s0 = inlined_call_operand.vmem [shape: f32[64,64], index: 0, kind: input, shape index: {}]
  %s1 = inlined_call_operand.vmem [shape: f32[64,128], index: 1, kind: input, shape index: {}]
  %s2 = inlined_call_operand.vmem [shape: f32[1,128], index: 2, kind: input, shape index: {}]
  %s3 = inlined_call_operand.vmem [shape: f32[64,128], index: 3, kind: output, shape index: {}]
  %s4 = sld [smem:[#allocation0]]
  $region22: #{tagger_forward.7} parent=0
    _
  %s6 = ssub.s32 1, %s4
  %s7 = scalar_select 0, %s6, %s4
  // Predicated region
  $region2: #{tagger_forward.7} parent=0 // pred_check
    _
  $region3: #{tagger_forward.7} parent=0 // pred_check_branch
    %9 = sbr.rel (0) target = $region5
  $region4: #{tagger_forward.7} parent=0 // pred_region
    _
  $region5: #{tagger_forward.7} parent=0 // pred_fallthru
    _
  // Predicated region
  $region6: #{tagger_forward.7} parent=0 // pred_check
    _
  $region7: #{tagger_forward.7} parent=0 // pred_check_branch
    %11 = sbr.rel (0) target = $region9
  $region8: #{tagger_forward.7} parent=0 // pred_region
    _
  $region9: #{tagger_forward.7} parent=0 // pred_fallthru
    _
  // Predicated region
  $region10: #{tagger_forward.7} parent=0 // pred_check
    _
  $region11: #{tagger_forward.7} parent=0 // pred_check_branch
    %13 = sbr.rel (0) target = $region13
  $region12: #{tagger_forward.7} parent=0 // pred_region
    _
  $region13: #{tagger_forward.7} parent=0 // pred_fallthru
    _
  %v14 = vld [vmem:[%s0] sm:$0xff]
  %v15 = vld [vmem:[%s0 + $0x8] sm:$0xff]
  %v16 = vld [vmem:[%s0 + $0x10] sm:$0xff]
  %v17 = vld [vmem:[%s0 + $0x18] sm:$0xff]
  %v18 = vld [vmem:[%s0 + $0x20] sm:$0xff]
  %v19 = vld [vmem:[%s0 + $0x28] sm:$0xff]
  %v20 = vld [vmem:[%s0 + $0x30] sm:$0xff]
  %v21 = vld [vmem:[%s0 + $0x38] sm:$0xff]
  %v22 = vld [vmem:[%s1] sm:$0xff]
  %v23 = vld [vmem:[%s1 + $0x8] sm:$0xff]
  %v24 = vld [vmem:[%s1 + $0x10] sm:$0xff]
  %v25 = vld [vmem:[%s1 + $0x18] sm:$0xff]
  %v26 = vld [vmem:[%s1 + $0x20] sm:$0xff]
  %v27 = vld [vmem:[%s1 + $0x28] sm:$0xff]
  %v28 = vld [vmem:[%s1 + $0x30] sm:$0xff]
  %v29 = vld [vmem:[%s1 + $0x38] sm:$0xff]
  %v30 = vld [vmem:[%s2] sm:$0x1]
  %v32 = vperm.slane %v30, 0
  %vm34 = vcmask 523264
  %v36 = vsel %vm34, %v14, 0
  %v39 = vsel %vm34, %v15, 0
  %v42 = vsel %vm34, %v16, 0
  %v45 = vsel %vm34, %v17, 0
  %v48 = vsel %vm34, %v18, 0
  %v51 = vsel %vm34, %v19, 0
  %v54 = vsel %vm34, %v20, 0
  %v57 = vsel %vm34, %v21, 0
  %59 = vmatpush.msra.mxu0 0.0
  %60 = vmatpush.msra.mxu0 0.0
  %61 = vmatpush.msra.mxu0 0.0
  %62 = vmatpush.msra.mxu0 0.0
  %63 = vmatpush.msra.mxu0 0.0
  %64 = vmatpush.msra.mxu0 0.0
  %65 = vmatpush.msra.mxu0 0.0
  %66 = vmatpush.msra.mxu0 0.0
  %67 = vmatpush.msra.mxu0 %v29
  %68 = vmatpush.msra.mxu0 %v28
  %69 = vmatpush.msra.mxu0 %v27
  %70 = vmatpush.msra.mxu0 %v26
  %71 = vmatpush.msra.mxu0 %v25
  %72 = vmatpush.msra.mxu0 %v24
  %73 = vmatpush.msra.mxu0 %v23
  %74 = vmatpush.msra.mxu0 %v22
  %75 = vmatmul.f32.gmra.mxu0 %v36
  %v76 = vpop.f32.mrf.mxu0
  %v77 = vadd.f32 %v32, %v76
  %78 = vmatmul.f32.gmra.mxu0 %v39
  %v79 = vpop.f32.mrf.mxu0
  %v80 = vadd.f32 %v32, %v79
  %81 = vmatmul.f32.gmra.mxu0 %v42
  %v82 = vpop.f32.mrf.mxu0
  %v83 = vadd.f32 %v32, %v82
  %84 = vmatmul.f32.gmra.mxu0 %v45
  %v85 = vpop.f32.mrf.mxu0
  %v86 = vadd.f32 %v32, %v85
  %87 = vmatmul.f32.gmra.mxu0 %v48
  %v88 = vpop.f32.mrf.mxu0
  %v89 = vadd.f32 %v32, %v88
  %90 = vmatmul.f32.gmra.mxu0 %v51
  %v91 = vpop.f32.mrf.mxu0
  %v92 = vadd.f32 %v32, %v91
  %93 = vmatmul.f32.gmra.mxu0 %v54
  %v94 = vpop.f32.mrf.mxu0
  %v95 = vadd.f32 %v32, %v94
  %96 = vmatmul.f32.gmra.mxu0 %v57
  %v97 = vpop.f32.mrf.mxu0
  %v98 = vadd.f32 %v32, %v97
  %99 = vdwg.mxu0
  %vm100 = vcmp.gt.f32.partialorder %v77, 0.0
  %vm101 = vcmp.gt.f32.partialorder %v80, 0.0
  %vm102 = vcmp.gt.f32.partialorder %v83, 0.0
  %vm103 = vcmp.gt.f32.partialorder %v86, 0.0
  %vm104 = vcmp.gt.f32.partialorder %v89, 0.0
  %vm105 = vcmp.gt.f32.partialorder %v92, 0.0
  %vm106 = vcmp.gt.f32.partialorder %v95, 0.0
  %vm107 = vcmp.gt.f32.partialorder %v98, 0.0
  %v108 = vmul.f32 %v77, 0.1
  %v109 = vmul.f32 %v80, 0.1
  %v110 = vmul.f32 %v83, 0.1
  %v111 = vmul.f32 %v86, 0.1
  %v112 = vmul.f32 %v89, 0.1
  %v113 = vmul.f32 %v92, 0.1
  %v114 = vmul.f32 %v95, 0.1
  %v115 = vmul.f32 %v98, 0.1
  %v116 = vsel %vm100, %v77, %v108
  %v117 = vsel %vm101, %v80, %v109
  %v118 = vsel %vm102, %v83, %v110
  %v119 = vsel %vm103, %v86, %v111
  %v120 = vsel %vm104, %v89, %v112
  %v121 = vsel %vm105, %v92, %v113
  %v122 = vsel %vm106, %v95, %v114
  %v123 = vsel %vm107, %v98, %v115
  %124 = vst [vmem:[%s3] sm:$0xff] %v116
  %125 = vst [vmem:[%s3 + $0x8] sm:$0xff] %v117
  %126 = vst [vmem:[%s3 + $0x10] sm:$0xff] %v118
  %127 = vst [vmem:[%s3 + $0x18] sm:$0xff] %v119
  %128 = vst [vmem:[%s3 + $0x20] sm:$0xff] %v120
  %129 = vst [vmem:[%s3 + $0x28] sm:$0xff] %v121
  %130 = vst [vmem:[%s3 + $0x30] sm:$0xff] %v122
  %131 = vst [vmem:[%s3 + $0x38] sm:$0xff] %v123
  // Predicated region
  $region14: #{tagger_forward.7} parent=0 // pred_check
    _
  $region15: #{tagger_forward.7} parent=0 // pred_check_branch
    %133 = sbr.rel (0) target = $region17
  $region16: #{tagger_forward.7} parent=0 // pred_region
    _
  $region17: #{tagger_forward.7} parent=0 // pred_fallthru
    _
  // Predicated region
  $region18: #{tagger_forward.7} parent=0 // pred_check
    _
  $region19: #{tagger_forward.7} parent=0 // pred_check_branch
    %135 = sbr.rel (0) target = $region21
  $region20: #{tagger_forward.7} parent=0 // pred_region
    _
  $region21: #{tagger_forward.7} parent=0 // pred_fallthru
    _

// kernel: tagger_forward.4
$region0: #{tagger_forward.4}
  #allocation0 [shape = 'u32[]', space=smem, size = 0x4, offset = 0x4, fixed_abs, tag = 'smem constant byte address 0x4 - core index']
  #allocation1 [shape = 'u32[72,128]{1,0:T(1,128)}', space=vmem, size = 0x9000, scoped, tag = 'internal scratch']
  #allocation2 [shape = 'f32[4,16,64]{2,1,0:T(8,128)}', space=vmem, size = 0x8000, scoped, tag = 'scratch operand']
  %s0 = inlined_call_operand.vmem [shape: f32[4,16,16], index: 0, kind: input, shape index: {}]
  %s1 = inlined_call_operand.vmem [shape: f32[4,16,1], index: 1, kind: input, shape index: {}]
  %s2 = inlined_call_operand.vmem [shape: f32[16,64], index: 2, kind: input, shape index: {}]
  %s3 = inlined_call_operand.vmem [shape: f32[1,64], index: 3, kind: input, shape index: {}]
  %s4 = inlined_call_operand.vmem [shape: f32[8,32], index: 4, kind: input, shape index: {}]
  %s5 = inlined_call_operand.vmem [shape: f32[8,32], index: 5, kind: input, shape index: {}]
  %s6 = inlined_call_operand.vmem [shape: f32[16,16], index: 6, kind: output, shape index: {}]
  %s7 = sld [smem:[#allocation0]]
  $region34: #{tagger_forward.4} parent=0
    _
  %s9 = ssub.s32 1, %s7
  %s10 = scalar_select 0, %s9, %s7
  // Predicated region
  $region2: #{tagger_forward.4} parent=0 // pred_check
    _
  $region3: #{tagger_forward.4} parent=0 // pred_check_branch
    %12 = sbr.rel (0) target = $region5
  $region4: #{tagger_forward.4} parent=0 // pred_region
    _
  $region5: #{tagger_forward.4} parent=0 // pred_fallthru
    _
  // Predicated region
  $region6: #{tagger_forward.4} parent=0 // pred_check
    _
  $region7: #{tagger_forward.4} parent=0 // pred_check_branch
    %14 = sbr.rel (0) target = $region9
  $region8: #{tagger_forward.4} parent=0 // pred_region
    _
  $region9: #{tagger_forward.4} parent=0 // pred_fallthru
    _
  // Predicated region
  $region10: #{tagger_forward.4} parent=0 // pred_check
    _
  $region11: #{tagger_forward.4} parent=0 // pred_check_branch
    %16 = sbr.rel (0) target = $region13
  $region12: #{tagger_forward.4} parent=0 // pred_region
    _
  $region13: #{tagger_forward.4} parent=0 // pred_fallthru
    _
  // Predicated region
  $region14: #{tagger_forward.4} parent=0 // pred_check
    _
  $region15: #{tagger_forward.4} parent=0 // pred_check_branch
    %18 = sbr.rel (0) target = $region17
  $region16: #{tagger_forward.4} parent=0 // pred_region
    _
  $region17: #{tagger_forward.4} parent=0 // pred_fallthru
    _
  // Predicated region
  $region18: #{tagger_forward.4} parent=0 // pred_check
    _
  $region19: #{tagger_forward.4} parent=0 // pred_check_branch
    %20 = sbr.rel (0) target = $region21
  $region20: #{tagger_forward.4} parent=0 // pred_region
    _
  $region21: #{tagger_forward.4} parent=0 // pred_fallthru
    _
  // Predicated region
  $region22: #{tagger_forward.4} parent=0 // pred_check
    _
  $region23: #{tagger_forward.4} parent=0 // pred_check_branch
    %22 = sbr.rel (0) target = $region25
  $region24: #{tagger_forward.4} parent=0 // pred_region
    _
  $region25: #{tagger_forward.4} parent=0 // pred_fallthru
    _
  %v23 = vld [vmem:[%s0] sm:$0xff]
  %v24 = vld [vmem:[%s0 + $0x8] sm:$0xff]
  %v25 = vld [vmem:[%s0 + $0x10] sm:$0xff]
  %v26 = vld [vmem:[%s0 + $0x18] sm:$0xff]
  %v27 = vld [vmem:[%s0 + $0x20] sm:$0xff]
  %v28 = vld [vmem:[%s0 + $0x28] sm:$0xff]
  %v29 = vld [vmem:[%s0 + $0x30] sm:$0xff]
  %v30 = vld [vmem:[%s0 + $0x38] sm:$0xff]
  %v31 = vld [vmem:[%s2] sm:$0xff]
  %v32 = vld [vmem:[%s2 + $0x8] sm:$0xff]
  %v33 = vld [vmem:[%s3] sm:$0x1]
  %v35 = vperm.slane %v33, 0
  %vm37 = vcmask 130048
  %v39 = vsel %vm37, %v23, 0
  %v42 = vsel %vm37, %v24, 0
  %v45 = vsel %vm37, %v25, 0
  %v48 = vsel %vm37, %v26, 0
  %v51 = vsel %vm37, %v27, 0
  %v54 = vsel %vm37, %v28, 0
  %v57 = vsel %vm37, %v29, 0
  %v60 = vsel %vm37, %v30, 0
  %62 = vmatpush.msra.mxu0 0.0
  %63 = vmatpush.msra.mxu0 0.0
  %64 = vmatpush.msra.mxu0 0.0
  %65 = vmatpush.msra.mxu0 0.0
  %66 = vmatpush.msra.mxu0 0.0
  %67 = vmatpush.msra.mxu0 0.0
  %68 = vmatpush.msra.mxu0 0.0
  %69 = vmatpush.msra.mxu0 0.0
  %70 = vmatpush.msra.mxu0 0.0
  %71 = vmatpush.msra.mxu0 0.0
  %72 = vmatpush.msra.mxu0 0.0
  %73 = vmatpush.msra.mxu0 0.0
  %74 = vmatpush.msra.mxu0 0.0
  %75 = vmatpush.msra.mxu0 0.0
  %76 = vmatpush.msra.mxu0 %v32
  %77 = vmatpush.msra.mxu0 %v31
  %78 = vmatmul.f32.gmra.mxu0 %v39
  %v79 = vpop.f32.mrf.mxu0
  %v80 = vadd.f32 %v35, %v79
  %81 = vmatmul.f32.gmra.mxu0 %v42
  %v82 = vpop.f32.mrf.mxu0
  %v83 = vadd.f32 %v35, %v82
  %84 = vmatmul.f32.gmra.mxu0 %v45
  %v85 = vpop.f32.mrf.mxu0
  %v86 = vadd.f32 %v35, %v85
  %87 = vmatmul.f32.gmra.mxu0 %v48
  %v88 = vpop.f32.mrf.mxu0
  %v89 = vadd.f32 %v35, %v88
  %90 = vmatmul.f32.gmra.mxu0 %v51
  %v91 = vpop.f32.mrf.mxu0
  %v92 = vadd.f32 %v35, %v91
  %93 = vmatmul.f32.gmra.mxu0 %v54
  %v94 = vpop.f32.mrf.mxu0
  %v95 = vadd.f32 %v35, %v94
  %96 = vmatmul.f32.gmra.mxu0 %v57
  %v97 = vpop.f32.mrf.mxu0
  %v98 = vadd.f32 %v35, %v97
  %99 = vmatmul.f32.gmra.mxu0 %v60
  %v100 = vpop.f32.mrf.mxu0
  %v101 = vadd.f32 %v35, %v100
  %102 = vdwg.mxu0
  %vm103 = vcmask 523264
  %104 = vst.msk [vmem:[#allocation2] sm:$0xff] %vm103, %v80
  %105 = vst.msk [vmem:[#allocation2 + $0x8] sm:$0xff] %vm103, %v83
  %106 = vst.msk [vmem:[#allocation2 + $0x10] sm:$0xff] %vm103, %v86
  %107 = vst.msk [vmem:[#allocation2 + $0x18] sm:$0xff] %vm103, %v89
  %108 = vst.msk [vmem:[#allocation2 + $0x20] sm:$0xff] %vm103, %v92
  %109 = vst.msk [vmem:[#allocation2 + $0x28] sm:$0xff] %vm103, %v95
  %110 = vst.msk [vmem:[#allocation2 + $0x30] sm:$0xff] %vm103, %v98
  %111 = vst.msk [vmem:[#allocation2 + $0x38] sm:$0xff] %vm103, %v101
  %v112 = vld [vmem:[%s1] sm:$0xff]
  %v113 = vld [vmem:[%s1 + $0x8] sm:$0xff]
  %s114 = scalar_lea.vmem %s1, 48
  %v115 = vld [vmem:[%s114] sm:$0xff]
  %v116 = vld [vmem:[%s114 + $0x8] sm:$0xff]
  %v117 = vld [vmem:[#allocation2] sm:$0xff]
  %v118 = vld [vmem:[#allocation2 + $0x8] sm:$0xff]
  %v119 = vld [vmem:[%s4] sm:$0xff]
  %vm120 = vcmask 64512
  %v122 = vsel %vm120, 0.0, 0
  %124 = vmatpush.msra.mxu0 0.0
  %125 = vmatpush.msra.mxu0 0.0
  %126 = vmatpush.msra.mxu0 0.0
  %127 = vmatpush.msra.mxu0 0.0
  %128 = vmatpush.msra.mxu0 0.0
  %129 = vmatpush.msra.mxu0 0.0
  %130 = vmatpush.msra.mxu0 0.0
  %131 = vmatpush.msra.mxu0 0.0
  %132 = vmatpush.msra.mxu0 0.0
  %133 = vmatpush.msra.mxu0 0.0
  %134 = vmatpush.msra.mxu0 0.0
  %135 = vmatpush.msra.mxu0 0.0
  %136 = vmatpush.msra.mxu0 0.0
  %137 = vmatpush.msra.mxu0 0.0
  %138 = vmatpush.msra.mxu0 0.0
  %139 = vmatpush.msra.mxu0 %v119
  %140 = vmatmul.f32.gmra.mxu0 %v122
  %v141 = vpop.f32.mrf.mxu0
  %v142 = vadd.f32 0.0, %v141
  %143 = vmatmul.f32.gmra.mxu0 %v122
  %v144 = vpop.f32.mrf.mxu0
  %v145 = vadd.f32 0.0, %v144
  %146 = vdwg.mxu0
  %v147 = vadd.f32 %v117, %v142
  %v148 = vadd.f32 %v118, %v145
  %s149 = scalar_lea.vmem [#allocation2], 48
  %v150 = vld [vmem:[%s149] sm:$0xff]
  %v151 = vld [vmem:[%s149 + $0x8] sm:$0xff]
  %v152 = vld [vmem:[%s5] sm:$0xff]
  %153 = vmatpush.msra.mxu0 0.0
  %154 = vmatpush.msra.mxu0 0.0
  %155 = vmatpush.msra.mxu0 0.0
  %156 = vmatpush.msra.mxu0 0.0
  %157 = vmatpush.msra.mxu0 0.0
  %158 = vmatpush.msra.mxu0 0.0
  %159 = vmatpush.msra.mxu0 0.0
  %160 = vmatpush.msra.mxu0 0.0
  %161 = vmatpush.msra.mxu0 0.0
  %162 = vmatpush.msra.mxu0 0.0
  %163 = vmatpush.msra.mxu0 0.0
  %164 = vmatpush.msra.mxu0 0.0
  %165 = vmatpush.msra.mxu0 0.0
  %166 = vmatpush.msra.mxu0 0.0
  %167 = vmatpush.msra.mxu0 0.0
  %168 = vmatpush.msra.mxu0 %v152
  %169 = vmatmul.f32.gmra.mxu0 %v122
  %v170 = vpop.f32.mrf.mxu0
  %v171 = vadd.f32 0.0, %v170
  %172 = vmatmul.f32.gmra.mxu0 %v122
  %v173 = vpop.f32.mrf.mxu0
  %v174 = vadd.f32 0.0, %v173
  %175 = vdwg.mxu0
  %178 = vrot.lane.b32.xlu0 %v171, 32
  %v179 = vpop.permute.xlu0 %178
  %180 = vrot.lane.b32.xlu0 %v174, 32
  %v181 = vpop.permute.xlu0 %180
  %v184 = vadd.f32 %v150, %v179
  %v185 = vadd.f32 %v151, %v181
  %v186 = vxor.u32 %v147, 2147483648
  %v187 = vxor.u32 %v148, 2147483648
  %v188 = vmul.f32 %v186, 1.442695
  %v189 = vpow.pop %v188
  %v190 = vmul.f32 %v187, 1.442695
  %v191 = vpow.pop %v190
  %v192 = vadd.f32 %v189, 1.0
  %v193 = vadd.f32 %v191, 1.0
  %v194 = vrcp.pop %v192
  %v195 = vmul.f32 %v192, %v194
  %v196 = vsub.f32 1.0, %v195
  %v197 = vmul.f32 %v194, %v196
  %v198 = vadd.f32 %v194, %v197
  %vm199 = vweird.f32 %v192
  %vm200 = vweird.f32 %v194
  %vm201 = vmor %vm199, %vm200
  %v202 = vsel %vm201, %v194, %v198
  %v203 = vand.u32 2147483647, %v192
  %vm204 = vcmp.eq.f32.partialorder %v203, 8.507059e+37
  %v205 = vand.u32 %v192, 2147483648
  %v206 = vor.u32 1.1754944e-38, %v205
  %v207 = vsel %vm204, %v206, %v202
  %v208 = vmul.f32 1.0, %v207
  %v209 = vrcp.pop %v193
  %v210 = vmul.f32 %v193, %v209
  %v211 = vsub.f32 1.0, %v210
  %v212 = vmul.f32 %v209, %v211
  %v213 = vadd.f32 %v209, %v212
  %vm214 = vweird.f32 %v193
  %vm215 = vweird.f32 %v209
  %vm216 = vmor %vm214, %vm215
  %v217 = vsel %vm216, %v209, %v213
  %v218 = vand.u32 2147483647, %v193
  %vm219 = vcmp.eq.f32.partialorder %v218, 8.507059e+37
  %v220 = vand.u32 %v193, 2147483648
  %v221 = vor.u32 1.1754944e-38, %v220
  %v222 = vsel %vm219, %v221, %v217
  %v223 = vmul.f32 1.0, %v222
  %v224 = vtanh.pop %v147
  %v225 = vtanh.pop %v148
  %v226 = vmul.f32 %v208, 0.0
  %v227 = vmul.f32 %v223, 0.0
  %230 = vrot.lane.b32.xlu0 %v224, 112
  %v231 = vpop.permute.xlu0 %230
  %232 = vrot.lane.b32.xlu0 %v225, 112
  %v233 = vpop.permute.xlu0 %232
  %v236 = vmul.f32 %v208, %v231
  %v237 = vmul.f32 %v223, %v233
  %240 = vrot.lane.b32.xlu0 %v236, 8
  %v241 = vpop.permute.xlu0 %240
  %242 = vrot.lane.b32.xlu0 %v237, 8
  %v243 = vpop.permute.xlu0 %242
  %v246 = vadd.f32 %v226, %v241
  %v247 = vadd.f32 %v227, %v243
  %v248 = vtanh.pop %v246
  %v249 = vtanh.pop %v247
  %252 = vrot.lane.b32.xlu0 %v248, 16
  %v253 = vpop.permute.xlu0 %252
  %254 = vrot.lane.b32.xlu0 %v249, 16
  %v255 = vpop.permute.xlu0 %254
  %v258 = vmul.f32 %v208, %v253
  %v259 = vmul.f32 %v223, %v255
  %261 = vset.pattern.permute.xlu0 0
  %262 = vperm.xlu0 %261, %v112
  %v263 = vpop.permute.xlu0 %262
  %266 = vset.pattern.permute.xlu0 0
  %267 = vperm.xlu0 %266, %v113
  %v268 = vpop.permute.xlu0 %267
  %v270 = vmul.f32 %v263, %v246
  %v271 = vmul.f32 %v268, %v247
  %v272 = vsub.f32 1.0, %v112
  %v273 = vsub.f32 1.0, %v113
  %275 = vset.pattern.permute.xlu0 0
  %276 = vperm.xlu0 %275, %v272
  %v277 = vpop.permute.xlu0 %276
  %280 = vset.pattern.permute.xlu0 0
  %281 = vperm.xlu0 %280, %v273
  %v282 = vpop.permute.xlu0 %281
  %v284 = vmul.f32 %v277, 0.0
  %v285 = vmul.f32 %v282, 0.0
  %v286 = vadd.f32 %v270, %v284
  %v287 = vadd.f32 %v271, %v285
  %v288 = vmul.f32 %v263, %v258
  %v289 = vmul.f32 %v268, %v259
  %v290 = vadd.f32 %v288, %v284
  %v291 = vadd.f32 %v289, %v285
  %v292 = vxor.u32 %v184, 2147483648
  %v293 = vxor.u32 %v185, 2147483648
  %v294 = vmul.f32 %v292, 1.442695
  %v295 = vpow.pop %v294
  %v296 = vmul.f32 %v293, 1.442695
  %v297 = vpow.pop %v296
  %v298 = vadd.f32 %v295, 1.0
  %v299 = vadd.f32 %v297, 1.0
  %v300 = vrcp.pop %v298
  %v301 = vmul.f32 %v298, %v300
  %v302 = vsub.f32 1.0, %v301
  %v303 = vmul.f32 %v300, %v302
  %v304 = vadd.f32 %v300, %v303
  %vm305 = vweird.f32 %v298
  %vm306 = vweird.f32 %v300
  %vm307 = vmor %vm305, %vm306
  %v308 = vsel %vm307, %v300, %v304
  %v309 = vand.u32 2147483647, %v298
  %vm310 = vcmp.eq.f32.partialorder %v309, 8.507059e+37
  %v311 = vand.u32 %v298, 2147483648
  %v312 = vor.u32 1.1754944e-38, %v311
  %v313 = vsel %vm310, %v312, %v308
  %v314 = vmul.f32 1.0, %v313
  %v315 = vrcp.pop %v299
  %v316 = vmul.f32 %v299, %v315
  %v317 = vsub.f32 1.0, %v316
  %v318 = vmul.f32 %v315, %v317
  %v319 = vadd.f32 %v315, %v318
  %vm320 = vweird.f32 %v299
  %vm321 = vweird.f32 %v315
  %vm322 = vmor %vm320, %vm321
  %v323 = vsel %vm322, %v315, %v319
  %v324 = vand.u32 2147483647, %v299
  %vm325 = vcmp.eq.f32.partialorder %v324, 8.507059e+37
  %v326 = vand.u32 %v299, 2147483648
  %v327 = vor.u32 1.1754944e-38, %v326
  %v328 = vsel %vm325, %v327, %v323
  %v329 = vmul.f32 1.0, %v328
  %v330 = vtanh.pop %v184
  %v331 = vtanh.pop %v185
  %v332 = vmul.f32 %v314, 0.0
  %v333 = vmul.f32 %v329, 0.0
  %336 = vrot.lane.b32.xlu0 %v330, 112
  %v337 = vpop.permute.xlu0 %336
  %338 = vrot.lane.b32.xlu0 %v331, 112
  %v339 = vpop.permute.xlu0 %338
  %v342 = vmul.f32 %v314, %v337
  %v343 = vmul.f32 %v329, %v339
  %346 = vrot.lane.b32.xlu0 %v342, 8
  %v347 = vpop.permute.xlu0 %346
  %348 = vrot.lane.b32.xlu0 %v343, 8
  %v349 = vpop.permute.xlu0 %348
  %v352 = vadd.f32 %v332, %v347
  %v353 = vadd.f32 %v333, %v349
  %v354 = vtanh.pop %v352
  %v355 = vtanh.pop %v353
  %358 = vrot.lane.b32.xlu0 %v354, 16
  %v359 = vpop.permute.xlu0 %358
  %360 = vrot.lane.b32.xlu0 %v355, 16
  %v361 = vpop.permute.xlu0 %360
  %v364 = vmul.f32 %v314, %v359
  %v365 = vmul.f32 %v329, %v361
  %367 = vset.pattern.permute.xlu0 0
  %368 = vperm.xlu0 %367, %v115
  %v369 = vpop.permute.xlu0 %368
  %372 = vset.pattern.permute.xlu0 0
  %373 = vperm.xlu0 %372, %v116
  %v374 = vpop.permute.xlu0 %373
  %v376 = vmul.f32 %v369, %v352
  %v377 = vmul.f32 %v374, %v353
  %v378 = vsub.f32 1.0, %v115
  %v379 = vsub.f32 1.0, %v116
  %381 = vset.pattern.permute.xlu0 0
  %382 = vperm.xlu0 %381, %v378
  %v383 = vpop.permute.xlu0 %382
  %386 = vset.pattern.permute.xlu0 0
  %387 = vperm.xlu0 %386, %v379
  %v388 = vpop.permute.xlu0 %387
  %v390 = vmul.f32 %v383, 0.0
  %v391 = vmul.f32 %v388, 0.0
  %v392 = vadd.f32 %v376, %v390
  %v393 = vadd.f32 %v377, %v391
  %v394 = vmul.f32 %v369, %v364
  %v395 = vmul.f32 %v374, %v365
  %v396 = vadd.f32 %v394, %v390
  %v397 = vadd.f32 %v395, %v391
  %s398 = scalar_lea.vmem %s1, 16
  %v399 = vld [vmem:[%s398] sm:$0xff]
  %v400 = vld [vmem:[%s398 + $0x8] sm:$0xff]
  %s401 = scalar_lea.vmem %s1, 32
  %v402 = vld [vmem:[%s401] sm:$0xff]
  %v403 = vld [vmem:[%s401 + $0x8] sm:$0xff]
  %s404 = scalar_lea.vmem [#allocation2], 16
  %v405 = vld [vmem:[%s404] sm:$0xff]
  %v406 = vld [vmem:[%s404 + $0x8] sm:$0xff]
  %409 = vrot.lane.b32.xlu0 %v290, 104
  %v410 = vpop.permute.xlu0 %409
  %411 = vrot.lane.b32.xlu0 %v291, 104
  %v412 = vpop.permute.xlu0 %411
  %v413 = vsel %vm120, %v410, 0
  %v415 = vsel %vm120, %v412, 0
  %417 = vmatpush.msra.mxu0 0.0
  %418 = vmatpush.msra.mxu0 0.0
  %419 = vmatpush.msra.mxu0 0.0
  %420 = vmatpush.msra.mxu0 0.0
  %421 = vmatpush.msra.mxu0 0.0
  %422 = vmatpush.msra.mxu0 0.0
  %423 = vmatpush.msra.mxu0 0.0
  %424 = vmatpush.msra.mxu0 0.0
  %425 = vmatpush.msra.mxu0 0.0
  %426 = vmatpush.msra.mxu0 0.0
  %427 = vmatpush.msra.mxu0 0.0
  %428 = vmatpush.msra.mxu0 0.0
  %429 = vmatpush.msra.mxu0 0.0
  %430 = vmatpush.msra.mxu0 0.0
  %431 = vmatpush.msra.mxu0 0.0
  %432 = vmatpush.msra.mxu0 %v119
  %433 = vmatmul.f32.gmra.mxu0 %v413
  %v434 = vpop.f32.mrf.mxu0
  %v435 = vadd.f32 0.0, %v434
  %436 = vmatmul.f32.gmra.mxu0 %v415
  %v437 = vpop.f32.mrf.mxu0
  %v438 = vadd.f32 0.0, %v437
  %439 = vdwg.mxu0
  %v440 = vadd.f32 %v405, %v435
  %v441 = vadd.f32 %v406, %v438
  %s442 = scalar_lea.vmem [#allocation2], 32
  %v443 = vld [vmem:[%s442] sm:$0xff]
  %v444 = vld [vmem:[%s442 + $0x8] sm:$0xff]
  %447 = vrot.lane.b32.xlu0 %v396, 72
  %v448 = vpop.permute.xlu0 %447
  %449 = vrot.lane.b32.xlu0 %v397, 72
  %v450 = vpop.permute.xlu0 %449
  %v451 = vsel %vm120, %v448, 0
  %v453 = vsel %vm120, %v450, 0
  %455 = vmatpush.msra.mxu0 0.0
  %456 = vmatpush.msra.mxu0 0.0
  %457 = vmatpush.msra.mxu0 0.0
  %458 = vmatpush.msra.mxu0 0.0
  %459 = vmatpush.msra.mxu0 0.0
  %460 = vmatpush.msra.mxu0 0.0
  %461 = vmatpush.msra.mxu0 0.0
  %462 = vmatpush.msra.mxu0 0.0
  %463 = vmatpush.msra.mxu0 0.0
  %464 = vmatpush.msra.mxu0 0.0
  %465 = vmatpush.msra.mxu0 0.0
  %466 = vmatpush.msra.mxu0 0.0
  %467 = vmatpush.msra.mxu0 0.0
  %468 = vmatpush.msra.mxu0 0.0
  %469 = vmatpush.msra.mxu0 0.0
  %470 = vmatpush.msra.mxu0 %v152
  %471 = vmatmul.f32.gmra.mxu0 %v451
  %v472 = vpop.f32.mrf.mxu0
  %v473 = vadd.f32 0.0, %v472
  %474 = vmatmul.f32.gmra.mxu0 %v453
  %v475 = vpop.f32.mrf.mxu0
  %v476 = vadd.f32 0.0, %v475
  %477 = vdwg.mxu0
  %480 = vrot.lane.b32.xlu0 %v473, 32
  %v481 = vpop.permute.xlu0 %480
  %482 = vrot.lane.b32.xlu0 %v476, 32
  %v483 = vpop.permute.xlu0 %482
  %v486 = vadd.f32 %v443, %v481
  %v487 = vadd.f32 %v444, %v483
  %v488 = vxor.u32 %v440, 2147483648
  %v489 = vxor.u32 %v441, 2147483648
  %v490 = vmul.f32 %v488, 1.442695
  %v491 = vpow.pop %v490
  %v492 = vmul.f32 %v489, 1.442695
  %v493 = vpow.pop %v492
  %v494 = vadd.f32 %v491, 1.0
  %v495 = vadd.f32 %v493, 1.0
  %v496 = vrcp.pop %v494
  %v497 = vmul.f32 %v494, %v496
  %v498 = vsub.f32 1.0, %v497
  %v499 = vmul.f32 %v496, %v498
  %v500 = vadd.f32 %v496, %v499
  %vm501 = vweird.f32 %v494
  %vm502 = vweird.f32 %v496
  %vm503 = vmor %vm501, %vm502
  %v504 = vsel %vm503, %v496, %v500
  %v505 = vand.u32 2147483647, %v494
  %vm506 = vcmp.eq.f32.partialorder %v505, 8.507059e+37
  %v507 = vand.u32 %v494, 2147483648
  %v508 = vor.u32 1.1754944e-38, %v507
  %v509 = vsel %vm506, %v508, %v504
  %v510 = vmul.f32 1.0, %v509
  %v511 = vrcp.pop %v495
  %v512 = vmul.f32 %v495, %v511
  %v513 = vsub.f32 1.0, %v512
  %v514 = vmul.f32 %v511, %v513
  %v515 = vadd.f32 %v511, %v514
  %vm516 = vweird.f32 %v495
  %vm517 = vweird.f32 %v511
  %vm518 = vmor %vm516, %vm517
  %v519 = vsel %vm518, %v511, %v515
  %v520 = vand.u32 2147483647, %v495
  %vm521 = vcmp.eq.f32.partialorder %v520, 8.507059e+37
  %v522 = vand.u32 %v495, 2147483648
  %v523 = vor.u32 1.1754944e-38, %v522
  %v524 = vsel %vm521, %v523, %v519
  %v525 = vmul.f32 1.0, %v524
  %v526 = vtanh.pop %v440
  %v527 = vtanh.pop %v441
  %v528 = vmul.f32 %v510, %v286
  %v529 = vmul.f32 %v525, %v287
  %532 = vrot.lane.b32.xlu0 %v526, 112
  %v533 = vpop.permute.xlu0 %532
  %534 = vrot.lane.b32.xlu0 %v527, 112
  %v535 = vpop.permute.xlu0 %534
  %v538 = vmul.f32 %v510, %v533
  %v539 = vmul.f32 %v525, %v535
  %542 = vrot.lane.b32.xlu0 %v538, 8
  %v543 = vpop.permute.xlu0 %542
  %544 = vrot.lane.b32.xlu0 %v539, 8
  %v545 = vpop.permute.xlu0 %544
  %v548 = vadd.f32 %v528, %v543
  %v549 = vadd.f32 %v529, %v545
  %v550 = vtanh.pop %v548
  %v551 = vtanh.pop %v549
  %554 = vrot.lane.b32.xlu0 %v550, 16
  %v555 = vpop.permute.xlu0 %554
  %556 = vrot.lane.b32.xlu0 %v551, 16
  %v557 = vpop.permute.xlu0 %556
  %v560 = vmul.f32 %v510, %v555
  %v561 = vmul.f32 %v525, %v557
  %563 = vset.pattern.permute.xlu0 0
  %564 = vperm.xlu0 %563, %v399
  %v565 = vpop.permute.xlu0 %564
  %568 = vset.pattern.permute.xlu0 0
  %569 = vperm.xlu0 %568, %v400
  %v570 = vpop.permute.xlu0 %569
  %v572 = vmul.f32 %v565, %v548
  %v573 = vmul.f32 %v570, %v549
  %v574 = vsub.f32 1.0, %v399
  %v575 = vsub.f32 1.0, %v400
  %577 = vset.pattern.permute.xlu0 0
  %578 = vperm.xlu0 %577, %v574
  %v579 = vpop.permute.xlu0 %578
  %582 = vset.pattern.permute.xlu0 0
  %583 = vperm.xlu0 %582, %v575
  %v584 = vpop.permute.xlu0 %583
  %v586 = vmul.f32 %v579, %v286
  %v587 = vmul.f32 %v584, %v287
  %v588 = vadd.f32 %v572, %v586
  %v589 = vadd.f32 %v573, %v587
  %v590 = vmul.f32 %v565, %v560
  %v591 = vmul.f32 %v570, %v561
  %v592 = vmul.f32 %v579, %v290
  %v593 = vmul.f32 %v584, %v291
  %v594 = vadd.f32 %v590, %v592
  %v595 = vadd.f32 %v591, %v593
  %v596 = vxor.u32 %v486, 2147483648
  %v597 = vxor.u32 %v487, 2147483648
  %v598 = vmul.f32 %v596, 1.442695
  %v599 = vpow.pop %v598
  %v600 = vmul.f32 %v597, 1.442695
  %v601 = vpow.pop %v600
  %v602 = vadd.f32 %v599, 1.0
  %v603 = vadd.f32 %v601, 1.0
  %v604 = vrcp.pop %v602
  %v605 = vmul.f32 %v602, %v604
  %v606 = vsub.f32 1.0, %v605
  %v607 = vmul.f32 %v604, %v606
  %v608 = vadd.f32 %v604, %v607
  %vm609 = vweird.f32 %v602
  %vm610 = vweird.f32 %v604
  %vm611 = vmor %vm609, %vm610
  %v612 = vsel %vm611, %v604, %v608
  %v613 = vand.u32 2147483647, %v602
  %vm614 = vcmp.eq.f32.partialorder %v613, 8.507059e+37
  %v615 = vand.u32 %v602, 2147483648
  %v616 = vor.u32 1.1754944e-38, %v615
  %v617 = vsel %vm614, %v616, %v612
  %v618 = vmul.f32 1.0, %v617
  %v619 = vrcp.pop %v603
  %v620 = vmul.f32 %v603, %v619
  %v621 = vsub.f32 1.0, %v620
  %v622 = vmul.f32 %v619, %v621
  %v623 = vadd.f32 %v619, %v622
  %vm624 = vweird.f32 %v603
  %vm625 = vweird.f32 %v619
  %vm626 = vmor %vm624, %vm625
  %v627 = vsel %vm626, %v619, %v623
  %v628 = vand.u32 2147483647, %v603
  %vm629 = vcmp.eq.f32.partialorder %v628, 8.507059e+37
  %v630 = vand.u32 %v603, 2147483648
  %v631 = vor.u32 1.1754944e-38, %v630
  %v632 = vsel %vm629, %v631, %v627
  %v633 = vmul.f32 1.0, %v632
  %v634 = vtanh.pop %v486
  %v635 = vtanh.pop %v487
  %v636 = vmul.f32 %v618, %v392
  %v637 = vmul.f32 %v633, %v393
  %640 = vrot.lane.b32.xlu0 %v634, 112
  %v641 = vpop.permute.xlu0 %640
  %642 = vrot.lane.b32.xlu0 %v635, 112
  %v643 = vpop.permute.xlu0 %642
  %v646 = vmul.f32 %v618, %v641
  %v647 = vmul.f32 %v633, %v643
  %650 = vrot.lane.b32.xlu0 %v646, 8
  %v651 = vpop.permute.xlu0 %650
  %652 = vrot.lane.b32.xlu0 %v647, 8
  %v653 = vpop.permute.xlu0 %652
  %v656 = vadd.f32 %v636, %v651
  %v657 = vadd.f32 %v637, %v653
  %v658 = vtanh.pop %v656
  %v659 = vtanh.pop %v657
  %662 = vrot.lane.b32.xlu0 %v658, 16
  %v663 = vpop.permute.xlu0 %662
  %664 = vrot.lane.b32.xlu0 %v659, 16
  %v665 = vpop.permute.xlu0 %664
  %v668 = vmul.f32 %v618, %v663
  %v669 = vmul.f32 %v633, %v665
  %671 = vset.pattern.permute.xlu0 0
  %672 = vperm.xlu0 %671, %v402
  %v673 = vpop.permute.xlu0 %672
  %676 = vset.pattern.permute.xlu0 0
  %677 = vperm.xlu0 %676, %v403
  %v678 = vpop.permute.xlu0 %677
  %v680 = vmul.f32 %v673, %v656
  %v681 = vmul.f32 %v678, %v657
  %v682 = vsub.f32 1.0, %v402
  %v683 = vsub.f32 1.0, %v403
  %685 = vset.pattern.permute.xlu0 0
  %686 = vperm.xlu0 %685, %v682
  %v687 = vpop.permute.xlu0 %686
  %690 = vset.pattern.permute.xlu0 0
  %691 = vperm.xlu0 %690, %v683
  %v692 = vpop.permute.xlu0 %691
  %v694 = vmul.f32 %v687, %v392
  %v695 = vmul.f32 %v692, %v393
  %v696 = vadd.f32 %v680, %v694
  %v697 = vadd.f32 %v681, %v695
  %v698 = vmul.f32 %v673, %v668
  %v699 = vmul.f32 %v678, %v669
  %v700 = vmul.f32 %v687, %v396
  %v701 = vmul.f32 %v692, %v397
  %v702 = vadd.f32 %v698, %v700
  %v703 = vadd.f32 %v699, %v701
  %706 = vrot.lane.b32.xlu0 %v594, 104
  %v707 = vpop.permute.xlu0 %706
  %708 = vrot.lane.b32.xlu0 %v595, 104
  %v709 = vpop.permute.xlu0 %708
  %v710 = vsel %vm120, %v707, 0
  %v712 = vsel %vm120, %v709, 0
  %714 = vmatpush.msra.mxu0 0.0
  %715 = vmatpush.msra.mxu0 0.0
  %716 = vmatpush.msra.mxu0 0.0
  %717 = vmatpush.msra.mxu0 0.0
  %718 = vmatpush.msra.mxu0 0.0
  %719 = vmatpush.msra.mxu0 0.0
  %720 = vmatpush.msra.mxu0 0.0
  %721 = vmatpush.msra.mxu0 0.0
  %722 = vmatpush.msra.mxu0 0.0
  %723 = vmatpush.msra.mxu0 0.0
  %724 = vmatpush.msra.mxu0 0.0
  %725 = vmatpush.msra.mxu0 0.0
  %726 = vmatpush.msra.mxu0 0.0
  %727 = vmatpush.msra.mxu0 0.0
  %728 = vmatpush.msra.mxu0 0.0
  %729 = vmatpush.msra.mxu0 %v119
  %730 = vmatmul.f32.gmra.mxu0 %v710
  %v731 = vpop.f32.mrf.mxu0
  %v732 = vadd.f32 0.0, %v731
  %733 = vmatmul.f32.gmra.mxu0 %v712
  %v734 = vpop.f32.mrf.mxu0
  %v735 = vadd.f32 0.0, %v734
  %736 = vdwg.mxu0
  %v737 = vadd.f32 %v443, %v732
  %v738 = vadd.f32 %v444, %v735
  %741 = vrot.lane.b32.xlu0 %v702, 72
  %v742 = vpop.permute.xlu0 %741
  %743 = vrot.lane.b32.xlu0 %v703, 72
  %v744 = vpop.permute.xlu0 %743
  %v745 = vsel %vm120, %v742, 0
  %v747 = vsel %vm120, %v744, 0
  %749 = vmatpush.msra.mxu0 0.0
  %750 = vmatpush.msra.mxu0 0.0
  %751 = vmatpush.msra.mxu0 0.0
  %752 = vmatpush.msra.mxu0 0.0
  %753 = vmatpush.msra.mxu0 0.0
  %754 = vmatpush.msra.mxu0 0.0
  %755 = vmatpush.msra.mxu0 0.0
  %756 = vmatpush.msra.mxu0 0.0
  %757 = vmatpush.msra.mxu0 0.0
  %758 = vmatpush.msra.mxu0 0.0
  %759 = vmatpush.msra.mxu0 0.0
  %760 = vmatpush.msra.mxu0 0.0
  %761 = vmatpush.msra.mxu0 0.0
  %762 = vmatpush.msra.mxu0 0.0
  %763 = vmatpush.msra.mxu0 0.0
  %764 = vmatpush.msra.mxu0 %v152
  %765 = vmatmul.f32.gmra.mxu0 %v745
  %v766 = vpop.f32.mrf.mxu0
  %v767 = vadd.f32 0.0, %v766
  %768 = vmatmul.f32.gmra.mxu0 %v747
  %v769 = vpop.f32.mrf.mxu0
  %v770 = vadd.f32 0.0, %v769
  %771 = vdwg.mxu0
  %774 = vrot.lane.b32.xlu0 %v767, 32
  %v775 = vpop.permute.xlu0 %774
  %776 = vrot.lane.b32.xlu0 %v770, 32
  %v777 = vpop.permute.xlu0 %776
  %v780 = vadd.f32 %v405, %v775
  %v781 = vadd.f32 %v406, %v777
  %v782 = vxor.u32 %v737, 2147483648
  %v783 = vxor.u32 %v738, 2147483648
  %v784 = vmul.f32 %v782, 1.442695
  %v785 = vpow.pop %v784
  %v786 = vmul.f32 %v783, 1.442695
  %v787 = vpow.pop %v786
  %v788 = vadd.f32 %v785, 1.0
  %v789 = vadd.f32 %v787, 1.0
  %v790 = vrcp.pop %v788
  %v791 = vmul.f32 %v788, %v790
  %v792 = vsub.f32 1.0, %v791
  %v793 = vmul.f32 %v790, %v792
  %v794 = vadd.f32 %v790, %v793
  %vm795 = vweird.f32 %v788
  %vm796 = vweird.f32 %v790
  %vm797 = vmor %vm795, %vm796
  %v798 = vsel %vm797, %v790, %v794
  %v799 = vand.u32 2147483647, %v788
  %vm800 = vcmp.eq.f32.partialorder %v799, 8.507059e+37
  %v801 = vand.u32 %v788, 2147483648
  %v802 = vor.u32 1.1754944e-38, %v801
  %v803 = vsel %vm800, %v802, %v798
  %v804 = vmul.f32 1.0, %v803
  %v805 = vrcp.pop %v789
  %v806 = vmul.f32 %v789, %v805
  %v807 = vsub.f32 1.0, %v806
  %v808 = vmul.f32 %v805, %v807
  %v809 = vadd.f32 %v805, %v808
  %vm810 = vweird.f32 %v789
  %vm811 = vweird.f32 %v805
  %vm812 = vmor %vm810, %vm811
  %v813 = vsel %vm812, %v805, %v809
  %v814 = vand.u32 2147483647, %v789
  %vm815 = vcmp.eq.f32.partialorder %v814, 8.507059e+37
  %v816 = vand.u32 %v789, 2147483648
  %v817 = vor.u32 1.1754944e-38, %v816
  %v818 = vsel %vm815, %v817, %v813
  %v819 = vmul.f32 1.0, %v818
  %v820 = vtanh.pop %v737
  %v821 = vtanh.pop %v738
  %v822 = vmul.f32 %v804, %v588
  %v823 = vmul.f32 %v819, %v589
  %826 = vrot.lane.b32.xlu0 %v820, 112
  %v827 = vpop.permute.xlu0 %826
  %828 = vrot.lane.b32.xlu0 %v821, 112
  %v829 = vpop.permute.xlu0 %828
  %v832 = vmul.f32 %v804, %v827
  %v833 = vmul.f32 %v819, %v829
  %836 = vrot.lane.b32.xlu0 %v832, 8
  %v837 = vpop.permute.xlu0 %836
  %838 = vrot.lane.b32.xlu0 %v833, 8
  %v839 = vpop.permute.xlu0 %838
  %v842 = vadd.f32 %v822, %v837
  %v843 = vadd.f32 %v823, %v839
  %v844 = vtanh.pop %v842
  %v845 = vtanh.pop %v843
  %848 = vrot.lane.b32.xlu0 %v844, 16
  %v849 = vpop.permute.xlu0 %848
  %850 = vrot.lane.b32.xlu0 %v845, 16
  %v851 = vpop.permute.xlu0 %850
  %v854 = vmul.f32 %v804, %v849
  %v855 = vmul.f32 %v819, %v851
  %v856 = vmul.f32 %v673, %v842
  %v857 = vmul.f32 %v678, %v843
  %v858 = vmul.f32 %v687, %v588
  %v859 = vmul.f32 %v692, %v589
  %v860 = vadd.f32 %v856, %v858
  %v861 = vadd.f32 %v857, %v859
  %v862 = vmul.f32 %v673, %v854
  %v863 = vmul.f32 %v678, %v855
  %v864 = vmul.f32 %v687, %v594
  %v865 = vmul.f32 %v692, %v595
  %v866 = vadd.f32 %v862, %v864
  %v867 = vadd.f32 %v863, %v865
  %v868 = vxor.u32 %v780, 2147483648
  %v869 = vxor.u32 %v781, 2147483648
  %v870 = vmul.f32 %v868, 1.442695
  %v871 = vpow.pop %v870
  %v872 = vmul.f32 %v869, 1.442695
  %v873 = vpow.pop %v872
  %v874 = vadd.f32 %v871, 1.0
  %v875 = vadd.f32 %v873, 1.0
  %v876 = vrcp.pop %v874
  %v877 = vmul.f32 %v874, %v876
  %v878 = vsub.f32 1.0, %v877
  %v879 = vmul.f32 %v876, %v878
  %v880 = vadd.f32 %v876, %v879
  %vm881 = vweird.f32 %v874
  %vm882 = vweird.f32 %v876
  %vm883 = vmor %vm881, %vm882
  %v884 = vsel %vm883, %v876, %v880
  %v885 = vand.u32 2147483647, %v874
  %vm886 = vcmp.eq.f32.partialorder %v885, 8.507059e+37
  %v887 = vand.u32 %v874, 2147483648
  %v888 = vor.u32 1.1754944e-38, %v887
  %v889 = vsel %vm886, %v888, %v884
  %v890 = vmul.f32 1.0, %v889
  %v891 = vrcp.pop %v875
  %v892 = vmul.f32 %v875, %v891
  %v893 = vsub.f32 1.0, %v892
  %v894 = vmul.f32 %v891, %v893
  %v895 = vadd.f32 %v891, %v894
  %vm896 = vweird.f32 %v875
  %vm897 = vweird.f32 %v891
  %vm898 = vmor %vm896, %vm897
  %v899 = vsel %vm898, %v891, %v895
  %v900 = vand.u32 2147483647, %v875
  %vm901 = vcmp.eq.f32.partialorder %v900, 8.507059e+37
  %v902 = vand.u32 %v875, 2147483648
  %v903 = vor.u32 1.1754944e-38, %v902
  %v904 = vsel %vm901, %v903, %v899
  %v905 = vmul.f32 1.0, %v904
  %v906 = vtanh.pop %v780
  %v907 = vtanh.pop %v781
  %v908 = vmul.f32 %v890, %v696
  %v909 = vmul.f32 %v905, %v697
  %912 = vrot.lane.b32.xlu0 %v906, 112
  %v913 = vpop.permute.xlu0 %912
  %914 = vrot.lane.b32.xlu0 %v907, 112
  %v915 = vpop.permute.xlu0 %914
  %v918 = vmul.f32 %v890, %v913
  %v919 = vmul.f32 %v905, %v915
  %922 = vrot.lane.b32.xlu0 %v918, 8
  %v923 = vpop.permute.xlu0 %922
  %924 = vrot.lane.b32.xlu0 %v919, 8
  %v925 = vpop.permute.xlu0 %924
  %v928 = vadd.f32 %v908, %v923
  %v929 = vadd.f32 %v909, %v925
  %v930 = vtanh.pop %v928
  %v931 = vtanh.pop %v929
  %934 = vrot.lane.b32.xlu0 %v930, 16
  %v935 = vpop.permute.xlu0 %934
  %936 = vrot.lane.b32.xlu0 %v931, 16
  %v937 = vpop.permute.xlu0 %936
  %v940 = vmul.f32 %v890, %v935
  %v941 = vmul.f32 %v905, %v937
  %v942 = vmul.f32 %v565, %v928
  %v943 = vmul.f32 %v570, %v929
  %v944 = vmul.f32 %v579, %v696
  %v945 = vmul.f32 %v584, %v697
  %v946 = vadd.f32 %v942, %v944
  %v947 = vadd.f32 %v943, %v945
  %v948 = vmul.f32 %v565, %v940
  %v949 = vmul.f32 %v570, %v941
  %v950 = vmul.f32 %v579, %v702
  %v951 = vmul.f32 %v584, %v703
  %v952 = vadd.f32 %v948, %v950
  %v953 = vadd.f32 %v949, %v951
  %956 = vrot.lane.b32.xlu0 %v866, 104
  %v957 = vpop.permute.xlu0 %956
  %958 = vrot.lane.b32.xlu0 %v867, 104
  %v959 = vpop.permute.xlu0 %958
  %v960 = vsel %vm120, %v957, 0
  %v962 = vsel %vm120, %v959, 0
  %964 = vmatpush.msra.mxu0 0.0
  %965 = vmatpush.msra.mxu0 0.0
  %966 = vmatpush.msra.mxu0 0.0
  %967 = vmatpush.msra.mxu0 0.0
  %968 = vmatpush.msra.mxu0 0.0
  %969 = vmatpush.msra.mxu0 0.0
  %970 = vmatpush.msra.mxu0 0.0
  %971 = vmatpush.msra.mxu0 0.0
  %972 = vmatpush.msra.mxu0 0.0
  %973 = vmatpush.msra.mxu0 0.0
  %974 = vmatpush.msra.mxu0 0.0
  %975 = vmatpush.msra.mxu0 0.0
  %976 = vmatpush.msra.mxu0 0.0
  %977 = vmatpush.msra.mxu0 0.0
  %978 = vmatpush.msra.mxu0 0.0
  %979 = vmatpush.msra.mxu0 %v119
  %980 = vmatmul.f32.gmra.mxu0 %v960
  %v981 = vpop.f32.mrf.mxu0
  %v982 = vadd.f32 0.0, %v981
  %983 = vmatmul.f32.gmra.mxu0 %v962
  %v984 = vpop.f32.mrf.mxu0
  %v985 = vadd.f32 0.0, %v984
  %986 = vdwg.mxu0
  %v987 = vadd.f32 %v150, %v982
  %v988 = vadd.f32 %v151, %v985
  %991 = vrot.lane.b32.xlu0 %v952, 72
  %v992 = vpop.permute.xlu0 %991
  %993 = vrot.lane.b32.xlu0 %v953, 72
  %v994 = vpop.permute.xlu0 %993
  %v995 = vsel %vm120, %v992, 0
  %v997 = vsel %vm120, %v994, 0
  %999 = vmatpush.msra.mxu0 0.0
  %1000 = vmatpush.msra.mxu0 0.0
  %1001 = vmatpush.msra.mxu0 0.0
  %1002 = vmatpush.msra.mxu0 0.0
  %1003 = vmatpush.msra.mxu0 0.0
  %1004 = vmatpush.msra.mxu0 0.0
  %1005 = vmatpush.msra.mxu0 0.0
  %1006 = vmatpush.msra.mxu0 0.0
  %1007 = vmatpush.msra.mxu0 0.0
  %1008 = vmatpush.msra.mxu0 0.0
  %1009 = vmatpush.msra.mxu0 0.0
  %1010 = vmatpush.msra.mxu0 0.0
  %1011 = vmatpush.msra.mxu0 0.0
  %1012 = vmatpush.msra.mxu0 0.0
  %1013 = vmatpush.msra.mxu0 0.0
  %1014 = vmatpush.msra.mxu0 %v152
  %1015 = vmatmul.f32.gmra.mxu0 %v995
  %v1016 = vpop.f32.mrf.mxu0
  %v1017 = vadd.f32 0.0, %v1016
  %1018 = vmatmul.f32.gmra.mxu0 %v997
  %v1019 = vpop.f32.mrf.mxu0
  %v1020 = vadd.f32 0.0, %v1019
  %1021 = vdwg.mxu0
  %1024 = vrot.lane.b32.xlu0 %v1017, 32
  %v1025 = vpop.permute.xlu0 %1024
  %1026 = vrot.lane.b32.xlu0 %v1020, 32
  %v1027 = vpop.permute.xlu0 %1026
  %v1030 = vadd.f32 %v117, %v1025
  %v1031 = vadd.f32 %v118, %v1027
  %v1032 = vxor.u32 %v987, 2147483648
  %v1033 = vxor.u32 %v988, 2147483648
  %v1034 = vmul.f32 %v1032, 1.442695
  %v1035 = vpow.pop %v1034
  %v1036 = vmul.f32 %v1033, 1.442695
  %v1037 = vpow.pop %v1036
  %v1038 = vadd.f32 %v1035, 1.0
  %v1039 = vadd.f32 %v1037, 1.0
  %v1040 = vrcp.pop %v1038
  %v1041 = vmul.f32 %v1038, %v1040
  %v1042 = vsub.f32 1.0, %v1041
  %v1043 = vmul.f32 %v1040, %v1042
  %v1044 = vadd.f32 %v1040, %v1043
  %vm1045 = vweird.f32 %v1038
  %vm1046 = vweird.f32 %v1040
  %vm1047 = vmor %vm1045, %vm1046
  %v1048 = vsel %vm1047, %v1040, %v1044
  %v1049 = vand.u32 2147483647, %v1038
  %vm1050 = vcmp.eq.f32.partialorder %v1049, 8.507059e+37
  %v1051 = vand.u32 %v1038, 2147483648
  %v1052 = vor.u32 1.1754944e-38, %v1051
  %v1053 = vsel %vm1050, %v1052, %v1048
  %v1054 = vmul.f32 1.0, %v1053
  %v1055 = vrcp.pop %v1039
  %v1056 = vmul.f32 %v1039, %v1055
  %v1057 = vsub.f32 1.0, %v1056
  %v1058 = vmul.f32 %v1055, %v1057
  %v1059 = vadd.f32 %v1055, %v1058
  %vm1060 = vweird.f32 %v1039
  %vm1061 = vweird.f32 %v1055
  %vm1062 = vmor %vm1060, %vm1061
  %v1063 = vsel %vm1062, %v1055, %v1059
  %v1064 = vand.u32 2147483647, %v1039
  %vm1065 = vcmp.eq.f32.partialorder %v1064, 8.507059e+37
  %v1066 = vand.u32 %v1039, 2147483648
  %v1067 = vor.u32 1.1754944e-38, %v1066
  %v1068 = vsel %vm1065, %v1067, %v1063
  %v1069 = vmul.f32 1.0, %v1068
  %v1070 = vtanh.pop %v987
  %v1071 = vtanh.pop %v988
  %v1072 = vmul.f32 %v1054, %v860
  %v1073 = vmul.f32 %v1069, %v861
  %1076 = vrot.lane.b32.xlu0 %v1070, 112
  %v1077 = vpop.permute.xlu0 %1076
  %1078 = vrot.lane.b32.xlu0 %v1071, 112
  %v1079 = vpop.permute.xlu0 %1078
  %v1082 = vmul.f32 %v1054, %v1077
  %v1083 = vmul.f32 %v1069, %v1079
  %1086 = vrot.lane.b32.xlu0 %v1082, 8
  %v1087 = vpop.permute.xlu0 %1086
  %1088 = vrot.lane.b32.xlu0 %v1083, 8
  %v1089 = vpop.permute.xlu0 %1088
  %v1092 = vadd.f32 %v1072, %v1087
  %v1093 = vadd.f32 %v1073, %v1089
  %v1094 = vtanh.pop %v1092
  %v1095 = vtanh.pop %v1093
  %1098 = vrot.lane.b32.xlu0 %v1094, 16
  %v1099 = vpop.permute.xlu0 %1098
  %1100 = vrot.lane.b32.xlu0 %v1095, 16
  %v1101 = vpop.permute.xlu0 %1100
  %v1104 = vmul.f32 %v1054, %v1099
  %v1105 = vmul.f32 %v1069, %v1101
  %v1106 = vmul.f32 %v369, %v1104
  %v1107 = vmul.f32 %v374, %v1105
  %v1108 = vmul.f32 %v383, %v866
  %v1109 = vmul.f32 %v388, %v867
  %v1110 = vadd.f32 %v1106, %v1108
  %v1111 = vadd.f32 %v1107, %v1109
  %v1112 = vxor.u32 %v1030, 2147483648
  %v1113 = vxor.u32 %v1031, 2147483648
  %v1114 = vmul.f32 %v1112, 1.442695
  %v1115 = vpow.pop %v1114
  %v1116 = vmul.f32 %v1113, 1.442695
  %v1117 = vpow.pop %v1116
  %v1118 = vadd.f32 %v1115, 1.0
  %v1119 = vadd.f32 %v1117, 1.0
  %v1120 = vrcp.pop %v1118
  %v1121 = vmul.f32 %v1118, %v1120
  %v1122 = vsub.f32 1.0, %v1121
  %v1123 = vmul.f32 %v1120, %v1122
  %v1124 = vadd.f32 %v1120, %v1123
  %vm1125 = vweird.f32 %v1118
  %vm1126 = vweird.f32 %v1120
  %vm1127 = vmor %vm1125, %vm1126
  %v1128 = vsel %vm1127, %v1120, %v1124
  %v1129 = vand.u32 2147483647, %v1118
  %vm1130 = vcmp.eq.f32.partialorder %v1129, 8.507059e+37
  %v1131 = vand.u32 %v1118, 2147483648
  %v1132 = vor.u32 1.1754944e-38, %v1131
  %v1133 = vsel %vm1130, %v1132, %v1128
  %v1134 = vmul.f32 1.0, %v1133
  %v1135 = vrcp.pop %v1119
  %v1136 = vmul.f32 %v1119, %v1135
  %v1137 = vsub.f32 1.0, %v1136
  %v1138 = vmul.f32 %v1135, %v1137
  %v1139 = vadd.f32 %v1135, %v1138
  %vm1140 = vweird.f32 %v1119
  %vm1141 = vweird.f32 %v1135
  %vm1142 = vmor %vm1140, %vm1141
  %v1143 = vsel %vm1142, %v1135, %v1139
  %v1144 = vand.u32 2147483647, %v1119
  %vm1145 = vcmp.eq.f32.partialorder %v1144, 8.507059e+37
  %v1146 = vand.u32 %v1119, 2147483648
  %v1147 = vor.u32 1.1754944e-38, %v1146
  %v1148 = vsel %vm1145, %v1147, %v1143
  %v1149 = vmul.f32 1.0, %v1148
  %v1150 = vtanh.pop %v1030
  %v1151 = vtanh.pop %v1031
  %v1152 = vmul.f32 %v1134, %v946
  %v1153 = vmul.f32 %v1149, %v947
  %1156 = vrot.lane.b32.xlu0 %v1150, 112
  %v1157 = vpop.permute.xlu0 %1156
  %1158 = vrot.lane.b32.xlu0 %v1151, 112
  %v1159 = vpop.permute.xlu0 %1158
  %v1162 = vmul.f32 %v1134, %v1157
  %v1163 = vmul.f32 %v1149, %v1159
  %1166 = vrot.lane.b32.xlu0 %v1162, 8
  %v1167 = vpop.permute.xlu0 %1166
  %1168 = vrot.lane.b32.xlu0 %v1163, 8
  %v1169 = vpop.permute.xlu0 %1168
  %v1172 = vadd.f32 %v1152, %v1167
  %v1173 = vadd.f32 %v1153, %v1169
  %v1174 = vtanh.pop %v1172
  %v1175 = vtanh.pop %v1173
  %1178 = vrot.lane.b32.xlu0 %v1174, 16
  %v1179 = vpop.permute.xlu0 %1178
  %1180 = vrot.lane.b32.xlu0 %v1175, 16
  %v1181 = vpop.permute.xlu0 %1180
  %v1184 = vmul.f32 %v1134, %v1179
  %v1185 = vmul.f32 %v1149, %v1181
  %v1186 = vmul.f32 %v263, %v1184
  %v1187 = vmul.f32 %v268, %v1185
  %v1188 = vmul.f32 %v277, %v952
  %v1189 = vmul.f32 %v282, %v953
  %v1190 = vadd.f32 %v1186, %v1188
  %v1191 = vadd.f32 %v1187, %v1189
  %1194 = vrot.lane.b32.xlu0 %v1110, 104
  %v1195 = vpop.permute.xlu0 %1194
  %1196 = vrot.lane.b32.xlu0 %v1111, 104
  %v1197 = vpop.permute.xlu0 %1196
  %1202 = vrot.lane.b32.xlu0 %v1190, 80
  %v1203 = vpop.permute.xlu0 %1202
  %1204 = vrot.lane.b32.xlu0 %v1191, 80
  %v1205 = vpop.permute.xlu0 %1204
  %v1208 = vsel %vm120, %v1195, %v1203
  %v1209 = vsel %vm120, %v1197, %v1205
  %1210 = vst.msk [vmem:[%s6] sm:$0xff] %vm37, %v1208
  %1211 = vst.msk [vmem:[%s6 + $0x8] sm:$0xff] %vm37, %v1209
  // Predicated region
  $region26: #{tagger_forward.4} parent=0 // pred_check
    _
  $region27: #{tagger_forward.4} parent=0 // pred_check_branch
    %1213 = sbr.rel (0) target = $region29
  $region28: #{tagger_forward.4} parent=0 // pred_region
    _
  $region29: #{tagger_forward.4} parent=0 // pred_fallthru
    _
  // Predicated region
  $region30: #{tagger_forward.4} parent=0 // pred_check
    _
  $region31: #{tagger_forward.4} parent=0 // pred_check_branch
    %1215 = sbr.rel (0) target = $region33
  $region32: #{tagger_forward.4} parent=0 // pred_region
    _
  $region33: #{tagger_forward.4} parent=0 // pred_fallthru
    _

// kernel: tagger_forward.5
$region0: #{tagger_forward.5}
  #allocation0 [shape = 'u32[]', space=smem, size = 0x4, offset = 0x4, fixed_abs, tag = 'smem constant byte address 0x4 - core index']
  #allocation1 [shape = 'u32[72,128]{1,0:T(1,128)}', space=vmem, size = 0x9000, scoped, tag = 'internal scratch']
  #allocation2 [shape = 'f32[8,8,256]{2,1,0:T(8,128)}', space=vmem, size = 0x10000, scoped, tag = 'scratch operand']
  %s0 = inlined_call_operand.vmem [shape: f32[8,8,48], index: 0, kind: input, shape index: {}]
  %s1 = inlined_call_operand.vmem [shape: f32[8,8,1], index: 1, kind: input, shape index: {}]
  %s2 = inlined_call_operand.vmem [shape: f32[48,256], index: 2, kind: input, shape index: {}]
  %s3 = inlined_call_operand.vmem [shape: f32[1,256], index: 3, kind: input, shape index: {}]
  %s4 = inlined_call_operand.vmem [shape: f32[32,128], index: 4, kind: input, shape index: {}]
  %s5 = inlined_call_operand.vmem [shape: f32[32,128], index: 5, kind: input, shape index: {}]
  %s6 = inlined_call_operand.vmem [shape: f32[8,8,64], index: 6, kind: output, shape index: {}]
  %s7 = sld [smem:[#allocation0]]
  $region34: #{tagger_forward.5} parent=0
    _
  %s9 = ssub.s32 1, %s7
  %s10 = scalar_select 0, %s9, %s7
  // Predicated region
  $region2: #{tagger_forward.5} parent=0 // pred_check
    _
  $region3: #{tagger_forward.5} parent=0 // pred_check_branch
    %12 = sbr.rel (0) target = $region5
  $region4: #{tagger_forward.5} parent=0 // pred_region
    _
  $region5: #{tagger_forward.5} parent=0 // pred_fallthru
    _
  // Predicated region
  $region6: #{tagger_forward.5} parent=0 // pred_check
    _
  $region7: #{tagger_forward.5} parent=0 // pred_check_branch
    %14 = sbr.rel (0) target = $region9
  $region8: #{tagger_forward.5} parent=0 // pred_region
    _
  $region9: #{tagger_forward.5} parent=0 // pred_fallthru
    _
  // Predicated region
  $region10: #{tagger_forward.5} parent=0 // pred_check
    _
  $region11: #{tagger_forward.5} parent=0 // pred_check_branch
    %16 = sbr.rel (0) target = $region13
  $region12: #{tagger_forward.5} parent=0 // pred_region
    _
  $region13: #{tagger_forward.5} parent=0 // pred_fallthru
    _
  // Predicated region
  $region14: #{tagger_forward.5} parent=0 // pred_check
    _
  $region15: #{tagger_forward.5} parent=0 // pred_check_branch
    %18 = sbr.rel (0) target = $region17
  $region16: #{tagger_forward.5} parent=0 // pred_region
    _
  $region17: #{tagger_forward.5} parent=0 // pred_fallthru
    _
  // Predicated region
  $region18: #{tagger_forward.5} parent=0 // pred_check
    _
  $region19: #{tagger_forward.5} parent=0 // pred_check_branch
    %20 = sbr.rel (0) target = $region21
  $region20: #{tagger_forward.5} parent=0 // pred_region
    _
  $region21: #{tagger_forward.5} parent=0 // pred_fallthru
    _
  // Predicated region
  $region22: #{tagger_forward.5} parent=0 // pred_check
    _
  $region23: #{tagger_forward.5} parent=0 // pred_check_branch
    %22 = sbr.rel (0) target = $region25
  $region24: #{tagger_forward.5} parent=0 // pred_region
    _
  $region25: #{tagger_forward.5} parent=0 // pred_fallthru
    _
  %v23 = vld [vmem:[%s0] sm:$0xff]
  %v24 = vld [vmem:[%s0 + $0x8] sm:$0xff]
  %v25 = vld [vmem:[%s0 + $0x10] sm:$0xff]
  %v26 = vld [vmem:[%s0 + $0x18] sm:$0xff]
  %v27 = vld [vmem:[%s0 + $0x20] sm:$0xff]
  %v28 = vld [vmem:[%s0 + $0x28] sm:$0xff]
  %v29 = vld [vmem:[%s0 + $0x30] sm:$0xff]
  %v30 = vld [vmem:[%s0 + $0x38] sm:$0xff]
  %v31 = vld [vmem:[%s2] sm:$0xff]
  %v32 = vld [vmem:[%s2 + $0x8] sm:$0xff]
  %v33 = vld [vmem:[%s2 + $0x10] sm:$0xff]
  %v34 = vld [vmem:[%s2 + $0x18] sm:$0xff]
  %v35 = vld [vmem:[%s2 + $0x20] sm:$0xff]
  %v36 = vld [vmem:[%s2 + $0x28] sm:$0xff]
  %v37 = vld [vmem:[%s2 + $0x30] sm:$0xff]
  %v38 = vld [vmem:[%s2 + $0x38] sm:$0xff]
  %v39 = vld [vmem:[%s2 + $0x40] sm:$0xff]
  %v40 = vld [vmem:[%s2 + $0x48] sm:$0xff]
  %v41 = vld [vmem:[%s2 + $0x50] sm:$0xff]
  %v42 = vld [vmem:[%s2 + $0x58] sm:$0xff]
  %v43 = vld [vmem:[%s3] sm:$0x3]
  %v45 = vperm.slane %v43, 0
  %v46 = vperm.slane %v43, 1
  %vm49 = vcmask 392192
  %v51 = vsel %vm49, %v23, 0
  %v54 = vsel %vm49, %v24, 0
  %v57 = vsel %vm49, %v25, 0
  %v60 = vsel %vm49, %v26, 0
  %v63 = vsel %vm49, %v27, 0
  %v66 = vsel %vm49, %v28, 0
  %v69 = vsel %vm49, %v29, 0
  %v72 = vsel %vm49, %v30, 0
  %74 = vmatpush.msra.mxu0 0.0
  %75 = vmatpush.msra.mxu0 0.0
  %76 = vmatpush.msra.mxu0 0.0
  %77 = vmatpush.msra.mxu0 0.0
  %78 = vmatpush.msra.mxu0 0.0
  %79 = vmatpush.msra.mxu0 0.0
  %80 = vmatpush.msra.mxu0 0.0
  %81 = vmatpush.msra.mxu0 0.0
  %82 = vmatpush.msra.mxu0 0.0
  %83 = vmatpush.msra.mxu0 0.0
  %84 = vmatpush.msra.mxu0 %v41
  %85 = vmatpush.msra.mxu0 %v39
  %86 = vmatpush.msra.mxu0 %v37
  %87 = vmatpush.msra.mxu0 %v35
  %88 = vmatpush.msra.mxu0 %v33
  %89 = vmatpush.msra.mxu0 %v31
  %90 = vmatmul.f32.gmra.mxu0 %v51
  %v91 = vpop.f32.mrf.mxu0
  %v92 = vadd.f32 %v45, %v91
  %93 = vmatmul.f32.gmra.mxu0 %v54
  %v94 = vpop.f32.mrf.mxu0
  %v95 = vadd.f32 %v45, %v94
  %96 = vmatmul.f32.gmra.mxu0 %v57
  %v97 = vpop.f32.mrf.mxu0
  %v98 = vadd.f32 %v45, %v97
  %99 = vmatmul.f32.gmra.mxu0 %v60
  %v100 = vpop.f32.mrf.mxu0
  %v101 = vadd.f32 %v45, %v100
  %102 = vmatmul.f32.gmra.mxu0 %v63
  %v103 = vpop.f32.mrf.mxu0
  %v104 = vadd.f32 %v45, %v103
  %105 = vmatmul.f32.gmra.mxu0 %v66
  %v106 = vpop.f32.mrf.mxu0
  %v107 = vadd.f32 %v45, %v106
  %108 = vmatmul.f32.gmra.mxu0 %v69
  %v109 = vpop.f32.mrf.mxu0
  %v110 = vadd.f32 %v45, %v109
  %111 = vmatmul.f32.gmra.mxu0 %v72
  %v112 = vpop.f32.mrf.mxu0
  %v113 = vadd.f32 %v45, %v112
  %114 = vdwg.mxu0
  %115 = vmatpush.msra.mxu0 0.0
  %116 = vmatpush.msra.mxu0 0.0
  %117 = vmatpush.msra.mxu0 0.0
  %118 = vmatpush.msra.mxu0 0.0
  %119 = vmatpush.msra.mxu0 0.0
  %120 = vmatpush.msra.mxu0 0.0
  %121 = vmatpush.msra.mxu0 0.0
  %122 = vmatpush.msra.mxu0 0.0
  %123 = vmatpush.msra.mxu0 0.0
  %124 = vmatpush.msra.mxu0 0.0
  %125 = vmatpush.msra.mxu0 %v42
  %126 = vmatpush.msra.mxu0 %v40
  %127 = vmatpush.msra.mxu0 %v38
  %128 = vmatpush.msra.mxu0 %v36
  %129 = vmatpush.msra.mxu0 %v34
  %130 = vmatpush.msra.mxu0 %v32
  %131 = vmatmul.f32.gmra.mxu0 %v51
  %v132 = vpop.f32.mrf.mxu0
  %v133 = vadd.f32 %v46, %v132
  %134 = vmatmul.f32.gmra.mxu0 %v54
  %v135 = vpop.f32.mrf.mxu0
  %v136 = vadd.f32 %v46, %v135
  %137 = vmatmul.f32.gmra.mxu0 %v57
  %v138 = vpop.f32.mrf.mxu0
  %v139 = vadd.f32 %v46, %v138
  %140 = vmatmul.f32.gmra.mxu0 %v60
  %v141 = vpop.f32.mrf.mxu0
  %v142 = vadd.f32 %v46, %v141
  %143 = vmatmul.f32.gmra.mxu0 %v63
  %v144 = vpop.f32.mrf.mxu0
  %v145 = vadd.f32 %v46, %v144
  %146 = vmatmul.f32.gmra.mxu0 %v66
  %v147 = vpop.f32.mrf.mxu0
  %v148 = vadd.f32 %v46, %v147
  %149 = vmatmul.f32.gmra.mxu0 %v69
  %v150 = vpop.f32.mrf.mxu0
  %v151 = vadd.f32 %v46, %v150
  %152 = vmatmul.f32.gmra.mxu0 %v72
  %v153 = vpop.f32.mrf.mxu0
  %v154 = vadd.f32 %v46, %v153
  %155 = vdwg.mxu0
  %156 = vst [vmem:[#allocation2] sm:$0xff] %v92
  %157 = vst [vmem:[#allocation2 + $0x8] sm:$0xff] %v133
  %158 = vst [vmem:[#allocation2 + $0x10] sm:$0xff] %v95
  %159 = vst [vmem:[#allocation2 + $0x18] sm:$0xff] %v136
  %160 = vst [vmem:[#allocation2 + $0x20] sm:$0xff] %v98
  %161 = vst [vmem:[#allocation2 + $0x28] sm:$0xff] %v139
  %162 = vst [vmem:[#allocation2 + $0x30] sm:$0xff] %v101
  %163 = vst [vmem:[#allocation2 + $0x38] sm:$0xff] %v142
  %164 = vst [vmem:[#allocation2 + $0x40] sm:$0xff] %v104
  %165 = vst [vmem:[#allocation2 + $0x48] sm:$0xff] %v145
  %166 = vst [vmem:[#allocation2 + $0x50] sm:$0xff] %v107
  %167 = vst [vmem:[#allocation2 + $0x58] sm:$0xff] %v148
  %168 = vst [vmem:[#allocation2 + $0x60] sm:$0xff] %v110
  %169 = vst [vmem:[#allocation2 + $0x68] sm:$0xff] %v151
  %170 = vst [vmem:[#allocation2 + $0x70] sm:$0xff] %v113
  %171 = vst [vmem:[#allocation2 + $0x78] sm:$0xff] %v154
  %v172 = vld [vmem:[%s1] sm:$0xff]
  %s173 = scalar_lea.vmem %s1, 56
  %v174 = vld [vmem:[%s173] sm:$0xff]
  %v175 = vld [vmem:[#allocation2] sm:$0xff]
  %v176 = vld [vmem:[%s4] sm:$0xff]
  %v177 = vld [vmem:[%s4 + $0x8] sm:$0xff]
  %v178 = vld [vmem:[%s4 + $0x10] sm:$0xff]
  %v179 = vld [vmem:[%s4 + $0x18] sm:$0xff]
  %vm180 = vcmask 261120
  %v182 = vsel %vm180, 0.0, 0
  %184 = vmatpush.msra.mxu0 0.0
  %185 = vmatpush.msra.mxu0 0.0
  %186 = vmatpush.msra.mxu0 0.0
  %187 = vmatpush.msra.mxu0 0.0
  %188 = vmatpush.msra.mxu0 0.0
  %189 = vmatpush.msra.mxu0 0.0
  %190 = vmatpush.msra.mxu0 0.0
  %191 = vmatpush.msra.mxu0 0.0
  %192 = vmatpush.msra.mxu0 0.0
  %193 = vmatpush.msra.mxu0 0.0
  %194 = vmatpush.msra.mxu0 0.0
  %195 = vmatpush.msra.mxu0 0.0
  %196 = vmatpush.msra.mxu0 %v179
  %197 = vmatpush.msra.mxu0 %v178
  %198 = vmatpush.msra.mxu0 %v177
  %199 = vmatpush.msra.mxu0 %v176
  %200 = vmatmul.f32.gmra.mxu0 %v182
  %v201 = vpop.f32.mrf.mxu0
  %v202 = vadd.f32 0.0, %v201
  %203 = vdwg.mxu0
  %v204 = vadd.f32 %v175, %v202
  %s205 = scalar_lea.vmem [#allocation2], 112
  %v206 = vld [vmem:[%s205 + $0x8] sm:$0xff]
  %v207 = vld [vmem:[%s5] sm:$0xff]
  %v208 = vld [vmem:[%s5 + $0x8] sm:$0xff]
  %v209 = vld [vmem:[%s5 + $0x10] sm:$0xff]
  %v210 = vld [vmem:[%s5 + $0x18] sm:$0xff]
  %211 = vmatpush.msra.mxu0 0.0
  %212 = vmatpush.msra.mxu0 0.0
  %213 = vmatpush.msra.mxu0 0.0
  %214 = vmatpush.msra.mxu0 0.0
  %215 = vmatpush.msra.mxu0 0.0
  %216 = vmatpush.msra.mxu0 0.0
  %217 = vmatpush.msra.mxu0 0.0
  %218 = vmatpush.msra.mxu0 0.0
  %219 = vmatpush.msra.mxu0 0.0
  %220 = vmatpush.msra.mxu0 0.0
  %221 = vmatpush.msra.mxu0 0.0
  %222 = vmatpush.msra.mxu0 0.0
  %223 = vmatpush.msra.mxu0 %v210
  %224 = vmatpush.msra.mxu0 %v209
  %225 = vmatpush.msra.mxu0 %v208
  %226 = vmatpush.msra.mxu0 %v207
  %227 = vmatmul.f32.gmra.mxu0 %v182
  %v228 = vpop.f32.mrf.mxu0
  %v229 = vadd.f32 0.0, %v228
  %230 = vdwg.mxu0
  %v231 = vadd.f32 %v206, %v229
  %v232 = vxor.u32 %v204, 2147483648
  %v233 = vmul.f32 %v232, 1.442695
  %v234 = vpow.pop %v233
  %v235 = vadd.f32 %v234, 1.0
  %v236 = vrcp.pop %v235
  %v237 = vmul.f32 %v235, %v236
  %v238 = vsub.f32 1.0, %v237
  %v239 = vmul.f32 %v236, %v238
  %v240 = vadd.f32 %v236, %v239
  %vm241 = vweird.f32 %v235
  %vm242 = vweird.f32 %v236
  %vm243 = vmor %vm241, %vm242
  %v244 = vsel %vm243, %v236, %v240
  %v245 = vand.u32 2147483647, %v235
  %vm246 = vcmp.eq.f32.partialorder %v245, 8.507059e+37
  %v247 = vand.u32 %v235, 2147483648
  %v248 = vor.u32 1.1754944e-38, %v247
  %v249 = vsel %vm246, %v248, %v244
  %v250 = vmul.f32 1.0, %v249
  %v251 = vtanh.pop %v204
  %v252 = vmul.f32 %v250, 0.0
  %254 = vrot.lane.b32.xlu0 %v251, 64
  %v255 = vpop.permute.xlu0 %254
  %v257 = vmul.f32 %v250, %v255
  %259 = vrot.lane.b32.xlu0 %v257, 32
  %v260 = vpop.permute.xlu0 %259
  %v262 = vadd.f32 %v252, %v260
  %v263 = vtanh.pop %v262
  %265 = vrot.lane.b32.xlu0 %v263, 64
  %v266 = vpop.permute.xlu0 %265
  %v268 = vmul.f32 %v250, %v266
  %270 = vset.pattern.permute.xlu0 0
  %271 = vperm.xlu0 %270, %v172
  %v272 = vpop.permute.xlu0 %271
  %v274 = vmul.f32 %v272, %v262
  %v275 = vsub.f32 1.0, %v172
  %277 = vset.pattern.permute.xlu0 0
  %278 = vperm.xlu0 %277, %v275
  %v279 = vpop.permute.xlu0 %278
  %v281 = vmul.f32 %v279, 0.0
  %v282 = vadd.f32 %v274, %v281
  %v283 = vmul.f32 %v272, %v268
  %v284 = vadd.f32 %v283, %v281
  %v285 = vxor.u32 %v231, 2147483648
  %v286 = vmul.f32 %v285, 1.442695
  %v287 = vpow.pop %v286
  %v288 = vadd.f32 %v287, 1.0
  %v289 = vrcp.pop %v288
  %v290 = vmul.f32 %v288, %v289
  %v291 = vsub.f32 1.0, %v290
  %v292 = vmul.f32 %v289, %v291
  %v293 = vadd.f32 %v289, %v292
  %vm294 = vweird.f32 %v288
  %vm295 = vweird.f32 %v289
  %vm296 = vmor %vm294, %vm295
  %v297 = vsel %vm296, %v289, %v293
  %v298 = vand.u32 2147483647, %v288
  %vm299 = vcmp.eq.f32.partialorder %v298, 8.507059e+37
  %v300 = vand.u32 %v288, 2147483648
  %v301 = vor.u32 1.1754944e-38, %v300
  %v302 = vsel %vm299, %v301, %v297
  %v303 = vmul.f32 1.0, %v302
  %v304 = vtanh.pop %v231
  %v305 = vmul.f32 %v303, 0.0
  %307 = vrot.lane.b32.xlu0 %v304, 64
  %v308 = vpop.permute.xlu0 %307
  %v310 = vmul.f32 %v303, %v308
  %312 = vrot.lane.b32.xlu0 %v310, 32
  %v313 = vpop.permute.xlu0 %312
  %v315 = vadd.f32 %v305, %v313
  %v316 = vtanh.pop %v315
  %318 = vrot.lane.b32.xlu0 %v316, 64
  %v319 = vpop.permute.xlu0 %318
  %v321 = vmul.f32 %v303, %v319
  %323 = vset.pattern.permute.xlu0 0
  %324 = vperm.xlu0 %323, %v174
  %v325 = vpop.permute.xlu0 %324
  %v327 = vmul.f32 %v325, %v315
  %v328 = vsub.f32 1.0, %v174
  %330 = vset.pattern.permute.xlu0 0
  %331 = vperm.xlu0 %330, %v328
  %v332 = vpop.permute.xlu0 %331
  %v334 = vmul.f32 %v332, 0.0
  %v335 = vadd.f32 %v327, %v334
  %v336 = vmul.f32 %v325, %v321
  %v337 = vadd.f32 %v336, %v334
  %339 = vrot.lane.b32.xlu0 %v283, 32
  %v340 = vpop.permute.xlu0 %339
  %342 = vst.msk [vmem:[%s6] sm:$0xff] %vm180, %v340
  %344 = vrot.lane.b32.xlu0 %v336, 64
  %v345 = vpop.permute.xlu0 %344
  %s347 = scalar_lea.vmem %s6, 56
  %vm348 = vcmask 523520
  %349 = vst.msk [vmem:[%s347] sm:$0xff] %vm348, %v345
  %s350 = scalar_lea.vmem %s1, 8
  %v351 = vld [vmem:[%s350] sm:$0xff]
  %s352 = scalar_lea.vmem %s1, 48
  %v353 = vld [vmem:[%s352] sm:$0xff]
  %s354 = scalar_lea.vmem [#allocation2], 16
  %v355 = vld [vmem:[%s354] sm:$0xff]
  %v356 = vld [vmem:[%s4] sm:$0xff]
  %v357 = vld [vmem:[%s4 + $0x8] sm:$0xff]
  %v358 = vld [vmem:[%s4 + $0x10] sm:$0xff]
  %v359 = vld [vmem:[%s4 + $0x18] sm:$0xff]
  %361 = vrot.lane.b32.xlu0 %v284, 32
  %v362 = vpop.permute.xlu0 %361
  %v363 = vsel %vm180, %v362, 0
  %365 = vmatpush.msra.mxu0 0.0
  %366 = vmatpush.msra.mxu0 0.0
  %367 = vmatpush.msra.mxu0 0.0
  %368 = vmatpush.msra.mxu0 0.0
  %369 = vmatpush.msra.mxu0 0.0
  %370 = vmatpush.msra.mxu0 0.0
  %371 = vmatpush.msra.mxu0 0.0
  %372 = vmatpush.msra.mxu0 0.0
  %373 = vmatpush.msra.mxu0 0.0
  %374 = vmatpush.msra.mxu0 0.0
  %375 = vmatpush.msra.mxu0 0.0
  %376 = vmatpush.msra.mxu0 0.0
  %377 = vmatpush.msra.mxu0 %v359
  %378 = vmatpush.msra.mxu0 %v358
  %379 = vmatpush.msra.mxu0 %v357
  %380 = vmatpush.msra.mxu0 %v356
  %381 = vmatmul.f32.gmra.mxu0 %v363
  %v382 = vpop.f32.mrf.mxu0
  %v383 = vadd.f32 0.0, %v382
  %384 = vdwg.mxu0
  %v385 = vadd.f32 %v355, %v383
  %s386 = scalar_lea.vmem [#allocation2], 96
  %v387 = vld [vmem:[%s386 + $0x8] sm:$0xff]
  %v388 = vld [vmem:[%s5] sm:$0xff]
  %v389 = vld [vmem:[%s5 + $0x8] sm:$0xff]
  %v390 = vld [vmem:[%s5 + $0x10] sm:$0xff]
  %v391 = vld [vmem:[%s5 + $0x18] sm:$0xff]
  %393 = vrot.lane.b32.xlu0 %v337, 32
  %v394 = vpop.permute.xlu0 %393
  %v395 = vsel %vm180, %v394, 0
  %397 = vmatpush.msra.mxu0 0.0
  %398 = vmatpush.msra.mxu0 0.0
  %399 = vmatpush.msra.mxu0 0.0
  %400 = vmatpush.msra.mxu0 0.0
  %401 = vmatpush.msra.mxu0 0.0
  %402 = vmatpush.msra.mxu0 0.0
  %403 = vmatpush.msra.mxu0 0.0
  %404 = vmatpush.msra.mxu0 0.0
  %405 = vmatpush.msra.mxu0 0.0
  %406 = vmatpush.msra.mxu0 0.0
  %407 = vmatpush.msra.mxu0 0.0
  %408 = vmatpush.msra.mxu0 0.0
  %409 = vmatpush.msra.mxu0 %v391
  %410 = vmatpush.msra.mxu0 %v390
  %411 = vmatpush.msra.mxu0 %v389
  %412 = vmatpush.msra.mxu0 %v388
  %413 = vmatmul.f32.gmra.mxu0 %v395
  %v414 = vpop.f32.mrf.mxu0
  %v415 = vadd.f32 0.0, %v414
  %416 = vdwg.mxu0
  %v417 = vadd.f32 %v387, %v415
  %v418 = vxor.u32 %v385, 2147483648
  %v419 = vmul.f32 %v418, 1.442695
  %v420 = vpow.pop %v419
  %v421 = vadd.f32 %v420, 1.0
  %v422 = vrcp.pop %v421
  %v423 = vmul.f32 %v421, %v422
  %v424 = vsub.f32 1.0, %v423
  %v425 = vmul.f32 %v422, %v424
  %v426 = vadd.f32 %v422, %v425
  %vm427 = vweird.f32 %v421
  %vm428 = vweird.f32 %v422
  %vm429 = vmor %vm427, %vm428
  %v430 = vsel %vm429, %v422, %v426
  %v431 = vand.u32 2147483647, %v421
  %vm432 = vcmp.eq.f32.partialorder %v431, 8.507059e+37
  %v433 = vand.u32 %v421, 2147483648
  %v434 = vor.u32 1.1754944e-38, %v433
  %v435 = vsel %vm432, %v434, %v430
  %v436 = vmul.f32 1.0, %v435
  %v437 = vtanh.pop %v385
  %v438 = vmul.f32 %v436, %v282
  %440 = vrot.lane.b32.xlu0 %v437, 64
  %v441 = vpop.permute.xlu0 %440
  %v443 = vmul.f32 %v436, %v441
  %445 = vrot.lane.b32.xlu0 %v443, 32
  %v446 = vpop.permute.xlu0 %445
  %v448 = vadd.f32 %v438, %v446
  %v449 = vtanh.pop %v448
  %451 = vrot.lane.b32.xlu0 %v449, 64
  %v452 = vpop.permute.xlu0 %451
  %v454 = vmul.f32 %v436, %v452
  %456 = vset.pattern.permute.xlu0 0
  %457 = vperm.xlu0 %456, %v351
  %v458 = vpop.permute.xlu0 %457
  %v460 = vmul.f32 %v458, %v448
  %v461 = vsub.f32 1.0, %v351
  %463 = vset.pattern.permute.xlu0 0
  %464 = vperm.xlu0 %463, %v461
  %v465 = vpop.permute.xlu0 %464
  %v467 = vmul.f32 %v465, %v282
  %v468 = vadd.f32 %v460, %v467
  %v469 = vmul.f32 %v458, %v454
  %v470 = vmul.f32 %v465, %v284
  %v471 = vadd.f32 %v469, %v470
  %v472 = vxor.u32 %v417, 2147483648
  %v473 = vmul.f32 %v472, 1.442695
  %v474 = vpow.pop %v473
  %v475 = vadd.f32 %v474, 1.0
  %v476 = vrcp.pop %v475
  %v477 = vmul.f32 %v475, %v476
  %v478 = vsub.f32 1.0, %v477
  %v479 = vmul.f32 %v476, %v478
  %v480 = vadd.f32 %v476, %v479
  %vm481 = vweird.f32 %v475
  %vm482 = vweird.f32 %v476
  %vm483 = vmor %vm481, %vm482
  %v484 = vsel %vm483, %v476, %v480
  %v485 = vand.u32 2147483647, %v475
  %vm486 = vcmp.eq.f32.partialorder %v485, 8.507059e+37
  %v487 = vand.u32 %v475, 2147483648
  %v488 = vor.u32 1.1754944e-38, %v487
  %v489 = vsel %vm486, %v488, %v484
  %v490 = vmul.f32 1.0, %v489
  %v491 = vtanh.pop %v417
  %v492 = vmul.f32 %v490, %v335
  %494 = vrot.lane.b32.xlu0 %v491, 64
  %v495 = vpop.permute.xlu0 %494
  %v497 = vmul.f32 %v490, %v495
  %499 = vrot.lane.b32.xlu0 %v497, 32
  %v500 = vpop.permute.xlu0 %499
  %v502 = vadd.f32 %v492, %v500
  %v503 = vtanh.pop %v502
  %505 = vrot.lane.b32.xlu0 %v503, 64
  %v506 = vpop.permute.xlu0 %505
  %v508 = vmul.f32 %v490, %v506
  %510 = vset.pattern.permute.xlu0 0
  %511 = vperm.xlu0 %510, %v353
  %v512 = vpop.permute.xlu0 %511
  %v514 = vmul.f32 %v512, %v502
  %v515 = vsub.f32 1.0, %v353
  %517 = vset.pattern.permute.xlu0 0
  %518 = vperm.xlu0 %517, %v515
  %v519 = vpop.permute.xlu0 %518
  %v521 = vmul.f32 %v519, %v335
  %v522 = vadd.f32 %v514, %v521
  %v523 = vmul.f32 %v512, %v508
  %v524 = vmul.f32 %v519, %v337
  %v525 = vadd.f32 %v523, %v524
  %527 = vrot.lane.b32.xlu0 %v469, 32
  %v528 = vpop.permute.xlu0 %527
  %s530 = scalar_lea.vmem %s6, 8
  %531 = vst.msk [vmem:[%s530] sm:$0xff] %vm180, %v528
  %533 = vrot.lane.b32.xlu0 %v523, 64
  %v534 = vpop.permute.xlu0 %533
  %s536 = scalar_lea.vmem %s6, 48
  %537 = vst.msk [vmem:[%s536] sm:$0xff] %vm348, %v534
  %s538 = scalar_lea.vmem %s1, 16
  %v539 = vld [vmem:[%s538] sm:$0xff]
  %s540 = scalar_lea.vmem %s1, 40
  %v541 = vld [vmem:[%s540] sm:$0xff]
  %s542 = scalar_lea.vmem [#allocation2], 32
  %v543 = vld [vmem:[%s542] sm:$0xff]
  %v544 = vld [vmem:[%s4] sm:$0xff]
  %v545 = vld [vmem:[%s4 + $0x8] sm:$0xff]
  %v546 = vld [vmem:[%s4 + $0x10] sm:$0xff]
  %v547 = vld [vmem:[%s4 + $0x18] sm:$0xff]
  %549 = vrot.lane.b32.xlu0 %v471, 32
  %v550 = vpop.permute.xlu0 %549
  %v551 = vsel %vm180, %v550, 0
  %553 = vmatpush.msra.mxu0 0.0
  %554 = vmatpush.msra.mxu0 0.0
  %555 = vmatpush.msra.mxu0 0.0
  %556 = vmatpush.msra.mxu0 0.0
  %557 = vmatpush.msra.mxu0 0.0
  %558 = vmatpush.msra.mxu0 0.0
  %559 = vmatpush.msra.mxu0 0.0
  %560 = vmatpush.msra.mxu0 0.0
  %561 = vmatpush.msra.mxu0 0.0
  %562 = vmatpush.msra.mxu0 0.0
  %563 = vmatpush.msra.mxu0 0.0
  %564 = vmatpush.msra.mxu0 0.0
  %565 = vmatpush.msra.mxu0 %v547
  %566 = vmatpush.msra.mxu0 %v546
  %567 = vmatpush.msra.mxu0 %v545
  %568 = vmatpush.msra.mxu0 %v544
  %569 = vmatmul.f32.gmra.mxu0 %v551
  %v570 = vpop.f32.mrf.mxu0
  %v571 = vadd.f32 0.0, %v570
  %572 = vdwg.mxu0
  %v573 = vadd.f32 %v543, %v571
  %s574 = scalar_lea.vmem [#allocation2], 80
  %v575 = vld [vmem:[%s574 + $0x8] sm:$0xff]
  %v576 = vld [vmem:[%s5] sm:$0xff]
  %v577 = vld [vmem:[%s5 + $0x8] sm:$0xff]
  %v578 = vld [vmem:[%s5 + $0x10] sm:$0xff]
  %v579 = vld [vmem:[%s5 + $0x18] sm:$0xff]
  %581 = vrot.lane.b32.xlu0 %v525, 32
  %v582 = vpop.permute.xlu0 %581
  %v583 = vsel %vm180, %v582, 0
  %585 = vmatpush.msra.mxu0 0.0
  %586 = vmatpush.msra.mxu0 0.0
  %587 = vmatpush.msra.mxu0 0.0
  %588 = vmatpush.msra.mxu0 0.0
  %589 = vmatpush.msra.mxu0 0.0
  %590 = vmatpush.msra.mxu0 0.0
  %591 = vmatpush.msra.mxu0 0.0
  %592 = vmatpush.msra.mxu0 0.0
  %593 = vmatpush.msra.mxu0 0.0
  %594 = vmatpush.msra.mxu0 0.0
  %595 = vmatpush.msra.mxu0 0.0
  %596 = vmatpush.msra.mxu0 0.0
  %597 = vmatpush.msra.mxu0 %v579
  %598 = vmatpush.msra.mxu0 %v578
  %599 = vmatpush.msra.mxu0 %v577
  %600 = vmatpush.msra.mxu0 %v576
  %601 = vmatmul.f32.gmra.mxu0 %v583
  %v602 = vpop.f32.mrf.mxu0
  %v603 = vadd.f32 0.0, %v602
  %604 = vdwg.mxu0
  %v605 = vadd.f32 %v575, %v603
  %v606 = vxor.u32 %v573, 2147483648
  %v607 = vmul.f32 %v606, 1.442695
  %v608 = vpow.pop %v607
  %v609 = vadd.f32 %v608, 1.0
  %v610 = vrcp.pop %v609
  %v611 = vmul.f32 %v609, %v610
  %v612 = vsub.f32 1.0, %v611
  %v613 = vmul.f32 %v610, %v612
  %v614 = vadd.f32 %v610, %v613
  %vm615 = vweird.f32 %v609
  %vm616 = vweird.f32 %v610
  %vm617 = vmor %vm615, %vm616
  %v618 = vsel %vm617, %v610, %v614
  %v619 = vand.u32 2147483647, %v609
  %vm620 = vcmp.eq.f32.partialorder %v619, 8.507059e+37
  %v621 = vand.u32 %v609, 2147483648
  %v622 = vor.u32 1.1754944e-38, %v621
  %v623 = vsel %vm620, %v622, %v618
  %v624 = vmul.f32 1.0, %v623
  %v625 = vtanh.pop %v573
  %v626 = vmul.f32 %v624, %v468
  %628 = vrot.lane.b32.xlu0 %v625, 64
  %v629 = vpop.permute.xlu0 %628
  %v631 = vmul.f32 %v624, %v629
  %633 = vrot.lane.b32.xlu0 %v631, 32
  %v634 = vpop.permute.xlu0 %633
  %v636 = vadd.f32 %v626, %v634
  %v637 = vtanh.pop %v636
  %639 = vrot.lane.b32.xlu0 %v637, 64
  %v640 = vpop.permute.xlu0 %639
  %v642 = vmul.f32 %v624, %v640
  %644 = vset.pattern.permute.xlu0 0
  %645 = vperm.xlu0 %644, %v539
  %v646 = vpop.permute.xlu0 %645
  %v648 = vmul.f32 %v646, %v636
  %v649 = vsub.f32 1.0, %v539
  %651 = vset.pattern.permute.xlu0 0
  %652 = vperm.xlu0 %651, %v649
  %v653 = vpop.permute.xlu0 %652
  %v655 = vmul.f32 %v653, %v468
  %v656 = vadd.f32 %v648, %v655
  %v657 = vmul.f32 %v646, %v642
  %v658 = vmul.f32 %v653, %v471
  %v659 = vadd.f32 %v657, %v658
  %v660 = vxor.u32 %v605, 2147483648
  %v661 = vmul.f32 %v660, 1.442695
  %v662 = vpow.pop %v661
  %v663 = vadd.f32 %v662, 1.0
  %v664 = vrcp.pop %v663
  %v665 = vmul.f32 %v663, %v664
  %v666 = vsub.f32 1.0, %v665
  %v667 = vmul.f32 %v664, %v666
  %v668 = vadd.f32 %v664, %v667
  %vm669 = vweird.f32 %v663
  %vm670 = vweird.f32 %v664
  %vm671 = vmor %vm669, %vm670
  %v672 = vsel %vm671, %v664, %v668
  %v673 = vand.u32 2147483647, %v663
  %vm674 = vcmp.eq.f32.partialorder %v673, 8.507059e+37
  %v675 = vand.u32 %v663, 2147483648
  %v676 = vor.u32 1.1754944e-38, %v675
  %v677 = vsel %vm674, %v676, %v672
  %v678 = vmul.f32 1.0, %v677
  %v679 = vtanh.pop %v605
  %v680 = vmul.f32 %v678, %v522
  %682 = vrot.lane.b32.xlu0 %v679, 64
  %v683 = vpop.permute.xlu0 %682
  %v685 = vmul.f32 %v678, %v683
  %687 = vrot.lane.b32.xlu0 %v685, 32
  %v688 = vpop.permute.xlu0 %687
  %v690 = vadd.f32 %v680, %v688
  %v691 = vtanh.pop %v690
  %693 = vrot.lane.b32.xlu0 %v691, 64
  %v694 = vpop.permute.xlu0 %693
  %v696 = vmul.f32 %v678, %v694
  %698 = vset.pattern.permute.xlu0 0
  %699 = vperm.xlu0 %698, %v541
  %v700 = vpop.permute.xlu0 %699
  %v702 = vmul.f32 %v700, %v690
  %v703 = vsub.f32 1.0, %v541
  %705 = vset.pattern.permute.xlu0 0
  %706 = vperm.xlu0 %705, %v703
  %v707 = vpop.permute.xlu0 %706
  %v709 = vmul.f32 %v707, %v522
  %v710 = vadd.f32 %v702, %v709
  %v711 = vmul.f32 %v700, %v696
  %v712 = vmul.f32 %v707, %v525
  %v713 = vadd.f32 %v711, %v712
  %715 = vrot.lane.b32.xlu0 %v657, 32
  %v716 = vpop.permute.xlu0 %715
  %s718 = scalar_lea.vmem %s6, 16
  %719 = vst.msk [vmem:[%s718] sm:$0xff] %vm180, %v716
  %721 = vrot.lane.b32.xlu0 %v711, 64
  %v722 = vpop.permute.xlu0 %721
  %s724 = scalar_lea.vmem %s6, 40
  %725 = vst.msk [vmem:[%s724] sm:$0xff] %vm348, %v722
  %s726 = scalar_lea.vmem %s1, 24
  %v727 = vld [vmem:[%s726] sm:$0xff]
  %s728 = scalar_lea.vmem %s1, 32
  %v729 = vld [vmem:[%s728] sm:$0xff]
  %s730 = scalar_lea.vmem [#allocation2], 48
  %v731 = vld [vmem:[%s730] sm:$0xff]
  %v732 = vld [vmem:[%s4] sm:$0xff]
  %v733 = vld [vmem:[%s4 + $0x8] sm:$0xff]
  %v734 = vld [vmem:[%s4 + $0x10] sm:$0xff]
  %v735 = vld [vmem:[%s4 + $0x18] sm:$0xff]
  %737 = vrot.lane.b32.xlu0 %v659, 32
  %v738 = vpop.permute.xlu0 %737
  %v739 = vsel %vm180, %v738, 0
  %741 = vmatpush.msra.mxu0 0.0
  %742 = vmatpush.msra.mxu0 0.0
  %743 = vmatpush.msra.mxu0 0.0
  %744 = vmatpush.msra.mxu0 0.0
  %745 = vmatpush.msra.mxu0 0.0
  %746 = vmatpush.msra.mxu0 0.0
  %747 = vmatpush.msra.mxu0 0.0
  %748 = vmatpush.msra.mxu0 0.0
  %749 = vmatpush.msra.mxu0 0.0
  %750 = vmatpush.msra.mxu0 0.0
  %751 = vmatpush.msra.mxu0 0.0
  %752 = vmatpush.msra.mxu0 0.0
  %753 = vmatpush.msra.mxu0 %v735
  %754 = vmatpush.msra.mxu0 %v734
  %755 = vmatpush.msra.mxu0 %v733
  %756 = vmatpush.msra.mxu0 %v732
  %757 = vmatmul.f32.gmra.mxu0 %v739
  %v758 = vpop.f32.mrf.mxu0
  %v759 = vadd.f32 0.0, %v758
  %760 = vdwg.mxu0
  %v761 = vadd.f32 %v731, %v759
  %s762 = scalar_lea.vmem [#allocation2], 64
  %v763 = vld [vmem:[%s762 + $0x8] sm:$0xff]
  %v764 = vld [vmem:[%s5] sm:$0xff]
  %v765 = vld [vmem:[%s5 + $0x8] sm:$0xff]
  %v766 = vld [vmem:[%s5 + $0x10] sm:$0xff]
  %v767 = vld [vmem:[%s5 + $0x18] sm:$0xff]
  %769 = vrot.lane.b32.xlu0 %v713, 32
  %v770 = vpop.permute.xlu0 %769
  %v771 = vsel %vm180, %v770, 0
  %773 = vmatpush.msra.mxu0 0.0
  %774 = vmatpush.msra.mxu0 0.0
  %775 = vmatpush.msra.mxu0 0.0
  %776 = vmatpush.msra.mxu0 0.0
  %777 = vmatpush.msra.mxu0 0.0
  %778 = vmatpush.msra.mxu0 0.0
  %779 = vmatpush.msra.mxu0 0.0
  %780 = vmatpush.msra.mxu0 0.0
  %781 = vmatpush.msra.mxu0 0.0
  %782 = vmatpush.msra.mxu0 0.0
  %783 = vmatpush.msra.mxu0 0.0
  %784 = vmatpush.msra.mxu0 0.0
  %785 = vmatpush.msra.mxu0 %v767
  %786 = vmatpush.msra.mxu0 %v766
  %787 = vmatpush.msra.mxu0 %v765
  %788 = vmatpush.msra.mxu0 %v764
  %789 = vmatmul.f32.gmra.mxu0 %v771
  %v790 = vpop.f32.mrf.mxu0
  %v791 = vadd.f32 0.0, %v790
  %792 = vdwg.mxu0
  %v793 = vadd.f32 %v763, %v791
  %v794 = vxor.u32 %v761, 2147483648
  %v795 = vmul.f32 %v794, 1.442695
  %v796 = vpow.pop %v795
  %v797 = vadd.f32 %v796, 1.0
  %v798 = vrcp.pop %v797
  %v799 = vmul.f32 %v797, %v798
  %v800 = vsub.f32 1.0, %v799
  %v801 = vmul.f32 %v798, %v800
  %v802 = vadd.f32 %v798, %v801
  %vm803 = vweird.f32 %v797
  %vm804 = vweird.f32 %v798
  %vm805 = vmor %vm803, %vm804
  %v806 = vsel %vm805, %v798, %v802
  %v807 = vand.u32 2147483647, %v797
  %vm808 = vcmp.eq.f32.partialorder %v807, 8.507059e+37
  %v809 = vand.u32 %v797, 2147483648
  %v810 = vor.u32 1.1754944e-38, %v809
  %v811 = vsel %vm808, %v810, %v806
  %v812 = vmul.f32 1.0, %v811
  %v813 = vtanh.pop %v761
  %v814 = vmul.f32 %v812, %v656
  %816 = vrot.lane.b32.xlu0 %v813, 64
  %v817 = vpop.permute.xlu0 %816
  %v819 = vmul.f32 %v812, %v817
  %821 = vrot.lane.b32.xlu0 %v819, 32
  %v822 = vpop.permute.xlu0 %821
  %v824 = vadd.f32 %v814, %v822
  %v825 = vtanh.pop %v824
  %827 = vrot.lane.b32.xlu0 %v825, 64
  %v828 = vpop.permute.xlu0 %827
  %v830 = vmul.f32 %v812, %v828
  %832 = vset.pattern.permute.xlu0 0
  %833 = vperm.xlu0 %832, %v727
  %v834 = vpop.permute.xlu0 %833
  %v836 = vmul.f32 %v834, %v824
  %v837 = vsub.f32 1.0, %v727
  %839 = vset.pattern.permute.xlu0 0
  %840 = vperm.xlu0 %839, %v837
  %v841 = vpop.permute.xlu0 %840
  %v843 = vmul.f32 %v841, %v656
  %v844 = vadd.f32 %v836, %v843
  %v845 = vmul.f32 %v834, %v830
  %v846 = vmul.f32 %v841, %v659
  %v847 = vadd.f32 %v845, %v846
  %v848 = vxor.u32 %v793, 2147483648
  %v849 = vmul.f32 %v848, 1.442695
  %v850 = vpow.pop %v849
  %v851 = vadd.f32 %v850, 1.0
  %v852 = vrcp.pop %v851
  %v853 = vmul.f32 %v851, %v852
  %v854 = vsub.f32 1.0, %v853
  %v855 = vmul.f32 %v852, %v854
  %v856 = vadd.f32 %v852, %v855
  %vm857 = vweird.f32 %v851
  %vm858 = vweird.f32 %v852
  %vm859 = vmor %vm857, %vm858
  %v860 = vsel %vm859, %v852, %v856
  %v861 = vand.u32 2147483647, %v851
  %vm862 = vcmp.eq.f32.partialorder %v861, 8.507059e+37
  %v863 = vand.u32 %v851, 2147483648
  %v864 = vor.u32 1.1754944e-38, %v863
  %v865 = vsel %vm862, %v864, %v860
  %v866 = vmul.f32 1.0, %v865
  %v867 = vtanh.pop %v793
  %v868 = vmul.f32 %v866, %v710
  %870 = vrot.lane.b32.xlu0 %v867, 64
  %v871 = vpop.permute.xlu0 %870
  %v873 = vmul.f32 %v866, %v871
  %875 = vrot.lane.b32.xlu0 %v873, 32
  %v876 = vpop.permute.xlu0 %875
  %v878 = vadd.f32 %v868, %v876
  %v879 = vtanh.pop %v878
  %881 = vrot.lane.b32.xlu0 %v879, 64
  %v882 = vpop.permute.xlu0 %881
  %v884 = vmul.f32 %v866, %v882
  %886 = vset.pattern.permute.xlu0 0
  %887 = vperm.xlu0 %886, %v729
  %v888 = vpop.permute.xlu0 %887
  %v890 = vmul.f32 %v888, %v878
  %v891 = vsub.f32 1.0, %v729
  %893 = vset.pattern.permute.xlu0 0
  %894 = vperm.xlu0 %893, %v891
  %v895 = vpop.permute.xlu0 %894
  %v897 = vmul.f32 %v895, %v710
  %v898 = vadd.f32 %v890, %v897
  %v899 = vmul.f32 %v888, %v884
  %v900 = vmul.f32 %v895, %v713
  %v901 = vadd.f32 %v899, %v900
  %903 = vrot.lane.b32.xlu0 %v845, 32
  %v904 = vpop.permute.xlu0 %903
  %s906 = scalar_lea.vmem %s6, 24
  %907 = vst.msk [vmem:[%s906] sm:$0xff] %vm180, %v904
  %909 = vrot.lane.b32.xlu0 %v899, 64
  %v910 = vpop.permute.xlu0 %909
  %s912 = scalar_lea.vmem %s6, 32
  %913 = vst.msk [vmem:[%s912] sm:$0xff] %vm348, %v910
  %v914 = vld [vmem:[%s728] sm:$0xff]
  %v915 = vld [vmem:[%s726] sm:$0xff]
  %v916 = vld [vmem:[%s762] sm:$0xff]
  %v917 = vld [vmem:[%s4] sm:$0xff]
  %v918 = vld [vmem:[%s4 + $0x8] sm:$0xff]
  %v919 = vld [vmem:[%s4 + $0x10] sm:$0xff]
  %v920 = vld [vmem:[%s4 + $0x18] sm:$0xff]
  %922 = vrot.lane.b32.xlu0 %v847, 32
  %v923 = vpop.permute.xlu0 %922
  %v924 = vsel %vm180, %v923, 0
  %926 = vmatpush.msra.mxu0 0.0
  %927 = vmatpush.msra.mxu0 0.0
  %928 = vmatpush.msra.mxu0 0.0
  %929 = vmatpush.msra.mxu0 0.0
  %930 = vmatpush.msra.mxu0 0.0
  %931 = vmatpush.msra.mxu0 0.0
  %932 = vmatpush.msra.mxu0 0.0
  %933 = vmatpush.msra.mxu0 0.0
  %934 = vmatpush.msra.mxu0 0.0
  %935 = vmatpush.msra.mxu0 0.0
  %936 = vmatpush.msra.mxu0 0.0
  %937 = vmatpush.msra.mxu0 0.0
  %938 = vmatpush.msra.mxu0 %v920
  %939 = vmatpush.msra.mxu0 %v919
  %940 = vmatpush.msra.mxu0 %v918
  %941 = vmatpush.msra.mxu0 %v917
  %942 = vmatmul.f32.gmra.mxu0 %v924
  %v943 = vpop.f32.mrf.mxu0
  %v944 = vadd.f32 0.0, %v943
  %945 = vdwg.mxu0
  %v946 = vadd.f32 %v916, %v944
  %v947 = vld [vmem:[%s730 + $0x8] sm:$0xff]
  %v948 = vld [vmem:[%s5] sm:$0xff]
  %v949 = vld [vmem:[%s5 + $0x8] sm:$0xff]
  %v950 = vld [vmem:[%s5 + $0x10] sm:$0xff]
  %v951 = vld [vmem:[%s5 + $0x18] sm:$0xff]
  %953 = vrot.lane.b32.xlu0 %v901, 32
  %v954 = vpop.permute.xlu0 %953
  %v955 = vsel %vm180, %v954, 0
  %957 = vmatpush.msra.mxu0 0.0
  %958 = vmatpush.msra.mxu0 0.0
  %959 = vmatpush.msra.mxu0 0.0
  %960 = vmatpush.msra.mxu0 0.0
  %961 = vmatpush.msra.mxu0 0.0
  %962 = vmatpush.msra.mxu0 0.0
  %963 = vmatpush.msra.mxu0 0.0
  %964 = vmatpush.msra.mxu0 0.0
  %965 = vmatpush.msra.mxu0 0.0
  %966 = vmatpush.msra.mxu0 0.0
  %967 = vmatpush.msra.mxu0 0.0
  %968 = vmatpush.msra.mxu0 0.0
  %969 = vmatpush.msra.mxu0 %v951
  %970 = vmatpush.msra.mxu0 %v950
  %971 = vmatpush.msra.mxu0 %v949
  %972 = vmatpush.msra.mxu0 %v948
  %973 = vmatmul.f32.gmra.mxu0 %v955
  %v974 = vpop.f32.mrf.mxu0
  %v975 = vadd.f32 0.0, %v974
  %976 = vdwg.mxu0
  %v977 = vadd.f32 %v947, %v975
  %v978 = vxor.u32 %v946, 2147483648
  %v979 = vmul.f32 %v978, 1.442695
  %v980 = vpow.pop %v979
  %v981 = vadd.f32 %v980, 1.0
  %v982 = vrcp.pop %v981
  %v983 = vmul.f32 %v981, %v982
  %v984 = vsub.f32 1.0, %v983
  %v985 = vmul.f32 %v982, %v984
  %v986 = vadd.f32 %v982, %v985
  %vm987 = vweird.f32 %v981
  %vm988 = vweird.f32 %v982
  %vm989 = vmor %vm987, %vm988
  %v990 = vsel %vm989, %v982, %v986
  %v991 = vand.u32 2147483647, %v981
  %vm992 = vcmp.eq.f32.partialorder %v991, 8.507059e+37
  %v993 = vand.u32 %v981, 2147483648
  %v994 = vor.u32 1.1754944e-38, %v993
  %v995 = vsel %vm992, %v994, %v990
  %v996 = vmul.f32 1.0, %v995
  %v997 = vtanh.pop %v946
  %v998 = vmul.f32 %v996, %v844
  %1000 = vrot.lane.b32.xlu0 %v997, 64
  %v1001 = vpop.permute.xlu0 %1000
  %v1003 = vmul.f32 %v996, %v1001
  %1005 = vrot.lane.b32.xlu0 %v1003, 32
  %v1006 = vpop.permute.xlu0 %1005
  %v1008 = vadd.f32 %v998, %v1006
  %v1009 = vtanh.pop %v1008
  %1011 = vrot.lane.b32.xlu0 %v1009, 64
  %v1012 = vpop.permute.xlu0 %1011
  %v1014 = vmul.f32 %v996, %v1012
  %1016 = vset.pattern.permute.xlu0 0
  %1017 = vperm.xlu0 %1016, %v914
  %v1018 = vpop.permute.xlu0 %1017
  %v1020 = vmul.f32 %v1018, %v1008
  %v1021 = vsub.f32 1.0, %v914
  %1023 = vset.pattern.permute.xlu0 0
  %1024 = vperm.xlu0 %1023, %v1021
  %v1025 = vpop.permute.xlu0 %1024
  %v1027 = vmul.f32 %v1025, %v844
  %v1028 = vadd.f32 %v1020, %v1027
  %v1029 = vmul.f32 %v1018, %v1014
  %v1030 = vmul.f32 %v1025, %v847
  %v1031 = vadd.f32 %v1029, %v1030
  %v1032 = vxor.u32 %v977, 2147483648
  %v1033 = vmul.f32 %v1032, 1.442695
  %v1034 = vpow.pop %v1033
  %v1035 = vadd.f32 %v1034, 1.0
  %v1036 = vrcp.pop %v1035
  %v1037 = vmul.f32 %v1035, %v1036
  %v1038 = vsub.f32 1.0, %v1037
  %v1039 = vmul.f32 %v1036, %v1038
  %v1040 = vadd.f32 %v1036, %v1039
  %vm1041 = vweird.f32 %v1035
  %vm1042 = vweird.f32 %v1036
  %vm1043 = vmor %vm1041, %vm1042
  %v1044 = vsel %vm1043, %v1036, %v1040
  %v1045 = vand.u32 2147483647, %v1035
  %vm1046 = vcmp.eq.f32.partialorder %v1045, 8.507059e+37
  %v1047 = vand.u32 %v1035, 2147483648
  %v1048 = vor.u32 1.1754944e-38, %v1047
  %v1049 = vsel %vm1046, %v1048, %v1044
  %v1050 = vmul.f32 1.0, %v1049
  %v1051 = vtanh.pop %v977
  %v1052 = vmul.f32 %v1050, %v898
  %1054 = vrot.lane.b32.xlu0 %v1051, 64
  %v1055 = vpop.permute.xlu0 %1054
  %v1057 = vmul.f32 %v1050, %v1055
  %1059 = vrot.lane.b32.xlu0 %v1057, 32
  %v1060 = vpop.permute.xlu0 %1059
  %v1062 = vadd.f32 %v1052, %v1060
  %v1063 = vtanh.pop %v1062
  %1065 = vrot.lane.b32.xlu0 %v1063, 64
  %v1066 = vpop.permute.xlu0 %1065
  %v1068 = vmul.f32 %v1050, %v1066
  %1070 = vset.pattern.permute.xlu0 0
  %1071 = vperm.xlu0 %1070, %v915
  %v1072 = vpop.permute.xlu0 %1071
  %v1074 = vmul.f32 %v1072, %v1062
  %v1075 = vsub.f32 1.0, %v915
  %1077 = vset.pattern.permute.xlu0 0
  %1078 = vperm.xlu0 %1077, %v1075
  %v1079 = vpop.permute.xlu0 %1078
  %v1081 = vmul.f32 %v1079, %v898
  %v1082 = vadd.f32 %v1074, %v1081
  %v1083 = vmul.f32 %v1072, %v1068
  %v1084 = vmul.f32 %v1079, %v901
  %v1085 = vadd.f32 %v1083, %v1084
  %1087 = vrot.lane.b32.xlu0 %v1029, 32
  %v1088 = vpop.permute.xlu0 %1087
  %1090 = vst.msk [vmem:[%s912] sm:$0xff] %vm180, %v1088
  %1092 = vrot.lane.b32.xlu0 %v1083, 64
  %v1093 = vpop.permute.xlu0 %1092
  %1095 = vst.msk [vmem:[%s906] sm:$0xff] %vm348, %v1093
  %v1096 = vld [vmem:[%s540] sm:$0xff]
  %v1097 = vld [vmem:[%s538] sm:$0xff]
  %v1098 = vld [vmem:[%s574] sm:$0xff]
  %v1099 = vld [vmem:[%s4] sm:$0xff]
  %v1100 = vld [vmem:[%s4 + $0x8] sm:$0xff]
  %v1101 = vld [vmem:[%s4 + $0x10] sm:$0xff]
  %v1102 = vld [vmem:[%s4 + $0x18] sm:$0xff]
  %1104 = vrot.lane.b32.xlu0 %v1031, 32
  %v1105 = vpop.permute.xlu0 %1104
  %v1106 = vsel %vm180, %v1105, 0
  %1108 = vmatpush.msra.mxu0 0.0
  %1109 = vmatpush.msra.mxu0 0.0
  %1110 = vmatpush.msra.mxu0 0.0
  %1111 = vmatpush.msra.mxu0 0.0
  %1112 = vmatpush.msra.mxu0 0.0
  %1113 = vmatpush.msra.mxu0 0.0
  %1114 = vmatpush.msra.mxu0 0.0
  %1115 = vmatpush.msra.mxu0 0.0
  %1116 = vmatpush.msra.mxu0 0.0
  %1117 = vmatpush.msra.mxu0 0.0
  %1118 = vmatpush.msra.mxu0 0.0
  %1119 = vmatpush.msra.mxu0 0.0
  %1120 = vmatpush.msra.mxu0 %v1102
  %1121 = vmatpush.msra.mxu0 %v1101
  %1122 = vmatpush.msra.mxu0 %v1100
  %1123 = vmatpush.msra.mxu0 %v1099
  %1124 = vmatmul.f32.gmra.mxu0 %v1106
  %v1125 = vpop.f32.mrf.mxu0
  %v1126 = vadd.f32 0.0, %v1125
  %1127 = vdwg.mxu0
  %v1128 = vadd.f32 %v1098, %v1126
  %v1129 = vld [vmem:[%s542 + $0x8] sm:$0xff]
  %v1130 = vld [vmem:[%s5] sm:$0xff]
  %v1131 = vld [vmem:[%s5 + $0x8] sm:$0xff]
  %v1132 = vld [vmem:[%s5 + $0x10] sm:$0xff]
  %v1133 = vld [vmem:[%s5 + $0x18] sm:$0xff]
  %1135 = vrot.lane.b32.xlu0 %v1085, 32
  %v1136 = vpop.permute.xlu0 %1135
  %v1137 = vsel %vm180, %v1136, 0
  %1139 = vmatpush.msra.mxu0 0.0
  %1140 = vmatpush.msra.mxu0 0.0
  %1141 = vmatpush.msra.mxu0 0.0
  %1142 = vmatpush.msra.mxu0 0.0
  %1143 = vmatpush.msra.mxu0 0.0
  %1144 = vmatpush.msra.mxu0 0.0
  %1145 = vmatpush.msra.mxu0 0.0
  %1146 = vmatpush.msra.mxu0 0.0
  %1147 = vmatpush.msra.mxu0 0.0
  %1148 = vmatpush.msra.mxu0 0.0
  %1149 = vmatpush.msra.mxu0 0.0
  %1150 = vmatpush.msra.mxu0 0.0
  %1151 = vmatpush.msra.mxu0 %v1133
  %1152 = vmatpush.msra.mxu0 %v1132
  %1153 = vmatpush.msra.mxu0 %v1131
  %1154 = vmatpush.msra.mxu0 %v1130
  %1155 = vmatmul.f32.gmra.mxu0 %v1137
  %v1156 = vpop.f32.mrf.mxu0
  %v1157 = vadd.f32 0.0, %v1156
  %1158 = vdwg.mxu0
  %v1159 = vadd.f32 %v1129, %v1157
  %v1160 = vxor.u32 %v1128, 2147483648
  %v1161 = vmul.f32 %v1160, 1.442695
  %v1162 = vpow.pop %v1161
  %v1163 = vadd.f32 %v1162, 1.0
  %v1164 = vrcp.pop %v1163
  %v1165 = vmul.f32 %v1163, %v1164
  %v1166 = vsub.f32 1.0, %v1165
  %v1167 = vmul.f32 %v1164, %v1166
  %v1168 = vadd.f32 %v1164, %v1167
  %vm1169 = vweird.f32 %v1163
  %vm1170 = vweird.f32 %v1164
  %vm1171 = vmor %vm1169, %vm1170
  %v1172 = vsel %vm1171, %v1164, %v1168
  %v1173 = vand.u32 2147483647, %v1163
  %vm1174 = vcmp.eq.f32.partialorder %v1173, 8.507059e+37
  %v1175 = vand.u32 %v1163, 2147483648
  %v1176 = vor.u32 1.1754944e-38, %v1175
  %v1177 = vsel %vm1174, %v1176, %v1172
  %v1178 = vmul.f32 1.0, %v1177
  %v1179 = vtanh.pop %v1128
  %v1180 = vmul.f32 %v1178, %v1028
  %1182 = vrot.lane.b32.xlu0 %v1179, 64
  %v1183 = vpop.permute.xlu0 %1182
  %v1185 = vmul.f32 %v1178, %v1183
  %1187 = vrot.lane.b32.xlu0 %v1185, 32
  %v1188 = vpop.permute.xlu0 %1187
  %v1190 = vadd.f32 %v1180, %v1188
  %v1191 = vtanh.pop %v1190
  %1193 = vrot.lane.b32.xlu0 %v1191, 64
  %v1194 = vpop.permute.xlu0 %1193
  %v1196 = vmul.f32 %v1178, %v1194
  %1198 = vset.pattern.permute.xlu0 0
  %1199 = vperm.xlu0 %1198, %v1096
  %v1200 = vpop.permute.xlu0 %1199
  %v1202 = vmul.f32 %v1200, %v1190
  %v1203 = vsub.f32 1.0, %v1096
  %1205 = vset.pattern.permute.xlu0 0
  %1206 = vperm.xlu0 %1205, %v1203
  %v1207 = vpop.permute.xlu0 %1206
  %v1209 = vmul.f32 %v1207, %v1028
  %v1210 = vadd.f32 %v1202, %v1209
  %v1211 = vmul.f32 %v1200, %v1196
  %v1212 = vmul.f32 %v1207, %v1031
  %v1213 = vadd.f32 %v1211, %v1212
  %v1214 = vxor.u32 %v1159, 2147483648
  %v1215 = vmul.f32 %v1214, 1.442695
  %v1216 = vpow.pop %v1215
  %v1217 = vadd.f32 %v1216, 1.0
  %v1218 = vrcp.pop %v1217
  %v1219 = vmul.f32 %v1217, %v1218
  %v1220 = vsub.f32 1.0, %v1219
  %v1221 = vmul.f32 %v1218, %v1220
  %v1222 = vadd.f32 %v1218, %v1221
  %vm1223 = vweird.f32 %v1217
  %vm1224 = vweird.f32 %v1218
  %vm1225 = vmor %vm1223, %vm1224
  %v1226 = vsel %vm1225, %v1218, %v1222
  %v1227 = vand.u32 2147483647, %v1217
  %vm1228 = vcmp.eq.f32.partialorder %v1227, 8.507059e+37
  %v1229 = vand.u32 %v1217, 2147483648
  %v1230 = vor.u32 1.1754944e-38, %v1229
  %v1231 = vsel %vm1228, %v1230, %v1226
  %v1232 = vmul.f32 1.0, %v1231
  %v1233 = vtanh.pop %v1159
  %v1234 = vmul.f32 %v1232, %v1082
  %1236 = vrot.lane.b32.xlu0 %v1233, 64
  %v1237 = vpop.permute.xlu0 %1236
  %v1239 = vmul.f32 %v1232, %v1237
  %1241 = vrot.lane.b32.xlu0 %v1239, 32
  %v1242 = vpop.permute.xlu0 %1241
  %v1244 = vadd.f32 %v1234, %v1242
  %v1245 = vtanh.pop %v1244
  %1247 = vrot.lane.b32.xlu0 %v1245, 64
  %v1248 = vpop.permute.xlu0 %1247
  %v1250 = vmul.f32 %v1232, %v1248
  %1252 = vset.pattern.permute.xlu0 0
  %1253 = vperm.xlu0 %1252, %v1097
  %v1254 = vpop.permute.xlu0 %1253
  %v1256 = vmul.f32 %v1254, %v1244
  %v1257 = vsub.f32 1.0, %v1097
  %1259 = vset.pattern.permute.xlu0 0
  %1260 = vperm.xlu0 %1259, %v1257
  %v1261 = vpop.permute.xlu0 %1260
  %v1263 = vmul.f32 %v1261, %v1082
  %v1264 = vadd.f32 %v1256, %v1263
  %v1265 = vmul.f32 %v1254, %v1250
  %v1266 = vmul.f32 %v1261, %v1085
  %v1267 = vadd.f32 %v1265, %v1266
  %1269 = vrot.lane.b32.xlu0 %v1211, 32
  %v1270 = vpop.permute.xlu0 %1269
  %1272 = vst.msk [vmem:[%s724] sm:$0xff] %vm180, %v1270
  %1274 = vrot.lane.b32.xlu0 %v1265, 64
  %v1275 = vpop.permute.xlu0 %1274
  %1277 = vst.msk [vmem:[%s718] sm:$0xff] %vm348, %v1275
  %v1278 = vld [vmem:[%s352] sm:$0xff]
  %v1279 = vld [vmem:[%s350] sm:$0xff]
  %v1280 = vld [vmem:[%s386] sm:$0xff]
  %v1281 = vld [vmem:[%s4] sm:$0xff]
  %v1282 = vld [vmem:[%s4 + $0x8] sm:$0xff]
  %v1283 = vld [vmem:[%s4 + $0x10] sm:$0xff]
  %v1284 = vld [vmem:[%s4 + $0x18] sm:$0xff]
  %1286 = vrot.lane.b32.xlu0 %v1213, 32
  %v1287 = vpop.permute.xlu0 %1286
  %v1288 = vsel %vm180, %v1287, 0
  %1290 = vmatpush.msra.mxu0 0.0
  %1291 = vmatpush.msra.mxu0 0.0
  %1292 = vmatpush.msra.mxu0 0.0
  %1293 = vmatpush.msra.mxu0 0.0
  %1294 = vmatpush.msra.mxu0 0.0
  %1295 = vmatpush.msra.mxu0 0.0
  %1296 = vmatpush.msra.mxu0 0.0
  %1297 = vmatpush.msra.mxu0 0.0
  %1298 = vmatpush.msra.mxu0 0.0
  %1299 = vmatpush.msra.mxu0 0.0
  %1300 = vmatpush.msra.mxu0 0.0
  %1301 = vmatpush.msra.mxu0 0.0
  %1302 = vmatpush.msra.mxu0 %v1284
  %1303 = vmatpush.msra.mxu0 %v1283
  %1304 = vmatpush.msra.mxu0 %v1282
  %1305 = vmatpush.msra.mxu0 %v1281
  %1306 = vmatmul.f32.gmra.mxu0 %v1288
  %v1307 = vpop.f32.mrf.mxu0
  %v1308 = vadd.f32 0.0, %v1307
  %1309 = vdwg.mxu0
  %v1310 = vadd.f32 %v1280, %v1308
  %v1311 = vld [vmem:[%s354 + $0x8] sm:$0xff]
  %v1312 = vld [vmem:[%s5] sm:$0xff]
  %v1313 = vld [vmem:[%s5 + $0x8] sm:$0xff]
  %v1314 = vld [vmem:[%s5 + $0x10] sm:$0xff]
  %v1315 = vld [vmem:[%s5 + $0x18] sm:$0xff]
  %1317 = vrot.lane.b32.xlu0 %v1267, 32
  %v1318 = vpop.permute.xlu0 %1317
  %v1319 = vsel %vm180, %v1318, 0
  %1321 = vmatpush.msra.mxu0 0.0
  %1322 = vmatpush.msra.mxu0 0.0
  %1323 = vmatpush.msra.mxu0 0.0
  %1324 = vmatpush.msra.mxu0 0.0
  %1325 = vmatpush.msra.mxu0 0.0
  %1326 = vmatpush.msra.mxu0 0.0
  %1327 = vmatpush.msra.mxu0 0.0
  %1328 = vmatpush.msra.mxu0 0.0
  %1329 = vmatpush.msra.mxu0 0.0
  %1330 = vmatpush.msra.mxu0 0.0
  %1331 = vmatpush.msra.mxu0 0.0
  %1332 = vmatpush.msra.mxu0 0.0
  %1333 = vmatpush.msra.mxu0 %v1315
  %1334 = vmatpush.msra.mxu0 %v1314
  %1335 = vmatpush.msra.mxu0 %v1313
  %1336 = vmatpush.msra.mxu0 %v1312
  %1337 = vmatmul.f32.gmra.mxu0 %v1319
  %v1338 = vpop.f32.mrf.mxu0
  %v1339 = vadd.f32 0.0, %v1338
  %1340 = vdwg.mxu0
  %v1341 = vadd.f32 %v1311, %v1339
  %v1342 = vxor.u32 %v1310, 2147483648
  %v1343 = vmul.f32 %v1342, 1.442695
  %v1344 = vpow.pop %v1343
  %v1345 = vadd.f32 %v1344, 1.0
  %v1346 = vrcp.pop %v1345
  %v1347 = vmul.f32 %v1345, %v1346
  %v1348 = vsub.f32 1.0, %v1347
  %v1349 = vmul.f32 %v1346, %v1348
  %v1350 = vadd.f32 %v1346, %v1349
  %vm1351 = vweird.f32 %v1345
  %vm1352 = vweird.f32 %v1346
  %vm1353 = vmor %vm1351, %vm1352
  %v1354 = vsel %vm1353, %v1346, %v1350
  %v1355 = vand.u32 2147483647, %v1345
  %vm1356 = vcmp.eq.f32.partialorder %v1355, 8.507059e+37
  %v1357 = vand.u32 %v1345, 2147483648
  %v1358 = vor.u32 1.1754944e-38, %v1357
  %v1359 = vsel %vm1356, %v1358, %v1354
  %v1360 = vmul.f32 1.0, %v1359
  %v1361 = vtanh.pop %v1310
  %v1362 = vmul.f32 %v1360, %v1210
  %1364 = vrot.lane.b32.xlu0 %v1361, 64
  %v1365 = vpop.permute.xlu0 %1364
  %v1367 = vmul.f32 %v1360, %v1365
  %1369 = vrot.lane.b32.xlu0 %v1367, 32
  %v1370 = vpop.permute.xlu0 %1369
  %v1372 = vadd.f32 %v1362, %v1370
  %v1373 = vtanh.pop %v1372
  %1375 = vrot.lane.b32.xlu0 %v1373, 64
  %v1376 = vpop.permute.xlu0 %1375
  %v1378 = vmul.f32 %v1360, %v1376
  %1380 = vset.pattern.permute.xlu0 0
  %1381 = vperm.xlu0 %1380, %v1278
  %v1382 = vpop.permute.xlu0 %1381
  %v1384 = vmul.f32 %v1382, %v1372
  %v1385 = vsub.f32 1.0, %v1278
  %1387 = vset.pattern.permute.xlu0 0
  %1388 = vperm.xlu0 %1387, %v1385
  %v1389 = vpop.permute.xlu0 %1388
  %v1391 = vmul.f32 %v1389, %v1210
  %v1392 = vadd.f32 %v1384, %v1391
  %v1393 = vmul.f32 %v1382, %v1378
  %v1394 = vmul.f32 %v1389, %v1213
  %v1395 = vadd.f32 %v1393, %v1394
  %v1396 = vxor.u32 %v1341, 2147483648
  %v1397 = vmul.f32 %v1396, 1.442695
  %v1398 = vpow.pop %v1397
  %v1399 = vadd.f32 %v1398, 1.0
  %v1400 = vrcp.pop %v1399
  %v1401 = vmul.f32 %v1399, %v1400
  %v1402 = vsub.f32 1.0, %v1401
  %v1403 = vmul.f32 %v1400, %v1402
  %v1404 = vadd.f32 %v1400, %v1403
  %vm1405 = vweird.f32 %v1399
  %vm1406 = vweird.f32 %v1400
  %vm1407 = vmor %vm1405, %vm1406
  %v1408 = vsel %vm1407, %v1400, %v1404
  %v1409 = vand.u32 2147483647, %v1399
  %vm1410 = vcmp.eq.f32.partialorder %v1409, 8.507059e+37
  %v1411 = vand.u32 %v1399, 2147483648
  %v1412 = vor.u32 1.1754944e-38, %v1411
  %v1413 = vsel %vm1410, %v1412, %v1408
  %v1414 = vmul.f32 1.0, %v1413
  %v1415 = vtanh.pop %v1341
  %v1416 = vmul.f32 %v1414, %v1264
  %1418 = vrot.lane.b32.xlu0 %v1415, 64
  %v1419 = vpop.permute.xlu0 %1418
  %v1421 = vmul.f32 %v1414, %v1419
  %1423 = vrot.lane.b32.xlu0 %v1421, 32
  %v1424 = vpop.permute.xlu0 %1423
  %v1426 = vadd.f32 %v1416, %v1424
  %v1427 = vtanh.pop %v1426
  %1429 = vrot.lane.b32.xlu0 %v1427, 64
  %v1430 = vpop.permute.xlu0 %1429
  %v1432 = vmul.f32 %v1414, %v1430
  %1434 = vset.pattern.permute.xlu0 0
  %1435 = vperm.xlu0 %1434, %v1279
  %v1436 = vpop.permute.xlu0 %1435
  %v1438 = vmul.f32 %v1436, %v1426
  %v1439 = vsub.f32 1.0, %v1279
  %1441 = vset.pattern.permute.xlu0 0
  %1442 = vperm.xlu0 %1441, %v1439
  %v1443 = vpop.permute.xlu0 %1442
  %v1445 = vmul.f32 %v1443, %v1264
  %v1446 = vadd.f32 %v1438, %v1445
  %v1447 = vmul.f32 %v1436, %v1432
  %v1448 = vmul.f32 %v1443, %v1267
  %v1449 = vadd.f32 %v1447, %v1448
  %1451 = vrot.lane.b32.xlu0 %v1393, 32
  %v1452 = vpop.permute.xlu0 %1451
  %1454 = vst.msk [vmem:[%s536] sm:$0xff] %vm180, %v1452
  %1456 = vrot.lane.b32.xlu0 %v1447, 64
  %v1457 = vpop.permute.xlu0 %1456
  %1459 = vst.msk [vmem:[%s530] sm:$0xff] %vm348, %v1457
  %v1460 = vld [vmem:[%s173] sm:$0xff]
  %v1461 = vld [vmem:[%s1] sm:$0xff]
  %v1462 = vld [vmem:[%s205] sm:$0xff]
  %v1463 = vld [vmem:[%s4] sm:$0xff]
  %v1464 = vld [vmem:[%s4 + $0x8] sm:$0xff]
  %v1465 = vld [vmem:[%s4 + $0x10] sm:$0xff]
  %v1466 = vld [vmem:[%s4 + $0x18] sm:$0xff]
  %1468 = vrot.lane.b32.xlu0 %v1395, 32
  %v1469 = vpop.permute.xlu0 %1468
  %v1470 = vsel %vm180, %v1469, 0
  %1472 = vmatpush.msra.mxu0 0.0
  %1473 = vmatpush.msra.mxu0 0.0
  %1474 = vmatpush.msra.mxu0 0.0
  %1475 = vmatpush.msra.mxu0 0.0
  %1476 = vmatpush.msra.mxu0 0.0
  %1477 = vmatpush.msra.mxu0 0.0
  %1478 = vmatpush.msra.mxu0 0.0
  %1479 = vmatpush.msra.mxu0 0.0
  %1480 = vmatpush.msra.mxu0 0.0
  %1481 = vmatpush.msra.mxu0 0.0
  %1482 = vmatpush.msra.mxu0 0.0
  %1483 = vmatpush.msra.mxu0 0.0
  %1484 = vmatpush.msra.mxu0 %v1466
  %1485 = vmatpush.msra.mxu0 %v1465
  %1486 = vmatpush.msra.mxu0 %v1464
  %1487 = vmatpush.msra.mxu0 %v1463
  %1488 = vmatmul.f32.gmra.mxu0 %v1470
  %v1489 = vpop.f32.mrf.mxu0
  %v1490 = vadd.f32 0.0, %v1489
  %1491 = vdwg.mxu0
  %v1492 = vadd.f32 %v1462, %v1490
  %v1493 = vld [vmem:[#allocation2 + $0x8] sm:$0xff]
  %v1494 = vld [vmem:[%s5] sm:$0xff]
  %v1495 = vld [vmem:[%s5 + $0x8] sm:$0xff]
  %v1496 = vld [vmem:[%s5 + $0x10] sm:$0xff]
  %v1497 = vld [vmem:[%s5 + $0x18] sm:$0xff]
  %1499 = vrot.lane.b32.xlu0 %v1449, 32
  %v1500 = vpop.permute.xlu0 %1499
  %v1501 = vsel %vm180, %v1500, 0
  %1503 = vmatpush.msra.mxu0 0.0
  %1504 = vmatpush.msra.mxu0 0.0
  %1505 = vmatpush.msra.mxu0 0.0
  %1506 = vmatpush.msra.mxu0 0.0
  %1507 = vmatpush.msra.mxu0 0.0
  %1508 = vmatpush.msra.mxu0 0.0
  %1509 = vmatpush.msra.mxu0 0.0
  %1510 = vmatpush.msra.mxu0 0.0
  %1511 = vmatpush.msra.mxu0 0.0
  %1512 = vmatpush.msra.mxu0 0.0
  %1513 = vmatpush.msra.mxu0 0.0
  %1514 = vmatpush.msra.mxu0 0.0
  %1515 = vmatpush.msra.mxu0 %v1497
  %1516 = vmatpush.msra.mxu0 %v1496
  %1517 = vmatpush.msra.mxu0 %v1495
  %1518 = vmatpush.msra.mxu0 %v1494
  %1519 = vmatmul.f32.gmra.mxu0 %v1501
  %v1520 = vpop.f32.mrf.mxu0
  %v1521 = vadd.f32 0.0, %v1520
  %1522 = vdwg.mxu0
  %v1523 = vadd.f32 %v1493, %v1521
  %v1524 = vxor.u32 %v1492, 2147483648
  %v1525 = vmul.f32 %v1524, 1.442695
  %v1526 = vpow.pop %v1525
  %v1527 = vadd.f32 %v1526, 1.0
  %v1528 = vrcp.pop %v1527
  %v1529 = vmul.f32 %v1527, %v1528
  %v1530 = vsub.f32 1.0, %v1529
  %v1531 = vmul.f32 %v1528, %v1530
  %v1532 = vadd.f32 %v1528, %v1531
  %vm1533 = vweird.f32 %v1527
  %vm1534 = vweird.f32 %v1528
  %vm1535 = vmor %vm1533, %vm1534
  %v1536 = vsel %vm1535, %v1528, %v1532
  %v1537 = vand.u32 2147483647, %v1527
  %vm1538 = vcmp.eq.f32.partialorder %v1537, 8.507059e+37
  %v1539 = vand.u32 %v1527, 2147483648
  %v1540 = vor.u32 1.1754944e-38, %v1539
  %v1541 = vsel %vm1538, %v1540, %v1536
  %v1542 = vmul.f32 1.0, %v1541
  %v1543 = vtanh.pop %v1492
  %v1544 = vmul.f32 %v1542, %v1392
  %1546 = vrot.lane.b32.xlu0 %v1543, 64
  %v1547 = vpop.permute.xlu0 %1546
  %v1549 = vmul.f32 %v1542, %v1547
  %1551 = vrot.lane.b32.xlu0 %v1549, 32
  %v1552 = vpop.permute.xlu0 %1551
  %v1554 = vadd.f32 %v1544, %v1552
  %v1555 = vtanh.pop %v1554
  %1557 = vrot.lane.b32.xlu0 %v1555, 64
  %v1558 = vpop.permute.xlu0 %1557
  %v1560 = vmul.f32 %v1542, %v1558
  %1562 = vset.pattern.permute.xlu0 0
  %1563 = vperm.xlu0 %1562, %v1460
  %v1564 = vpop.permute.xlu0 %1563
  %v1566 = vmul.f32 %v1564, %v1560
  %v1567 = vxor.u32 %v1523, 2147483648
  %v1568 = vmul.f32 %v1567, 1.442695
  %v1569 = vpow.pop %v1568
  %v1570 = vadd.f32 %v1569, 1.0
  %v1571 = vrcp.pop %v1570
  %v1572 = vmul.f32 %v1570, %v1571
  %v1573 = vsub.f32 1.0, %v1572
  %v1574 = vmul.f32 %v1571, %v1573
  %v1575 = vadd.f32 %v1571, %v1574
  %vm1576 = vweird.f32 %v1570
  %vm1577 = vweird.f32 %v1571
  %vm1578 = vmor %vm1576, %vm1577
  %v1579 = vsel %vm1578, %v1571, %v1575
  %v1580 = vand.u32 2147483647, %v1570
  %vm1581 = vcmp.eq.f32.partialorder %v1580, 8.507059e+37
  %v1582 = vand.u32 %v1570, 2147483648
  %v1583 = vor.u32 1.1754944e-38, %v1582
  %v1584 = vsel %vm1581, %v1583, %v1579
  %v1585 = vmul.f32 1.0, %v1584
  %v1586 = vtanh.pop %v1523
  %v1587 = vmul.f32 %v1585, %v1446
  %1589 = vrot.lane.b32.xlu0 %v1586, 64
  %v1590 = vpop.permute.xlu0 %1589
  %v1592 = vmul.f32 %v1585, %v1590
  %1594 = vrot.lane.b32.xlu0 %v1592, 32
  %v1595 = vpop.permute.xlu0 %1594
  %v1597 = vadd.f32 %v1587, %v1595
  %v1598 = vtanh.pop %v1597
  %1600 = vrot.lane.b32.xlu0 %v1598, 64
  %v1601 = vpop.permute.xlu0 %1600
  %v1603 = vmul.f32 %v1585, %v1601
  %1605 = vset.pattern.permute.xlu0 0
  %1606 = vperm.xlu0 %1605, %v1461
  %v1607 = vpop.permute.xlu0 %1606
  %v1609 = vmul.f32 %v1607, %v1603
  %1611 = vrot.lane.b32.xlu0 %v1566, 32
  %v1612 = vpop.permute.xlu0 %1611
  %1614 = vst.msk [vmem:[%s347] sm:$0xff] %vm180, %v1612
  %1616 = vrot.lane.b32.xlu0 %v1609, 64
  %v1617 = vpop.permute.xlu0 %1616
  %1619 = vst.msk [vmem:[%s6] sm:$0xff] %vm348, %v1617
  // Predicated region
  $region26: #{tagger_forward.5} parent=0 // pred_check
    _
  $region27: #{tagger_forward.5} parent=0 // pred_check_branch
    %1621 = sbr.rel (0) target = $region29
  $region28: #{tagger_forward.5} parent=0 // pred_region
    _
  $region29: #{tagger_forward.5} parent=0 // pred_fallthru
    _
  // Predicated region
  $region30: #{tagger_forward.5} parent=0 // pred_check
    _
  $region31: #{tagger_forward.5} parent=0 // pred_check_branch
    %1623 = sbr.rel (0) target = $region33
  $region32: #{tagger_forward.5} parent=0 // pred_region
    _
  $region33: #{tagger_forward.5} parent=0 // pred_fallthru
    _

// kernel: tagger_forward.6
$region0: #{tagger_forward.6}
  #allocation0 [shape = 'u32[]', space=smem, size = 0x4, offset = 0x4, fixed_abs, tag = 'smem constant byte address 0x4 - core index']
  #allocation1 [shape = 'u32[72,128]{1,0:T(1,128)}', space=vmem, size = 0x9000, scoped, tag = 'internal scratch']
  #allocation2 [shape = 'f32[8,8,256]{2,1,0:T(8,128)}', space=vmem, size = 0x10000, scoped, tag = 'scratch operand']
  %s0 = inlined_call_operand.vmem [shape: f32[8,8,64], index: 0, kind: input, shape index: {}]
  %s1 = inlined_call_operand.vmem [shape: f32[8,8,1], index: 1, kind: input, shape index: {}]
  %s2 = inlined_call_operand.vmem [shape: f32[64,256], index: 2, kind: input, shape index: {}]
  %s3 = inlined_call_operand.vmem [shape: f32[1,256], index: 3, kind: input, shape index: {}]
  %s4 = inlined_call_operand.vmem [shape: f32[32,128], index: 4, kind: input, shape index: {}]
  %s5 = inlined_call_operand.vmem [shape: f32[32,128], index: 5, kind: input, shape index: {}]
  %s6 = inlined_call_operand.vmem [shape: f32[8,8,64], index: 6, kind: output, shape index: {}]
  %s7 = sld [smem:[#allocation0]]
  $region34: #{tagger_forward.6} parent=0
    _
  %s9 = ssub.s32 1, %s7
  %s10 = scalar_select 0, %s9, %s7
  // Predicated region
  $region2: #{tagger_forward.6} parent=0 // pred_check
    _
  $region3: #{tagger_forward.6} parent=0 // pred_check_branch
    %12 = sbr.rel (0) target = $region5
  $region4: #{tagger_forward.6} parent=0 // pred_region
    _
  $region5: #{tagger_forward.6} parent=0 // pred_fallthru
    _
  // Predicated region
  $region6: #{tagger_forward.6} parent=0 // pred_check
    _
  $region7: #{tagger_forward.6} parent=0 // pred_check_branch
    %14 = sbr.rel (0) target = $region9
  $region8: #{tagger_forward.6} parent=0 // pred_region
    _
  $region9: #{tagger_forward.6} parent=0 // pred_fallthru
    _
  // Predicated region
  $region10: #{tagger_forward.6} parent=0 // pred_check
    _
  $region11: #{tagger_forward.6} parent=0 // pred_check_branch
    %16 = sbr.rel (0) target = $region13
  $region12: #{tagger_forward.6} parent=0 // pred_region
    _
  $region13: #{tagger_forward.6} parent=0 // pred_fallthru
    _
  // Predicated region
  $region14: #{tagger_forward.6} parent=0 // pred_check
    _
  $region15: #{tagger_forward.6} parent=0 // pred_check_branch
    %18 = sbr.rel (0) target = $region17
  $region16: #{tagger_forward.6} parent=0 // pred_region
    _
  $region17: #{tagger_forward.6} parent=0 // pred_fallthru
    _
  // Predicated region
  $region18: #{tagger_forward.6} parent=0 // pred_check
    _
  $region19: #{tagger_forward.6} parent=0 // pred_check_branch
    %20 = sbr.rel (0) target = $region21
  $region20: #{tagger_forward.6} parent=0 // pred_region
    _
  $region21: #{tagger_forward.6} parent=0 // pred_fallthru
    _
  // Predicated region
  $region22: #{tagger_forward.6} parent=0 // pred_check
    _
  $region23: #{tagger_forward.6} parent=0 // pred_check_branch
    %22 = sbr.rel (0) target = $region25
  $region24: #{tagger_forward.6} parent=0 // pred_region
    _
  $region25: #{tagger_forward.6} parent=0 // pred_fallthru
    _
  %v23 = vld [vmem:[%s0] sm:$0xff]
  %v24 = vld [vmem:[%s0 + $0x8] sm:$0xff]
  %v25 = vld [vmem:[%s0 + $0x10] sm:$0xff]
  %v26 = vld [vmem:[%s0 + $0x18] sm:$0xff]
  %v27 = vld [vmem:[%s0 + $0x20] sm:$0xff]
  %v28 = vld [vmem:[%s0 + $0x28] sm:$0xff]
  %v29 = vld [vmem:[%s0 + $0x30] sm:$0xff]
  %v30 = vld [vmem:[%s0 + $0x38] sm:$0xff]
  %v31 = vld [vmem:[%s2] sm:$0xff]
  %v32 = vld [vmem:[%s2 + $0x8] sm:$0xff]
  %v33 = vld [vmem:[%s2 + $0x10] sm:$0xff]
  %v34 = vld [vmem:[%s2 + $0x18] sm:$0xff]
  %v35 = vld [vmem:[%s2 + $0x20] sm:$0xff]
  %v36 = vld [vmem:[%s2 + $0x28] sm:$0xff]
  %v37 = vld [vmem:[%s2 + $0x30] sm:$0xff]
  %v38 = vld [vmem:[%s2 + $0x38] sm:$0xff]
  %v39 = vld [vmem:[%s2 + $0x40] sm:$0xff]
  %v40 = vld [vmem:[%s2 + $0x48] sm:$0xff]
  %v41 = vld [vmem:[%s2 + $0x50] sm:$0xff]
  %v42 = vld [vmem:[%s2 + $0x58] sm:$0xff]
  %v43 = vld [vmem:[%s2 + $0x60] sm:$0xff]
  %v44 = vld [vmem:[%s2 + $0x68] sm:$0xff]
  %v45 = vld [vmem:[%s2 + $0x70] sm:$0xff]
  %v46 = vld [vmem:[%s2 + $0x78] sm:$0xff]
  %v47 = vld [vmem:[%s3] sm:$0x3]
  %v49 = vperm.slane %v47, 0
  %v50 = vperm.slane %v47, 1
  %vm53 = vcmask 523264
  %v55 = vsel %vm53, %v23, 0
  %v58 = vsel %vm53, %v24, 0
  %v61 = vsel %vm53, %v25, 0
  %v64 = vsel %vm53, %v26, 0
  %v67 = vsel %vm53, %v27, 0
  %v70 = vsel %vm53, %v28, 0
  %v73 = vsel %vm53, %v29, 0
  %v76 = vsel %vm53, %v30, 0
  %78 = vmatpush.msra.mxu0 0.0
  %79 = vmatpush.msra.mxu0 0.0
  %80 = vmatpush.msra.mxu0 0.0
  %81 = vmatpush.msra.mxu0 0.0
  %82 = vmatpush.msra.mxu0 0.0
  %83 = vmatpush.msra.mxu0 0.0
  %84 = vmatpush.msra.mxu0 0.0
  %85 = vmatpush.msra.mxu0 0.0
  %86 = vmatpush.msra.mxu0 %v45
  %87 = vmatpush.msra.mxu0 %v43
  %88 = vmatpush.msra.mxu0 %v41
  %89 = vmatpush.msra.mxu0 %v39
  %90 = vmatpush.msra.mxu0 %v37
  %91 = vmatpush.msra.mxu0 %v35
  %92 = vmatpush.msra.mxu0 %v33
  %93 = vmatpush.msra.mxu0 %v31
  %94 = vmatmul.f32.gmra.mxu0 %v55
  %v95 = vpop.f32.mrf.mxu0
  %v96 = vadd.f32 %v49, %v95
  %97 = vmatmul.f32.gmra.mxu0 %v58
  %v98 = vpop.f32.mrf.mxu0
  %v99 = vadd.f32 %v49, %v98
  %100 = vmatmul.f32.gmra.mxu0 %v61
  %v101 = vpop.f32.mrf.mxu0
  %v102 = vadd.f32 %v49, %v101
  %103 = vmatmul.f32.gmra.mxu0 %v64
  %v104 = vpop.f32.mrf.mxu0
  %v105 = vadd.f32 %v49, %v104
  %106 = vmatmul.f32.gmra.mxu0 %v67
  %v107 = vpop.f32.mrf.mxu0
  %v108 = vadd.f32 %v49, %v107
  %109 = vmatmul.f32.gmra.mxu0 %v70
  %v110 = vpop.f32.mrf.mxu0
  %v111 = vadd.f32 %v49, %v110
  %112 = vmatmul.f32.gmra.mxu0 %v73
  %v113 = vpop.f32.mrf.mxu0
  %v114 = vadd.f32 %v49, %v113
  %115 = vmatmul.f32.gmra.mxu0 %v76
  %v116 = vpop.f32.mrf.mxu0
  %v117 = vadd.f32 %v49, %v116
  %118 = vdwg.mxu0
  %119 = vmatpush.msra.mxu0 0.0
  %120 = vmatpush.msra.mxu0 0.0
  %121 = vmatpush.msra.mxu0 0.0
  %122 = vmatpush.msra.mxu0 0.0
  %123 = vmatpush.msra.mxu0 0.0
  %124 = vmatpush.msra.mxu0 0.0
  %125 = vmatpush.msra.mxu0 0.0
  %126 = vmatpush.msra.mxu0 0.0
  %127 = vmatpush.msra.mxu0 %v46
  %128 = vmatpush.msra.mxu0 %v44
  %129 = vmatpush.msra.mxu0 %v42
  %130 = vmatpush.msra.mxu0 %v40
  %131 = vmatpush.msra.mxu0 %v38
  %132 = vmatpush.msra.mxu0 %v36
  %133 = vmatpush.msra.mxu0 %v34
  %134 = vmatpush.msra.mxu0 %v32
  %135 = vmatmul.f32.gmra.mxu0 %v55
  %v136 = vpop.f32.mrf.mxu0
  %v137 = vadd.f32 %v50, %v136
  %138 = vmatmul.f32.gmra.mxu0 %v58
  %v139 = vpop.f32.mrf.mxu0
  %v140 = vadd.f32 %v50, %v139
  %141 = vmatmul.f32.gmra.mxu0 %v61
  %v142 = vpop.f32.mrf.mxu0
  %v143 = vadd.f32 %v50, %v142
  %144 = vmatmul.f32.gmra.mxu0 %v64
  %v145 = vpop.f32.mrf.mxu0
  %v146 = vadd.f32 %v50, %v145
  %147 = vmatmul.f32.gmra.mxu0 %v67
  %v148 = vpop.f32.mrf.mxu0
  %v149 = vadd.f32 %v50, %v148
  %150 = vmatmul.f32.gmra.mxu0 %v70
  %v151 = vpop.f32.mrf.mxu0
  %v152 = vadd.f32 %v50, %v151
  %153 = vmatmul.f32.gmra.mxu0 %v73
  %v154 = vpop.f32.mrf.mxu0
  %v155 = vadd.f32 %v50, %v154
  %156 = vmatmul.f32.gmra.mxu0 %v76
  %v157 = vpop.f32.mrf.mxu0
  %v158 = vadd.f32 %v50, %v157
  %159 = vdwg.mxu0
  %160 = vst [vmem:[#allocation2] sm:$0xff] %v96
  %161 = vst [vmem:[#allocation2 + $0x8] sm:$0xff] %v137
  %162 = vst [vmem:[#allocation2 + $0x10] sm:$0xff] %v99
  %163 = vst [vmem:[#allocation2 + $0x18] sm:$0xff] %v140
  %164 = vst [vmem:[#allocation2 + $0x20] sm:$0xff] %v102
  %165 = vst [vmem:[#allocation2 + $0x28] sm:$0xff] %v143
  %166 = vst [vmem:[#allocation2 + $0x30] sm:$0xff] %v105
  %167 = vst [vmem:[#allocation2 + $0x38] sm:$0xff] %v146
  %168 = vst [vmem:[#allocation2 + $0x40] sm:$0xff] %v108
  %169 = vst [vmem:[#allocation2 + $0x48] sm:$0xff] %v149
  %170 = vst [vmem:[#allocation2 + $0x50] sm:$0xff] %v111
  %171 = vst [vmem:[#allocation2 + $0x58] sm:$0xff] %v152
  %172 = vst [vmem:[#allocation2 + $0x60] sm:$0xff] %v114
  %173 = vst [vmem:[#allocation2 + $0x68] sm:$0xff] %v155
  %174 = vst [vmem:[#allocation2 + $0x70] sm:$0xff] %v117
  %175 = vst [vmem:[#allocation2 + $0x78] sm:$0xff] %v158
  %v176 = vld [vmem:[%s1] sm:$0xff]
  %s177 = scalar_lea.vmem %s1, 56
  %v178 = vld [vmem:[%s177] sm:$0xff]
  %v179 = vld [vmem:[#allocation2] sm:$0xff]
  %v180 = vld [vmem:[%s4] sm:$0xff]
  %v181 = vld [vmem:[%s4 + $0x8] sm:$0xff]
  %v182 = vld [vmem:[%s4 + $0x10] sm:$0xff]
  %v183 = vld [vmem:[%s4 + $0x18] sm:$0xff]
  %vm184 = vcmask 261120
  %v186 = vsel %vm184, 0.0, 0
  %188 = vmatpush.msra.mxu0 0.0
  %189 = vmatpush.msra.mxu0 0.0
  %190 = vmatpush.msra.mxu0 0.0
  %191 = vmatpush.msra.mxu0 0.0
  %192 = vmatpush.msra.mxu0 0.0
  %193 = vmatpush.msra.mxu0 0.0
  %194 = vmatpush.msra.mxu0 0.0
  %195 = vmatpush.msra.mxu0 0.0
  %196 = vmatpush.msra.mxu0 0.0
  %197 = vmatpush.msra.mxu0 0.0
  %198 = vmatpush.msra.mxu0 0.0
  %199 = vmatpush.msra.mxu0 0.0
  %200 = vmatpush.msra.mxu0 %v183
  %201 = vmatpush.msra.mxu0 %v182
  %202 = vmatpush.msra.mxu0 %v181
  %203 = vmatpush.msra.mxu0 %v180
  %204 = vmatmul.f32.gmra.mxu0 %v186
  %v205 = vpop.f32.mrf.mxu0
  %v206 = vadd.f32 0.0, %v205
  %207 = vdwg.mxu0
  %v208 = vadd.f32 %v179, %v206
  %s209 = scalar_lea.vmem [#allocation2], 112
  %v210 = vld [vmem:[%s209 + $0x8] sm:$0xff]
  %v211 = vld [vmem:[%s5] sm:$0xff]
  %v212 = vld [vmem:[%s5 + $0x8] sm:$0xff]
  %v213 = vld [vmem:[%s5 + $0x10] sm:$0xff]
  %v214 = vld [vmem:[%s5 + $0x18] sm:$0xff]
  %215 = vmatpush.msra.mxu0 0.0
  %216 = vmatpush.msra.mxu0 0.0
  %217 = vmatpush.msra.mxu0 0.0
  %218 = vmatpush.msra.mxu0 0.0
  %219 = vmatpush.msra.mxu0 0.0
  %220 = vmatpush.msra.mxu0 0.0
  %221 = vmatpush.msra.mxu0 0.0
  %222 = vmatpush.msra.mxu0 0.0
  %223 = vmatpush.msra.mxu0 0.0
  %224 = vmatpush.msra.mxu0 0.0
  %225 = vmatpush.msra.mxu0 0.0
  %226 = vmatpush.msra.mxu0 0.0
  %227 = vmatpush.msra.mxu0 %v214
  %228 = vmatpush.msra.mxu0 %v213
  %229 = vmatpush.msra.mxu0 %v212
  %230 = vmatpush.msra.mxu0 %v211
  %231 = vmatmul.f32.gmra.mxu0 %v186
  %v232 = vpop.f32.mrf.mxu0
  %v233 = vadd.f32 0.0, %v232
  %234 = vdwg.mxu0
  %v235 = vadd.f32 %v210, %v233
  %v236 = vxor.u32 %v208, 2147483648
  %v237 = vmul.f32 %v236, 1.442695
  %v238 = vpow.pop %v237
  %v239 = vadd.f32 %v238, 1.0
  %v240 = vrcp.pop %v239
  %v241 = vmul.f32 %v239, %v240
  %v242 = vsub.f32 1.0, %v241
  %v243 = vmul.f32 %v240, %v242
  %v244 = vadd.f32 %v240, %v243
  %vm245 = vweird.f32 %v239
  %vm246 = vweird.f32 %v240
  %vm247 = vmor %vm245, %vm246
  %v248 = vsel %vm247, %v240, %v244
  %v249 = vand.u32 2147483647, %v239
  %vm250 = vcmp.eq.f32.partialorder %v249, 8.507059e+37
  %v251 = vand.u32 %v239, 2147483648
  %v252 = vor.u32 1.1754944e-38, %v251
  %v253 = vsel %vm250, %v252, %v248
  %v254 = vmul.f32 1.0, %v253
  %v255 = vtanh.pop %v208
  %v256 = vmul.f32 %v254, 0.0
  %258 = vrot.lane.b32.xlu0 %v255, 64
  %v259 = vpop.permute.xlu0 %258
  %v261 = vmul.f32 %v254, %v259
  %263 = vrot.lane.b32.xlu0 %v261, 32
  %v264 = vpop.permute.xlu0 %263
  %v266 = vadd.f32 %v256, %v264
  %v267 = vtanh.pop %v266
  %269 = vrot.lane.b32.xlu0 %v267, 64
  %v270 = vpop.permute.xlu0 %269
  %v272 = vmul.f32 %v254, %v270
  %274 = vset.pattern.permute.xlu0 0
  %275 = vperm.xlu0 %274, %v176
  %v276 = vpop.permute.xlu0 %275
  %v278 = vmul.f32 %v276, %v266
  %v279 = vsub.f32 1.0, %v176
  %281 = vset.pattern.permute.xlu0 0
  %282 = vperm.xlu0 %281, %v279
  %v283 = vpop.permute.xlu0 %282
  %v285 = vmul.f32 %v283, 0.0
  %v286 = vadd.f32 %v278, %v285
  %v287 = vmul.f32 %v276, %v272
  %v288 = vadd.f32 %v287, %v285
  %v289 = vxor.u32 %v235, 2147483648
  %v290 = vmul.f32 %v289, 1.442695
  %v291 = vpow.pop %v290
  %v292 = vadd.f32 %v291, 1.0
  %v293 = vrcp.pop %v292
  %v294 = vmul.f32 %v292, %v293
  %v295 = vsub.f32 1.0, %v294
  %v296 = vmul.f32 %v293, %v295
  %v297 = vadd.f32 %v293, %v296
  %vm298 = vweird.f32 %v292
  %vm299 = vweird.f32 %v293
  %vm300 = vmor %vm298, %vm299
  %v301 = vsel %vm300, %v293, %v297
  %v302 = vand.u32 2147483647, %v292
  %vm303 = vcmp.eq.f32.partialorder %v302, 8.507059e+37
  %v304 = vand.u32 %v292, 2147483648
  %v305 = vor.u32 1.1754944e-38, %v304
  %v306 = vsel %vm303, %v305, %v301
  %v307 = vmul.f32 1.0, %v306
  %v308 = vtanh.pop %v235
  %v309 = vmul.f32 %v307, 0.0
  %311 = vrot.lane.b32.xlu0 %v308, 64
  %v312 = vpop.permute.xlu0 %311
  %v314 = vmul.f32 %v307, %v312
  %316 = vrot.lane.b32.xlu0 %v314, 32
  %v317 = vpop.permute.xlu0 %316
  %v319 = vadd.f32 %v309, %v317
  %v320 = vtanh.pop %v319
  %322 = vrot.lane.b32.xlu0 %v320, 64
  %v323 = vpop.permute.xlu0 %322
  %v325 = vmul.f32 %v307, %v323
  %327 = vset.pattern.permute.xlu0 0
  %328 = vperm.xlu0 %327, %v178
  %v329 = vpop.permute.xlu0 %328
  %v331 = vmul.f32 %v329, %v319
  %v332 = vsub.f32 1.0, %v178
  %334 = vset.pattern.permute.xlu0 0
  %335 = vperm.xlu0 %334, %v332
  %v336 = vpop.permute.xlu0 %335
  %v338 = vmul.f32 %v336, 0.0
  %v339 = vadd.f32 %v331, %v338
  %v340 = vmul.f32 %v329, %v325
  %v341 = vadd.f32 %v340, %v338
  %343 = vrot.lane.b32.xlu0 %v287, 32
  %v344 = vpop.permute.xlu0 %343
  %346 = vst.msk [vmem:[%s6] sm:$0xff] %vm184, %v344
  %348 = vrot.lane.b32.xlu0 %v340, 64
  %v349 = vpop.permute.xlu0 %348
  %s351 = scalar_lea.vmem %s6, 56
  %vm352 = vcmask 523520
  %353 = vst.msk [vmem:[%s351] sm:$0xff] %vm352, %v349
  %s354 = scalar_lea.vmem %s1, 8
  %v355 = vld [vmem:[%s354] sm:$0xff]
  %s356 = scalar_lea.vmem %s1, 48
  %v357 = vld [vmem:[%s356] sm:$0xff]
  %s358 = scalar_lea.vmem [#allocation2], 16
  %v359 = vld [vmem:[%s358] sm:$0xff]
  %v360 = vld [vmem:[%s4] sm:$0xff]
  %v361 = vld [vmem:[%s4 + $0x8] sm:$0xff]
  %v362 = vld [vmem:[%s4 + $0x10] sm:$0xff]
  %v363 = vld [vmem:[%s4 + $0x18] sm:$0xff]
  %365 = vrot.lane.b32.xlu0 %v288, 32
  %v366 = vpop.permute.xlu0 %365
  %v367 = vsel %vm184, %v366, 0
  %369 = vmatpush.msra.mxu0 0.0
  %370 = vmatpush.msra.mxu0 0.0
  %371 = vmatpush.msra.mxu0 0.0
  %372 = vmatpush.msra.mxu0 0.0
  %373 = vmatpush.msra.mxu0 0.0
  %374 = vmatpush.msra.mxu0 0.0
  %375 = vmatpush.msra.mxu0 0.0
  %376 = vmatpush.msra.mxu0 0.0
  %377 = vmatpush.msra.mxu0 0.0
  %378 = vmatpush.msra.mxu0 0.0
  %379 = vmatpush.msra.mxu0 0.0
  %380 = vmatpush.msra.mxu0 0.0
  %381 = vmatpush.msra.mxu0 %v363
  %382 = vmatpush.msra.mxu0 %v362
  %383 = vmatpush.msra.mxu0 %v361
  %384 = vmatpush.msra.mxu0 %v360
  %385 = vmatmul.f32.gmra.mxu0 %v367
  %v386 = vpop.f32.mrf.mxu0
  %v387 = vadd.f32 0.0, %v386
  %388 = vdwg.mxu0
  %v389 = vadd.f32 %v359, %v387
  %s390 = scalar_lea.vmem [#allocation2], 96
  %v391 = vld [vmem:[%s390 + $0x8] sm:$0xff]
  %v392 = vld [vmem:[%s5] sm:$0xff]
  %v393 = vld [vmem:[%s5 + $0x8] sm:$0xff]
  %v394 = vld [vmem:[%s5 + $0x10] sm:$0xff]
  %v395 = vld [vmem:[%s5 + $0x18] sm:$0xff]
  %397 = vrot.lane.b32.xlu0 %v341, 32
  %v398 = vpop.permute.xlu0 %397
  %v399 = vsel %vm184, %v398, 0
  %401 = vmatpush.msra.mxu0 0.0
  %402 = vmatpush.msra.mxu0 0.0
  %403 = vmatpush.msra.mxu0 0.0
  %404 = vmatpush.msra.mxu0 0.0
  %405 = vmatpush.msra.mxu0 0.0
  %406 = vmatpush.msra.mxu0 0.0
  %407 = vmatpush.msra.mxu0 0.0
  %408 = vmatpush.msra.mxu0 0.0
  %409 = vmatpush.msra.mxu0 0.0
  %410 = vmatpush.msra.mxu0 0.0
  %411 = vmatpush.msra.mxu0 0.0
  %412 = vmatpush.msra.mxu0 0.0
  %413 = vmatpush.msra.mxu0 %v395
  %414 = vmatpush.msra.mxu0 %v394
  %415 = vmatpush.msra.mxu0 %v393
  %416 = vmatpush.msra.mxu0 %v392
  %417 = vmatmul.f32.gmra.mxu0 %v399
  %v418 = vpop.f32.mrf.mxu0
  %v419 = vadd.f32 0.0, %v418
  %420 = vdwg.mxu0
  %v421 = vadd.f32 %v391, %v419
  %v422 = vxor.u32 %v389, 2147483648
  %v423 = vmul.f32 %v422, 1.442695
  %v424 = vpow.pop %v423
  %v425 = vadd.f32 %v424, 1.0
  %v426 = vrcp.pop %v425
  %v427 = vmul.f32 %v425, %v426
  %v428 = vsub.f32 1.0, %v427
  %v429 = vmul.f32 %v426, %v428
  %v430 = vadd.f32 %v426, %v429
  %vm431 = vweird.f32 %v425
  %vm432 = vweird.f32 %v426
  %vm433 = vmor %vm431, %vm432
  %v434 = vsel %vm433, %v426, %v430
  %v435 = vand.u32 2147483647, %v425
  %vm436 = vcmp.eq.f32.partialorder %v435, 8.507059e+37
  %v437 = vand.u32 %v425, 2147483648
  %v438 = vor.u32 1.1754944e-38, %v437
  %v439 = vsel %vm436, %v438, %v434
  %v440 = vmul.f32 1.0, %v439
  %v441 = vtanh.pop %v389
  %v442 = vmul.f32 %v440, %v286
  %444 = vrot.lane.b32.xlu0 %v441, 64
  %v445 = vpop.permute.xlu0 %444
  %v447 = vmul.f32 %v440, %v445
  %449 = vrot.lane.b32.xlu0 %v447, 32
  %v450 = vpop.permute.xlu0 %449
  %v452 = vadd.f32 %v442, %v450
  %v453 = vtanh.pop %v452
  %455 = vrot.lane.b32.xlu0 %v453, 64
  %v456 = vpop.permute.xlu0 %455
  %v458 = vmul.f32 %v440, %v456
  %460 = vset.pattern.permute.xlu0 0
  %461 = vperm.xlu0 %460, %v355
  %v462 = vpop.permute.xlu0 %461
  %v464 = vmul.f32 %v462, %v452
  %v465 = vsub.f32 1.0, %v355
  %467 = vset.pattern.permute.xlu0 0
  %468 = vperm.xlu0 %467, %v465
  %v469 = vpop.permute.xlu0 %468
  %v471 = vmul.f32 %v469, %v286
  %v472 = vadd.f32 %v464, %v471
  %v473 = vmul.f32 %v462, %v458
  %v474 = vmul.f32 %v469, %v288
  %v475 = vadd.f32 %v473, %v474
  %v476 = vxor.u32 %v421, 2147483648
  %v477 = vmul.f32 %v476, 1.442695
  %v478 = vpow.pop %v477
  %v479 = vadd.f32 %v478, 1.0
  %v480 = vrcp.pop %v479
  %v481 = vmul.f32 %v479, %v480
  %v482 = vsub.f32 1.0, %v481
  %v483 = vmul.f32 %v480, %v482
  %v484 = vadd.f32 %v480, %v483
  %vm485 = vweird.f32 %v479
  %vm486 = vweird.f32 %v480
  %vm487 = vmor %vm485, %vm486
  %v488 = vsel %vm487, %v480, %v484
  %v489 = vand.u32 2147483647, %v479
  %vm490 = vcmp.eq.f32.partialorder %v489, 8.507059e+37
  %v491 = vand.u32 %v479, 2147483648
  %v492 = vor.u32 1.1754944e-38, %v491
  %v493 = vsel %vm490, %v492, %v488
  %v494 = vmul.f32 1.0, %v493
  %v495 = vtanh.pop %v421
  %v496 = vmul.f32 %v494, %v339
  %498 = vrot.lane.b32.xlu0 %v495, 64
  %v499 = vpop.permute.xlu0 %498
  %v501 = vmul.f32 %v494, %v499
  %503 = vrot.lane.b32.xlu0 %v501, 32
  %v504 = vpop.permute.xlu0 %503
  %v506 = vadd.f32 %v496, %v504
  %v507 = vtanh.pop %v506
  %509 = vrot.lane.b32.xlu0 %v507, 64
  %v510 = vpop.permute.xlu0 %509
  %v512 = vmul.f32 %v494, %v510
  %514 = vset.pattern.permute.xlu0 0
  %515 = vperm.xlu0 %514, %v357
  %v516 = vpop.permute.xlu0 %515
  %v518 = vmul.f32 %v516, %v506
  %v519 = vsub.f32 1.0, %v357
  %521 = vset.pattern.permute.xlu0 0
  %522 = vperm.xlu0 %521, %v519
  %v523 = vpop.permute.xlu0 %522
  %v525 = vmul.f32 %v523, %v339
  %v526 = vadd.f32 %v518, %v525
  %v527 = vmul.f32 %v516, %v512
  %v528 = vmul.f32 %v523, %v341
  %v529 = vadd.f32 %v527, %v528
  %531 = vrot.lane.b32.xlu0 %v473, 32
  %v532 = vpop.permute.xlu0 %531
  %s534 = scalar_lea.vmem %s6, 8
  %535 = vst.msk [vmem:[%s534] sm:$0xff] %vm184, %v532
  %537 = vrot.lane.b32.xlu0 %v527, 64
  %v538 = vpop.permute.xlu0 %537
  %s540 = scalar_lea.vmem %s6, 48
  %541 = vst.msk [vmem:[%s540] sm:$0xff] %vm352, %v538
  %s542 = scalar_lea.vmem %s1, 16
  %v543 = vld [vmem:[%s542] sm:$0xff]
  %s544 = scalar_lea.vmem %s1, 40
  %v545 = vld [vmem:[%s544] sm:$0xff]
  %s546 = scalar_lea.vmem [#allocation2], 32
  %v547 = vld [vmem:[%s546] sm:$0xff]
  %v548 = vld [vmem:[%s4] sm:$0xff]
  %v549 = vld [vmem:[%s4 + $0x8] sm:$0xff]
  %v550 = vld [vmem:[%s4 + $0x10] sm:$0xff]
  %v551 = vld [vmem:[%s4 + $0x18] sm:$0xff]
  %553 = vrot.lane.b32.xlu0 %v475, 32
  %v554 = vpop.permute.xlu0 %553
  %v555 = vsel %vm184, %v554, 0
  %557 = vmatpush.msra.mxu0 0.0
  %558 = vmatpush.msra.mxu0 0.0
  %559 = vmatpush.msra.mxu0 0.0
  %560 = vmatpush.msra.mxu0 0.0
  %561 = vmatpush.msra.mxu0 0.0
  %562 = vmatpush.msra.mxu0 0.0
  %563 = vmatpush.msra.mxu0 0.0
  %564 = vmatpush.msra.mxu0 0.0
  %565 = vmatpush.msra.mxu0 0.0
  %566 = vmatpush.msra.mxu0 0.0
  %567 = vmatpush.msra.mxu0 0.0
  %568 = vmatpush.msra.mxu0 0.0
  %569 = vmatpush.msra.mxu0 %v551
  %570 = vmatpush.msra.mxu0 %v550
  %571 = vmatpush.msra.mxu0 %v549
  %572 = vmatpush.msra.mxu0 %v548
  %573 = vmatmul.f32.gmra.mxu0 %v555
  %v574 = vpop.f32.mrf.mxu0
  %v575 = vadd.f32 0.0, %v574
  %576 = vdwg.mxu0
  %v577 = vadd.f32 %v547, %v575
  %s578 = scalar_lea.vmem [#allocation2], 80
  %v579 = vld [vmem:[%s578 + $0x8] sm:$0xff]
  %v580 = vld [vmem:[%s5] sm:$0xff]
  %v581 = vld [vmem:[%s5 + $0x8] sm:$0xff]
  %v582 = vld [vmem:[%s5 + $0x10] sm:$0xff]
  %v583 = vld [vmem:[%s5 + $0x18] sm:$0xff]
  %585 = vrot.lane.b32.xlu0 %v529, 32
  %v586 = vpop.permute.xlu0 %585
  %v587 = vsel %vm184, %v586, 0
  %589 = vmatpush.msra.mxu0 0.0
  %590 = vmatpush.msra.mxu0 0.0
  %591 = vmatpush.msra.mxu0 0.0
  %592 = vmatpush.msra.mxu0 0.0
  %593 = vmatpush.msra.mxu0 0.0
  %594 = vmatpush.msra.mxu0 0.0
  %595 = vmatpush.msra.mxu0 0.0
  %596 = vmatpush.msra.mxu0 0.0
  %597 = vmatpush.msra.mxu0 0.0
  %598 = vmatpush.msra.mxu0 0.0
  %599 = vmatpush.msra.mxu0 0.0
  %600 = vmatpush.msra.mxu0 0.0
  %601 = vmatpush.msra.mxu0 %v583
  %602 = vmatpush.msra.mxu0 %v582
  %603 = vmatpush.msra.mxu0 %v581
  %604 = vmatpush.msra.mxu0 %v580
  %605 = vmatmul.f32.gmra.mxu0 %v587
  %v606 = vpop.f32.mrf.mxu0
  %v607 = vadd.f32 0.0, %v606
  %608 = vdwg.mxu0
  %v609 = vadd.f32 %v579, %v607
  %v610 = vxor.u32 %v577, 2147483648
  %v611 = vmul.f32 %v610, 1.442695
  %v612 = vpow.pop %v611
  %v613 = vadd.f32 %v612, 1.0
  %v614 = vrcp.pop %v613
  %v615 = vmul.f32 %v613, %v614
  %v616 = vsub.f32 1.0, %v615
  %v617 = vmul.f32 %v614, %v616
  %v618 = vadd.f32 %v614, %v617
  %vm619 = vweird.f32 %v613
  %vm620 = vweird.f32 %v614
  %vm621 = vmor %vm619, %vm620
  %v622 = vsel %vm621, %v614, %v618
  %v623 = vand.u32 2147483647, %v613
  %vm624 = vcmp.eq.f32.partialorder %v623, 8.507059e+37
  %v625 = vand.u32 %v613, 2147483648
  %v626 = vor.u32 1.1754944e-38, %v625
  %v627 = vsel %vm624, %v626, %v622
  %v628 = vmul.f32 1.0, %v627
  %v629 = vtanh.pop %v577
  %v630 = vmul.f32 %v628, %v472
  %632 = vrot.lane.b32.xlu0 %v629, 64
  %v633 = vpop.permute.xlu0 %632
  %v635 = vmul.f32 %v628, %v633
  %637 = vrot.lane.b32.xlu0 %v635, 32
  %v638 = vpop.permute.xlu0 %637
  %v640 = vadd.f32 %v630, %v638
  %v641 = vtanh.pop %v640
  %643 = vrot.lane.b32.xlu0 %v641, 64
  %v644 = vpop.permute.xlu0 %643
  %v646 = vmul.f32 %v628, %v644
  %648 = vset.pattern.permute.xlu0 0
  %649 = vperm.xlu0 %648, %v543
  %v650 = vpop.permute.xlu0 %649
  %v652 = vmul.f32 %v650, %v640
  %v653 = vsub.f32 1.0, %v543
  %655 = vset.pattern.permute.xlu0 0
  %656 = vperm.xlu0 %655, %v653
  %v657 = vpop.permute.xlu0 %656
  %v659 = vmul.f32 %v657, %v472
  %v660 = vadd.f32 %v652, %v659
  %v661 = vmul.f32 %v650, %v646
  %v662 = vmul.f32 %v657, %v475
  %v663 = vadd.f32 %v661, %v662
  %v664 = vxor.u32 %v609, 2147483648
  %v665 = vmul.f32 %v664, 1.442695
  %v666 = vpow.pop %v665
  %v667 = vadd.f32 %v666, 1.0
  %v668 = vrcp.pop %v667
  %v669 = vmul.f32 %v667, %v668
  %v670 = vsub.f32 1.0, %v669
  %v671 = vmul.f32 %v668, %v670
  %v672 = vadd.f32 %v668, %v671
  %vm673 = vweird.f32 %v667
  %vm674 = vweird.f32 %v668
  %vm675 = vmor %vm673, %vm674
  %v676 = vsel %vm675, %v668, %v672
  %v677 = vand.u32 2147483647, %v667
  %vm678 = vcmp.eq.f32.partialorder %v677, 8.507059e+37
  %v679 = vand.u32 %v667, 2147483648
  %v680 = vor.u32 1.1754944e-38, %v679
  %v681 = vsel %vm678, %v680, %v676
  %v682 = vmul.f32 1.0, %v681
  %v683 = vtanh.pop %v609
  %v684 = vmul.f32 %v682, %v526
  %686 = vrot.lane.b32.xlu0 %v683, 64
  %v687 = vpop.permute.xlu0 %686
  %v689 = vmul.f32 %v682, %v687
  %691 = vrot.lane.b32.xlu0 %v689, 32
  %v692 = vpop.permute.xlu0 %691
  %v694 = vadd.f32 %v684, %v692
  %v695 = vtanh.pop %v694
  %697 = vrot.lane.b32.xlu0 %v695, 64
  %v698 = vpop.permute.xlu0 %697
  %v700 = vmul.f32 %v682, %v698
  %702 = vset.pattern.permute.xlu0 0
  %703 = vperm.xlu0 %702, %v545
  %v704 = vpop.permute.xlu0 %703
  %v706 = vmul.f32 %v704, %v694
  %v707 = vsub.f32 1.0, %v545
  %709 = vset.pattern.permute.xlu0 0
  %710 = vperm.xlu0 %709, %v707
  %v711 = vpop.permute.xlu0 %710
  %v713 = vmul.f32 %v711, %v526
  %v714 = vadd.f32 %v706, %v713
  %v715 = vmul.f32 %v704, %v700
  %v716 = vmul.f32 %v711, %v529
  %v717 = vadd.f32 %v715, %v716
  %719 = vrot.lane.b32.xlu0 %v661, 32
  %v720 = vpop.permute.xlu0 %719
  %s722 = scalar_lea.vmem %s6, 16
  %723 = vst.msk [vmem:[%s722] sm:$0xff] %vm184, %v720
  %725 = vrot.lane.b32.xlu0 %v715, 64
  %v726 = vpop.permute.xlu0 %725
  %s728 = scalar_lea.vmem %s6, 40
  %729 = vst.msk [vmem:[%s728] sm:$0xff] %vm352, %v726
  %s730 = scalar_lea.vmem %s1, 24
  %v731 = vld [vmem:[%s730] sm:$0xff]
  %s732 = scalar_lea.vmem %s1, 32
  %v733 = vld [vmem:[%s732] sm:$0xff]
  %s734 = scalar_lea.vmem [#allocation2], 48
  %v735 = vld [vmem:[%s734] sm:$0xff]
  %v736 = vld [vmem:[%s4] sm:$0xff]
  %v737 = vld [vmem:[%s4 + $0x8] sm:$0xff]
  %v738 = vld [vmem:[%s4 + $0x10] sm:$0xff]
  %v739 = vld [vmem:[%s4 + $0x18] sm:$0xff]
  %741 = vrot.lane.b32.xlu0 %v663, 32
  %v742 = vpop.permute.xlu0 %741
  %v743 = vsel %vm184, %v742, 0
  %745 = vmatpush.msra.mxu0 0.0
  %746 = vmatpush.msra.mxu0 0.0
  %747 = vmatpush.msra.mxu0 0.0
  %748 = vmatpush.msra.mxu0 0.0
  %749 = vmatpush.msra.mxu0 0.0
  %750 = vmatpush.msra.mxu0 0.0
  %751 = vmatpush.msra.mxu0 0.0
  %752 = vmatpush.msra.mxu0 0.0
  %753 = vmatpush.msra.mxu0 0.0
  %754 = vmatpush.msra.mxu0 0.0
  %755 = vmatpush.msra.mxu0 0.0
  %756 = vmatpush.msra.mxu0 0.0
  %757 = vmatpush.msra.mxu0 %v739
  %758 = vmatpush.msra.mxu0 %v738
  %759 = vmatpush.msra.mxu0 %v737
  %760 = vmatpush.msra.mxu0 %v736
  %761 = vmatmul.f32.gmra.mxu0 %v743
  %v762 = vpop.f32.mrf.mxu0
  %v763 = vadd.f32 0.0, %v762
  %764 = vdwg.mxu0
  %v765 = vadd.f32 %v735, %v763
  %s766 = scalar_lea.vmem [#allocation2], 64
  %v767 = vld [vmem:[%s766 + $0x8] sm:$0xff]
  %v768 = vld [vmem:[%s5] sm:$0xff]
  %v769 = vld [vmem:[%s5 + $0x8] sm:$0xff]
  %v770 = vld [vmem:[%s5 + $0x10] sm:$0xff]
  %v771 = vld [vmem:[%s5 + $0x18] sm:$0xff]
  %773 = vrot.lane.b32.xlu0 %v717, 32
  %v774 = vpop.permute.xlu0 %773
  %v775 = vsel %vm184, %v774, 0
  %777 = vmatpush.msra.mxu0 0.0
  %778 = vmatpush.msra.mxu0 0.0
  %779 = vmatpush.msra.mxu0 0.0
  %780 = vmatpush.msra.mxu0 0.0
  %781 = vmatpush.msra.mxu0 0.0
  %782 = vmatpush.msra.mxu0 0.0
  %783 = vmatpush.msra.mxu0 0.0
  %784 = vmatpush.msra.mxu0 0.0
  %785 = vmatpush.msra.mxu0 0.0
  %786 = vmatpush.msra.mxu0 0.0
  %787 = vmatpush.msra.mxu0 0.0
  %788 = vmatpush.msra.mxu0 0.0
  %789 = vmatpush.msra.mxu0 %v771
  %790 = vmatpush.msra.mxu0 %v770
  %791 = vmatpush.msra.mxu0 %v769
  %792 = vmatpush.msra.mxu0 %v768
  %793 = vmatmul.f32.gmra.mxu0 %v775
  %v794 = vpop.f32.mrf.mxu0
  %v795 = vadd.f32 0.0, %v794
  %796 = vdwg.mxu0
  %v797 = vadd.f32 %v767, %v795
  %v798 = vxor.u32 %v765, 2147483648
  %v799 = vmul.f32 %v798, 1.442695
  %v800 = vpow.pop %v799
  %v801 = vadd.f32 %v800, 1.0
  %v802 = vrcp.pop %v801
  %v803 = vmul.f32 %v801, %v802
  %v804 = vsub.f32 1.0, %v803
  %v805 = vmul.f32 %v802, %v804
  %v806 = vadd.f32 %v802, %v805
  %vm807 = vweird.f32 %v801
  %vm808 = vweird.f32 %v802
  %vm809 = vmor %vm807, %vm808
  %v810 = vsel %vm809, %v802, %v806
  %v811 = vand.u32 2147483647, %v801
  %vm812 = vcmp.eq.f32.partialorder %v811, 8.507059e+37
  %v813 = vand.u32 %v801, 2147483648
  %v814 = vor.u32 1.1754944e-38, %v813
  %v815 = vsel %vm812, %v814, %v810
  %v816 = vmul.f32 1.0, %v815
  %v817 = vtanh.pop %v765
  %v818 = vmul.f32 %v816, %v660
  %820 = vrot.lane.b32.xlu0 %v817, 64
  %v821 = vpop.permute.xlu0 %820
  %v823 = vmul.f32 %v816, %v821
  %825 = vrot.lane.b32.xlu0 %v823, 32
  %v826 = vpop.permute.xlu0 %825
  %v828 = vadd.f32 %v818, %v826
  %v829 = vtanh.pop %v828
  %831 = vrot.lane.b32.xlu0 %v829, 64
  %v832 = vpop.permute.xlu0 %831
  %v834 = vmul.f32 %v816, %v832
  %836 = vset.pattern.permute.xlu0 0
  %837 = vperm.xlu0 %836, %v731
  %v838 = vpop.permute.xlu0 %837
  %v840 = vmul.f32 %v838, %v828
  %v841 = vsub.f32 1.0, %v731
  %843 = vset.pattern.permute.xlu0 0
  %844 = vperm.xlu0 %843, %v841
  %v845 = vpop.permute.xlu0 %844
  %v847 = vmul.f32 %v845, %v660
  %v848 = vadd.f32 %v840, %v847
  %v849 = vmul.f32 %v838, %v834
  %v850 = vmul.f32 %v845, %v663
  %v851 = vadd.f32 %v849, %v850
  %v852 = vxor.u32 %v797, 2147483648
  %v853 = vmul.f32 %v852, 1.442695
  %v854 = vpow.pop %v853
  %v855 = vadd.f32 %v854, 1.0
  %v856 = vrcp.pop %v855
  %v857 = vmul.f32 %v855, %v856
  %v858 = vsub.f32 1.0, %v857
  %v859 = vmul.f32 %v856, %v858
  %v860 = vadd.f32 %v856, %v859
  %vm861 = vweird.f32 %v855
  %vm862 = vweird.f32 %v856
  %vm863 = vmor %vm861, %vm862
  %v864 = vsel %vm863, %v856, %v860
  %v865 = vand.u32 2147483647, %v855
  %vm866 = vcmp.eq.f32.partialorder %v865, 8.507059e+37
  %v867 = vand.u32 %v855, 2147483648
  %v868 = vor.u32 1.1754944e-38, %v867
  %v869 = vsel %vm866, %v868, %v864
  %v870 = vmul.f32 1.0, %v869
  %v871 = vtanh.pop %v797
  %v872 = vmul.f32 %v870, %v714
  %874 = vrot.lane.b32.xlu0 %v871, 64
  %v875 = vpop.permute.xlu0 %874
  %v877 = vmul.f32 %v870, %v875
  %879 = vrot.lane.b32.xlu0 %v877, 32
  %v880 = vpop.permute.xlu0 %879
  %v882 = vadd.f32 %v872, %v880
  %v883 = vtanh.pop %v882
  %885 = vrot.lane.b32.xlu0 %v883, 64
  %v886 = vpop.permute.xlu0 %885
  %v888 = vmul.f32 %v870, %v886
  %890 = vset.pattern.permute.xlu0 0
  %891 = vperm.xlu0 %890, %v733
  %v892 = vpop.permute.xlu0 %891
  %v894 = vmul.f32 %v892, %v882
  %v895 = vsub.f32 1.0, %v733
  %897 = vset.pattern.permute.xlu0 0
  %898 = vperm.xlu0 %897, %v895
  %v899 = vpop.permute.xlu0 %898
  %v901 = vmul.f32 %v899, %v714
  %v902 = vadd.f32 %v894, %v901
  %v903 = vmul.f32 %v892, %v888
  %v904 = vmul.f32 %v899, %v717
  %v905 = vadd.f32 %v903, %v904
  %907 = vrot.lane.b32.xlu0 %v849, 32
  %v908 = vpop.permute.xlu0 %907
  %s910 = scalar_lea.vmem %s6, 24
  %911 = vst.msk [vmem:[%s910] sm:$0xff] %vm184, %v908
  %913 = vrot.lane.b32.xlu0 %v903, 64
  %v914 = vpop.permute.xlu0 %913
  %s916 = scalar_lea.vmem %s6, 32
  %917 = vst.msk [vmem:[%s916] sm:$0xff] %vm352, %v914
  %v918 = vld [vmem:[%s732] sm:$0xff]
  %v919 = vld [vmem:[%s730] sm:$0xff]
  %v920 = vld [vmem:[%s766] sm:$0xff]
  %v921 = vld [vmem:[%s4] sm:$0xff]
  %v922 = vld [vmem:[%s4 + $0x8] sm:$0xff]
  %v923 = vld [vmem:[%s4 + $0x10] sm:$0xff]
  %v924 = vld [vmem:[%s4 + $0x18] sm:$0xff]
  %926 = vrot.lane.b32.xlu0 %v851, 32
  %v927 = vpop.permute.xlu0 %926
  %v928 = vsel %vm184, %v927, 0
  %930 = vmatpush.msra.mxu0 0.0
  %931 = vmatpush.msra.mxu0 0.0
  %932 = vmatpush.msra.mxu0 0.0
  %933 = vmatpush.msra.mxu0 0.0
  %934 = vmatpush.msra.mxu0 0.0
  %935 = vmatpush.msra.mxu0 0.0
  %936 = vmatpush.msra.mxu0 0.0
  %937 = vmatpush.msra.mxu0 0.0
  %938 = vmatpush.msra.mxu0 0.0
  %939 = vmatpush.msra.mxu0 0.0
  %940 = vmatpush.msra.mxu0 0.0
  %941 = vmatpush.msra.mxu0 0.0
  %942 = vmatpush.msra.mxu0 %v924
  %943 = vmatpush.msra.mxu0 %v923
  %944 = vmatpush.msra.mxu0 %v922
  %945 = vmatpush.msra.mxu0 %v921
  %946 = vmatmul.f32.gmra.mxu0 %v928
  %v947 = vpop.f32.mrf.mxu0
  %v948 = vadd.f32 0.0, %v947
  %949 = vdwg.mxu0
  %v950 = vadd.f32 %v920, %v948
  %v951 = vld [vmem:[%s734 + $0x8] sm:$0xff]
  %v952 = vld [vmem:[%s5] sm:$0xff]
  %v953 = vld [vmem:[%s5 + $0x8] sm:$0xff]
  %v954 = vld [vmem:[%s5 + $0x10] sm:$0xff]
  %v955 = vld [vmem:[%s5 + $0x18] sm:$0xff]
  %957 = vrot.lane.b32.xlu0 %v905, 32
  %v958 = vpop.permute.xlu0 %957
  %v959 = vsel %vm184, %v958, 0
  %961 = vmatpush.msra.mxu0 0.0
  %962 = vmatpush.msra.mxu0 0.0
  %963 = vmatpush.msra.mxu0 0.0
  %964 = vmatpush.msra.mxu0 0.0
  %965 = vmatpush.msra.mxu0 0.0
  %966 = vmatpush.msra.mxu0 0.0
  %967 = vmatpush.msra.mxu0 0.0
  %968 = vmatpush.msra.mxu0 0.0
  %969 = vmatpush.msra.mxu0 0.0
  %970 = vmatpush.msra.mxu0 0.0
  %971 = vmatpush.msra.mxu0 0.0
  %972 = vmatpush.msra.mxu0 0.0
  %973 = vmatpush.msra.mxu0 %v955
  %974 = vmatpush.msra.mxu0 %v954
  %975 = vmatpush.msra.mxu0 %v953
  %976 = vmatpush.msra.mxu0 %v952
  %977 = vmatmul.f32.gmra.mxu0 %v959
  %v978 = vpop.f32.mrf.mxu0
  %v979 = vadd.f32 0.0, %v978
  %980 = vdwg.mxu0
  %v981 = vadd.f32 %v951, %v979
  %v982 = vxor.u32 %v950, 2147483648
  %v983 = vmul.f32 %v982, 1.442695
  %v984 = vpow.pop %v983
  %v985 = vadd.f32 %v984, 1.0
  %v986 = vrcp.pop %v985
  %v987 = vmul.f32 %v985, %v986
  %v988 = vsub.f32 1.0, %v987
  %v989 = vmul.f32 %v986, %v988
  %v990 = vadd.f32 %v986, %v989
  %vm991 = vweird.f32 %v985
  %vm992 = vweird.f32 %v986
  %vm993 = vmor %vm991, %vm992
  %v994 = vsel %vm993, %v986, %v990
  %v995 = vand.u32 2147483647, %v985
  %vm996 = vcmp.eq.f32.partialorder %v995, 8.507059e+37
  %v997 = vand.u32 %v985, 2147483648
  %v998 = vor.u32 1.1754944e-38, %v997
  %v999 = vsel %vm996, %v998, %v994
  %v1000 = vmul.f32 1.0, %v999
  %v1001 = vtanh.pop %v950
  %v1002 = vmul.f32 %v1000, %v848
  %1004 = vrot.lane.b32.xlu0 %v1001, 64
  %v1005 = vpop.permute.xlu0 %1004
  %v1007 = vmul.f32 %v1000, %v1005
  %1009 = vrot.lane.b32.xlu0 %v1007, 32
  %v1010 = vpop.permute.xlu0 %1009
  %v1012 = vadd.f32 %v1002, %v1010
  %v1013 = vtanh.pop %v1012
  %1015 = vrot.lane.b32.xlu0 %v1013, 64
  %v1016 = vpop.permute.xlu0 %1015
  %v1018 = vmul.f32 %v1000, %v1016
  %1020 = vset.pattern.permute.xlu0 0
  %1021 = vperm.xlu0 %1020, %v918
  %v1022 = vpop.permute.xlu0 %1021
  %v1024 = vmul.f32 %v1022, %v1012
  %v1025 = vsub.f32 1.0, %v918
  %1027 = vset.pattern.permute.xlu0 0
  %1028 = vperm.xlu0 %1027, %v1025
  %v1029 = vpop.permute.xlu0 %1028
  %v1031 = vmul.f32 %v1029, %v848
  %v1032 = vadd.f32 %v1024, %v1031
  %v1033 = vmul.f32 %v1022, %v1018
  %v1034 = vmul.f32 %v1029, %v851
  %v1035 = vadd.f32 %v1033, %v1034
  %v1036 = vxor.u32 %v981, 2147483648
  %v1037 = vmul.f32 %v1036, 1.442695
  %v1038 = vpow.pop %v1037
  %v1039 = vadd.f32 %v1038, 1.0
  %v1040 = vrcp.pop %v1039
  %v1041 = vmul.f32 %v1039, %v1040
  %v1042 = vsub.f32 1.0, %v1041
  %v1043 = vmul.f32 %v1040, %v1042
  %v1044 = vadd.f32 %v1040, %v1043
  %vm1045 = vweird.f32 %v1039
  %vm1046 = vweird.f32 %v1040
  %vm1047 = vmor %vm1045, %vm1046
  %v1048 = vsel %vm1047, %v1040, %v1044
  %v1049 = vand.u32 2147483647, %v1039
  %vm1050 = vcmp.eq.f32.partialorder %v1049, 8.507059e+37
  %v1051 = vand.u32 %v1039, 2147483648
  %v1052 = vor.u32 1.1754944e-38, %v1051
  %v1053 = vsel %vm1050, %v1052, %v1048
  %v1054 = vmul.f32 1.0, %v1053
  %v1055 = vtanh.pop %v981
  %v1056 = vmul.f32 %v1054, %v902
  %1058 = vrot.lane.b32.xlu0 %v1055, 64
  %v1059 = vpop.permute.xlu0 %1058
  %v1061 = vmul.f32 %v1054, %v1059
  %1063 = vrot.lane.b32.xlu0 %v1061, 32
  %v1064 = vpop.permute.xlu0 %1063
  %v1066 = vadd.f32 %v1056, %v1064
  %v1067 = vtanh.pop %v1066
  %1069 = vrot.lane.b32.xlu0 %v1067, 64
  %v1070 = vpop.permute.xlu0 %1069
  %v1072 = vmul.f32 %v1054, %v1070
  %1074 = vset.pattern.permute.xlu0 0
  %1075 = vperm.xlu0 %1074, %v919
  %v1076 = vpop.permute.xlu0 %1075
  %v1078 = vmul.f32 %v1076, %v1066
  %v1079 = vsub.f32 1.0, %v919
  %1081 = vset.pattern.permute.xlu0 0
  %1082 = vperm.xlu0 %1081, %v1079
  %v1083 = vpop.permute.xlu0 %1082
  %v1085 = vmul.f32 %v1083, %v902
  %v1086 = vadd.f32 %v1078, %v1085
  %v1087 = vmul.f32 %v1076, %v1072
  %v1088 = vmul.f32 %v1083, %v905
  %v1089 = vadd.f32 %v1087, %v1088
  %1091 = vrot.lane.b32.xlu0 %v1033, 32
  %v1092 = vpop.permute.xlu0 %1091
  %1094 = vst.msk [vmem:[%s916] sm:$0xff] %vm184, %v1092
  %1096 = vrot.lane.b32.xlu0 %v1087, 64
  %v1097 = vpop.permute.xlu0 %1096
  %1099 = vst.msk [vmem:[%s910] sm:$0xff] %vm352, %v1097
  %v1100 = vld [vmem:[%s544] sm:$0xff]
  %v1101 = vld [vmem:[%s542] sm:$0xff]
  %v1102 = vld [vmem:[%s578] sm:$0xff]
  %v1103 = vld [vmem:[%s4] sm:$0xff]
  %v1104 = vld [vmem:[%s4 + $0x8] sm:$0xff]
  %v1105 = vld [vmem:[%s4 + $0x10] sm:$0xff]
  %v1106 = vld [vmem:[%s4 + $0x18] sm:$0xff]
  %1108 = vrot.lane.b32.xlu0 %v1035, 32
  %v1109 = vpop.permute.xlu0 %1108
  %v1110 = vsel %vm184, %v1109, 0
  %1112 = vmatpush.msra.mxu0 0.0
  %1113 = vmatpush.msra.mxu0 0.0
  %1114 = vmatpush.msra.mxu0 0.0
  %1115 = vmatpush.msra.mxu0 0.0
  %1116 = vmatpush.msra.mxu0 0.0
  %1117 = vmatpush.msra.mxu0 0.0
  %1118 = vmatpush.msra.mxu0 0.0
  %1119 = vmatpush.msra.mxu0 0.0
  %1120 = vmatpush.msra.mxu0 0.0
  %1121 = vmatpush.msra.mxu0 0.0
  %1122 = vmatpush.msra.mxu0 0.0
  %1123 = vmatpush.msra.mxu0 0.0
  %1124 = vmatpush.msra.mxu0 %v1106
  %1125 = vmatpush.msra.mxu0 %v1105
  %1126 = vmatpush.msra.mxu0 %v1104
  %1127 = vmatpush.msra.mxu0 %v1103
  %1128 = vmatmul.f32.gmra.mxu0 %v1110
  %v1129 = vpop.f32.mrf.mxu0
  %v1130 = vadd.f32 0.0, %v1129
  %1131 = vdwg.mxu0
  %v1132 = vadd.f32 %v1102, %v1130
  %v1133 = vld [vmem:[%s546 + $0x8] sm:$0xff]
  %v1134 = vld [vmem:[%s5] sm:$0xff]
  %v1135 = vld [vmem:[%s5 + $0x8] sm:$0xff]
  %v1136 = vld [vmem:[%s5 + $0x10] sm:$0xff]
  %v1137 = vld [vmem:[%s5 + $0x18] sm:$0xff]
  %1139 = vrot.lane.b32.xlu0 %v1089, 32
  %v1140 = vpop.permute.xlu0 %1139
  %v1141 = vsel %vm184, %v1140, 0
  %1143 = vmatpush.msra.mxu0 0.0
  %1144 = vmatpush.msra.mxu0 0.0
  %1145 = vmatpush.msra.mxu0 0.0
  %1146 = vmatpush.msra.mxu0 0.0
  %1147 = vmatpush.msra.mxu0 0.0
  %1148 = vmatpush.msra.mxu0 0.0
  %1149 = vmatpush.msra.mxu0 0.0
  %1150 = vmatpush.msra.mxu0 0.0
  %1151 = vmatpush.msra.mxu0 0.0
  %1152 = vmatpush.msra.mxu0 0.0
  %1153 = vmatpush.msra.mxu0 0.0
  %1154 = vmatpush.msra.mxu0 0.0
  %1155 = vmatpush.msra.mxu0 %v1137
  %1156 = vmatpush.msra.mxu0 %v1136
  %1157 = vmatpush.msra.mxu0 %v1135
  %1158 = vmatpush.msra.mxu0 %v1134
  %1159 = vmatmul.f32.gmra.mxu0 %v1141
  %v1160 = vpop.f32.mrf.mxu0
  %v1161 = vadd.f32 0.0, %v1160
  %1162 = vdwg.mxu0
  %v1163 = vadd.f32 %v1133, %v1161
  %v1164 = vxor.u32 %v1132, 2147483648
  %v1165 = vmul.f32 %v1164, 1.442695
  %v1166 = vpow.pop %v1165
  %v1167 = vadd.f32 %v1166, 1.0
  %v1168 = vrcp.pop %v1167
  %v1169 = vmul.f32 %v1167, %v1168
  %v1170 = vsub.f32 1.0, %v1169
  %v1171 = vmul.f32 %v1168, %v1170
  %v1172 = vadd.f32 %v1168, %v1171
  %vm1173 = vweird.f32 %v1167
  %vm1174 = vweird.f32 %v1168
  %vm1175 = vmor %vm1173, %vm1174
  %v1176 = vsel %vm1175, %v1168, %v1172
  %v1177 = vand.u32 2147483647, %v1167
  %vm1178 = vcmp.eq.f32.partialorder %v1177, 8.507059e+37
  %v1179 = vand.u32 %v1167, 2147483648
  %v1180 = vor.u32 1.1754944e-38, %v1179
  %v1181 = vsel %vm1178, %v1180, %v1176
  %v1182 = vmul.f32 1.0, %v1181
  %v1183 = vtanh.pop %v1132
  %v1184 = vmul.f32 %v1182, %v1032
  %1186 = vrot.lane.b32.xlu0 %v1183, 64
  %v1187 = vpop.permute.xlu0 %1186
  %v1189 = vmul.f32 %v1182, %v1187
  %1191 = vrot.lane.b32.xlu0 %v1189, 32
  %v1192 = vpop.permute.xlu0 %1191
  %v1194 = vadd.f32 %v1184, %v1192
  %v1195 = vtanh.pop %v1194
  %1197 = vrot.lane.b32.xlu0 %v1195, 64
  %v1198 = vpop.permute.xlu0 %1197
  %v1200 = vmul.f32 %v1182, %v1198
  %1202 = vset.pattern.permute.xlu0 0
  %1203 = vperm.xlu0 %1202, %v1100
  %v1204 = vpop.permute.xlu0 %1203
  %v1206 = vmul.f32 %v1204, %v1194
  %v1207 = vsub.f32 1.0, %v1100
  %1209 = vset.pattern.permute.xlu0 0
  %1210 = vperm.xlu0 %1209, %v1207
  %v1211 = vpop.permute.xlu0 %1210
  %v1213 = vmul.f32 %v1211, %v1032
  %v1214 = vadd.f32 %v1206, %v1213
  %v1215 = vmul.f32 %v1204, %v1200
  %v1216 = vmul.f32 %v1211, %v1035
  %v1217 = vadd.f32 %v1215, %v1216
  %v1218 = vxor.u32 %v1163, 2147483648
  %v1219 = vmul.f32 %v1218, 1.442695
  %v1220 = vpow.pop %v1219
  %v1221 = vadd.f32 %v1220, 1.0
  %v1222 = vrcp.pop %v1221
  %v1223 = vmul.f32 %v1221, %v1222
  %v1224 = vsub.f32 1.0, %v1223
  %v1225 = vmul.f32 %v1222, %v1224
  %v1226 = vadd.f32 %v1222, %v1225
  %vm1227 = vweird.f32 %v1221
  %vm1228 = vweird.f32 %v1222
  %vm1229 = vmor %vm1227, %vm1228
  %v1230 = vsel %vm1229, %v1222, %v1226
  %v1231 = vand.u32 2147483647, %v1221
  %vm1232 = vcmp.eq.f32.partialorder %v1231, 8.507059e+37
  %v1233 = vand.u32 %v1221, 2147483648
  %v1234 = vor.u32 1.1754944e-38, %v1233
  %v1235 = vsel %vm1232, %v1234, %v1230
  %v1236 = vmul.f32 1.0, %v1235
  %v1237 = vtanh.pop %v1163
  %v1238 = vmul.f32 %v1236, %v1086
  %1240 = vrot.lane.b32.xlu0 %v1237, 64
  %v1241 = vpop.permute.xlu0 %1240
  %v1243 = vmul.f32 %v1236, %v1241
  %1245 = vrot.lane.b32.xlu0 %v1243, 32
  %v1246 = vpop.permute.xlu0 %1245
  %v1248 = vadd.f32 %v1238, %v1246
  %v1249 = vtanh.pop %v1248
  %1251 = vrot.lane.b32.xlu0 %v1249, 64
  %v1252 = vpop.permute.xlu0 %1251
  %v1254 = vmul.f32 %v1236, %v1252
  %1256 = vset.pattern.permute.xlu0 0
  %1257 = vperm.xlu0 %1256, %v1101
  %v1258 = vpop.permute.xlu0 %1257
  %v1260 = vmul.f32 %v1258, %v1248
  %v1261 = vsub.f32 1.0, %v1101
  %1263 = vset.pattern.permute.xlu0 0
  %1264 = vperm.xlu0 %1263, %v1261
  %v1265 = vpop.permute.xlu0 %1264
  %v1267 = vmul.f32 %v1265, %v1086
  %v1268 = vadd.f32 %v1260, %v1267
  %v1269 = vmul.f32 %v1258, %v1254
  %v1270 = vmul.f32 %v1265, %v1089
  %v1271 = vadd.f32 %v1269, %v1270
  %1273 = vrot.lane.b32.xlu0 %v1215, 32
  %v1274 = vpop.permute.xlu0 %1273
  %1276 = vst.msk [vmem:[%s728] sm:$0xff] %vm184, %v1274
  %1278 = vrot.lane.b32.xlu0 %v1269, 64
  %v1279 = vpop.permute.xlu0 %1278
  %1281 = vst.msk [vmem:[%s722] sm:$0xff] %vm352, %v1279
  %v1282 = vld [vmem:[%s356] sm:$0xff]
  %v1283 = vld [vmem:[%s354] sm:$0xff]
  %v1284 = vld [vmem:[%s390] sm:$0xff]
  %v1285 = vld [vmem:[%s4] sm:$0xff]
  %v1286 = vld [vmem:[%s4 + $0x8] sm:$0xff]
  %v1287 = vld [vmem:[%s4 + $0x10] sm:$0xff]
  %v1288 = vld [vmem:[%s4 + $0x18] sm:$0xff]
  %1290 = vrot.lane.b32.xlu0 %v1217, 32
  %v1291 = vpop.permute.xlu0 %1290
  %v1292 = vsel %vm184, %v1291, 0
  %1294 = vmatpush.msra.mxu0 0.0
  %1295 = vmatpush.msra.mxu0 0.0
  %1296 = vmatpush.msra.mxu0 0.0
  %1297 = vmatpush.msra.mxu0 0.0
  %1298 = vmatpush.msra.mxu0 0.0
  %1299 = vmatpush.msra.mxu0 0.0
  %1300 = vmatpush.msra.mxu0 0.0
  %1301 = vmatpush.msra.mxu0 0.0
  %1302 = vmatpush.msra.mxu0 0.0
  %1303 = vmatpush.msra.mxu0 0.0
  %1304 = vmatpush.msra.mxu0 0.0
  %1305 = vmatpush.msra.mxu0 0.0
  %1306 = vmatpush.msra.mxu0 %v1288
  %1307 = vmatpush.msra.mxu0 %v1287
  %1308 = vmatpush.msra.mxu0 %v1286
  %1309 = vmatpush.msra.mxu0 %v1285
  %1310 = vmatmul.f32.gmra.mxu0 %v1292
  %v1311 = vpop.f32.mrf.mxu0
  %v1312 = vadd.f32 0.0, %v1311
  %1313 = vdwg.mxu0
  %v1314 = vadd.f32 %v1284, %v1312
  %v1315 = vld [vmem:[%s358 + $0x8] sm:$0xff]
  %v1316 = vld [vmem:[%s5] sm:$0xff]
  %v1317 = vld [vmem:[%s5 + $0x8] sm:$0xff]
  %v1318 = vld [vmem:[%s5 + $0x10] sm:$0xff]
  %v1319 = vld [vmem:[%s5 + $0x18] sm:$0xff]
  %1321 = vrot.lane.b32.xlu0 %v1271, 32
  %v1322 = vpop.permute.xlu0 %1321
  %v1323 = vsel %vm184, %v1322, 0
  %1325 = vmatpush.msra.mxu0 0.0
  %1326 = vmatpush.msra.mxu0 0.0
  %1327 = vmatpush.msra.mxu0 0.0
  %1328 = vmatpush.msra.mxu0 0.0
  %1329 = vmatpush.msra.mxu0 0.0
  %1330 = vmatpush.msra.mxu0 0.0
  %1331 = vmatpush.msra.mxu0 0.0
  %1332 = vmatpush.msra.mxu0 0.0
  %1333 = vmatpush.msra.mxu0 0.0
  %1334 = vmatpush.msra.mxu0 0.0
  %1335 = vmatpush.msra.mxu0 0.0
  %1336 = vmatpush.msra.mxu0 0.0
  %1337 = vmatpush.msra.mxu0 %v1319
  %1338 = vmatpush.msra.mxu0 %v1318
  %1339 = vmatpush.msra.mxu0 %v1317
  %1340 = vmatpush.msra.mxu0 %v1316
  %1341 = vmatmul.f32.gmra.mxu0 %v1323
  %v1342 = vpop.f32.mrf.mxu0
  %v1343 = vadd.f32 0.0, %v1342
  %1344 = vdwg.mxu0
  %v1345 = vadd.f32 %v1315, %v1343
  %v1346 = vxor.u32 %v1314, 2147483648
  %v1347 = vmul.f32 %v1346, 1.442695
  %v1348 = vpow.pop %v1347
  %v1349 = vadd.f32 %v1348, 1.0
  %v1350 = vrcp.pop %v1349
  %v1351 = vmul.f32 %v1349, %v1350
  %v1352 = vsub.f32 1.0, %v1351
  %v1353 = vmul.f32 %v1350, %v1352
  %v1354 = vadd.f32 %v1350, %v1353
  %vm1355 = vweird.f32 %v1349
  %vm1356 = vweird.f32 %v1350
  %vm1357 = vmor %vm1355, %vm1356
  %v1358 = vsel %vm1357, %v1350, %v1354
  %v1359 = vand.u32 2147483647, %v1349
  %vm1360 = vcmp.eq.f32.partialorder %v1359, 8.507059e+37
  %v1361 = vand.u32 %v1349, 2147483648
  %v1362 = vor.u32 1.1754944e-38, %v1361
  %v1363 = vsel %vm1360, %v1362, %v1358
  %v1364 = vmul.f32 1.0, %v1363
  %v1365 = vtanh.pop %v1314
  %v1366 = vmul.f32 %v1364, %v1214
  %1368 = vrot.lane.b32.xlu0 %v1365, 64
  %v1369 = vpop.permute.xlu0 %1368
  %v1371 = vmul.f32 %v1364, %v1369
  %1373 = vrot.lane.b32.xlu0 %v1371, 32
  %v1374 = vpop.permute.xlu0 %1373
  %v1376 = vadd.f32 %v1366, %v1374
  %v1377 = vtanh.pop %v1376
  %1379 = vrot.lane.b32.xlu0 %v1377, 64
  %v1380 = vpop.permute.xlu0 %1379
  %v1382 = vmul.f32 %v1364, %v1380
  %1384 = vset.pattern.permute.xlu0 0
  %1385 = vperm.xlu0 %1384, %v1282
  %v1386 = vpop.permute.xlu0 %1385
  %v1388 = vmul.f32 %v1386, %v1376
  %v1389 = vsub.f32 1.0, %v1282
  %1391 = vset.pattern.permute.xlu0 0
  %1392 = vperm.xlu0 %1391, %v1389
  %v1393 = vpop.permute.xlu0 %1392
  %v1395 = vmul.f32 %v1393, %v1214
  %v1396 = vadd.f32 %v1388, %v1395
  %v1397 = vmul.f32 %v1386, %v1382
  %v1398 = vmul.f32 %v1393, %v1217
  %v1399 = vadd.f32 %v1397, %v1398
  %v1400 = vxor.u32 %v1345, 2147483648
  %v1401 = vmul.f32 %v1400, 1.442695
  %v1402 = vpow.pop %v1401
  %v1403 = vadd.f32 %v1402, 1.0
  %v1404 = vrcp.pop %v1403
  %v1405 = vmul.f32 %v1403, %v1404
  %v1406 = vsub.f32 1.0, %v1405
  %v1407 = vmul.f32 %v1404, %v1406
  %v1408 = vadd.f32 %v1404, %v1407
  %vm1409 = vweird.f32 %v1403
  %vm1410 = vweird.f32 %v1404
  %vm1411 = vmor %vm1409, %vm1410
  %v1412 = vsel %vm1411, %v1404, %v1408
  %v1413 = vand.u32 2147483647, %v1403
  %vm1414 = vcmp.eq.f32.partialorder %v1413, 8.507059e+37
  %v1415 = vand.u32 %v1403, 2147483648
  %v1416 = vor.u32 1.1754944e-38, %v1415
  %v1417 = vsel %vm1414, %v1416, %v1412
  %v1418 = vmul.f32 1.0, %v1417
  %v1419 = vtanh.pop %v1345
  %v1420 = vmul.f32 %v1418, %v1268
  %1422 = vrot.lane.b32.xlu0 %v1419, 64
  %v1423 = vpop.permute.xlu0 %1422
  %v1425 = vmul.f32 %v1418, %v1423
  %1427 = vrot.lane.b32.xlu0 %v1425, 32
  %v1428 = vpop.permute.xlu0 %1427
  %v1430 = vadd.f32 %v1420, %v1428
  %v1431 = vtanh.pop %v1430
  %1433 = vrot.lane.b32.xlu0 %v1431, 64
  %v1434 = vpop.permute.xlu0 %1433
  %v1436 = vmul.f32 %v1418, %v1434
  %1438 = vset.pattern.permute.xlu0 0
  %1439 = vperm.xlu0 %1438, %v1283
  %v1440 = vpop.permute.xlu0 %1439
  %v1442 = vmul.f32 %v1440, %v1430
  %v1443 = vsub.f32 1.0, %v1283
  %1445 = vset.pattern.permute.xlu0 0
  %1446 = vperm.xlu0 %1445, %v1443
  %v1447 = vpop.permute.xlu0 %1446
  %v1449 = vmul.f32 %v1447, %v1268
  %v1450 = vadd.f32 %v1442, %v1449
  %v1451 = vmul.f32 %v1440, %v1436
  %v1452 = vmul.f32 %v1447, %v1271
  %v1453 = vadd.f32 %v1451, %v1452
  %1455 = vrot.lane.b32.xlu0 %v1397, 32
  %v1456 = vpop.permute.xlu0 %1455
  %1458 = vst.msk [vmem:[%s540] sm:$0xff] %vm184, %v1456
  %1460 = vrot.lane.b32.xlu0 %v1451, 64
  %v1461 = vpop.permute.xlu0 %1460
  %1463 = vst.msk [vmem:[%s534] sm:$0xff] %vm352, %v1461
  %v1464 = vld [vmem:[%s177] sm:$0xff]
  %v1465 = vld [vmem:[%s1] sm:$0xff]
  %v1466 = vld [vmem:[%s209] sm:$0xff]
  %v1467 = vld [vmem:[%s4] sm:$0xff]
  %v1468 = vld [vmem:[%s4 + $0x8] sm:$0xff]
  %v1469 = vld [vmem:[%s4 + $0x10] sm:$0xff]
  %v1470 = vld [vmem:[%s4 + $0x18] sm:$0xff]
  %1472 = vrot.lane.b32.xlu0 %v1399, 32
  %v1473 = vpop.permute.xlu0 %1472
  %v1474 = vsel %vm184, %v1473, 0
  %1476 = vmatpush.msra.mxu0 0.0
  %1477 = vmatpush.msra.mxu0 0.0
  %1478 = vmatpush.msra.mxu0 0.0
  %1479 = vmatpush.msra.mxu0 0.0
  %1480 = vmatpush.msra.mxu0 0.0
  %1481 = vmatpush.msra.mxu0 0.0
  %1482 = vmatpush.msra.mxu0 0.0
  %1483 = vmatpush.msra.mxu0 0.0
  %1484 = vmatpush.msra.mxu0 0.0
  %1485 = vmatpush.msra.mxu0 0.0
  %1486 = vmatpush.msra.mxu0 0.0
  %1487 = vmatpush.msra.mxu0 0.0
  %1488 = vmatpush.msra.mxu0 %v1470
  %1489 = vmatpush.msra.mxu0 %v1469
  %1490 = vmatpush.msra.mxu0 %v1468
  %1491 = vmatpush.msra.mxu0 %v1467
  %1492 = vmatmul.f32.gmra.mxu0 %v1474
  %v1493 = vpop.f32.mrf.mxu0
  %v1494 = vadd.f32 0.0, %v1493
  %1495 = vdwg.mxu0
  %v1496 = vadd.f32 %v1466, %v1494
  %v1497 = vld [vmem:[#allocation2 + $0x8] sm:$0xff]
  %v1498 = vld [vmem:[%s5] sm:$0xff]
  %v1499 = vld [vmem:[%s5 + $0x8] sm:$0xff]
  %v1500 = vld [vmem:[%s5 + $0x10] sm:$0xff]
  %v1501 = vld [vmem:[%s5 + $0x18] sm:$0xff]
  %1503 = vrot.lane.b32.xlu0 %v1453, 32
  %v1504 = vpop.permute.xlu0 %1503
  %v1505 = vsel %vm184, %v1504, 0
  %1507 = vmatpush.msra.mxu0 0.0
  %1508 = vmatpush.msra.mxu0 0.0
  %1509 = vmatpush.msra.mxu0 0.0
  %1510 = vmatpush.msra.mxu0 0.0
  %1511 = vmatpush.msra.mxu0 0.0
  %1512 = vmatpush.msra.mxu0 0.0
  %1513 = vmatpush.msra.mxu0 0.0
  %1514 = vmatpush.msra.mxu0 0.0
  %1515 = vmatpush.msra.mxu0 0.0
  %1516 = vmatpush.msra.mxu0 0.0
  %1517 = vmatpush.msra.mxu0 0.0
  %1518 = vmatpush.msra.mxu0 0.0
  %1519 = vmatpush.msra.mxu0 %v1501
  %1520 = vmatpush.msra.mxu0 %v1500
  %1521 = vmatpush.msra.mxu0 %v1499
  %1522 = vmatpush.msra.mxu0 %v1498
  %1523 = vmatmul.f32.gmra.mxu0 %v1505
  %v1524 = vpop.f32.mrf.mxu0
  %v1525 = vadd.f32 0.0, %v1524
  %1526 = vdwg.mxu0
  %v1527 = vadd.f32 %v1497, %v1525
  %v1528 = vxor.u32 %v1496, 2147483648
  %v1529 = vmul.f32 %v1528, 1.442695
  %v1530 = vpow.pop %v1529
  %v1531 = vadd.f32 %v1530, 1.0
  %v1532 = vrcp.pop %v1531
  %v1533 = vmul.f32 %v1531, %v1532
  %v1534 = vsub.f32 1.0, %v1533
  %v1535 = vmul.f32 %v1532, %v1534
  %v1536 = vadd.f32 %v1532, %v1535
  %vm1537 = vweird.f32 %v1531
  %vm1538 = vweird.f32 %v1532
  %vm1539 = vmor %vm1537, %vm1538
  %v1540 = vsel %vm1539, %v1532, %v1536
  %v1541 = vand.u32 2147483647, %v1531
  %vm1542 = vcmp.eq.f32.partialorder %v1541, 8.507059e+37
  %v1543 = vand.u32 %v1531, 2147483648
  %v1544 = vor.u32 1.1754944e-38, %v1543
  %v1545 = vsel %vm1542, %v1544, %v1540
  %v1546 = vmul.f32 1.0, %v1545
  %v1547 = vtanh.pop %v1496
  %v1548 = vmul.f32 %v1546, %v1396
  %1550 = vrot.lane.b32.xlu0 %v1547, 64
  %v1551 = vpop.permute.xlu0 %1550
  %v1553 = vmul.f32 %v1546, %v1551
  %1555 = vrot.lane.b32.xlu0 %v1553, 32
  %v1556 = vpop.permute.xlu0 %1555
  %v1558 = vadd.f32 %v1548, %v1556
  %v1559 = vtanh.pop %v1558
  %1561 = vrot.lane.b32.xlu0 %v1559, 64
  %v1562 = vpop.permute.xlu0 %1561
  %v1564 = vmul.f32 %v1546, %v1562
  %1566 = vset.pattern.permute.xlu0 0
  %1567 = vperm.xlu0 %1566, %v1464
  %v1568 = vpop.permute.xlu0 %1567
  %v1570 = vmul.f32 %v1568, %v1564
  %v1571 = vxor.u32 %v1527, 2147483648
  %v1572 = vmul.f32 %v1571, 1.442695
  %v1573 = vpow.pop %v1572
  %v1574 = vadd.f32 %v1573, 1.0
  %v1575 = vrcp.pop %v1574
  %v1576 = vmul.f32 %v1574, %v1575
  %v1577 = vsub.f32 1.0, %v1576
  %v1578 = vmul.f32 %v1575, %v1577
  %v1579 = vadd.f32 %v1575, %v1578
  %vm1580 = vweird.f32 %v1574
  %vm1581 = vweird.f32 %v1575
  %vm1582 = vmor %vm1580, %vm1581
  %v1583 = vsel %vm1582, %v1575, %v1579
  %v1584 = vand.u32 2147483647, %v1574
  %vm1585 = vcmp.eq.f32.partialorder %v1584, 8.507059e+37
  %v1586 = vand.u32 %v1574, 2147483648
  %v1587 = vor.u32 1.1754944e-38, %v1586
  %v1588 = vsel %vm1585, %v1587, %v1583
  %v1589 = vmul.f32 1.0, %v1588
  %v1590 = vtanh.pop %v1527
  %v1591 = vmul.f32 %v1589, %v1450
  %1593 = vrot.lane.b32.xlu0 %v1590, 64
  %v1594 = vpop.permute.xlu0 %1593
  %v1596 = vmul.f32 %v1589, %v1594
  %1598 = vrot.lane.b32.xlu0 %v1596, 32
  %v1599 = vpop.permute.xlu0 %1598
  %v1601 = vadd.f32 %v1591, %v1599
  %v1602 = vtanh.pop %v1601
  %1604 = vrot.lane.b32.xlu0 %v1602, 64
  %v1605 = vpop.permute.xlu0 %1604
  %v1607 = vmul.f32 %v1589, %v1605
  %1609 = vset.pattern.permute.xlu0 0
  %1610 = vperm.xlu0 %1609, %v1465
  %v1611 = vpop.permute.xlu0 %1610
  %v1613 = vmul.f32 %v1611, %v1607
  %1615 = vrot.lane.b32.xlu0 %v1570, 32
  %v1616 = vpop.permute.xlu0 %1615
  %1618 = vst.msk [vmem:[%s351] sm:$0xff] %vm184, %v1616
  %1620 = vrot.lane.b32.xlu0 %v1613, 64
  %v1621 = vpop.permute.xlu0 %1620
  %1623 = vst.msk [vmem:[%s6] sm:$0xff] %vm352, %v1621
  // Predicated region
  $region26: #{tagger_forward.6} parent=0 // pred_check
    _
  $region27: #{tagger_forward.6} parent=0 // pred_check_branch
    %1625 = sbr.rel (0) target = $region29
  $region28: #{tagger_forward.6} parent=0 // pred_region
    _
  $region29: #{tagger_forward.6} parent=0 // pred_fallthru
    _
  // Predicated region
  $region30: #{tagger_forward.6} parent=0 // pred_check
    _
  $region31: #{tagger_forward.6} parent=0 // pred_check_branch
    %1627 = sbr.rel (0) target = $region33
  $region32: #{tagger_forward.6} parent=0 // pred_region
    _
  $region33: #{tagger_forward.6} parent=0 // pred_fallthru
    _

</llo_original>
